<compile_context>
chip_gen: v5e
topology: v5e:2x2
jax: 0.10.0
libtpu: 0.0.40
codegen_flags: <defaults>
</compile_context>

<pallas_src>
import functools
import math

import jax
import jax.numpy as jnp
from jax.experimental import pallas as pl
from jax.experimental.pallas import tpu as pltpu


def _round_up(x, m):
    return ((x + m - 1) // m) * m


def _pad2(a, rows, cols):
    return jnp.pad(a, ((0, rows - a.shape[0]), (0, cols - a.shape[1])))


# --------------------------------------------------------------------------- #
# Kernels
# --------------------------------------------------------------------------- #
def _edge_kernel(f_ref, wq_ref, wr_ref, a_ref, fout_ref):
    # One pass over a row tile of the big edge-feature matrix F:
    #   A column = F_tile @ w_q   -> [block_r, 1]
    #   F_out    = F_tile @ w_r   -> [block_r, e_out]
    # Two separate small-K dots (K = edge_features) avoid any lane re-slicing.
    f = f_ref[...]
    a_ref[...] = jnp.dot(
        f, wq_ref[...], preferred_element_type=jnp.float32
    ).astype(a_ref.dtype)
    fout_ref[...] = jnp.dot(
        f, wr_ref[...], preferred_element_type=jnp.float32
    ).astype(fout_ref.dtype)


def _support_kernel(x_ref, w_ref, o_ref):
    # support = X @ W for one row tile; W is fully resident in VMEM.
    o_ref[...] = jnp.dot(
        x_ref[...], w_ref[...], preferred_element_type=jnp.float32
    ).astype(o_ref.dtype)


def _agg_kernel(a_ref, s_ref, b_ref, o_ref, acc_ref):
    # output[i] = sum_k A[i, k] @ support[k] + bias, accumulated in f32 VMEM.
    k = pl.program_id(1)

    @pl.when(k == 0)
    def _init():
        acc_ref[...] = jnp.zeros_like(acc_ref)

    acc_ref[...] += jnp.dot(
        a_ref[...], s_ref[...], preferred_element_type=jnp.float32
    )

    @pl.when(k == pl.num_programs(1) - 1)
    def _finalize():
        # Bias is added exactly once, only in the final reduction step.
        o_ref[...] = (acc_ref[...] + b_ref[...]).astype(o_ref.dtype)


# --------------------------------------------------------------------------- #
# Wrapper
# --------------------------------------------------------------------------- #
def cpw_forward(x, f_edge, weight, weight_q, weight_r, bias=None, *,
                block_m=512, block_k=512, block_r=8192,
                compute_dtype=jnp.bfloat16):
    """CPW forward.  `adj` of the PyTorch forward is unused and not an input.

    x        : [N, in_features]        node features
    f_edge   : [N*N, edge_features]    dense edge-feature matrix (F in PyTorch).
                                       Store it in bfloat16 to halve the HBM read
                                       of the dominant stage (it is consumed as-is,
                                       no host-side pad/cast copy is made).
    weight   : [in_features, out_features]
    weight_q : [edge_features, 1]
    weight_r : [edge_features, edge_out_features]
    bias     : [out_features] or None
    Returns (output [N, out_features] f32-ish, F_out [N*N, edge_out_features] f32).

    compute_dtype (default bf16) is used for the A / support operands of the
    A @ support matmul; accumulation and the bias add stay in float32, so the
    extra error vs. full f32 is ~1e-2 relative on the node output.
    """
    n, in_f = x.shape
    out_f = weight.shape[1]
    e_feat, e_out = weight_r.shape
    assert weight_q.shape == (e_feat, 1)
    r_rows = n * n
    assert f_edge.shape == (r_rows, e_feat)
    if bias is None:
        bias = jnp.zeros((out_f,), jnp.float32)

    # ---- tile sizes (clamped for small problems, kept (8,128)-friendly) -----
    block_m = _round_up(min(block_m, _round_up(n, 128)), 128)
    block_k = _round_up(min(block_k, _round_up(n, 128)), 128)
    block_r = _round_up(min(block_r, _round_up(r_rows, 512)), 512)

    m_pad = _round_up(n, block_m)          # output rows of A @ support
    k_pad = _round_up(n, block_k)          # contraction dim (A cols / support rows)
    kin_pad = _round_up(in_f, 128)
    fout_pad = _round_up(out_f, 128)       # lane-dense node output

    lane = lambda c: _round_up(c, 128)     # VMEM lane padding of narrow tiles
    f_bytes = jnp.dtype(f_edge.dtype).itemsize
    c_bytes = jnp.dtype(compute_dtype).itemsize

    # ---- 1) edge kernel: single pass over F -> A column + F_out -------------
    # No row padding of F: grid = cdiv and Pallas masks the ragged last tile
    # (its rows hold unspecified values but are row-independent and never
    # written back, so correctness is unaffected).
    grid_r = pl.cdiv(r_rows, block_r)
    edge_vmem = int(2 * block_r * (lane(e_feat) * f_bytes
                                   + lane(1) * 4 + lane(e_out) * 4)
                    + 4 * 1024 * 1024)
    a_col, f_out = pl.pallas_call(
        _edge_kernel,
        out_shape=(jax.ShapeDtypeStruct((r_rows, 1), jnp.float32),
                   jax.ShapeDtypeStruct((r_rows, e_out), jnp.float32)),
        grid=(grid_r,),
        in_specs=[
            pl.BlockSpec((block_r, e_feat), lambda i: (i, 0)),
            pl.BlockSpec((e_feat, 1), lambda i: (0, 0)),
            pl.BlockSpec((e_feat, e_out), lambda i: (0, 0)),
        ],
        out_specs=(
            pl.BlockSpec((block_r, 1), lambda i: (i, 0)),
            pl.BlockSpec((block_r, e_out), lambda i: (i, 0)),
        ),
        compiler_params=pltpu.CompilerParams(
            dimension_semantics=("parallel",),
            vmem_limit_bytes=edge_vmem,
        ),
        cost_estimate=pl.CostEstimate(
            flops=2 * r_rows * e_feat * (1 + e_out),
            transcendentals=0,
            bytes_accessed=f_bytes * r_rows * e_feat
                           + 4 * r_rows * (1 + e_out)
                           + 4 * e_feat * (1 + e_out),
        ),
    )(f_edge, weight_q.astype(f_edge.dtype), weight_r.astype(f_edge.dtype))

    # ---- 2) support kernel: support = X @ W (computed exactly once) ---------
    x_p = _pad2(x.astype(jnp.float32), k_pad, kin_pad)
    w_p = _pad2(weight.astype(jnp.float32), kin_pad, fout_pad)
    support = pl.pallas_call(
        _support_kernel,
        out_shape=jax.ShapeDtypeStruct((k_pad, fout_pad), compute_dtype),
        grid=(k_pad // block_k,),
        in_specs=[
            pl.BlockSpec((block_k, kin_pad), lambda i: (i, 0)),
            pl.BlockSpec((kin_pad, fout_pad), lambda i: (0, 0)),
        ],
        out_specs=pl.BlockSpec((block_k, fout_pad), lambda i: (i, 0)),
        compiler_params=pltpu.CompilerParams(dimension_semantics=("parallel",)),
        cost_estimate=pl.CostEstimate(
            flops=2 * k_pad * kin_pad * fout_pad,
            transcendentals=0,
            bytes_accessed=4 * (k_pad * kin_pad + kin_pad * fout_pad)
                           + c_bytes * k_pad * fout_pad,
        ),
    )(x_p, w_p)

    # A = (F @ w_q).view(N, N); zero-pad only what the tiling needs
    # (zeros in the padded contraction columns keep the reduction exact).
    a_mat = a_col.reshape(n, n)
    a_p = jnp.pad(a_mat, ((0, m_pad - n), (0, k_pad - n))).astype(compute_dtype)

    b_p = _pad2(bias.reshape(1, out_f).astype(jnp.float32), 1, fout_pad)

    # ---- 3) aggregation kernel: output = A @ support + bias -----------------
    n_i = m_pad // block_m
    n_k = k_pad // block_k
    agg_vmem = int(2 * (block_m * block_k * c_bytes
                        + block_k * fout_pad * c_bytes
                        + 8 * fout_pad * 4
                        + block_m * fout_pad * 4)
                   + block_m * fout_pad * 4
                   + 4 * 1024 * 1024)
    out_p = pl.pallas_call(
        _agg_kernel,
        out_shape=jax.ShapeDtypeStruct((m_pad, fout_pad), jnp.float32),
        grid=(n_i, n_k),                       # reduction axis (k) last
        in_specs=[
            pl.BlockSpec((block_m, block_k), lambda i, k: (i, k)),
            pl.BlockSpec((block_k, fout_pad), lambda i, k: (k, 0)),
            pl.BlockSpec((1, fout_pad), lambda i, k: (0, 0)),
        ],
        out_specs=pl.BlockSpec((block_m, fout_pad), lambda i, k: (i, 0)),
        scratch_shapes=[pltpu.VMEM((block_m, fout_pad), jnp.float32)],
        compiler_params=pltpu.CompilerParams(
            dimension_semantics=("parallel", "arbitrary"),
            vmem_limit_bytes=agg_vmem,
        ),
        cost_estimate=pl.CostEstimate(
            flops=2 * m_pad * k_pad * fout_pad,
            transcendentals=0,
            bytes_accessed=c_bytes * (m_pad * k_pad + n_i * k_pad * fout_pad)
                           + 4 * m_pad * fout_pad,
        ),
    )(a_p, support, b_p)

    output = out_p[:n, :out_f].astype(x.dtype)
    return output, f_out


# --------------------------------------------------------------------------- #
# Self-test
# --------------------------------------------------------------------------- #
if __name__ == "__main__":
    # N deliberately not a multiple of 128 and block_r not dividing N*N, so the
    # padding / boundary-masking paths and the multi-step k-reduction are all
    # exercised.
    N = 200
    in_features, out_features = 48, 40
    edge_features, edge_out_features = 8, 12

    key = jax.random.PRNGKey(0)
    kx, kf, kw, kb, kq, kr = jax.random.split(key, 6)

    # Parameter init mirroring CPW.reset_parameters().
    stdv = 1.0 / math.sqrt(out_features)
    weight = jax.random.uniform(kw, (in_features, out_features), jnp.float32, -stdv, stdv)
    bias = jax.random.uniform(kb, (out_features,), jnp.float32, -stdv, stdv)
    stdv_q = 1.0 / math.sqrt(1.0)
    weight_q = jax.random.uniform(kq, (edge_features, 1), jnp.float32, -stdv_q, stdv_q)
    stdv_r = 1.0 / math.sqrt(edge_out_features)
    weight_r = jax.random.uniform(kr, (edge_features, edge_out_features), jnp.float32,
                                  -stdv_r, stdv_r)

    x = jax.random.normal(kx, (N, in_features), jnp.float32)
    f_edge_f32 = 0.1 * jax.random.normal(kf, (N * N, edge_features), jnp.float32)

    # Round values to the bf16 grid so the kernel (which uses bf16 for the large
    # operands) and the f32 reference see identical operand values.
    def bf16_exact(a):
        return a.astype(jnp.bfloat16).astype(jnp.float32)

    x, weight, weight_q, weight_r = map(bf16_exact, (x, weight, weight_q, weight_r))
    f_edge = f_edge_f32.astype(jnp.bfloat16)       # stored in bf16 -> half HBM read
    f_edge_f32 = f_edge.astype(jnp.float32)        # same values for the reference

    fwd = jax.jit(functools.partial(
        cpw_forward, block_m=128, block_k=128, block_r=4096,
        compute_dtype=jnp.bfloat16))
    out, f_out = fwd(x, f_edge, weight, weight_q, weight_r, bias)
    jax.block_until_ready((out, f_out))

    # Plain-JAX reference at highest matmul precision.
    hp = jax.lax.Precision.HIGHEST
    ref_support = jnp.dot(x, weight, precision=hp)
    ref_a = jnp.dot(f_edge_f32, weight_q, precision=hp).reshape(N, N)
    ref_out = jnp.dot(ref_a, ref_support, precision=hp) + bias
    ref_fout = jnp.dot(f_edge_f32, weight_r, precision=hp)

    assert out.shape == (N, out_features)
    assert f_out.shape == (N * N, edge_out_features)
    # out: A and support are carried in bf16 (f32 accumulation), so allow ~1e-2
    # absolute error; F_out operands are bf16-exact -> tight check.
    assert bool(jnp.allclose(out, ref_out, rtol=2e-2, atol=3e-2)), \
        float(jnp.max(jnp.abs(out - ref_out)))
    assert bool(jnp.allclose(f_out, ref_fout, rtol=1e-3, atol=1e-4)), \
        float(jnp.max(jnp.abs(f_out - ref_fout)))

    print("KERNEL_OK")
</pallas_src>

<mosaic_0001>
module attributes {stable_mosaic.version = 11 : i64} {
  func.func @_edge_kernel(%arg0: i32, %arg1: memref<4096x8xbf16, #tpu.memory_space<vmem>>, %arg2: memref<8x1xbf16, #tpu.memory_space<vmem>>, %arg3: memref<8x12xbf16, #tpu.memory_space<vmem>>, %arg4: memref<4096x1xf32, #tpu.memory_space<vmem>>, %arg5: memref<4096x12xf32, #tpu.memory_space<vmem>>) attributes {dimension_semantics = [#tpu.dimension_semantics<parallel>], iteration_bounds = array<i64: 10>, scalar_prefetch = 0 : i64, scratch_operands = 0 : i64, tpu.core_type = #tpu.core_type<tc>, window_params = [{transform_indices = @transform_0, window_bounds = array<i64: 4096, 8>}, {pipeline_mode = #tpu.pipeline_mode<synchronous>, transform_indices = @transform_1, window_bounds = array<i64: 8, 1>}, {pipeline_mode = #tpu.pipeline_mode<synchronous>, transform_indices = @transform_2, window_bounds = array<i64: 8, 12>}, {transform_indices = @transform_3, window_bounds = array<i64: 4096, 1>}, {transform_indices = @transform_4, window_bounds = array<i64: 4096, 12>}]} {
    %c0 = arith.constant 0 : index
    %c0_0 = arith.constant 0 : index
    %0 = vector.load %arg1[%c0, %c0_0] : memref<4096x8xbf16, #tpu.memory_space<vmem>>, vector<4096x8xbf16>
    %c0_1 = arith.constant 0 : index
    %c0_2 = arith.constant 0 : index
    %1 = vector.load %arg2[%c0_1, %c0_2] : memref<8x1xbf16, #tpu.memory_space<vmem>>, vector<8x1xbf16>
    %cst = arith.constant dense<0.000000e+00> : vector<4096x1xf32>
    %2 = tpu.matmul %0, %1, %cst {dimension_numbers = #tpu.dot_dimension_numbers<[1], [0], [0], [1], [0, 0, 1, 1], [], []>} : vector<4096x8xbf16>, vector<8x1xbf16>, vector<4096x1xf32> -> vector<4096x1xf32>
    %c0_3 = arith.constant 0 : index
    %c0_4 = arith.constant 0 : index
    %3 = vector.load %arg4[%c0_3, %c0_4] : memref<4096x1xf32, #tpu.memory_space<vmem>>, vector<4096x1xf32>
    tpu.vector_store %arg4[%c0_3, %c0_4], %2 {strides = array<i32>} : memref<4096x1xf32, #tpu.memory_space<vmem>>, vector<4096x1xf32>,
    %c0_5 = arith.constant 0 : index
    %c0_6 = arith.constant 0 : index
    %4 = vector.load %arg3[%c0_5, %c0_6] : memref<8x12xbf16, #tpu.memory_space<vmem>>, vector<8x12xbf16>
    %cst_7 = arith.constant dense<0.000000e+00> : vector<4096x12xf32>
    %5 = tpu.matmul %0, %4, %cst_7 {dimension_numbers = #tpu.dot_dimension_numbers<[1], [0], [0], [1], [0, 0, 1, 1], [], []>} : vector<4096x8xbf16>, vector<8x12xbf16>, vector<4096x12xf32> -> vector<4096x12xf32>
    %c0_8 = arith.constant 0 : index
    %c0_9 = arith.constant 0 : index
    %6 = vector.load %arg5[%c0_8, %c0_9] : memref<4096x12xf32, #tpu.memory_space<vmem>>, vector<4096x12xf32>
    tpu.vector_store %arg5[%c0_8, %c0_9], %5 {strides = array<i32>} : memref<4096x12xf32, #tpu.memory_space<vmem>>, vector<4096x12xf32>,
    return
  }
  func.func @transform_0(%arg0: i32) -> (i32, i32) {
    %c0_i32 = arith.constant 0 : i32
    %c0_i32_0 = arith.constant 0 : i32
    return %arg0, %c0_i32 : i32, i32
  }
  func.func @transform_1(%arg0: i32) -> (i32, i32) {
    %c0_i32 = arith.constant 0 : i32
    %c0_i32_0 = arith.constant 0 : i32
    %c0_i32_1 = arith.constant 0 : i32
    return %c0_i32, %c0_i32_0 : i32, i32
  }
  func.func @transform_2(%arg0: i32) -> (i32, i32) {
    %c0_i32 = arith.constant 0 : i32
    %c0_i32_0 = arith.constant 0 : i32
    %c0_i32_1 = arith.constant 0 : i32
    return %c0_i32, %c0_i32_0 : i32, i32
  }
  func.func @transform_3(%arg0: i32) -> (i32, i32) {
    %c0_i32 = arith.constant 0 : i32
    %c0_i32_0 = arith.constant 0 : i32
    return %arg0, %c0_i32 : i32, i32
  }
  func.func @transform_4(%arg0: i32) -> (i32, i32) {
    %c0_i32 = arith.constant 0 : i32
    %c0_i32_0 = arith.constant 0 : i32
    return %arg0, %c0_i32 : i32, i32
  }
}

module attributes {stable_mosaic.version = 11 : i64} {
  func.func @_agg_kernel(%arg0: i32, %arg1: i32, %arg2: memref<128x128xbf16, #tpu.memory_space<vmem>>, %arg3: memref<128x128xbf16, #tpu.memory_space<vmem>>, %arg4: memref<1x128xf32, #tpu.memory_space<vmem>>, %arg5: memref<128x128xf32, #tpu.memory_space<vmem>>, %arg6: memref<128x128xf32, #tpu.memory_space<vmem>>) attributes {dimension_semantics = [#tpu.dimension_semantics<parallel>, #tpu.dimension_semantics<arbitrary>], iteration_bounds = array<i64: 2, 2>, scalar_prefetch = 0 : i64, scratch_operands = 1 : i64, tpu.core_type = #tpu.core_type<tc>, window_params = [{transform_indices = @transform_0, window_bounds = array<i64: 128, 128>}, {transform_indices = @transform_1, window_bounds = array<i64: 128, 128>}, {pipeline_mode = #tpu.pipeline_mode<synchronous>, transform_indices = @transform_2, window_bounds = array<i64: 1, 128>}, {transform_indices = @transform_3, window_bounds = array<i64: 128, 128>}]} {
    %c0_i32 = arith.constant 0 : i32
    %0 = arith.cmpi eq, %arg1, %c0_i32 : i32
    %1 = arith.extui %0 : i1 to i32
    %c0_i32_0 = arith.constant 0 : i32
    %2 = arith.cmpi ne, %1, %c0_i32_0 : i32
    scf.if %2 {
      %cst_9 = arith.constant 0.000000e+00 : f32
      %12 = vector.broadcast %cst_9 : f32 to vector<128x128xf32>
      %c0_10 = arith.constant 0 : index
      %c0_11 = arith.constant 0 : index
      %13 = vector.load %arg6[%c0_10, %c0_11] : memref<128x128xf32, #tpu.memory_space<vmem>>, vector<128x128xf32>
      tpu.vector_store %arg6[%c0_10, %c0_11], %12 {strides = array<i32>} : memref<128x128xf32, #tpu.memory_space<vmem>>, vector<128x128xf32>,
    } else {
    }
    %c0 = arith.constant 0 : index
    %c0_1 = arith.constant 0 : index
    %3 = vector.load %arg6[%c0, %c0_1] : memref<128x128xf32, #tpu.memory_space<vmem>>, vector<128x128xf32>
    %c0_2 = arith.constant 0 : index
    %c0_3 = arith.constant 0 : index
    %4 = vector.load %arg2[%c0_2, %c0_3] : memref<128x128xbf16, #tpu.memory_space<vmem>>, vector<128x128xbf16>
    %c0_4 = arith.constant 0 : index
    %c0_5 = arith.constant 0 : index
    %5 = vector.load %arg3[%c0_4, %c0_5] : memref<128x128xbf16, #tpu.memory_space<vmem>>, vector<128x128xbf16>
    %cst = arith.constant dense<0.000000e+00> : vector<128x128xf32>
    %6 = tpu.matmul %4, %5, %cst {dimension_numbers = #tpu.dot_dimension_numbers<[1], [0], [0], [1], [0, 0, 1, 1], [], []>} : vector<128x128xbf16>, vector<128x128xbf16>, vector<128x128xf32> -> vector<128x128xf32>
    %7 = arith.addf %3, %6 : vector<128x128xf32>
    %c0_6 = arith.constant 0 : index
    %c0_7 = arith.constant 0 : index
    %8 = vector.load %arg6[%c0_6, %c0_7] : memref<128x128xf32, #tpu.memory_space<vmem>>, vector<128x128xf32>
    tpu.vector_store %arg6[%c0_6, %c0_7], %7 {strides = array<i32>} : memref<128x128xf32, #tpu.memory_space<vmem>>, vector<128x128xf32>,
    %c1_i32 = arith.constant 1 : i32
    %9 = arith.cmpi eq, %arg1, %c1_i32 : i32
    %10 = arith.extui %9 : i1 to i32
    %c0_i32_8 = arith.constant 0 : i32
    %11 = arith.cmpi ne, %10, %c0_i32_8 : i32
    scf.if %11 {
      %c0_9 = arith.constant 0 : index
      %c0_10 = arith.constant 0 : index
      %12 = vector.load %arg6[%c0_9, %c0_10] : memref<128x128xf32, #tpu.memory_space<vmem>>, vector<128x128xf32>
      %c0_11 = arith.constant 0 : index
      %c0_12 = arith.constant 0 : index
      %13 = vector.load %arg4[%c0_11, %c0_12] : memref<1x128xf32, #tpu.memory_space<vmem>>, vector<1x128xf32>
      %14 = vector.broadcast %13 : vector<1x128xf32> to vector<128x128xf32>
      %15 = arith.addf %12, %14 : vector<128x128xf32>
      %c0_13 = arith.constant 0 : index
      %c0_14 = arith.constant 0 : index
      %16 = vector.load %arg5[%c0_13, %c0_14] : memref<128x128xf32, #tpu.memory_space<vmem>>, vector<128x128xf32>
      tpu.vector_store %arg5[%c0_13, %c0_14], %15 {strides = array<i32>} : memref<128x128xf32, #tpu.memory_space<vmem>>, vector<128x128xf32>,
    } else {
    }
    return
  }
  func.func @transform_0(%arg0: i32, %arg1: i32) -> (i32, i32) {
    %c0_i32 = arith.constant 0 : i32
    return %arg0, %arg1 : i32, i32
  }
  func.func @transform_1(%arg0: i32, %arg1: i32) -> (i32, i32) {
    %c0_i32 = arith.constant 0 : i32
    %c0_i32_0 = arith.constant 0 : i32
    return %arg1, %c0_i32 : i32, i32
  }
  func.func @transform_2(%arg0: i32, %arg1: i32) -> (i32, i32) {
    %c0_i32 = arith.constant 0 : i32
    %c0_i32_0 = arith.constant 0 : i32
    %c0_i32_1 = arith.constant 0 : i32
    return %c0_i32, %c0_i32_0 : i32, i32
  }
  func.func @transform_3(%arg0: i32, %arg1: i32) -> (i32, i32) {
    %c0_i32 = arith.constant 0 : i32
    %c0_i32_0 = arith.constant 0 : i32
    return %arg0, %c0_i32 : i32, i32
  }
}

module attributes {stable_mosaic.version = 11 : i64} {
  func.func @_support_kernel(%arg0: i32, %arg1: memref<128x128xf32, #tpu.memory_space<vmem>>, %arg2: memref<128x128xf32, #tpu.memory_space<vmem>>, %arg3: memref<128x128xbf16, #tpu.memory_space<vmem>>) attributes {dimension_semantics = [#tpu.dimension_semantics<parallel>], iteration_bounds = array<i64: 2>, scalar_prefetch = 0 : i64, scratch_operands = 0 : i64, tpu.core_type = #tpu.core_type<tc>, window_params = [{transform_indices = @transform_0, window_bounds = array<i64: 128, 128>}, {pipeline_mode = #tpu.pipeline_mode<synchronous>, transform_indices = @transform_1, window_bounds = array<i64: 128, 128>}, {transform_indices = @transform_2, window_bounds = array<i64: 128, 128>}]} {
    %c0 = arith.constant 0 : index
    %c0_0 = arith.constant 0 : index
    %0 = vector.load %arg1[%c0, %c0_0] : memref<128x128xf32, #tpu.memory_space<vmem>>, vector<128x128xf32>
    %c0_1 = arith.constant 0 : index
    %c0_2 = arith.constant 0 : index
    %1 = vector.load %arg2[%c0_1, %c0_2] : memref<128x128xf32, #tpu.memory_space<vmem>>, vector<128x128xf32>
    %cst = arith.constant dense<0.000000e+00> : vector<128x128xf32>
    %2 = tpu.matmul %0, %1, %cst {dimension_numbers = #tpu.dot_dimension_numbers<[1], [0], [0], [1], [0, 0, 1, 1], [], []>} : vector<128x128xf32>, vector<128x128xf32>, vector<128x128xf32> -> vector<128x128xf32>
    %3 = arith.truncf %2 : vector<128x128xf32> to vector<128x128xbf16>
    %c0_3 = arith.constant 0 : index
    %c0_4 = arith.constant 0 : index
    %4 = vector.load %arg3[%c0_3, %c0_4] : memref<128x128xbf16, #tpu.memory_space<vmem>>, vector<128x128xbf16>
    tpu.vector_store %arg3[%c0_3, %c0_4], %3 {strides = array<i32>} : memref<128x128xbf16, #tpu.memory_space<vmem>>, vector<128x128xbf16>,
    return
  }
  func.func @transform_0(%arg0: i32) -> (i32, i32) {
    %c0_i32 = arith.constant 0 : i32
    %c0_i32_0 = arith.constant 0 : i32
    return %arg0, %c0_i32 : i32, i32
  }
  func.func @transform_1(%arg0: i32) -> (i32, i32) {
    %c0_i32 = arith.constant 0 : i32
    %c0_i32_0 = arith.constant 0 : i32
    %c0_i32_1 = arith.constant 0 : i32
    return %c0_i32, %c0_i32_0 : i32, i32
  }
  func.func @transform_2(%arg0: i32) -> (i32, i32) {
    %c0_i32 = arith.constant 0 : i32
    %c0_i32_0 = arith.constant 0 : i32
    return %arg0, %c0_i32 : i32, i32
  }
}

</mosaic_0001>

<llo_original>
// kernel: cpw_forward.4
$region0: #{cpw_forward.4}
  #allocation0 [shape = 'u32[]', space=smem, size = 0x4, offset = 0x4, fixed_abs, tag = 'smem constant byte address 0x4 - core index']
  #allocation1 [shape = 'u32[72,128]{1,0:T(1,128)}', space=vmem, size = 0x9000, scoped, tag = 'internal scratch']
  %s0 = inlined_call_operand.vmem [shape: f32[256,128], index: 0, kind: input, shape index: {}]
  %s1 = inlined_call_operand.vmem [shape: f32[128,128], index: 1, kind: input, shape index: {}]
  %s2 = inlined_call_operand.vmem [shape: bf16[256,128], index: 2, kind: output, shape index: {}]
  %s3 = sld [smem:[#allocation0]]
  $region41: #{cpw_forward.4} parent=0
    _
  %s5 = ssub.s32 1, %s3
  %s6 = scalar_select 0, %s5, %s3
  loop: start=0, step=1, limit=4
  $region2: #{cpw_forward.4} parent=0 // loop_pre_header
    _
  $region3: #{cpw_forward.4} parent=0 // loop_header
    %s8 = sphi 0, %s12
    %p9 = scmp.ge.s32.totalorder %s8, 4
    %s18 = sphi 0, %s20
    %s21 = sphi 0, %s18
    %s22 = sphi 0, %s21
    %s38 = sphi 0, %s22
    %s42 = sphi 0, %s42
    %s44 = sphi 0, %s42
    %s45 = sphi 0, %s44
    %s59 = sphi 0, %s45
    %s65 = sphi 0, %s67
    %s68 = sphi 0, %s65
    %s69 = sphi 0, %s68
    %s85 = sphi 0, %s69
  $region4: #{cpw_forward.4} parent=0 // loop_header_branch
    %11 = sbr.rel (%p9) target = $region8
  $region5: #{cpw_forward.4} parent=0 // loop_body
    %s13 = ssub.s32 %s8, 1
    %s14 = ssub.s32 %s8, 2
    %s15 = sadd.s32 %s8, 1
    %s16 = ssub.s32 %s8, %s15
    %p17 = scmp.eq.s32.totalorder %s16, 0
    %s19 = sadd.s32 %s18, 1
    %s20 = scalar_select %p17, %s18, %s19
    %p23 = pneg %p17
    %p24 = scmp.eq.s32.totalorder %s8, 1
    %p25 = por %p23, %p24
    %p26 = scmp.ne.s32.totalorder %s18, %s21
    %p27 = scmp.eq.s32.totalorder %s8, 0
    %p28 = por %p26, %p27
    %p29 = scmp.ne.s32.totalorder %s18, %s21
    %p30 = scmp.eq.s32.totalorder %s13, 1
    %p31 = por %p29, %p30
    %p32 = scmp.ne.s32.totalorder %s21, %s22
    %p33 = scmp.eq.s32.totalorder %s13, 0
    %p34 = por %p32, %p33
    %p35 = scmp.ne.s32.totalorder %s21, %s22
    %p36 = scmp.eq.s32.totalorder %s14, 1
    %p37 = por %p35, %p36
    %p39 = scmp.ne.s32.totalorder %s22, %s38
    %p40 = scmp.eq.s32.totalorder %s14, 0
    %p41 = por %p39, %p40
    %s43 = sadd.s32 %s42, 1
    %p46 = scmp.eq.s32.totalorder %s8, 1
    %p47 = scmp.ne.s32.totalorder %s42, %s44
    %p48 = scmp.eq.s32.totalorder %s8, 0
    %p49 = por %p47, %p48
    %p50 = scmp.ne.s32.totalorder %s42, %s44
    %p51 = scmp.eq.s32.totalorder %s13, 1
    %p52 = por %p50, %p51
    %p53 = scmp.ne.s32.totalorder %s44, %s45
    %p54 = scmp.eq.s32.totalorder %s13, 0
    %p55 = por %p53, %p54
    %p56 = scmp.ne.s32.totalorder %s44, %s45
    %p57 = scmp.eq.s32.totalorder %s14, 1
    %p58 = por %p56, %p57
    %p60 = scmp.ne.s32.totalorder %s45, %s59
    %p61 = scmp.eq.s32.totalorder %s14, 0
    %p62 = por %p60, %p61
    %s63 = ssub.s32 %s8, %s15
    %p64 = scmp.eq.s32.totalorder %s63, 0
    %s66 = sadd.s32 %s65, 1
    %s67 = scalar_select %p64, %s65, %s66
    %p70 = pneg %p64
    %p71 = scmp.eq.s32.totalorder %s8, 1
    %p72 = por %p70, %p71
    %p73 = scmp.ne.s32.totalorder %s65, %s68
    %p74 = scmp.eq.s32.totalorder %s8, 0
    %p75 = por %p73, %p74
    %p76 = scmp.ne.s32.totalorder %s65, %s68
    %p77 = scmp.eq.s32.totalorder %s13, 1
    %p78 = por %p76, %p77
    %p79 = scmp.ne.s32.totalorder %s68, %s69
    %p80 = scmp.eq.s32.totalorder %s13, 0
    %p81 = por %p79, %p80
    %p82 = scmp.ne.s32.totalorder %s68, %s69
    %p83 = scmp.eq.s32.totalorder %s14, 1
    %p84 = por %p82, %p83
    %p86 = scmp.ne.s32.totalorder %s69, %s85
    %p87 = scmp.eq.s32.totalorder %s14, 0
    %p88 = por %p86, %p87
    %p89 = scmp.le.s32.totalorder 1, %s8
    %p90 = scmp.lt.s32.totalorder %s8, 3
    %p91 = pnand %p89, %p90
    %p92 = pneg %p91
    // Predicated region
    $region9: #{cpw_forward.4} parent=5 // pred_check
      _
    $region10: #{cpw_forward.4} parent=5 // pred_check_branch
      %94 = sbr.rel (%p91) target = $region12
    $region11: #{cpw_forward.4} parent=5 // pred_region
      %s95 = ssub.s32 %s8, 1
      // Predicated region
      $region13: #{cpw_forward.4} parent=11 // pred_check
        %p96 = pneg %p55
      $region14: #{cpw_forward.4} parent=11 // pred_check_branch
        %98 = sbr.rel (%p96) target = $region16
      $region15: #{cpw_forward.4} parent=11 // pred_region
        _
      $region16: #{cpw_forward.4} parent=11 // pred_fallthru
        _
    $region12: #{cpw_forward.4} parent=5 // pred_fallthru
      _
    %p99 = scmp.lt.s32.totalorder %s8, 2
    // Predicated region
    $region17: #{cpw_forward.4} parent=5 // pred_check
      %p100 = pneg %p99
    $region18: #{cpw_forward.4} parent=5 // pred_check_branch
      %102 = sbr.rel (%p100) target = $region20
    $region19: #{cpw_forward.4} parent=5 // pred_region
      // Predicated region
      $region21: #{cpw_forward.4} parent=19 // pred_check
        %p103 = pneg %p28
      $region22: #{cpw_forward.4} parent=19 // pred_check_branch
        %105 = sbr.rel (%p103) target = $region24
      $region23: #{cpw_forward.4} parent=19 // pred_region
        %s106 = smul.u32 16, %s8
        %p107 = scmp.lt.s32.totalorder %s106, 31
        %s108 = scalar_select %p107, %s106, 31
        %s109 = smul.addr %s108, 8
        %s110 = scalar_lea.vmem %s0, %s109
        %s111 = smul.u32 16, %s8
      $region24: #{cpw_forward.4} parent=19 // pred_fallthru
        _
    $region20: #{cpw_forward.4} parent=5 // pred_fallthru
      _
    %p112 = scmp.le.s32.totalorder 1, %s8
    %p113 = scmp.lt.s32.totalorder %s8, 3
    %p114 = pnand %p112, %p113
    %p115 = pneg %p114
    // Predicated region
    $region25: #{cpw_forward.4} parent=5 // pred_check
      _
    $region26: #{cpw_forward.4} parent=5 // pred_check_branch
      %117 = sbr.rel (%p114) target = $region28
    $region27: #{cpw_forward.4} parent=5 // pred_region
      %s118 = ssub.s32 %s8, 1
      %s119 = smul.u32 16, %s13
      %p120 = scmp.lt.s32.totalorder %s119, 31
      %s121 = scalar_select %p120, %s119, 31
      %s122 = smul.addr %s121, 8
      %s123 = scalar_lea.vmem %s0, %s122
      %p124 = pneg %p34
      %p125 = pneg %p31
      %p126 = pneg %p55
      %p127 = pneg %p52
      %p128 = pneg %p81
      %p129 = pneg %p78
      %s130 = smul.u32 16, %s13
      %p131 = scmp.lt.s32.totalorder %s130, 31
      %s132 = scalar_select %p131, %s130, 31
      %s133 = smul.addr %s132, 4
      %s134 = scalar_lea.vmem %s2, %s133
      %s135 = smul.u32 16, %s13
      %p136 = scmp.lt.s32.totalorder %s135, 31
      %s137 = scalar_select %p136, %s135, 31
      %s138 = smul.addr %s137, 8
      %s139 = scalar_lea.vmem %s0, %s138
      %s140 = smul.u32 16, %s13
      %s141 = smul.u32 16, %s13
      %p142 = scmp.lt.s32.totalorder %s141, 31
      %s143 = scalar_select %p142, %s141, 31
      %s144 = smul.addr %s143, 4
      %s145 = scalar_lea.vmem %s2, %s144
      %s146 = smul.u32 16, %s13
      %v147 = vld [vmem:[%s139] sm:$0xff]
      %v148 = vld [vmem:[%s139 + $0x8] sm:$0xff]
      %v149 = vld [vmem:[%s139 + $0x10] sm:$0xff]
      %v150 = vld [vmem:[%s139 + $0x18] sm:$0xff]
      %v151 = vld [vmem:[%s139 + $0x20] sm:$0xff]
      %v152 = vld [vmem:[%s139 + $0x28] sm:$0xff]
      %v153 = vld [vmem:[%s139 + $0x30] sm:$0xff]
      %v154 = vld [vmem:[%s139 + $0x38] sm:$0xff]
      %v155 = vld [vmem:[%s139 + $0x40] sm:$0xff]
      %v156 = vld [vmem:[%s139 + $0x48] sm:$0xff]
      %v157 = vld [vmem:[%s139 + $0x50] sm:$0xff]
      %v158 = vld [vmem:[%s139 + $0x58] sm:$0xff]
      %v159 = vld [vmem:[%s139 + $0x60] sm:$0xff]
      %v160 = vld [vmem:[%s139 + $0x68] sm:$0xff]
      %v161 = vld [vmem:[%s139 + $0x70] sm:$0xff]
      %v162 = vld [vmem:[%s139 + $0x78] sm:$0xff]
      %v163 = vld [vmem:[%s1] sm:$0xff]
      %v164 = vld [vmem:[%s1 + $0x8] sm:$0xff]
      %v165 = vld [vmem:[%s1 + $0x10] sm:$0xff]
      %v166 = vld [vmem:[%s1 + $0x18] sm:$0xff]
      %v167 = vld [vmem:[%s1 + $0x20] sm:$0xff]
      %v168 = vld [vmem:[%s1 + $0x28] sm:$0xff]
      %v169 = vld [vmem:[%s1 + $0x30] sm:$0xff]
      %v170 = vld [vmem:[%s1 + $0x38] sm:$0xff]
      %v171 = vld [vmem:[%s1 + $0x40] sm:$0xff]
      %v172 = vld [vmem:[%s1 + $0x48] sm:$0xff]
      %v173 = vld [vmem:[%s1 + $0x50] sm:$0xff]
      %v174 = vld [vmem:[%s1 + $0x58] sm:$0xff]
      %v175 = vld [vmem:[%s1 + $0x60] sm:$0xff]
      %v176 = vld [vmem:[%s1 + $0x68] sm:$0xff]
      %v177 = vld [vmem:[%s1 + $0x70] sm:$0xff]
      %v178 = vld [vmem:[%s1 + $0x78] sm:$0xff]
      %179 = vmatpush.msra.mxu0 %v178
      %180 = vmatpush.msra.mxu0 %v177
      %181 = vmatpush.msra.mxu0 %v176
      %182 = vmatpush.msra.mxu0 %v175
      %183 = vmatpush.msra.mxu0 %v174
      %184 = vmatpush.msra.mxu0 %v173
      %185 = vmatpush.msra.mxu0 %v172
      %186 = vmatpush.msra.mxu0 %v171
      %187 = vmatpush.msra.mxu0 %v170
      %188 = vmatpush.msra.mxu0 %v169
      %189 = vmatpush.msra.mxu0 %v168
      %190 = vmatpush.msra.mxu0 %v167
      %191 = vmatpush.msra.mxu0 %v166
      %192 = vmatpush.msra.mxu0 %v165
      %193 = vmatpush.msra.mxu0 %v164
      %194 = vmatpush.msra.mxu0 %v163
      %195 = vmatmul.f32.gmra.mxu0 %v147
      %v196 = vpop.f32.mrf.mxu0
      %v197 = vadd.f32 0.0, %v196
      %198 = vmatmul.f32.gmra.mxu0 %v148
      %v199 = vpop.f32.mrf.mxu0
      %v200 = vadd.f32 0.0, %v199
      %201 = vmatmul.f32.gmra.mxu0 %v149
      %v202 = vpop.f32.mrf.mxu0
      %v203 = vadd.f32 0.0, %v202
      %204 = vmatmul.f32.gmra.mxu0 %v150
      %v205 = vpop.f32.mrf.mxu0
      %v206 = vadd.f32 0.0, %v205
      %207 = vmatmul.f32.gmra.mxu0 %v151
      %v208 = vpop.f32.mrf.mxu0
      %v209 = vadd.f32 0.0, %v208
      %210 = vmatmul.f32.gmra.mxu0 %v152
      %v211 = vpop.f32.mrf.mxu0
      %v212 = vadd.f32 0.0, %v211
      %213 = vmatmul.f32.gmra.mxu0 %v153
      %v214 = vpop.f32.mrf.mxu0
      %v215 = vadd.f32 0.0, %v214
      %216 = vmatmul.f32.gmra.mxu0 %v154
      %v217 = vpop.f32.mrf.mxu0
      %v218 = vadd.f32 0.0, %v217
      %219 = vmatmul.f32.gmra.mxu0 %v155
      %v220 = vpop.f32.mrf.mxu0
      %v221 = vadd.f32 0.0, %v220
      %222 = vmatmul.f32.gmra.mxu0 %v156
      %v223 = vpop.f32.mrf.mxu0
      %v224 = vadd.f32 0.0, %v223
      %225 = vmatmul.f32.gmra.mxu0 %v157
      %v226 = vpop.f32.mrf.mxu0
      %v227 = vadd.f32 0.0, %v226
      %228 = vmatmul.f32.gmra.mxu0 %v158
      %v229 = vpop.f32.mrf.mxu0
      %v230 = vadd.f32 0.0, %v229
      %231 = vmatmul.f32.gmra.mxu0 %v159
      %v232 = vpop.f32.mrf.mxu0
      %v233 = vadd.f32 0.0, %v232
      %234 = vmatmul.f32.gmra.mxu0 %v160
      %v235 = vpop.f32.mrf.mxu0
      %v236 = vadd.f32 0.0, %v235
      %237 = vmatmul.f32.gmra.mxu0 %v161
      %v238 = vpop.f32.mrf.mxu0
      %v239 = vadd.f32 0.0, %v238
      %240 = vmatmul.f32.gmra.mxu0 %v162
      %v241 = vpop.f32.mrf.mxu0
      %v242 = vadd.f32 0.0, %v241
      %243 = vdwg.mxu0
      %v244 = vpack.c.bf16 %v197, %v197
      %v245 = vpack.c.bf16 %v200, %v200
      %v246 = vpack.c.bf16 %v203, %v203
      %v247 = vpack.c.bf16 %v206, %v206
      %v248 = vpack.c.bf16 %v209, %v209
      %v249 = vpack.c.bf16 %v212, %v212
      %v250 = vpack.c.bf16 %v215, %v215
      %v251 = vpack.c.bf16 %v218, %v218
      %v252 = vpack.c.bf16 %v221, %v221
      %v253 = vpack.c.bf16 %v224, %v224
      %v254 = vpack.c.bf16 %v227, %v227
      %v255 = vpack.c.bf16 %v230, %v230
      %v256 = vpack.c.bf16 %v233, %v233
      %v257 = vpack.c.bf16 %v236, %v236
      %v258 = vpack.c.bf16 %v239, %v239
      %v259 = vpack.c.bf16 %v242, %v242
      %260 = vst [vmem:[%s145] sm:$0xf] %v244
      %261 = vst [vmem:[%s145 + $0x4] sm:$0xf] %v245
      %262 = vst [vmem:[%s145 + $0x8] sm:$0xf] %v246
      %263 = vst [vmem:[%s145 + $0xc] sm:$0xf] %v247
      %264 = vst [vmem:[%s145 + $0x10] sm:$0xf] %v248
      %265 = vst [vmem:[%s145 + $0x14] sm:$0xf] %v249
      %266 = vst [vmem:[%s145 + $0x18] sm:$0xf] %v250
      %267 = vst [vmem:[%s145 + $0x1c] sm:$0xf] %v251
      %268 = vst [vmem:[%s145 + $0x20] sm:$0xf] %v252
      %269 = vst [vmem:[%s145 + $0x24] sm:$0xf] %v253
      %270 = vst [vmem:[%s145 + $0x28] sm:$0xf] %v254
      %271 = vst [vmem:[%s145 + $0x2c] sm:$0xf] %v255
      %272 = vst [vmem:[%s145 + $0x30] sm:$0xf] %v256
      %273 = vst [vmem:[%s145 + $0x34] sm:$0xf] %v257
      %274 = vst [vmem:[%s145 + $0x38] sm:$0xf] %v258
      %275 = vst [vmem:[%s145 + $0x3c] sm:$0xf] %v259
      %s276 = smul.u32 16, %s13
      %p277 = scmp.lt.s32.totalorder %s276, 31
      %s278 = scalar_select %p277, %s276, 31
      %s279 = smul.addr %s278, 4
      %s280 = scalar_lea.vmem %s2, %s279
      // Predicated region
      $region29: #{cpw_forward.4} parent=27 // pred_check
        %p281 = pneg %p78
      $region30: #{cpw_forward.4} parent=27 // pred_check_branch
        %283 = sbr.rel (%p281) target = $region32
      $region31: #{cpw_forward.4} parent=27 // pred_region
        %s284 = smul.u32 16, %s13
      $region32: #{cpw_forward.4} parent=27 // pred_fallthru
        _
    $region28: #{cpw_forward.4} parent=5 // pred_fallthru
      _
    %p285 = scmp.le.s32.totalorder 2, %s8
    // Predicated region
    $region33: #{cpw_forward.4} parent=5 // pred_check
      %p286 = pneg %p285
    $region34: #{cpw_forward.4} parent=5 // pred_check_branch
      %288 = sbr.rel (%p286) target = $region36
    $region35: #{cpw_forward.4} parent=5 // pred_region
      %s289 = ssub.s32 %s8, 2
      // Predicated region
      $region37: #{cpw_forward.4} parent=35 // pred_check
        %p290 = pneg %p84
      $region38: #{cpw_forward.4} parent=35 // pred_check_branch
        %292 = sbr.rel (%p290) target = $region40
      $region39: #{cpw_forward.4} parent=35 // pred_region
        %s293 = smul.u32 16, %s14
        %p294 = scmp.lt.s32.totalorder %s293, 31
        %s295 = scalar_select %p294, %s293, 31
        %s296 = smul.addr %s295, 4
        %s297 = scalar_lea.vmem %s2, %s296
      $region40: #{cpw_forward.4} parent=35 // pred_fallthru
        _
    $region36: #{cpw_forward.4} parent=5 // pred_fallthru
      _
  $region6: #{cpw_forward.4} parent=0 // loop_footer
    %s12 = sadd.s32 1, %s8
  $region7: #{cpw_forward.4} parent=0 // loop_footer_branch
    %7 = sbr.rel target = $region3
  $region8: #{cpw_forward.4} parent=0 // loop_exit
    _

// kernel: cpw_forward.5
$region0: #{cpw_forward.5}
  #allocation0 [shape = 'u32[]', space=smem, size = 0x4, offset = 0x4, fixed_abs, tag = 'smem constant byte address 0x4 - core index']
  #allocation1 [shape = 'u32[72,128]{1,0:T(1,128)}', space=vmem, size = 0x9000, scoped, tag = 'internal scratch']
  #allocation2 [shape = 'f32[128,128]{1,0:T(8,128)}', space=vmem, size = 0x10000, scoped, tag = 'scratch operand']
  %s0 = inlined_call_operand.vmem [shape: bf16[256,256], index: 0, kind: input, shape index: {}]
  %s1 = inlined_call_operand.vmem [shape: bf16[256,128], index: 1, kind: input, shape index: {}]
  %s2 = inlined_call_operand.vmem [shape: f32[1,128], index: 2, kind: input, shape index: {}]
  %s3 = inlined_call_operand.vmem [shape: f32[256,128], index: 3, kind: output, shape index: {}]
  %s4 = sld [smem:[#allocation0]]
  $region94: #{cpw_forward.5} parent=0
    _
  %s6 = ssub.s32 1, %s4
  %s7 = scalar_select 0, %s6, %s4
  $region1: #{cpw_forward.5} parent=0
    #allocation3 [shape = 'u8[65536]{0}', space=vmem, size = 0x10000, scoped, tag = 'input window, operand 0']
    loop: start=0, step=1, limit=6
    $region2: #{cpw_forward.5} parent=1 // loop_pre_header
      _
    $region3: #{cpw_forward.5} parent=1 // loop_header
      %s9 = sphi 0, %s13
      %p10 = scmp.ge.s32.totalorder %s9, 6
      %s16 = sphi 0, %s28
      %s17 = sphi 0, %s24
      %s18 = sphi 0, %s16
      %s19 = sphi 0, %s17
      %s20 = sphi 0, %s18
      %s21 = sphi 0, %s19
      %s33 = sphi 0, %s35
      %s36 = sphi 0, %s33
      %s37 = sphi 0, %s36
      %s53 = sphi 0, %s37
      %s59 = sphi 0, %s61
      %s62 = sphi 0, %s59
      %s63 = sphi 0, %s62
      %s79 = sphi 0, %s63
      %s83 = sphi 0, %s83
      %s85 = sphi 0, %s83
      %s86 = sphi 0, %s85
      %s100 = sphi 0, %s86
      %s106 = sphi 0, %s108
      %s109 = sphi 0, %s106
      %s110 = sphi 0, %s109
      %s126 = sphi 0, %s110
    $region4: #{cpw_forward.5} parent=1 // loop_header_branch
      %12 = sbr.rel (%p10) target = $region8
    $region5: #{cpw_forward.5} parent=1 // loop_body
      %s14 = ssub.s32 %s9, 1
      %s15 = ssub.s32 %s9, 2
      %s22 = sadd.s32 1, %s17
      %p23 = scmp.ge.s32.totalorder %s22, 2
      %s24 = scalar_select %p23, 0, %s22
      %s25 = sadd.s32 1, %s16
      %s26 = scalar_select %p23, %s25, %s16
      %p27 = scmp.ge.s32.totalorder %s26, 2
      %s28 = scalar_select %p27, 0, %s26
      %s29 = ssub.s32 %s16, %s28
      %s30 = ssub.s32 %s17, %s24
      %s31 = sor.u32 %s29, %s30
      %p32 = scmp.eq.s32.totalorder %s31, 0
      %s34 = sadd.s32 %s33, 1
      %s35 = scalar_select %p32, %s33, %s34
      %p38 = pneg %p32
      %p39 = scmp.eq.s32.totalorder %s9, 3
      %p40 = por %p38, %p39
      %p41 = scmp.ne.s32.totalorder %s33, %s36
      %p42 = scmp.eq.s32.totalorder %s9, 0
      %p43 = por %p41, %p42
      %p44 = scmp.ne.s32.totalorder %s33, %s36
      %p45 = scmp.eq.s32.totalorder %s14, 3
      %p46 = por %p44, %p45
      %p47 = scmp.ne.s32.totalorder %s36, %s37
      %p48 = scmp.eq.s32.totalorder %s14, 0
      %p49 = por %p47, %p48
      %p50 = scmp.ne.s32.totalorder %s36, %s37
      %p51 = scmp.eq.s32.totalorder %s15, 3
      %p52 = por %p50, %p51
      %p54 = scmp.ne.s32.totalorder %s37, %s53
      %p55 = scmp.eq.s32.totalorder %s15, 0
      %p56 = por %p54, %p55
      %s57 = ssub.s32 %s17, %s24
      %p58 = scmp.eq.s32.totalorder %s57, 0
      %s60 = sadd.s32 %s59, 1
      %s61 = scalar_select %p58, %s59, %s60
      %p64 = pneg %p58
      %p65 = scmp.eq.s32.totalorder %s9, 3
      %p66 = por %p64, %p65
      %p67 = scmp.ne.s32.totalorder %s59, %s62
      %p68 = scmp.eq.s32.totalorder %s9, 0
      %p69 = por %p67, %p68
      %p70 = scmp.ne.s32.totalorder %s59, %s62
      %p71 = scmp.eq.s32.totalorder %s14, 3
      %p72 = por %p70, %p71
      %p73 = scmp.ne.s32.totalorder %s62, %s63
      %p74 = scmp.eq.s32.totalorder %s14, 0
      %p75 = por %p73, %p74
      %p76 = scmp.ne.s32.totalorder %s62, %s63
      %p77 = scmp.eq.s32.totalorder %s15, 3
      %p78 = por %p76, %p77
      %p80 = scmp.ne.s32.totalorder %s63, %s79
      %p81 = scmp.eq.s32.totalorder %s15, 0
      %p82 = por %p80, %p81
      %s84 = sadd.s32 %s83, 1
      %p87 = scmp.eq.s32.totalorder %s9, 3
      %p88 = scmp.ne.s32.totalorder %s83, %s85
      %p89 = scmp.eq.s32.totalorder %s9, 0
      %p90 = por %p88, %p89
      %p91 = scmp.ne.s32.totalorder %s83, %s85
      %p92 = scmp.eq.s32.totalorder %s14, 3
      %p93 = por %p91, %p92
      %p94 = scmp.ne.s32.totalorder %s85, %s86
      %p95 = scmp.eq.s32.totalorder %s14, 0
      %p96 = por %p94, %p95
      %p97 = scmp.ne.s32.totalorder %s85, %s86
      %p98 = scmp.eq.s32.totalorder %s15, 3
      %p99 = por %p97, %p98
      %p101 = scmp.ne.s32.totalorder %s86, %s100
      %p102 = scmp.eq.s32.totalorder %s15, 0
      %p103 = por %p101, %p102
      %s104 = ssub.s32 %s16, %s28
      %p105 = scmp.eq.s32.totalorder %s104, 0
      %s107 = sadd.s32 %s106, 1
      %s108 = scalar_select %p105, %s106, %s107
      %p111 = pneg %p105
      %p112 = scmp.eq.s32.totalorder %s9, 3
      %p113 = por %p111, %p112
      %p114 = scmp.ne.s32.totalorder %s106, %s109
      %p115 = scmp.eq.s32.totalorder %s9, 0
      %p116 = por %p114, %p115
      %p117 = scmp.ne.s32.totalorder %s106, %s109
      %p118 = scmp.eq.s32.totalorder %s14, 3
      %p119 = por %p117, %p118
      %p120 = scmp.ne.s32.totalorder %s109, %s110
      %p121 = scmp.eq.s32.totalorder %s14, 0
      %p122 = por %p120, %p121
      %p123 = scmp.ne.s32.totalorder %s109, %s110
      %p124 = scmp.eq.s32.totalorder %s15, 3
      %p125 = por %p123, %p124
      %p127 = scmp.ne.s32.totalorder %s110, %s126
      %p128 = scmp.eq.s32.totalorder %s15, 0
      %p129 = por %p127, %p128
      %p130 = scmp.le.s32.totalorder 1, %s9
      %p131 = scmp.lt.s32.totalorder %s9, 5
      %p132 = pnand %p130, %p131
      %p133 = pneg %p132
      // Predicated region
      $region9: #{cpw_forward.5} parent=5 // pred_check
        _
      $region10: #{cpw_forward.5} parent=5 // pred_check_branch
        %135 = sbr.rel (%p132) target = $region12
      $region11: #{cpw_forward.5} parent=5 // pred_region
        %s136 = ssub.s32 %s9, 1
        // Predicated region
        $region13: #{cpw_forward.5} parent=11 // pred_check
          %p137 = pneg %p96
        $region14: #{cpw_forward.5} parent=11 // pred_check_branch
          %139 = sbr.rel (%p137) target = $region16
        $region15: #{cpw_forward.5} parent=11 // pred_region
          _
        $region16: #{cpw_forward.5} parent=11 // pred_fallthru
          _
      $region12: #{cpw_forward.5} parent=5 // pred_fallthru
        _
      %p140 = scmp.lt.s32.totalorder %s9, 4
      // Predicated region
      $region17: #{cpw_forward.5} parent=5 // pred_check
        %p141 = pneg %p140
      $region18: #{cpw_forward.5} parent=5 // pred_check_branch
        %143 = sbr.rel (%p141) target = $region20
      $region19: #{cpw_forward.5} parent=5 // pred_region
        // Predicated region
        $region21: #{cpw_forward.5} parent=19 // pred_check
          %p144 = pneg %p43
        $region22: #{cpw_forward.5} parent=19 // pred_check_branch
          %146 = sbr.rel (%p144) target = $region24
        $region23: #{cpw_forward.5} parent=19 // pred_region
          %s147 = sand.u32 %s33, 1
          %s148 = sand.u32 %s33, 1
          %s149 = smul.addr %s148, 64
          %s150 = scalar_lea.vmem [#allocation3], %s149
          %s151 = smul.u32 16, %s16
          %s152 = smul.addr %s151, 2
          %s153 = sadd.s32 %s17, %s152
          %s154 = smul.addr %s153, 4
          %s155 = scalar_lea.vmem %s0, %s154
          // Predicated region
          $region25: #{cpw_forward.5} parent=23 // pred_check
            _
          $region26: #{cpw_forward.5} parent=23 // pred_check_branch
            %157 = sbr.rel (0) target = $region28
          $region27: #{cpw_forward.5} parent=23 // pred_region
            // Predicated region
            $region29: #{cpw_forward.5} parent=27 // pred_check
              _
            $region30: #{cpw_forward.5} parent=27 // pred_check_branch
              %159 = sbr.rel target = $region32
            $region31: #{cpw_forward.5} parent=27 // pred_region
              // Predicated region
              $region44: #{cpw_forward.5} parent=31 // pred_check
                _
              $region45: #{cpw_forward.5} parent=31 // pred_check_branch
                %205 = sbr.rel (0) target = $region47
              $region46: #{cpw_forward.5} parent=31 // pred_region
                loop: start=0, step=1, limit=1
                $region48: #{cpw_forward.5} parent=46 // loop_pre_header
                  _
                $region49: #{cpw_forward.5} parent=46 // loop_header
                  %s207 = sphi 0, %s211
                  %p208 = scmp.ge.s32.totalorder %s207, 1
                  %s212 = sphi %s155, %s155
                  %s213 = sphi %s150, %s150
                $region50: #{cpw_forward.5} parent=46 // loop_header_branch
                  %210 = sbr.rel (%p208) target = $region54
                $region51: #{cpw_forward.5} parent=46 // loop_body
                  _
                $region52: #{cpw_forward.5} parent=46 // loop_footer
                  %s211 = sadd.s32 1, %s207
                $region53: #{cpw_forward.5} parent=46 // loop_footer_branch
                  %206 = sbr.rel target = $region49
                $region54: #{cpw_forward.5} parent=46 // loop_exit
                  _
                %s215 = ssub.s32 16, 1
                loop: start=0, step=1, limit=1
                $region55: #{cpw_forward.5} parent=46 // loop_pre_header
                  _
                $region56: #{cpw_forward.5} parent=46 // loop_header
                  %s217 = sphi 0, %s221
                  %p218 = scmp.ge.s32.totalorder %s217, 1
                  %s222 = sphi %s155, %s155
                  %s223 = sphi %s150, %s150
                $region57: #{cpw_forward.5} parent=46 // loop_header_branch
                  %220 = sbr.rel (%p218) target = $region61
                $region58: #{cpw_forward.5} parent=46 // loop_body
                  %v224 = vld [vmem:[%s222] sm:%s215]
                  %225 = vst [vmem:[%s223] sm:%s215] %v224
                  %v226 = vld [vmem:[%s222 + $0x8] sm:%s215]
                  %227 = vst [vmem:[%s223 + $0x4] sm:%s215] %v226
                  %v228 = vld [vmem:[%s222 + $0x10] sm:%s215]
                  %229 = vst [vmem:[%s223 + $0x8] sm:%s215] %v228
                  %v230 = vld [vmem:[%s222 + $0x18] sm:%s215]
                  %231 = vst [vmem:[%s223 + $0xc] sm:%s215] %v230
                  %v232 = vld [vmem:[%s222 + $0x20] sm:%s215]
                  %233 = vst [vmem:[%s223 + $0x10] sm:%s215] %v232
                  %v234 = vld [vmem:[%s222 + $0x28] sm:%s215]
                  %235 = vst [vmem:[%s223 + $0x14] sm:%s215] %v234
                  %v236 = vld [vmem:[%s222 + $0x30] sm:%s215]
                  %237 = vst [vmem:[%s223 + $0x18] sm:%s215] %v236
                  %v238 = vld [vmem:[%s222 + $0x38] sm:%s215]
                  %239 = vst [vmem:[%s223 + $0x1c] sm:%s215] %v238
                  %v240 = vld [vmem:[%s222 + $0x40] sm:%s215]
                  %241 = vst [vmem:[%s223 + $0x20] sm:%s215] %v240
                  %v242 = vld [vmem:[%s222 + $0x48] sm:%s215]
                  %243 = vst [vmem:[%s223 + $0x24] sm:%s215] %v242
                  %v244 = vld [vmem:[%s222 + $0x50] sm:%s215]
                  %245 = vst [vmem:[%s223 + $0x28] sm:%s215] %v244
                  %v246 = vld [vmem:[%s222 + $0x58] sm:%s215]
                  %247 = vst [vmem:[%s223 + $0x2c] sm:%s215] %v246
                  %v248 = vld [vmem:[%s222 + $0x60] sm:%s215]
                  %249 = vst [vmem:[%s223 + $0x30] sm:%s215] %v248
                  %v250 = vld [vmem:[%s222 + $0x68] sm:%s215]
                  %251 = vst [vmem:[%s223 + $0x34] sm:%s215] %v250
                  %v252 = vld [vmem:[%s222 + $0x70] sm:%s215]
                  %253 = vst [vmem:[%s223 + $0x38] sm:%s215] %v252
                  %v254 = vld [vmem:[%s222 + $0x78] sm:%s215]
                  %255 = vst [vmem:[%s223 + $0x3c] sm:%s215] %v254
                $region59: #{cpw_forward.5} parent=46 // loop_footer
                  %s221 = sadd.s32 1, %s217
                $region60: #{cpw_forward.5} parent=46 // loop_footer_branch
                  %216 = sbr.rel target = $region56
                $region61: #{cpw_forward.5} parent=46 // loop_exit
                  _
              $region47: #{cpw_forward.5} parent=31 // pred_fallthru
                _
            $region32: #{cpw_forward.5} parent=27 // pred_fallthru
              _
            // Predicated region
            $region33: #{cpw_forward.5} parent=27 // pred_check
              _
            $region34: #{cpw_forward.5} parent=27 // pred_check_branch
              %161 = sbr.rel (0) target = $region36
            $region35: #{cpw_forward.5} parent=27 // pred_region
              %s163 = ssub.s32 16, 1
              loop: start=0, step=1, limit=1
              $region37: #{cpw_forward.5} parent=35 // loop_pre_header
                _
              $region38: #{cpw_forward.5} parent=35 // loop_header
                %s165 = sphi 0, %s169
                %p166 = scmp.ge.s32.totalorder %s165, 1
                %s170 = sphi %s155, %s155
                %s171 = sphi %s150, %s150
              $region39: #{cpw_forward.5} parent=35 // loop_header_branch
                %168 = sbr.rel (%p166) target = $region43
              $region40: #{cpw_forward.5} parent=35 // loop_body
                %v172 = vld [vmem:[%s170] sm:%s163]
                %173 = vst [vmem:[%s171] sm:%s163] %v172
                %v174 = vld [vmem:[%s170 + $0x8] sm:%s163]
                %175 = vst [vmem:[%s171 + $0x4] sm:%s163] %v174
                %v176 = vld [vmem:[%s170 + $0x10] sm:%s163]
                %177 = vst [vmem:[%s171 + $0x8] sm:%s163] %v176
                %v178 = vld [vmem:[%s170 + $0x18] sm:%s163]
                %179 = vst [vmem:[%s171 + $0xc] sm:%s163] %v178
                %v180 = vld [vmem:[%s170 + $0x20] sm:%s163]
                %181 = vst [vmem:[%s171 + $0x10] sm:%s163] %v180
                %v182 = vld [vmem:[%s170 + $0x28] sm:%s163]
                %183 = vst [vmem:[%s171 + $0x14] sm:%s163] %v182
                %v184 = vld [vmem:[%s170 + $0x30] sm:%s163]
                %185 = vst [vmem:[%s171 + $0x18] sm:%s163] %v184
                %v186 = vld [vmem:[%s170 + $0x38] sm:%s163]
                %187 = vst [vmem:[%s171 + $0x1c] sm:%s163] %v186
                %v188 = vld [vmem:[%s170 + $0x40] sm:%s163]
                %189 = vst [vmem:[%s171 + $0x20] sm:%s163] %v188
                %v190 = vld [vmem:[%s170 + $0x48] sm:%s163]
                %191 = vst [vmem:[%s171 + $0x24] sm:%s163] %v190
                %v192 = vld [vmem:[%s170 + $0x50] sm:%s163]
                %193 = vst [vmem:[%s171 + $0x28] sm:%s163] %v192
                %v194 = vld [vmem:[%s170 + $0x58] sm:%s163]
                %195 = vst [vmem:[%s171 + $0x2c] sm:%s163] %v194
                %v196 = vld [vmem:[%s170 + $0x60] sm:%s163]
                %197 = vst [vmem:[%s171 + $0x30] sm:%s163] %v196
                %v198 = vld [vmem:[%s170 + $0x68] sm:%s163]
                %199 = vst [vmem:[%s171 + $0x34] sm:%s163] %v198
                %v200 = vld [vmem:[%s170 + $0x70] sm:%s163]
                %201 = vst [vmem:[%s171 + $0x38] sm:%s163] %v200
                %v202 = vld [vmem:[%s170 + $0x78] sm:%s163]
                %203 = vst [vmem:[%s171 + $0x3c] sm:%s163] %v202
              $region41: #{cpw_forward.5} parent=35 // loop_footer
                %s169 = sadd.s32 1, %s165
              $region42: #{cpw_forward.5} parent=35 // loop_footer_branch
                %164 = sbr.rel target = $region38
              $region43: #{cpw_forward.5} parent=35 // loop_exit
                _
            $region36: #{cpw_forward.5} parent=27 // pred_fallthru
              _
          $region28: #{cpw_forward.5} parent=23 // pred_fallthru
            _
          %256 = vnop
        $region24: #{cpw_forward.5} parent=19 // pred_fallthru
          _
        // Predicated region
        $region62: #{cpw_forward.5} parent=19 // pred_check
          %p257 = pneg %p69
        $region63: #{cpw_forward.5} parent=19 // pred_check_branch
          %259 = sbr.rel (%p257) target = $region65
        $region64: #{cpw_forward.5} parent=19 // pred_region
          %s260 = smul.u32 16, %s17
          %p261 = scmp.lt.s32.totalorder %s260, 31
          %s262 = scalar_select %p261, %s260, 31
          %s263 = smul.addr %s262, 4
          %s264 = scalar_lea.vmem %s1, %s263
          %s265 = smul.u32 16, %s17
        $region65: #{cpw_forward.5} parent=19 // pred_fallthru
          _
      $region20: #{cpw_forward.5} parent=5 // pred_fallthru
        _
      %p266 = scmp.le.s32.totalorder 1, %s9
      %p267 = scmp.lt.s32.totalorder %s9, 5
      %p268 = pnand %p266, %p267
      %p269 = pneg %p268
      // Predicated region
      $region66: #{cpw_forward.5} parent=5 // pred_check
        _
      $region67: #{cpw_forward.5} parent=5 // pred_check_branch
        %271 = sbr.rel (%p268) target = $region69
      $region68: #{cpw_forward.5} parent=5 // pred_region
        %s272 = ssub.s32 %s9, 1
        %s273 = sand.u32 %s36, 1
        %s274 = sand.u32 %s36, 1
        %s275 = smul.addr %s274, 64
        %s276 = scalar_lea.vmem [#allocation3], %s275
        // Predicated region
        $region70: #{cpw_forward.5} parent=68 // pred_check
          %p277 = pneg %p49
        $region71: #{cpw_forward.5} parent=68 // pred_check_branch
          %279 = sbr.rel (%p277) target = $region73
        $region72: #{cpw_forward.5} parent=68 // pred_region
          _
        $region73: #{cpw_forward.5} parent=68 // pred_fallthru
          _
        %s280 = sand.u32 %s36, 1
        %s281 = sand.u32 %s36, 1
        %s282 = smul.addr %s281, 64
        %s283 = scalar_lea.vmem [#allocation3], %s282
        %p284 = pneg %p49
        %p285 = pneg %p46
        %s286 = smul.u32 16, %s19
        %p287 = scmp.lt.s32.totalorder %s286, 31
        %s288 = scalar_select %p287, %s286, 31
        %s289 = smul.addr %s288, 4
        %s290 = scalar_lea.vmem %s1, %s289
        %p291 = pneg %p75
        %p292 = pneg %p72
        %p293 = pneg %p96
        %p294 = pneg %p93
        %p295 = pneg %p122
        %p296 = pneg %p119
        %s297 = smul.u32 16, %s18
        %p298 = scmp.lt.s32.totalorder %s297, 31
        %s299 = scalar_select %p298, %s297, 31
        %s300 = smul.addr %s299, 8
        %s301 = scalar_lea.vmem %s3, %s300
        %s302 = smul.u32 16, %s18
        %s303 = smul.u32 16, %s19
        %p304 = scmp.lt.s32.totalorder %s303, 31
        %s305 = scalar_select %p304, %s303, 31
        %s306 = smul.addr %s305, 4
        %s307 = scalar_lea.vmem %s1, %s306
        %s308 = smul.u32 16, %s19
        %s309 = smul.u32 16, %s18
        %p310 = scmp.lt.s32.totalorder %s309, 31
        %s311 = scalar_select %p310, %s309, 31
        %s312 = smul.addr %s311, 8
        %s313 = scalar_lea.vmem %s3, %s312
        %s314 = smul.u32 16, %s18
        %p315 = scmp.eq.s32.totalorder %s19, 0
        // Predicated region
        $region74: #{cpw_forward.5} parent=68 // pred_check
          %p316 = pneg %p315
        $region75: #{cpw_forward.5} parent=68 // pred_check_branch
          %318 = sbr.rel (%p316) target = $region77
        $region76: #{cpw_forward.5} parent=68 // pred_region
          %319 = vst [vmem:[#allocation2] sm:$0xff] 0.0
          %320 = vst [vmem:[#allocation2 + $0x8] sm:$0xff] 0.0
          %321 = vst [vmem:[#allocation2 + $0x10] sm:$0xff] 0.0
          %322 = vst [vmem:[#allocation2 + $0x18] sm:$0xff] 0.0
          %323 = vst [vmem:[#allocation2 + $0x20] sm:$0xff] 0.0
          %324 = vst [vmem:[#allocation2 + $0x28] sm:$0xff] 0.0
          %325 = vst [vmem:[#allocation2 + $0x30] sm:$0xff] 0.0
          %326 = vst [vmem:[#allocation2 + $0x38] sm:$0xff] 0.0
          %327 = vst [vmem:[#allocation2 + $0x40] sm:$0xff] 0.0
          %328 = vst [vmem:[#allocation2 + $0x48] sm:$0xff] 0.0
          %329 = vst [vmem:[#allocation2 + $0x50] sm:$0xff] 0.0
          %330 = vst [vmem:[#allocation2 + $0x58] sm:$0xff] 0.0
          %331 = vst [vmem:[#allocation2 + $0x60] sm:$0xff] 0.0
          %332 = vst [vmem:[#allocation2 + $0x68] sm:$0xff] 0.0
          %333 = vst [vmem:[#allocation2 + $0x70] sm:$0xff] 0.0
          %334 = vst [vmem:[#allocation2 + $0x78] sm:$0xff] 0.0
        $region77: #{cpw_forward.5} parent=68 // pred_fallthru
          _
        %v335 = vld [vmem:[#allocation2] sm:$0xff]
        %v336 = vld [vmem:[#allocation2 + $0x8] sm:$0xff]
        %v337 = vld [vmem:[#allocation2 + $0x10] sm:$0xff]
        %v338 = vld [vmem:[#allocation2 + $0x18] sm:$0xff]
        %v339 = vld [vmem:[#allocation2 + $0x20] sm:$0xff]
        %v340 = vld [vmem:[#allocation2 + $0x28] sm:$0xff]
        %v341 = vld [vmem:[#allocation2 + $0x30] sm:$0xff]
        %v342 = vld [vmem:[#allocation2 + $0x38] sm:$0xff]
        %v343 = vld [vmem:[#allocation2 + $0x40] sm:$0xff]
        %v344 = vld [vmem:[#allocation2 + $0x48] sm:$0xff]
        %v345 = vld [vmem:[#allocation2 + $0x50] sm:$0xff]
        %v346 = vld [vmem:[#allocation2 + $0x58] sm:$0xff]
        %v347 = vld [vmem:[#allocation2 + $0x60] sm:$0xff]
        %v348 = vld [vmem:[#allocation2 + $0x68] sm:$0xff]
        %v349 = vld [vmem:[#allocation2 + $0x70] sm:$0xff]
        %v350 = vld [vmem:[#allocation2 + $0x78] sm:$0xff]
        %v351 = vld [vmem:[%s276] sm:$0xf]
        %v352 = vld [vmem:[%s276 + $0x4] sm:$0xf]
        %v353 = vld [vmem:[%s276 + $0x8] sm:$0xf]
        %v354 = vld [vmem:[%s276 + $0xc] sm:$0xf]
        %v355 = vld [vmem:[%s276 + $0x10] sm:$0xf]
        %v356 = vld [vmem:[%s276 + $0x14] sm:$0xf]
        %v357 = vld [vmem:[%s276 + $0x18] sm:$0xf]
        %v358 = vld [vmem:[%s276 + $0x1c] sm:$0xf]
        %v359 = vld [vmem:[%s276 + $0x20] sm:$0xf]
        %v360 = vld [vmem:[%s276 + $0x24] sm:$0xf]
        %v361 = vld [vmem:[%s276 + $0x28] sm:$0xf]
        %v362 = vld [vmem:[%s276 + $0x2c] sm:$0xf]
        %v363 = vld [vmem:[%s276 + $0x30] sm:$0xf]
        %v364 = vld [vmem:[%s276 + $0x34] sm:$0xf]
        %v365 = vld [vmem:[%s276 + $0x38] sm:$0xf]
        %v366 = vld [vmem:[%s276 + $0x3c] sm:$0xf]
        %v367 = vld [vmem:[%s307] sm:$0xf]
        %v368 = vld [vmem:[%s307 + $0x4] sm:$0xf]
        %v369 = vld [vmem:[%s307 + $0x8] sm:$0xf]
        %v370 = vld [vmem:[%s307 + $0xc] sm:$0xf]
        %v371 = vld [vmem:[%s307 + $0x10] sm:$0xf]
        %v372 = vld [vmem:[%s307 + $0x14] sm:$0xf]
        %v373 = vld [vmem:[%s307 + $0x18] sm:$0xf]
        %v374 = vld [vmem:[%s307 + $0x1c] sm:$0xf]
        %v375 = vld [vmem:[%s307 + $0x20] sm:$0xf]
        %v376 = vld [vmem:[%s307 + $0x24] sm:$0xf]
        %v377 = vld [vmem:[%s307 + $0x28] sm:$0xf]
        %v378 = vld [vmem:[%s307 + $0x2c] sm:$0xf]
        %v379 = vld [vmem:[%s307 + $0x30] sm:$0xf]
        %v380 = vld [vmem:[%s307 + $0x34] sm:$0xf]
        %v381 = vld [vmem:[%s307 + $0x38] sm:$0xf]
        %v382 = vld [vmem:[%s307 + $0x3c] sm:$0xf]
        %v399 = vunpack.c.l.b16 %v351
        %v400 = vunpack.c.l.b16 %v352
        %v401 = vunpack.c.l.b16 %v353
        %v402 = vunpack.c.l.b16 %v354
        %v403 = vunpack.c.l.b16 %v355
        %v404 = vunpack.c.l.b16 %v356
        %v405 = vunpack.c.l.b16 %v357
        %v406 = vunpack.c.l.b16 %v358
        %v407 = vunpack.c.l.b16 %v359
        %v408 = vunpack.c.l.b16 %v360
        %v409 = vunpack.c.l.b16 %v361
        %v410 = vunpack.c.l.b16 %v362
        %v411 = vunpack.c.l.b16 %v363
        %v412 = vunpack.c.l.b16 %v364
        %v413 = vunpack.c.l.b16 %v365
        %v414 = vunpack.c.l.b16 %v366
        %v415 = vpack.c.b16 %v400, %v399
        %v416 = vpack.c.b16 %v402, %v401
        %v417 = vpack.c.b16 %v404, %v403
        %v418 = vpack.c.b16 %v406, %v405
        %v419 = vpack.c.b16 %v408, %v407
        %v420 = vpack.c.b16 %v410, %v409
        %v421 = vpack.c.b16 %v412, %v411
        %v422 = vpack.c.b16 %v414, %v413
        %v447 = vunpack.c.l.b16 %v367
        %v448 = vunpack.c.l.b16 %v368
        %v449 = vunpack.c.l.b16 %v369
        %v450 = vunpack.c.l.b16 %v370
        %v451 = vunpack.c.l.b16 %v371
        %v452 = vunpack.c.l.b16 %v372
        %v453 = vunpack.c.l.b16 %v373
        %v454 = vunpack.c.l.b16 %v374
        %v455 = vunpack.c.l.b16 %v375
        %v456 = vunpack.c.l.b16 %v376
        %v457 = vunpack.c.l.b16 %v377
        %v458 = vunpack.c.l.b16 %v378
        %v459 = vunpack.c.l.b16 %v379
        %v460 = vunpack.c.l.b16 %v380
        %v461 = vunpack.c.l.b16 %v381
        %v462 = vunpack.c.l.b16 %v382
        %v463 = vpack.c.b16 %v448, %v447
        %v464 = vpack.c.b16 %v450, %v449
        %v465 = vpack.c.b16 %v452, %v451
        %v466 = vpack.c.b16 %v454, %v453
        %v467 = vpack.c.b16 %v456, %v455
        %v468 = vpack.c.b16 %v458, %v457
        %v469 = vpack.c.b16 %v460, %v459
        %v470 = vpack.c.b16 %v462, %v461
        %479 = vmatpush.bf16.msra.mxu0 %v470
        %480 = vmatpush.bf16.msra.mxu0 %v469
        %481 = vmatpush.bf16.msra.mxu0 %v468
        %482 = vmatpush.bf16.msra.mxu0 %v467
        %483 = vmatpush.bf16.msra.mxu0 %v466
        %484 = vmatpush.bf16.msra.mxu0 %v465
        %485 = vmatpush.bf16.msra.mxu0 %v464
        %486 = vmatpush.bf16.msra.mxu0 %v463
        %487 = vmatmul.bf16.gmra.mxu0 %v415
        %v488 = vpop.f32.mrf.mxu0
        %v489 = vadd.f32 0.0, %v488
        %v490 = vpop.f32.mrf.mxu0
        %v491 = vadd.f32 0.0, %v490
        %492 = vmatmul.bf16.gmra.mxu0 %v416
        %v493 = vpop.f32.mrf.mxu0
        %v494 = vadd.f32 0.0, %v493
        %v495 = vpop.f32.mrf.mxu0
        %v496 = vadd.f32 0.0, %v495
        %497 = vmatmul.bf16.gmra.mxu0 %v417
        %v498 = vpop.f32.mrf.mxu0
        %v499 = vadd.f32 0.0, %v498
        %v500 = vpop.f32.mrf.mxu0
        %v501 = vadd.f32 0.0, %v500
        %502 = vmatmul.bf16.gmra.mxu0 %v418
        %v503 = vpop.f32.mrf.mxu0
        %v504 = vadd.f32 0.0, %v503
        %v505 = vpop.f32.mrf.mxu0
        %v506 = vadd.f32 0.0, %v505
        %507 = vmatmul.bf16.gmra.mxu0 %v419
        %v508 = vpop.f32.mrf.mxu0
        %v509 = vadd.f32 0.0, %v508
        %v510 = vpop.f32.mrf.mxu0
        %v511 = vadd.f32 0.0, %v510
        %512 = vmatmul.bf16.gmra.mxu0 %v420
        %v513 = vpop.f32.mrf.mxu0
        %v514 = vadd.f32 0.0, %v513
        %v515 = vpop.f32.mrf.mxu0
        %v516 = vadd.f32 0.0, %v515
        %517 = vmatmul.bf16.gmra.mxu0 %v421
        %v518 = vpop.f32.mrf.mxu0
        %v519 = vadd.f32 0.0, %v518
        %v520 = vpop.f32.mrf.mxu0
        %v521 = vadd.f32 0.0, %v520
        %522 = vmatmul.bf16.gmra.mxu0 %v422
        %v523 = vpop.f32.mrf.mxu0
        %v524 = vadd.f32 0.0, %v523
        %v525 = vpop.f32.mrf.mxu0
        %v526 = vadd.f32 0.0, %v525
        %527 = vdwg.mxu0
        %v528 = vadd.f32 %v335, %v489
        %v529 = vadd.f32 %v336, %v491
        %v530 = vadd.f32 %v337, %v494
        %v531 = vadd.f32 %v338, %v496
        %v532 = vadd.f32 %v339, %v499
        %v533 = vadd.f32 %v340, %v501
        %v534 = vadd.f32 %v341, %v504
        %v535 = vadd.f32 %v342, %v506
        %v536 = vadd.f32 %v343, %v509
        %v537 = vadd.f32 %v344, %v511
        %v538 = vadd.f32 %v345, %v514
        %v539 = vadd.f32 %v346, %v516
        %v540 = vadd.f32 %v347, %v519
        %v541 = vadd.f32 %v348, %v521
        %v542 = vadd.f32 %v349, %v524
        %v543 = vadd.f32 %v350, %v526
        %544 = vst [vmem:[#allocation2] sm:$0xff] %v528
        %545 = vst [vmem:[#allocation2 + $0x8] sm:$0xff] %v529
        %546 = vst [vmem:[#allocation2 + $0x10] sm:$0xff] %v530
        %547 = vst [vmem:[#allocation2 + $0x18] sm:$0xff] %v531
        %548 = vst [vmem:[#allocation2 + $0x20] sm:$0xff] %v532
        %549 = vst [vmem:[#allocation2 + $0x28] sm:$0xff] %v533
        %550 = vst [vmem:[#allocation2 + $0x30] sm:$0xff] %v534
        %551 = vst [vmem:[#allocation2 + $0x38] sm:$0xff] %v535
        %552 = vst [vmem:[#allocation2 + $0x40] sm:$0xff] %v536
        %553 = vst [vmem:[#allocation2 + $0x48] sm:$0xff] %v537
        %554 = vst [vmem:[#allocation2 + $0x50] sm:$0xff] %v538
        %555 = vst [vmem:[#allocation2 + $0x58] sm:$0xff] %v539
        %556 = vst [vmem:[#allocation2 + $0x60] sm:$0xff] %v540
        %557 = vst [vmem:[#allocation2 + $0x68] sm:$0xff] %v541
        %558 = vst [vmem:[#allocation2 + $0x70] sm:$0xff] %v542
        %559 = vst [vmem:[#allocation2 + $0x78] sm:$0xff] %v543
        %p560 = scmp.eq.s32.totalorder %s19, 1
        // Predicated region
        $region78: #{cpw_forward.5} parent=68 // pred_check
          %p561 = pneg %p560
        $region79: #{cpw_forward.5} parent=68 // pred_check_branch
          %563 = sbr.rel (%p561) target = $region81
        $region80: #{cpw_forward.5} parent=68 // pred_region
          %v564 = vld [vmem:[#allocation2] sm:$0xff]
          %v565 = vld [vmem:[#allocation2 + $0x8] sm:$0xff]
          %v566 = vld [vmem:[#allocation2 + $0x10] sm:$0xff]
          %v567 = vld [vmem:[#allocation2 + $0x18] sm:$0xff]
          %v568 = vld [vmem:[#allocation2 + $0x20] sm:$0xff]
          %v569 = vld [vmem:[#allocation2 + $0x28] sm:$0xff]
          %v570 = vld [vmem:[#allocation2 + $0x30] sm:$0xff]
          %v571 = vld [vmem:[#allocation2 + $0x38] sm:$0xff]
          %v572 = vld [vmem:[#allocation2 + $0x40] sm:$0xff]
          %v573 = vld [vmem:[#allocation2 + $0x48] sm:$0xff]
          %v574 = vld [vmem:[#allocation2 + $0x50] sm:$0xff]
          %v575 = vld [vmem:[#allocation2 + $0x58] sm:$0xff]
          %v576 = vld [vmem:[#allocation2 + $0x60] sm:$0xff]
          %v577 = vld [vmem:[#allocation2 + $0x68] sm:$0xff]
          %v578 = vld [vmem:[#allocation2 + $0x70] sm:$0xff]
          %v579 = vld [vmem:[#allocation2 + $0x78] sm:$0xff]
          %v580 = vld [vmem:[%s2] sm:$0x1]
          %v582 = vperm.slane %v580, 0
          %v584 = vadd.f32 %v564, %v582
          %v585 = vadd.f32 %v565, %v582
          %v586 = vadd.f32 %v566, %v582
          %v587 = vadd.f32 %v567, %v582
          %v588 = vadd.f32 %v568, %v582
          %v589 = vadd.f32 %v569, %v582
          %v590 = vadd.f32 %v570, %v582
          %v591 = vadd.f32 %v571, %v582
          %v592 = vadd.f32 %v572, %v582
          %v593 = vadd.f32 %v573, %v582
          %v594 = vadd.f32 %v574, %v582
          %v595 = vadd.f32 %v575, %v582
          %v596 = vadd.f32 %v576, %v582
          %v597 = vadd.f32 %v577, %v582
          %v598 = vadd.f32 %v578, %v582
          %v599 = vadd.f32 %v579, %v582
          %600 = vst [vmem:[%s313] sm:$0xff] %v584
          %601 = vst [vmem:[%s313 + $0x8] sm:$0xff] %v585
          %602 = vst [vmem:[%s313 + $0x10] sm:$0xff] %v586
          %603 = vst [vmem:[%s313 + $0x18] sm:$0xff] %v587
          %604 = vst [vmem:[%s313 + $0x20] sm:$0xff] %v588
          %605 = vst [vmem:[%s313 + $0x28] sm:$0xff] %v589
          %606 = vst [vmem:[%s313 + $0x30] sm:$0xff] %v590
          %607 = vst [vmem:[%s313 + $0x38] sm:$0xff] %v591
          %608 = vst [vmem:[%s313 + $0x40] sm:$0xff] %v592
          %609 = vst [vmem:[%s313 + $0x48] sm:$0xff] %v593
          %610 = vst [vmem:[%s313 + $0x50] sm:$0xff] %v594
          %611 = vst [vmem:[%s313 + $0x58] sm:$0xff] %v595
          %612 = vst [vmem:[%s313 + $0x60] sm:$0xff] %v596
          %613 = vst [vmem:[%s313 + $0x68] sm:$0xff] %v597
          %614 = vst [vmem:[%s313 + $0x70] sm:$0xff] %v598
          %615 = vst [vmem:[%s313 + $0x78] sm:$0xff] %v599
        $region81: #{cpw_forward.5} parent=68 // pred_fallthru
          _
        %s616 = smul.u32 16, %s18
        %p617 = scmp.lt.s32.totalorder %s616, 31
        %s618 = scalar_select %p617, %s616, 31
        %s619 = smul.addr %s618, 8
        %s620 = scalar_lea.vmem %s3, %s619
        // Predicated region
        $region82: #{cpw_forward.5} parent=68 // pred_check
          %p621 = pneg %p119
        $region83: #{cpw_forward.5} parent=68 // pred_check_branch
          %623 = sbr.rel (%p621) target = $region85
        $region84: #{cpw_forward.5} parent=68 // pred_region
          %s624 = smul.u32 16, %s18
        $region85: #{cpw_forward.5} parent=68 // pred_fallthru
          _
      $region69: #{cpw_forward.5} parent=5 // pred_fallthru
        _
      %p625 = scmp.le.s32.totalorder 2, %s9
      // Predicated region
      $region86: #{cpw_forward.5} parent=5 // pred_check
        %p626 = pneg %p625
      $region87: #{cpw_forward.5} parent=5 // pred_check_branch
        %628 = sbr.rel (%p626) target = $region89
      $region88: #{cpw_forward.5} parent=5 // pred_region
        %s629 = ssub.s32 %s9, 2
        // Predicated region
        $region90: #{cpw_forward.5} parent=88 // pred_check
          %p630 = pneg %p125
        $region91: #{cpw_forward.5} parent=88 // pred_check_branch
          %632 = sbr.rel (%p630) target = $region93
        $region92: #{cpw_forward.5} parent=88 // pred_region
          %s633 = smul.u32 16, %s20
          %p634 = scmp.lt.s32.totalorder %s633, 31
          %s635 = scalar_select %p634, %s633, 31
          %s636 = smul.addr %s635, 8
          %s637 = scalar_lea.vmem %s3, %s636
        $region93: #{cpw_forward.5} parent=88 // pred_fallthru
          _
      $region89: #{cpw_forward.5} parent=5 // pred_fallthru
        _
    $region6: #{cpw_forward.5} parent=1 // loop_footer
      %s13 = sadd.s32 1, %s9
    $region7: #{cpw_forward.5} parent=1 // loop_footer_branch
      %8 = sbr.rel target = $region3
    $region8: #{cpw_forward.5} parent=1 // loop_exit
      _

// kernel: cpw_forward.3
$region0: #{cpw_forward.3}
  #allocation0 [shape = 'u32[]', space=smem, size = 0x4, offset = 0x4, fixed_abs, tag = 'smem constant byte address 0x4 - core index']
  #allocation1 [shape = 'u32[72,128]{1,0:T(1,128)}', space=vmem, size = 0x9000, scoped, tag = 'internal scratch']
  %s0 = inlined_call_operand.vmem [shape: bf16[40000,8], index: 0, kind: input, shape index: {}]
  %s1 = inlined_call_operand.vmem [shape: bf16[8,1], index: 1, kind: input, shape index: {}]
  %s2 = inlined_call_operand.vmem [shape: bf16[8,12], index: 2, kind: input, shape index: {}]
  %s3 = inlined_call_operand.vmem [shape: f32[40000,1], index: 3, kind: output, shape index: {0}]
  %s4 = inlined_call_operand.vmem [shape: f32[40000,12], index: 4, kind: output, shape index: {1}]
  %5 = xla_tuple %s3, %s4
  %s6 = sld [smem:[#allocation0]]
  $region149: #{cpw_forward.3} parent=0
    _
  %s8 = ssub.s32 1, %s6
  %s9 = scalar_select 0, %s8, %s6
  $region1: #{cpw_forward.3} parent=0
    #allocation2 [shape = 'u8[4194304]{0}', space=vmem, size = 0x400000, scoped, tag = 'output window, operand 0']
    #allocation3 [shape = 'u8[4194304]{0}', space=vmem, size = 0x400000, scoped, tag = 'output window, operand 1']
    loop: start=0, step=1, limit=12
    $region2: #{cpw_forward.3} parent=1 // loop_pre_header
      _
    $region3: #{cpw_forward.3} parent=1 // loop_header
      %s11 = sphi 0, %s15
      %p12 = scmp.ge.s32.totalorder %s11, 12
      %s21 = sphi 0, %s23
      %s24 = sphi 0, %s21
      %s25 = sphi 0, %s24
      %s41 = sphi 0, %s25
      %s45 = sphi 0, %s45
      %s47 = sphi 0, %s45
      %s48 = sphi 0, %s47
      %s62 = sphi 0, %s48
      %s66 = sphi 0, %s66
      %s68 = sphi 0, %s66
      %s69 = sphi 0, %s68
      %s83 = sphi 0, %s69
      %s89 = sphi 0, %s91
      %s92 = sphi 0, %s89
      %s93 = sphi 0, %s92
      %s109 = sphi 0, %s93
      %s115 = sphi 0, %s117
      %s118 = sphi 0, %s115
      %s119 = sphi 0, %s118
      %s135 = sphi 0, %s119
    $region4: #{cpw_forward.3} parent=1 // loop_header_branch
      %14 = sbr.rel (%p12) target = $region8
    $region5: #{cpw_forward.3} parent=1 // loop_body
      %s16 = ssub.s32 %s11, 1
      %s17 = ssub.s32 %s11, 2
      %s18 = sadd.s32 %s11, 1
      %s19 = ssub.s32 %s11, %s18
      %p20 = scmp.eq.s32.totalorder %s19, 0
      %s22 = sadd.s32 %s21, 1
      %s23 = scalar_select %p20, %s21, %s22
      %p26 = pneg %p20
      %p27 = scmp.eq.s32.totalorder %s11, 9
      %p28 = por %p26, %p27
      %p29 = scmp.ne.s32.totalorder %s21, %s24
      %p30 = scmp.eq.s32.totalorder %s11, 0
      %p31 = por %p29, %p30
      %p32 = scmp.ne.s32.totalorder %s21, %s24
      %p33 = scmp.eq.s32.totalorder %s16, 9
      %p34 = por %p32, %p33
      %p35 = scmp.ne.s32.totalorder %s24, %s25
      %p36 = scmp.eq.s32.totalorder %s16, 0
      %p37 = por %p35, %p36
      %p38 = scmp.ne.s32.totalorder %s24, %s25
      %p39 = scmp.eq.s32.totalorder %s17, 9
      %p40 = por %p38, %p39
      %p42 = scmp.ne.s32.totalorder %s25, %s41
      %p43 = scmp.eq.s32.totalorder %s17, 0
      %p44 = por %p42, %p43
      %s46 = sadd.s32 %s45, 1
      %p49 = scmp.eq.s32.totalorder %s11, 9
      %p50 = scmp.ne.s32.totalorder %s45, %s47
      %p51 = scmp.eq.s32.totalorder %s11, 0
      %p52 = por %p50, %p51
      %p53 = scmp.ne.s32.totalorder %s45, %s47
      %p54 = scmp.eq.s32.totalorder %s16, 9
      %p55 = por %p53, %p54
      %p56 = scmp.ne.s32.totalorder %s47, %s48
      %p57 = scmp.eq.s32.totalorder %s16, 0
      %p58 = por %p56, %p57
      %p59 = scmp.ne.s32.totalorder %s47, %s48
      %p60 = scmp.eq.s32.totalorder %s17, 9
      %p61 = por %p59, %p60
      %p63 = scmp.ne.s32.totalorder %s48, %s62
      %p64 = scmp.eq.s32.totalorder %s17, 0
      %p65 = por %p63, %p64
      %s67 = sadd.s32 %s66, 1
      %p70 = scmp.eq.s32.totalorder %s11, 9
      %p71 = scmp.ne.s32.totalorder %s66, %s68
      %p72 = scmp.eq.s32.totalorder %s11, 0
      %p73 = por %p71, %p72
      %p74 = scmp.ne.s32.totalorder %s66, %s68
      %p75 = scmp.eq.s32.totalorder %s16, 9
      %p76 = por %p74, %p75
      %p77 = scmp.ne.s32.totalorder %s68, %s69
      %p78 = scmp.eq.s32.totalorder %s16, 0
      %p79 = por %p77, %p78
      %p80 = scmp.ne.s32.totalorder %s68, %s69
      %p81 = scmp.eq.s32.totalorder %s17, 9
      %p82 = por %p80, %p81
      %p84 = scmp.ne.s32.totalorder %s69, %s83
      %p85 = scmp.eq.s32.totalorder %s17, 0
      %p86 = por %p84, %p85
      %s87 = ssub.s32 %s11, %s18
      %p88 = scmp.eq.s32.totalorder %s87, 0
      %s90 = sadd.s32 %s89, 1
      %s91 = scalar_select %p88, %s89, %s90
      %p94 = pneg %p88
      %p95 = scmp.eq.s32.totalorder %s11, 9
      %p96 = por %p94, %p95
      %p97 = scmp.ne.s32.totalorder %s89, %s92
      %p98 = scmp.eq.s32.totalorder %s11, 0
      %p99 = por %p97, %p98
      %p100 = scmp.ne.s32.totalorder %s89, %s92
      %p101 = scmp.eq.s32.totalorder %s16, 9
      %p102 = por %p100, %p101
      %p103 = scmp.ne.s32.totalorder %s92, %s93
      %p104 = scmp.eq.s32.totalorder %s16, 0
      %p105 = por %p103, %p104
      %p106 = scmp.ne.s32.totalorder %s92, %s93
      %p107 = scmp.eq.s32.totalorder %s17, 9
      %p108 = por %p106, %p107
      %p110 = scmp.ne.s32.totalorder %s93, %s109
      %p111 = scmp.eq.s32.totalorder %s17, 0
      %p112 = por %p110, %p111
      %s113 = ssub.s32 %s11, %s18
      %p114 = scmp.eq.s32.totalorder %s113, 0
      %s116 = sadd.s32 %s115, 1
      %s117 = scalar_select %p114, %s115, %s116
      %p120 = pneg %p114
      %p121 = scmp.eq.s32.totalorder %s11, 9
      %p122 = por %p120, %p121
      %p123 = scmp.ne.s32.totalorder %s115, %s118
      %p124 = scmp.eq.s32.totalorder %s11, 0
      %p125 = por %p123, %p124
      %p126 = scmp.ne.s32.totalorder %s115, %s118
      %p127 = scmp.eq.s32.totalorder %s16, 9
      %p128 = por %p126, %p127
      %p129 = scmp.ne.s32.totalorder %s118, %s119
      %p130 = scmp.eq.s32.totalorder %s16, 0
      %p131 = por %p129, %p130
      %p132 = scmp.ne.s32.totalorder %s118, %s119
      %p133 = scmp.eq.s32.totalorder %s17, 9
      %p134 = por %p132, %p133
      %p136 = scmp.ne.s32.totalorder %s119, %s135
      %p137 = scmp.eq.s32.totalorder %s17, 0
      %p138 = por %p136, %p137
      %p139 = scmp.le.s32.totalorder 1, %s11
      %p140 = scmp.lt.s32.totalorder %s11, 11
      %p141 = pnand %p139, %p140
      %p142 = pneg %p141
      // Predicated region
      $region9: #{cpw_forward.3} parent=5 // pred_check
        _
      $region10: #{cpw_forward.3} parent=5 // pred_check_branch
        %144 = sbr.rel (%p141) target = $region12
      $region11: #{cpw_forward.3} parent=5 // pred_region
        %s145 = ssub.s32 %s11, 1
        // Predicated region
        $region13: #{cpw_forward.3} parent=11 // pred_check
          %p146 = pneg %p58
        $region14: #{cpw_forward.3} parent=11 // pred_check_branch
          %148 = sbr.rel (%p146) target = $region16
        $region15: #{cpw_forward.3} parent=11 // pred_region
          _
        $region16: #{cpw_forward.3} parent=11 // pred_fallthru
          _
        // Predicated region
        $region17: #{cpw_forward.3} parent=11 // pred_check
          %p149 = pneg %p79
        $region18: #{cpw_forward.3} parent=11 // pred_check_branch
          %151 = sbr.rel (%p149) target = $region20
        $region19: #{cpw_forward.3} parent=11 // pred_region
          _
        $region20: #{cpw_forward.3} parent=11 // pred_fallthru
          _
      $region12: #{cpw_forward.3} parent=5 // pred_fallthru
        _
      %p152 = scmp.lt.s32.totalorder %s11, 10
      // Predicated region
      $region21: #{cpw_forward.3} parent=5 // pred_check
        %p153 = pneg %p152
      $region22: #{cpw_forward.3} parent=5 // pred_check_branch
        %155 = sbr.rel (%p153) target = $region24
      $region23: #{cpw_forward.3} parent=5 // pred_region
        // Predicated region
        $region25: #{cpw_forward.3} parent=23 // pred_check
          %p156 = pneg %p31
        $region26: #{cpw_forward.3} parent=23 // pred_check_branch
          %158 = sbr.rel (%p156) target = $region28
        $region27: #{cpw_forward.3} parent=23 // pred_region
          %s159 = smul.u32 512, %s11
          %s160 = ssub.s32 5000, %s159
          %p161 = scmp.lt.s32.totalorder %s160, 512
          %s162 = scalar_select %p161, %s160, 512
          %s163 = smul.u32 4, %s162
          %p164 = scmp.lt.s32.totalorder %s159, 4999
          %s165 = scalar_select %p164, %s159, 4999
          %s166 = smul.addr %s165, 4
          %s167 = scalar_lea.vmem %s0, %s166
          %s168 = smul.u32 512, %s11
          %s169 = ssub.s32 5000, %s168
          %p170 = scmp.lt.s32.totalorder %s169, 512
          %s171 = scalar_select %p170, %s169, 512
          %s172 = smul.u32 4, %s171
        $region28: #{cpw_forward.3} parent=23 // pred_fallthru
          _
      $region24: #{cpw_forward.3} parent=5 // pred_fallthru
        _
      %p173 = scmp.le.s32.totalorder 1, %s11
      %p174 = scmp.lt.s32.totalorder %s11, 11
      %p175 = pnand %p173, %p174
      %p176 = pneg %p175
      // Predicated region
      $region29: #{cpw_forward.3} parent=5 // pred_check
        _
      $region30: #{cpw_forward.3} parent=5 // pred_check_branch
        %178 = sbr.rel (%p175) target = $region32
      $region31: #{cpw_forward.3} parent=5 // pred_region
        %s179 = ssub.s32 %s11, 1
        %s180 = smul.u32 512, %s16
        %s181 = ssub.s32 5000, %s180
        %p182 = scmp.lt.s32.totalorder %s181, 512
        %s183 = scalar_select %p182, %s181, 512
        %s184 = smul.u32 4, %s183
        %p185 = scmp.lt.s32.totalorder %s180, 4999
        %s186 = scalar_select %p185, %s180, 4999
        %s187 = smul.addr %s186, 4
        %s188 = scalar_lea.vmem %s0, %s187
        %p189 = pneg %p37
        %p190 = pneg %p34
        %p191 = pneg %p58
        %p192 = pneg %p55
        %p193 = pneg %p79
        %p194 = pneg %p76
        %p195 = pneg %p105
        %p196 = pneg %p102
        %s197 = sand.u32 %s92, 1
        %s198 = sand.u32 %s92, 1
        %s199 = smul.addr %s198, 4096
        %s200 = scalar_lea.vmem [#allocation2], %s199
        %p201 = pneg %p131
        %p202 = pneg %p128
        %s203 = sand.u32 %s118, 1
        %s204 = sand.u32 %s118, 1
        %s205 = smul.addr %s204, 4096
        %s206 = scalar_lea.vmem [#allocation3], %s205
        %s207 = smul.u32 512, %s16
        %s208 = ssub.s32 5000, %s207
        %p209 = scmp.lt.s32.totalorder %s208, 512
        %s210 = scalar_select %p209, %s208, 512
        %s211 = smul.u32 4, %s210
        %p212 = scmp.lt.s32.totalorder %s207, 4999
        %s213 = scalar_select %p212, %s207, 4999
        %s214 = smul.addr %s213, 4
        %s215 = scalar_lea.vmem %s0, %s214
        %s216 = smul.u32 512, %s16
        %s217 = ssub.s32 5000, %s216
        %p218 = scmp.lt.s32.totalorder %s217, 512
        %s219 = scalar_select %p218, %s217, 512
        %s220 = smul.u32 4, %s219
        %s221 = smul.u32 512, %s16
        %s222 = ssub.s32 5000, %s221
        %p223 = scmp.lt.s32.totalorder %s222, 512
        %s224 = scalar_select %p223, %s222, 512
        %s225 = smul.u32 8, %s224
        %s226 = smul.u32 512, %s16
        %s227 = ssub.s32 5000, %s226
        %p228 = scmp.lt.s32.totalorder %s227, 512
        %s229 = scalar_select %p228, %s227, 512
        %s230 = smul.u32 8, %s229
        %v232 = vld [vmem:[%s215] sm:$0xf]
        %v233 = vld [vmem:[%s215 + $0x4] sm:$0xf]
        %v234 = vld [vmem:[%s215 + $0x8] sm:$0xf]
        %v235 = vld [vmem:[%s215 + $0xc] sm:$0xf]
        %v236 = vld [vmem:[%s215 + $0x10] sm:$0xf]
        %v237 = vld [vmem:[%s215 + $0x14] sm:$0xf]
        %v238 = vld [vmem:[%s215 + $0x18] sm:$0xf]
        %v239 = vld [vmem:[%s215 + $0x1c] sm:$0xf]
        %v240 = vld [vmem:[%s215 + $0x20] sm:$0xf]
        %v241 = vld [vmem:[%s215 + $0x24] sm:$0xf]
        %v242 = vld [vmem:[%s215 + $0x28] sm:$0xf]
        %v243 = vld [vmem:[%s215 + $0x2c] sm:$0xf]
        %v244 = vld [vmem:[%s215 + $0x30] sm:$0xf]
        %v245 = vld [vmem:[%s215 + $0x34] sm:$0xf]
        %v246 = vld [vmem:[%s215 + $0x38] sm:$0xf]
        %v247 = vld [vmem:[%s215 + $0x3c] sm:$0xf]
        %v248 = vld [vmem:[%s215 + $0x40] sm:$0xf]
        %v249 = vld [vmem:[%s215 + $0x44] sm:$0xf]
        %v250 = vld [vmem:[%s215 + $0x48] sm:$0xf]
        %v251 = vld [vmem:[%s215 + $0x4c] sm:$0xf]
        %v252 = vld [vmem:[%s215 + $0x50] sm:$0xf]
        %v253 = vld [vmem:[%s215 + $0x54] sm:$0xf]
        %v254 = vld [vmem:[%s215 + $0x58] sm:$0xf]
        %v255 = vld [vmem:[%s215 + $0x5c] sm:$0xf]
        %v256 = vld [vmem:[%s215 + $0x60] sm:$0xf]
        %v257 = vld [vmem:[%s215 + $0x64] sm:$0xf]
        %v258 = vld [vmem:[%s215 + $0x68] sm:$0xf]
        %v259 = vld [vmem:[%s215 + $0x6c] sm:$0xf]
        %v260 = vld [vmem:[%s215 + $0x70] sm:$0xf]
        %v261 = vld [vmem:[%s215 + $0x74] sm:$0xf]
        %v262 = vld [vmem:[%s215 + $0x78] sm:$0xf]
        %v263 = vld [vmem:[%s215 + $0x7c] sm:$0xf]
        %v264 = vld [vmem:[%s215 + $0x80] sm:$0xf]
        %v265 = vld [vmem:[%s215 + $0x84] sm:$0xf]
        %v266 = vld [vmem:[%s215 + $0x88] sm:$0xf]
        %v267 = vld [vmem:[%s215 + $0x8c] sm:$0xf]
        %v268 = vld [vmem:[%s215 + $0x90] sm:$0xf]
        %v269 = vld [vmem:[%s215 + $0x94] sm:$0xf]
        %v270 = vld [vmem:[%s215 + $0x98] sm:$0xf]
        %v271 = vld [vmem:[%s215 + $0x9c] sm:$0xf]
        %v272 = vld [vmem:[%s215 + $0xa0] sm:$0xf]
        %v273 = vld [vmem:[%s215 + $0xa4] sm:$0xf]
        %v274 = vld [vmem:[%s215 + $0xa8] sm:$0xf]
        %v275 = vld [vmem:[%s215 + $0xac] sm:$0xf]
        %v276 = vld [vmem:[%s215 + $0xb0] sm:$0xf]
        %v277 = vld [vmem:[%s215 + $0xb4] sm:$0xf]
        %v278 = vld [vmem:[%s215 + $0xb8] sm:$0xf]
        %v279 = vld [vmem:[%s215 + $0xbc] sm:$0xf]
        %v280 = vld [vmem:[%s215 + $0xc0] sm:$0xf]
        %v281 = vld [vmem:[%s215 + $0xc4] sm:$0xf]
        %v282 = vld [vmem:[%s215 + $0xc8] sm:$0xf]
        %v283 = vld [vmem:[%s215 + $0xcc] sm:$0xf]
        %v284 = vld [vmem:[%s215 + $0xd0] sm:$0xf]
        %v285 = vld [vmem:[%s215 + $0xd4] sm:$0xf]
        %v286 = vld [vmem:[%s215 + $0xd8] sm:$0xf]
        %v287 = vld [vmem:[%s215 + $0xdc] sm:$0xf]
        %v288 = vld [vmem:[%s215 + $0xe0] sm:$0xf]
        %v289 = vld [vmem:[%s215 + $0xe4] sm:$0xf]
        %v290 = vld [vmem:[%s215 + $0xe8] sm:$0xf]
        %v291 = vld [vmem:[%s215 + $0xec] sm:$0xf]
        %v292 = vld [vmem:[%s215 + $0xf0] sm:$0xf]
        %v293 = vld [vmem:[%s215 + $0xf4] sm:$0xf]
        %v294 = vld [vmem:[%s215 + $0xf8] sm:$0xf]
        %v295 = vld [vmem:[%s215 + $0xfc] sm:$0xf]
        %v296 = vld [vmem:[%s215 + $0x100] sm:$0xf]
        %v297 = vld [vmem:[%s215 + $0x104] sm:$0xf]
        %v298 = vld [vmem:[%s215 + $0x108] sm:$0xf]
        %v299 = vld [vmem:[%s215 + $0x10c] sm:$0xf]
        %v300 = vld [vmem:[%s215 + $0x110] sm:$0xf]
        %v301 = vld [vmem:[%s215 + $0x114] sm:$0xf]
        %v302 = vld [vmem:[%s215 + $0x118] sm:$0xf]
        %v303 = vld [vmem:[%s215 + $0x11c] sm:$0xf]
        %v304 = vld [vmem:[%s215 + $0x120] sm:$0xf]
        %v305 = vld [vmem:[%s215 + $0x124] sm:$0xf]
        %v306 = vld [vmem:[%s215 + $0x128] sm:$0xf]
        %v307 = vld [vmem:[%s215 + $0x12c] sm:$0xf]
        %v308 = vld [vmem:[%s215 + $0x130] sm:$0xf]
        %v309 = vld [vmem:[%s215 + $0x134] sm:$0xf]
        %v310 = vld [vmem:[%s215 + $0x138] sm:$0xf]
        %v311 = vld [vmem:[%s215 + $0x13c] sm:$0xf]
        %v312 = vld [vmem:[%s215 + $0x140] sm:$0xf]
        %v313 = vld [vmem:[%s215 + $0x144] sm:$0xf]
        %v314 = vld [vmem:[%s215 + $0x148] sm:$0xf]
        %v315 = vld [vmem:[%s215 + $0x14c] sm:$0xf]
        %v316 = vld [vmem:[%s215 + $0x150] sm:$0xf]
        %v317 = vld [vmem:[%s215 + $0x154] sm:$0xf]
        %v318 = vld [vmem:[%s215 + $0x158] sm:$0xf]
        %v319 = vld [vmem:[%s215 + $0x15c] sm:$0xf]
        %v320 = vld [vmem:[%s215 + $0x160] sm:$0xf]
        %v321 = vld [vmem:[%s215 + $0x164] sm:$0xf]
        %v322 = vld [vmem:[%s215 + $0x168] sm:$0xf]
        %v323 = vld [vmem:[%s215 + $0x16c] sm:$0xf]
        %v324 = vld [vmem:[%s215 + $0x170] sm:$0xf]
        %v325 = vld [vmem:[%s215 + $0x174] sm:$0xf]
        %v326 = vld [vmem:[%s215 + $0x178] sm:$0xf]
        %v327 = vld [vmem:[%s215 + $0x17c] sm:$0xf]
        %v328 = vld [vmem:[%s215 + $0x180] sm:$0xf]
        %v329 = vld [vmem:[%s215 + $0x184] sm:$0xf]
        %v330 = vld [vmem:[%s215 + $0x188] sm:$0xf]
        %v331 = vld [vmem:[%s215 + $0x18c] sm:$0xf]
        %v332 = vld [vmem:[%s215 + $0x190] sm:$0xf]
        %v333 = vld [vmem:[%s215 + $0x194] sm:$0xf]
        %v334 = vld [vmem:[%s215 + $0x198] sm:$0xf]
        %v335 = vld [vmem:[%s215 + $0x19c] sm:$0xf]
        %v336 = vld [vmem:[%s215 + $0x1a0] sm:$0xf]
        %v337 = vld [vmem:[%s215 + $0x1a4] sm:$0xf]
        %v338 = vld [vmem:[%s215 + $0x1a8] sm:$0xf]
        %v339 = vld [vmem:[%s215 + $0x1ac] sm:$0xf]
        %v340 = vld [vmem:[%s215 + $0x1b0] sm:$0xf]
        %v341 = vld [vmem:[%s215 + $0x1b4] sm:$0xf]
        %v342 = vld [vmem:[%s215 + $0x1b8] sm:$0xf]
        %v343 = vld [vmem:[%s215 + $0x1bc] sm:$0xf]
        %v344 = vld [vmem:[%s215 + $0x1c0] sm:$0xf]
        %v345 = vld [vmem:[%s215 + $0x1c4] sm:$0xf]
        %v346 = vld [vmem:[%s215 + $0x1c8] sm:$0xf]
        %v347 = vld [vmem:[%s215 + $0x1cc] sm:$0xf]
        %v348 = vld [vmem:[%s215 + $0x1d0] sm:$0xf]
        %v349 = vld [vmem:[%s215 + $0x1d4] sm:$0xf]
        %v350 = vld [vmem:[%s215 + $0x1d8] sm:$0xf]
        %v351 = vld [vmem:[%s215 + $0x1dc] sm:$0xf]
        %v352 = vld [vmem:[%s215 + $0x1e0] sm:$0xf]
        %v353 = vld [vmem:[%s215 + $0x1e4] sm:$0xf]
        %v354 = vld [vmem:[%s215 + $0x1e8] sm:$0xf]
        %v355 = vld [vmem:[%s215 + $0x1ec] sm:$0xf]
        %v356 = vld [vmem:[%s215 + $0x1f0] sm:$0xf]
        %v357 = vld [vmem:[%s215 + $0x1f4] sm:$0xf]
        %v358 = vld [vmem:[%s215 + $0x1f8] sm:$0xf]
        %v359 = vld [vmem:[%s215 + $0x1fc] sm:$0xf]
        %v360 = vld [vmem:[%s215 + $0x200] sm:$0xf]
        %v361 = vld [vmem:[%s215 + $0x204] sm:$0xf]
        %v362 = vld [vmem:[%s215 + $0x208] sm:$0xf]
        %v363 = vld [vmem:[%s215 + $0x20c] sm:$0xf]
        %v364 = vld [vmem:[%s215 + $0x210] sm:$0xf]
        %v365 = vld [vmem:[%s215 + $0x214] sm:$0xf]
        %v366 = vld [vmem:[%s215 + $0x218] sm:$0xf]
        %v367 = vld [vmem:[%s215 + $0x21c] sm:$0xf]
        %v368 = vld [vmem:[%s215 + $0x220] sm:$0xf]
        %v369 = vld [vmem:[%s215 + $0x224] sm:$0xf]
        %v370 = vld [vmem:[%s215 + $0x228] sm:$0xf]
        %v371 = vld [vmem:[%s215 + $0x22c] sm:$0xf]
        %v372 = vld [vmem:[%s215 + $0x230] sm:$0xf]
        %v373 = vld [vmem:[%s215 + $0x234] sm:$0xf]
        %v374 = vld [vmem:[%s215 + $0x238] sm:$0xf]
        %v375 = vld [vmem:[%s215 + $0x23c] sm:$0xf]
        %v376 = vld [vmem:[%s215 + $0x240] sm:$0xf]
        %v377 = vld [vmem:[%s215 + $0x244] sm:$0xf]
        %v378 = vld [vmem:[%s215 + $0x248] sm:$0xf]
        %v379 = vld [vmem:[%s215 + $0x24c] sm:$0xf]
        %v380 = vld [vmem:[%s215 + $0x250] sm:$0xf]
        %v381 = vld [vmem:[%s215 + $0x254] sm:$0xf]
        %v382 = vld [vmem:[%s215 + $0x258] sm:$0xf]
        %v383 = vld [vmem:[%s215 + $0x25c] sm:$0xf]
        %v384 = vld [vmem:[%s215 + $0x260] sm:$0xf]
        %v385 = vld [vmem:[%s215 + $0x264] sm:$0xf]
        %v386 = vld [vmem:[%s215 + $0x268] sm:$0xf]
        %v387 = vld [vmem:[%s215 + $0x26c] sm:$0xf]
        %v388 = vld [vmem:[%s215 + $0x270] sm:$0xf]
        %v389 = vld [vmem:[%s215 + $0x274] sm:$0xf]
        %v390 = vld [vmem:[%s215 + $0x278] sm:$0xf]
        %v391 = vld [vmem:[%s215 + $0x27c] sm:$0xf]
        %v392 = vld [vmem:[%s215 + $0x280] sm:$0xf]
        %v393 = vld [vmem:[%s215 + $0x284] sm:$0xf]
        %v394 = vld [vmem:[%s215 + $0x288] sm:$0xf]
        %v395 = vld [vmem:[%s215 + $0x28c] sm:$0xf]
        %v396 = vld [vmem:[%s215 + $0x290] sm:$0xf]
        %v397 = vld [vmem:[%s215 + $0x294] sm:$0xf]
        %v398 = vld [vmem:[%s215 + $0x298] sm:$0xf]
        %v399 = vld [vmem:[%s215 + $0x29c] sm:$0xf]
        %v400 = vld [vmem:[%s215 + $0x2a0] sm:$0xf]
        %v401 = vld [vmem:[%s215 + $0x2a4] sm:$0xf]
        %v402 = vld [vmem:[%s215 + $0x2a8] sm:$0xf]
        %v403 = vld [vmem:[%s215 + $0x2ac] sm:$0xf]
        %v404 = vld [vmem:[%s215 + $0x2b0] sm:$0xf]
        %v405 = vld [vmem:[%s215 + $0x2b4] sm:$0xf]
        %v406 = vld [vmem:[%s215 + $0x2b8] sm:$0xf]
        %v407 = vld [vmem:[%s215 + $0x2bc] sm:$0xf]
        %v408 = vld [vmem:[%s215 + $0x2c0] sm:$0xf]
        %v409 = vld [vmem:[%s215 + $0x2c4] sm:$0xf]
        %v410 = vld [vmem:[%s215 + $0x2c8] sm:$0xf]
        %v411 = vld [vmem:[%s215 + $0x2cc] sm:$0xf]
        %v412 = vld [vmem:[%s215 + $0x2d0] sm:$0xf]
        %v413 = vld [vmem:[%s215 + $0x2d4] sm:$0xf]
        %v414 = vld [vmem:[%s215 + $0x2d8] sm:$0xf]
        %v415 = vld [vmem:[%s215 + $0x2dc] sm:$0xf]
        %v416 = vld [vmem:[%s215 + $0x2e0] sm:$0xf]
        %v417 = vld [vmem:[%s215 + $0x2e4] sm:$0xf]
        %v418 = vld [vmem:[%s215 + $0x2e8] sm:$0xf]
        %v419 = vld [vmem:[%s215 + $0x2ec] sm:$0xf]
        %v420 = vld [vmem:[%s215 + $0x2f0] sm:$0xf]
        %v421 = vld [vmem:[%s215 + $0x2f4] sm:$0xf]
        %v422 = vld [vmem:[%s215 + $0x2f8] sm:$0xf]
        %v423 = vld [vmem:[%s215 + $0x2fc] sm:$0xf]
        %v424 = vld [vmem:[%s215 + $0x300] sm:$0xf]
        %v425 = vld [vmem:[%s215 + $0x304] sm:$0xf]
        %v426 = vld [vmem:[%s215 + $0x308] sm:$0xf]
        %v427 = vld [vmem:[%s215 + $0x30c] sm:$0xf]
        %v428 = vld [vmem:[%s215 + $0x310] sm:$0xf]
        %v429 = vld [vmem:[%s215 + $0x314] sm:$0xf]
        %v430 = vld [vmem:[%s215 + $0x318] sm:$0xf]
        %v431 = vld [vmem:[%s215 + $0x31c] sm:$0xf]
        %v432 = vld [vmem:[%s215 + $0x320] sm:$0xf]
        %v433 = vld [vmem:[%s215 + $0x324] sm:$0xf]
        %v434 = vld [vmem:[%s215 + $0x328] sm:$0xf]
        %v435 = vld [vmem:[%s215 + $0x32c] sm:$0xf]
        %v436 = vld [vmem:[%s215 + $0x330] sm:$0xf]
        %v437 = vld [vmem:[%s215 + $0x334] sm:$0xf]
        %v438 = vld [vmem:[%s215 + $0x338] sm:$0xf]
        %v439 = vld [vmem:[%s215 + $0x33c] sm:$0xf]
        %v440 = vld [vmem:[%s215 + $0x340] sm:$0xf]
        %v441 = vld [vmem:[%s215 + $0x344] sm:$0xf]
        %v442 = vld [vmem:[%s215 + $0x348] sm:$0xf]
        %v443 = vld [vmem:[%s215 + $0x34c] sm:$0xf]
        %v444 = vld [vmem:[%s215 + $0x350] sm:$0xf]
        %v445 = vld [vmem:[%s215 + $0x354] sm:$0xf]
        %v446 = vld [vmem:[%s215 + $0x358] sm:$0xf]
        %v447 = vld [vmem:[%s215 + $0x35c] sm:$0xf]
        %v448 = vld [vmem:[%s215 + $0x360] sm:$0xf]
        %v449 = vld [vmem:[%s215 + $0x364] sm:$0xf]
        %v450 = vld [vmem:[%s215 + $0x368] sm:$0xf]
        %v451 = vld [vmem:[%s215 + $0x36c] sm:$0xf]
        %v452 = vld [vmem:[%s215 + $0x370] sm:$0xf]
        %v453 = vld [vmem:[%s215 + $0x374] sm:$0xf]
        %v454 = vld [vmem:[%s215 + $0x378] sm:$0xf]
        %v455 = vld [vmem:[%s215 + $0x37c] sm:$0xf]
        %v456 = vld [vmem:[%s215 + $0x380] sm:$0xf]
        %v457 = vld [vmem:[%s215 + $0x384] sm:$0xf]
        %v458 = vld [vmem:[%s215 + $0x388] sm:$0xf]
        %v459 = vld [vmem:[%s215 + $0x38c] sm:$0xf]
        %v460 = vld [vmem:[%s215 + $0x390] sm:$0xf]
        %v461 = vld [vmem:[%s215 + $0x394] sm:$0xf]
        %v462 = vld [vmem:[%s215 + $0x398] sm:$0xf]
        %v463 = vld [vmem:[%s215 + $0x39c] sm:$0xf]
        %v464 = vld [vmem:[%s215 + $0x3a0] sm:$0xf]
        %v465 = vld [vmem:[%s215 + $0x3a4] sm:$0xf]
        %v466 = vld [vmem:[%s215 + $0x3a8] sm:$0xf]
        %v467 = vld [vmem:[%s215 + $0x3ac] sm:$0xf]
        %v468 = vld [vmem:[%s215 + $0x3b0] sm:$0xf]
        %v469 = vld [vmem:[%s215 + $0x3b4] sm:$0xf]
        %v470 = vld [vmem:[%s215 + $0x3b8] sm:$0xf]
        %v471 = vld [vmem:[%s215 + $0x3bc] sm:$0xf]
        %v472 = vld [vmem:[%s215 + $0x3c0] sm:$0xf]
        %v473 = vld [vmem:[%s215 + $0x3c4] sm:$0xf]
        %v474 = vld [vmem:[%s215 + $0x3c8] sm:$0xf]
        %v475 = vld [vmem:[%s215 + $0x3cc] sm:$0xf]
        %v476 = vld [vmem:[%s215 + $0x3d0] sm:$0xf]
        %v477 = vld [vmem:[%s215 + $0x3d4] sm:$0xf]
        %v478 = vld [vmem:[%s215 + $0x3d8] sm:$0xf]
        %v479 = vld [vmem:[%s215 + $0x3dc] sm:$0xf]
        %v480 = vld [vmem:[%s215 + $0x3e0] sm:$0xf]
        %v481 = vld [vmem:[%s215 + $0x3e4] sm:$0xf]
        %v482 = vld [vmem:[%s215 + $0x3e8] sm:$0xf]
        %v483 = vld [vmem:[%s215 + $0x3ec] sm:$0xf]
        %v484 = vld [vmem:[%s215 + $0x3f0] sm:$0xf]
        %v485 = vld [vmem:[%s215 + $0x3f4] sm:$0xf]
        %v486 = vld [vmem:[%s215 + $0x3f8] sm:$0xf]
        %v487 = vld [vmem:[%s215 + $0x3fc] sm:$0xf]
        %v488 = vld [vmem:[%s215 + $0x400] sm:$0xf]
        %v489 = vld [vmem:[%s215 + $0x404] sm:$0xf]
        %v490 = vld [vmem:[%s215 + $0x408] sm:$0xf]
        %v491 = vld [vmem:[%s215 + $0x40c] sm:$0xf]
        %v492 = vld [vmem:[%s215 + $0x410] sm:$0xf]
        %v493 = vld [vmem:[%s215 + $0x414] sm:$0xf]
        %v494 = vld [vmem:[%s215 + $0x418] sm:$0xf]
        %v495 = vld [vmem:[%s215 + $0x41c] sm:$0xf]
        %v496 = vld [vmem:[%s215 + $0x420] sm:$0xf]
        %v497 = vld [vmem:[%s215 + $0x424] sm:$0xf]
        %v498 = vld [vmem:[%s215 + $0x428] sm:$0xf]
        %v499 = vld [vmem:[%s215 + $0x42c] sm:$0xf]
        %v500 = vld [vmem:[%s215 + $0x430] sm:$0xf]
        %v501 = vld [vmem:[%s215 + $0x434] sm:$0xf]
        %v502 = vld [vmem:[%s215 + $0x438] sm:$0xf]
        %v503 = vld [vmem:[%s215 + $0x43c] sm:$0xf]
        %v504 = vld [vmem:[%s215 + $0x440] sm:$0xf]
        %v505 = vld [vmem:[%s215 + $0x444] sm:$0xf]
        %v506 = vld [vmem:[%s215 + $0x448] sm:$0xf]
        %v507 = vld [vmem:[%s215 + $0x44c] sm:$0xf]
        %v508 = vld [vmem:[%s215 + $0x450] sm:$0xf]
        %v509 = vld [vmem:[%s215 + $0x454] sm:$0xf]
        %v510 = vld [vmem:[%s215 + $0x458] sm:$0xf]
        %v511 = vld [vmem:[%s215 + $0x45c] sm:$0xf]
        %v512 = vld [vmem:[%s215 + $0x460] sm:$0xf]
        %v513 = vld [vmem:[%s215 + $0x464] sm:$0xf]
        %v514 = vld [vmem:[%s215 + $0x468] sm:$0xf]
        %v515 = vld [vmem:[%s215 + $0x46c] sm:$0xf]
        %v516 = vld [vmem:[%s215 + $0x470] sm:$0xf]
        %v517 = vld [vmem:[%s215 + $0x474] sm:$0xf]
        %v518 = vld [vmem:[%s215 + $0x478] sm:$0xf]
        %v519 = vld [vmem:[%s215 + $0x47c] sm:$0xf]
        %v520 = vld [vmem:[%s215 + $0x480] sm:$0xf]
        %v521 = vld [vmem:[%s215 + $0x484] sm:$0xf]
        %v522 = vld [vmem:[%s215 + $0x488] sm:$0xf]
        %v523 = vld [vmem:[%s215 + $0x48c] sm:$0xf]
        %v524 = vld [vmem:[%s215 + $0x490] sm:$0xf]
        %v525 = vld [vmem:[%s215 + $0x494] sm:$0xf]
        %v526 = vld [vmem:[%s215 + $0x498] sm:$0xf]
        %v527 = vld [vmem:[%s215 + $0x49c] sm:$0xf]
        %v528 = vld [vmem:[%s215 + $0x4a0] sm:$0xf]
        %v529 = vld [vmem:[%s215 + $0x4a4] sm:$0xf]
        %v530 = vld [vmem:[%s215 + $0x4a8] sm:$0xf]
        %v531 = vld [vmem:[%s215 + $0x4ac] sm:$0xf]
        %v532 = vld [vmem:[%s215 + $0x4b0] sm:$0xf]
        %v533 = vld [vmem:[%s215 + $0x4b4] sm:$0xf]
        %v534 = vld [vmem:[%s215 + $0x4b8] sm:$0xf]
        %v535 = vld [vmem:[%s215 + $0x4bc] sm:$0xf]
        %v536 = vld [vmem:[%s215 + $0x4c0] sm:$0xf]
        %v537 = vld [vmem:[%s215 + $0x4c4] sm:$0xf]
        %v538 = vld [vmem:[%s215 + $0x4c8] sm:$0xf]
        %v539 = vld [vmem:[%s215 + $0x4cc] sm:$0xf]
        %v540 = vld [vmem:[%s215 + $0x4d0] sm:$0xf]
        %v541 = vld [vmem:[%s215 + $0x4d4] sm:$0xf]
        %v542 = vld [vmem:[%s215 + $0x4d8] sm:$0xf]
        %v543 = vld [vmem:[%s215 + $0x4dc] sm:$0xf]
        %v544 = vld [vmem:[%s215 + $0x4e0] sm:$0xf]
        %v545 = vld [vmem:[%s215 + $0x4e4] sm:$0xf]
        %v546 = vld [vmem:[%s215 + $0x4e8] sm:$0xf]
        %v547 = vld [vmem:[%s215 + $0x4ec] sm:$0xf]
        %v548 = vld [vmem:[%s215 + $0x4f0] sm:$0xf]
        %v549 = vld [vmem:[%s215 + $0x4f4] sm:$0xf]
        %v550 = vld [vmem:[%s215 + $0x4f8] sm:$0xf]
        %v551 = vld [vmem:[%s215 + $0x4fc] sm:$0xf]
        %v552 = vld [vmem:[%s215 + $0x500] sm:$0xf]
        %v553 = vld [vmem:[%s215 + $0x504] sm:$0xf]
        %v554 = vld [vmem:[%s215 + $0x508] sm:$0xf]
        %v555 = vld [vmem:[%s215 + $0x50c] sm:$0xf]
        %v556 = vld [vmem:[%s215 + $0x510] sm:$0xf]
        %v557 = vld [vmem:[%s215 + $0x514] sm:$0xf]
        %v558 = vld [vmem:[%s215 + $0x518] sm:$0xf]
        %v559 = vld [vmem:[%s215 + $0x51c] sm:$0xf]
        %v560 = vld [vmem:[%s215 + $0x520] sm:$0xf]
        %v561 = vld [vmem:[%s215 + $0x524] sm:$0xf]
        %v562 = vld [vmem:[%s215 + $0x528] sm:$0xf]
        %v563 = vld [vmem:[%s215 + $0x52c] sm:$0xf]
        %v564 = vld [vmem:[%s215 + $0x530] sm:$0xf]
        %v565 = vld [vmem:[%s215 + $0x534] sm:$0xf]
        %v566 = vld [vmem:[%s215 + $0x538] sm:$0xf]
        %v567 = vld [vmem:[%s215 + $0x53c] sm:$0xf]
        %v568 = vld [vmem:[%s215 + $0x540] sm:$0xf]
        %v569 = vld [vmem:[%s215 + $0x544] sm:$0xf]
        %v570 = vld [vmem:[%s215 + $0x548] sm:$0xf]
        %v571 = vld [vmem:[%s215 + $0x54c] sm:$0xf]
        %v572 = vld [vmem:[%s215 + $0x550] sm:$0xf]
        %v573 = vld [vmem:[%s215 + $0x554] sm:$0xf]
        %v574 = vld [vmem:[%s215 + $0x558] sm:$0xf]
        %v575 = vld [vmem:[%s215 + $0x55c] sm:$0xf]
        %v576 = vld [vmem:[%s215 + $0x560] sm:$0xf]
        %v577 = vld [vmem:[%s215 + $0x564] sm:$0xf]
        %v578 = vld [vmem:[%s215 + $0x568] sm:$0xf]
        %v579 = vld [vmem:[%s215 + $0x56c] sm:$0xf]
        %v580 = vld [vmem:[%s215 + $0x570] sm:$0xf]
        %v581 = vld [vmem:[%s215 + $0x574] sm:$0xf]
        %v582 = vld [vmem:[%s215 + $0x578] sm:$0xf]
        %v583 = vld [vmem:[%s215 + $0x57c] sm:$0xf]
        %v584 = vld [vmem:[%s215 + $0x580] sm:$0xf]
        %v585 = vld [vmem:[%s215 + $0x584] sm:$0xf]
        %v586 = vld [vmem:[%s215 + $0x588] sm:$0xf]
        %v587 = vld [vmem:[%s215 + $0x58c] sm:$0xf]
        %v588 = vld [vmem:[%s215 + $0x590] sm:$0xf]
        %v589 = vld [vmem:[%s215 + $0x594] sm:$0xf]
        %v590 = vld [vmem:[%s215 + $0x598] sm:$0xf]
        %v591 = vld [vmem:[%s215 + $0x59c] sm:$0xf]
        %v592 = vld [vmem:[%s215 + $0x5a0] sm:$0xf]
        %v593 = vld [vmem:[%s215 + $0x5a4] sm:$0xf]
        %v594 = vld [vmem:[%s215 + $0x5a8] sm:$0xf]
        %v595 = vld [vmem:[%s215 + $0x5ac] sm:$0xf]
        %v596 = vld [vmem:[%s215 + $0x5b0] sm:$0xf]
        %v597 = vld [vmem:[%s215 + $0x5b4] sm:$0xf]
        %v598 = vld [vmem:[%s215 + $0x5b8] sm:$0xf]
        %v599 = vld [vmem:[%s215 + $0x5bc] sm:$0xf]
        %v600 = vld [vmem:[%s215 + $0x5c0] sm:$0xf]
        %v601 = vld [vmem:[%s215 + $0x5c4] sm:$0xf]
        %v602 = vld [vmem:[%s215 + $0x5c8] sm:$0xf]
        %v603 = vld [vmem:[%s215 + $0x5cc] sm:$0xf]
        %v604 = vld [vmem:[%s215 + $0x5d0] sm:$0xf]
        %v605 = vld [vmem:[%s215 + $0x5d4] sm:$0xf]
        %v606 = vld [vmem:[%s215 + $0x5d8] sm:$0xf]
        %v607 = vld [vmem:[%s215 + $0x5dc] sm:$0xf]
        %v608 = vld [vmem:[%s215 + $0x5e0] sm:$0xf]
        %v609 = vld [vmem:[%s215 + $0x5e4] sm:$0xf]
        %v610 = vld [vmem:[%s215 + $0x5e8] sm:$0xf]
        %v611 = vld [vmem:[%s215 + $0x5ec] sm:$0xf]
        %v612 = vld [vmem:[%s215 + $0x5f0] sm:$0xf]
        %v613 = vld [vmem:[%s215 + $0x5f4] sm:$0xf]
        %v614 = vld [vmem:[%s215 + $0x5f8] sm:$0xf]
        %v615 = vld [vmem:[%s215 + $0x5fc] sm:$0xf]
        %v616 = vld [vmem:[%s215 + $0x600] sm:$0xf]
        %v617 = vld [vmem:[%s215 + $0x604] sm:$0xf]
        %v618 = vld [vmem:[%s215 + $0x608] sm:$0xf]
        %v619 = vld [vmem:[%s215 + $0x60c] sm:$0xf]
        %v620 = vld [vmem:[%s215 + $0x610] sm:$0xf]
        %v621 = vld [vmem:[%s215 + $0x614] sm:$0xf]
        %v622 = vld [vmem:[%s215 + $0x618] sm:$0xf]
        %v623 = vld [vmem:[%s215 + $0x61c] sm:$0xf]
        %v624 = vld [vmem:[%s215 + $0x620] sm:$0xf]
        %v625 = vld [vmem:[%s215 + $0x624] sm:$0xf]
        %v626 = vld [vmem:[%s215 + $0x628] sm:$0xf]
        %v627 = vld [vmem:[%s215 + $0x62c] sm:$0xf]
        %v628 = vld [vmem:[%s215 + $0x630] sm:$0xf]
        %v629 = vld [vmem:[%s215 + $0x634] sm:$0xf]
        %v630 = vld [vmem:[%s215 + $0x638] sm:$0xf]
        %v631 = vld [vmem:[%s215 + $0x63c] sm:$0xf]
        %v632 = vld [vmem:[%s215 + $0x640] sm:$0xf]
        %v633 = vld [vmem:[%s215 + $0x644] sm:$0xf]
        %v634 = vld [vmem:[%s215 + $0x648] sm:$0xf]
        %v635 = vld [vmem:[%s215 + $0x64c] sm:$0xf]
        %v636 = vld [vmem:[%s215 + $0x650] sm:$0xf]
        %v637 = vld [vmem:[%s215 + $0x654] sm:$0xf]
        %v638 = vld [vmem:[%s215 + $0x658] sm:$0xf]
        %v639 = vld [vmem:[%s215 + $0x65c] sm:$0xf]
        %v640 = vld [vmem:[%s215 + $0x660] sm:$0xf]
        %v641 = vld [vmem:[%s215 + $0x664] sm:$0xf]
        %v642 = vld [vmem:[%s215 + $0x668] sm:$0xf]
        %v643 = vld [vmem:[%s215 + $0x66c] sm:$0xf]
        %v644 = vld [vmem:[%s215 + $0x670] sm:$0xf]
        %v645 = vld [vmem:[%s215 + $0x674] sm:$0xf]
        %v646 = vld [vmem:[%s215 + $0x678] sm:$0xf]
        %v647 = vld [vmem:[%s215 + $0x67c] sm:$0xf]
        %v648 = vld [vmem:[%s215 + $0x680] sm:$0xf]
        %v649 = vld [vmem:[%s215 + $0x684] sm:$0xf]
        %v650 = vld [vmem:[%s215 + $0x688] sm:$0xf]
        %v651 = vld [vmem:[%s215 + $0x68c] sm:$0xf]
        %v652 = vld [vmem:[%s215 + $0x690] sm:$0xf]
        %v653 = vld [vmem:[%s215 + $0x694] sm:$0xf]
        %v654 = vld [vmem:[%s215 + $0x698] sm:$0xf]
        %v655 = vld [vmem:[%s215 + $0x69c] sm:$0xf]
        %v656 = vld [vmem:[%s215 + $0x6a0] sm:$0xf]
        %v657 = vld [vmem:[%s215 + $0x6a4] sm:$0xf]
        %v658 = vld [vmem:[%s215 + $0x6a8] sm:$0xf]
        %v659 = vld [vmem:[%s215 + $0x6ac] sm:$0xf]
        %v660 = vld [vmem:[%s215 + $0x6b0] sm:$0xf]
        %v661 = vld [vmem:[%s215 + $0x6b4] sm:$0xf]
        %v662 = vld [vmem:[%s215 + $0x6b8] sm:$0xf]
        %v663 = vld [vmem:[%s215 + $0x6bc] sm:$0xf]
        %v664 = vld [vmem:[%s215 + $0x6c0] sm:$0xf]
        %v665 = vld [vmem:[%s215 + $0x6c4] sm:$0xf]
        %v666 = vld [vmem:[%s215 + $0x6c8] sm:$0xf]
        %v667 = vld [vmem:[%s215 + $0x6cc] sm:$0xf]
        %v668 = vld [vmem:[%s215 + $0x6d0] sm:$0xf]
        %v669 = vld [vmem:[%s215 + $0x6d4] sm:$0xf]
        %v670 = vld [vmem:[%s215 + $0x6d8] sm:$0xf]
        %v671 = vld [vmem:[%s215 + $0x6dc] sm:$0xf]
        %v672 = vld [vmem:[%s215 + $0x6e0] sm:$0xf]
        %v673 = vld [vmem:[%s215 + $0x6e4] sm:$0xf]
        %v674 = vld [vmem:[%s215 + $0x6e8] sm:$0xf]
        %v675 = vld [vmem:[%s215 + $0x6ec] sm:$0xf]
        %v676 = vld [vmem:[%s215 + $0x6f0] sm:$0xf]
        %v677 = vld [vmem:[%s215 + $0x6f4] sm:$0xf]
        %v678 = vld [vmem:[%s215 + $0x6f8] sm:$0xf]
        %v679 = vld [vmem:[%s215 + $0x6fc] sm:$0xf]
        %v680 = vld [vmem:[%s215 + $0x700] sm:$0xf]
        %v681 = vld [vmem:[%s215 + $0x704] sm:$0xf]
        %v682 = vld [vmem:[%s215 + $0x708] sm:$0xf]
        %v683 = vld [vmem:[%s215 + $0x70c] sm:$0xf]
        %v684 = vld [vmem:[%s215 + $0x710] sm:$0xf]
        %v685 = vld [vmem:[%s215 + $0x714] sm:$0xf]
        %v686 = vld [vmem:[%s215 + $0x718] sm:$0xf]
        %v687 = vld [vmem:[%s215 + $0x71c] sm:$0xf]
        %v688 = vld [vmem:[%s215 + $0x720] sm:$0xf]
        %v689 = vld [vmem:[%s215 + $0x724] sm:$0xf]
        %v690 = vld [vmem:[%s215 + $0x728] sm:$0xf]
        %v691 = vld [vmem:[%s215 + $0x72c] sm:$0xf]
        %v692 = vld [vmem:[%s215 + $0x730] sm:$0xf]
        %v693 = vld [vmem:[%s215 + $0x734] sm:$0xf]
        %v694 = vld [vmem:[%s215 + $0x738] sm:$0xf]
        %v695 = vld [vmem:[%s215 + $0x73c] sm:$0xf]
        %v696 = vld [vmem:[%s215 + $0x740] sm:$0xf]
        %v697 = vld [vmem:[%s215 + $0x744] sm:$0xf]
        %v698 = vld [vmem:[%s215 + $0x748] sm:$0xf]
        %v699 = vld [vmem:[%s215 + $0x74c] sm:$0xf]
        %v700 = vld [vmem:[%s215 + $0x750] sm:$0xf]
        %v701 = vld [vmem:[%s215 + $0x754] sm:$0xf]
        %v702 = vld [vmem:[%s215 + $0x758] sm:$0xf]
        %v703 = vld [vmem:[%s215 + $0x75c] sm:$0xf]
        %v704 = vld [vmem:[%s215 + $0x760] sm:$0xf]
        %v705 = vld [vmem:[%s215 + $0x764] sm:$0xf]
        %v706 = vld [vmem:[%s215 + $0x768] sm:$0xf]
        %v707 = vld [vmem:[%s215 + $0x76c] sm:$0xf]
        %v708 = vld [vmem:[%s215 + $0x770] sm:$0xf]
        %v709 = vld [vmem:[%s215 + $0x774] sm:$0xf]
        %v710 = vld [vmem:[%s215 + $0x778] sm:$0xf]
        %v711 = vld [vmem:[%s215 + $0x77c] sm:$0xf]
        %v712 = vld [vmem:[%s215 + $0x780] sm:$0xf]
        %v713 = vld [vmem:[%s215 + $0x784] sm:$0xf]
        %v714 = vld [vmem:[%s215 + $0x788] sm:$0xf]
        %v715 = vld [vmem:[%s215 + $0x78c] sm:$0xf]
        %v716 = vld [vmem:[%s215 + $0x790] sm:$0xf]
        %v717 = vld [vmem:[%s215 + $0x794] sm:$0xf]
        %v718 = vld [vmem:[%s215 + $0x798] sm:$0xf]
        %v719 = vld [vmem:[%s215 + $0x79c] sm:$0xf]
        %v720 = vld [vmem:[%s215 + $0x7a0] sm:$0xf]
        %v721 = vld [vmem:[%s215 + $0x7a4] sm:$0xf]
        %v722 = vld [vmem:[%s215 + $0x7a8] sm:$0xf]
        %v723 = vld [vmem:[%s215 + $0x7ac] sm:$0xf]
        %v724 = vld [vmem:[%s215 + $0x7b0] sm:$0xf]
        %v725 = vld [vmem:[%s215 + $0x7b4] sm:$0xf]
        %v726 = vld [vmem:[%s215 + $0x7b8] sm:$0xf]
        %v727 = vld [vmem:[%s215 + $0x7bc] sm:$0xf]
        %v728 = vld [vmem:[%s215 + $0x7c0] sm:$0xf]
        %v729 = vld [vmem:[%s215 + $0x7c4] sm:$0xf]
        %v730 = vld [vmem:[%s215 + $0x7c8] sm:$0xf]
        %v731 = vld [vmem:[%s215 + $0x7cc] sm:$0xf]
        %v732 = vld [vmem:[%s215 + $0x7d0] sm:$0xf]
        %v733 = vld [vmem:[%s215 + $0x7d4] sm:$0xf]
        %v734 = vld [vmem:[%s215 + $0x7d8] sm:$0xf]
        %v735 = vld [vmem:[%s215 + $0x7dc] sm:$0xf]
        %v736 = vld [vmem:[%s215 + $0x7e0] sm:$0xf]
        %v737 = vld [vmem:[%s215 + $0x7e4] sm:$0xf]
        %v738 = vld [vmem:[%s215 + $0x7e8] sm:$0xf]
        %v739 = vld [vmem:[%s215 + $0x7ec] sm:$0xf]
        %v740 = vld [vmem:[%s215 + $0x7f0] sm:$0xf]
        %v741 = vld [vmem:[%s215 + $0x7f4] sm:$0xf]
        %v742 = vld [vmem:[%s215 + $0x7f8] sm:$0xf]
        %v743 = vld [vmem:[%s215 + $0x7fc] sm:$0xf]
        %v744 = vld [vmem:[%s1] sm:$0xf]
        %v1257 = vunpack.c.l.b16 %v232
        %v1258 = vunpack.c.l.b16 %v233
        %v1259 = vunpack.c.l.b16 %v234
        %v1260 = vunpack.c.l.b16 %v235
        %v1261 = vunpack.c.l.b16 %v236
        %v1262 = vunpack.c.l.b16 %v237
        %v1263 = vunpack.c.l.b16 %v238
        %v1264 = vunpack.c.l.b16 %v239
        %v1265 = vunpack.c.l.b16 %v240
        %v1266 = vunpack.c.l.b16 %v241
        %v1267 = vunpack.c.l.b16 %v242
        %v1268 = vunpack.c.l.b16 %v243
        %v1269 = vunpack.c.l.b16 %v244
        %v1270 = vunpack.c.l.b16 %v245
        %v1271 = vunpack.c.l.b16 %v246
        %v1272 = vunpack.c.l.b16 %v247
        %v1273 = vunpack.c.l.b16 %v248
        %v1274 = vunpack.c.l.b16 %v249
        %v1275 = vunpack.c.l.b16 %v250
        %v1276 = vunpack.c.l.b16 %v251
        %v1277 = vunpack.c.l.b16 %v252
        %v1278 = vunpack.c.l.b16 %v253
        %v1279 = vunpack.c.l.b16 %v254
        %v1280 = vunpack.c.l.b16 %v255
        %v1281 = vunpack.c.l.b16 %v256
        %v1282 = vunpack.c.l.b16 %v257
        %v1283 = vunpack.c.l.b16 %v258
        %v1284 = vunpack.c.l.b16 %v259
        %v1285 = vunpack.c.l.b16 %v260
        %v1286 = vunpack.c.l.b16 %v261
        %v1287 = vunpack.c.l.b16 %v262
        %v1288 = vunpack.c.l.b16 %v263
        %v1289 = vunpack.c.l.b16 %v264
        %v1290 = vunpack.c.l.b16 %v265
        %v1291 = vunpack.c.l.b16 %v266
        %v1292 = vunpack.c.l.b16 %v267
        %v1293 = vunpack.c.l.b16 %v268
        %v1294 = vunpack.c.l.b16 %v269
        %v1295 = vunpack.c.l.b16 %v270
        %v1296 = vunpack.c.l.b16 %v271
        %v1297 = vunpack.c.l.b16 %v272
        %v1298 = vunpack.c.l.b16 %v273
        %v1299 = vunpack.c.l.b16 %v274
        %v1300 = vunpack.c.l.b16 %v275
        %v1301 = vunpack.c.l.b16 %v276
        %v1302 = vunpack.c.l.b16 %v277
        %v1303 = vunpack.c.l.b16 %v278
        %v1304 = vunpack.c.l.b16 %v279
        %v1305 = vunpack.c.l.b16 %v280
        %v1306 = vunpack.c.l.b16 %v281
        %v1307 = vunpack.c.l.b16 %v282
        %v1308 = vunpack.c.l.b16 %v283
        %v1309 = vunpack.c.l.b16 %v284
        %v1310 = vunpack.c.l.b16 %v285
        %v1311 = vunpack.c.l.b16 %v286
        %v1312 = vunpack.c.l.b16 %v287
        %v1313 = vunpack.c.l.b16 %v288
        %v1314 = vunpack.c.l.b16 %v289
        %v1315 = vunpack.c.l.b16 %v290
        %v1316 = vunpack.c.l.b16 %v291
        %v1317 = vunpack.c.l.b16 %v292
        %v1318 = vunpack.c.l.b16 %v293
        %v1319 = vunpack.c.l.b16 %v294
        %v1320 = vunpack.c.l.b16 %v295
        %v1321 = vunpack.c.l.b16 %v296
        %v1322 = vunpack.c.l.b16 %v297
        %v1323 = vunpack.c.l.b16 %v298
        %v1324 = vunpack.c.l.b16 %v299
        %v1325 = vunpack.c.l.b16 %v300
        %v1326 = vunpack.c.l.b16 %v301
        %v1327 = vunpack.c.l.b16 %v302
        %v1328 = vunpack.c.l.b16 %v303
        %v1329 = vunpack.c.l.b16 %v304
        %v1330 = vunpack.c.l.b16 %v305
        %v1331 = vunpack.c.l.b16 %v306
        %v1332 = vunpack.c.l.b16 %v307
        %v1333 = vunpack.c.l.b16 %v308
        %v1334 = vunpack.c.l.b16 %v309
        %v1335 = vunpack.c.l.b16 %v310
        %v1336 = vunpack.c.l.b16 %v311
        %v1337 = vunpack.c.l.b16 %v312
        %v1338 = vunpack.c.l.b16 %v313
        %v1339 = vunpack.c.l.b16 %v314
        %v1340 = vunpack.c.l.b16 %v315
        %v1341 = vunpack.c.l.b16 %v316
        %v1342 = vunpack.c.l.b16 %v317
        %v1343 = vunpack.c.l.b16 %v318
        %v1344 = vunpack.c.l.b16 %v319
        %v1345 = vunpack.c.l.b16 %v320
        %v1346 = vunpack.c.l.b16 %v321
        %v1347 = vunpack.c.l.b16 %v322
        %v1348 = vunpack.c.l.b16 %v323
        %v1349 = vunpack.c.l.b16 %v324
        %v1350 = vunpack.c.l.b16 %v325
        %v1351 = vunpack.c.l.b16 %v326
        %v1352 = vunpack.c.l.b16 %v327
        %v1353 = vunpack.c.l.b16 %v328
        %v1354 = vunpack.c.l.b16 %v329
        %v1355 = vunpack.c.l.b16 %v330
        %v1356 = vunpack.c.l.b16 %v331
        %v1357 = vunpack.c.l.b16 %v332
        %v1358 = vunpack.c.l.b16 %v333
        %v1359 = vunpack.c.l.b16 %v334
        %v1360 = vunpack.c.l.b16 %v335
        %v1361 = vunpack.c.l.b16 %v336
        %v1362 = vunpack.c.l.b16 %v337
        %v1363 = vunpack.c.l.b16 %v338
        %v1364 = vunpack.c.l.b16 %v339
        %v1365 = vunpack.c.l.b16 %v340
        %v1366 = vunpack.c.l.b16 %v341
        %v1367 = vunpack.c.l.b16 %v342
        %v1368 = vunpack.c.l.b16 %v343
        %v1369 = vunpack.c.l.b16 %v344
        %v1370 = vunpack.c.l.b16 %v345
        %v1371 = vunpack.c.l.b16 %v346
        %v1372 = vunpack.c.l.b16 %v347
        %v1373 = vunpack.c.l.b16 %v348
        %v1374 = vunpack.c.l.b16 %v349
        %v1375 = vunpack.c.l.b16 %v350
        %v1376 = vunpack.c.l.b16 %v351
        %v1377 = vunpack.c.l.b16 %v352
        %v1378 = vunpack.c.l.b16 %v353
        %v1379 = vunpack.c.l.b16 %v354
        %v1380 = vunpack.c.l.b16 %v355
        %v1381 = vunpack.c.l.b16 %v356
        %v1382 = vunpack.c.l.b16 %v357
        %v1383 = vunpack.c.l.b16 %v358
        %v1384 = vunpack.c.l.b16 %v359
        %v1385 = vunpack.c.l.b16 %v360
        %v1386 = vunpack.c.l.b16 %v361
        %v1387 = vunpack.c.l.b16 %v362
        %v1388 = vunpack.c.l.b16 %v363
        %v1389 = vunpack.c.l.b16 %v364
        %v1390 = vunpack.c.l.b16 %v365
        %v1391 = vunpack.c.l.b16 %v366
        %v1392 = vunpack.c.l.b16 %v367
        %v1393 = vunpack.c.l.b16 %v368
        %v1394 = vunpack.c.l.b16 %v369
        %v1395 = vunpack.c.l.b16 %v370
        %v1396 = vunpack.c.l.b16 %v371
        %v1397 = vunpack.c.l.b16 %v372
        %v1398 = vunpack.c.l.b16 %v373
        %v1399 = vunpack.c.l.b16 %v374
        %v1400 = vunpack.c.l.b16 %v375
        %v1401 = vunpack.c.l.b16 %v376
        %v1402 = vunpack.c.l.b16 %v377
        %v1403 = vunpack.c.l.b16 %v378
        %v1404 = vunpack.c.l.b16 %v379
        %v1405 = vunpack.c.l.b16 %v380
        %v1406 = vunpack.c.l.b16 %v381
        %v1407 = vunpack.c.l.b16 %v382
        %v1408 = vunpack.c.l.b16 %v383
        %v1409 = vunpack.c.l.b16 %v384
        %v1410 = vunpack.c.l.b16 %v385
        %v1411 = vunpack.c.l.b16 %v386
        %v1412 = vunpack.c.l.b16 %v387
        %v1413 = vunpack.c.l.b16 %v388
        %v1414 = vunpack.c.l.b16 %v389
        %v1415 = vunpack.c.l.b16 %v390
        %v1416 = vunpack.c.l.b16 %v391
        %v1417 = vunpack.c.l.b16 %v392
        %v1418 = vunpack.c.l.b16 %v393
        %v1419 = vunpack.c.l.b16 %v394
        %v1420 = vunpack.c.l.b16 %v395
        %v1421 = vunpack.c.l.b16 %v396
        %v1422 = vunpack.c.l.b16 %v397
        %v1423 = vunpack.c.l.b16 %v398
        %v1424 = vunpack.c.l.b16 %v399
        %v1425 = vunpack.c.l.b16 %v400
        %v1426 = vunpack.c.l.b16 %v401
        %v1427 = vunpack.c.l.b16 %v402
        %v1428 = vunpack.c.l.b16 %v403
        %v1429 = vunpack.c.l.b16 %v404
        %v1430 = vunpack.c.l.b16 %v405
        %v1431 = vunpack.c.l.b16 %v406
        %v1432 = vunpack.c.l.b16 %v407
        %v1433 = vunpack.c.l.b16 %v408
        %v1434 = vunpack.c.l.b16 %v409
        %v1435 = vunpack.c.l.b16 %v410
        %v1436 = vunpack.c.l.b16 %v411
        %v1437 = vunpack.c.l.b16 %v412
        %v1438 = vunpack.c.l.b16 %v413
        %v1439 = vunpack.c.l.b16 %v414
        %v1440 = vunpack.c.l.b16 %v415
        %v1441 = vunpack.c.l.b16 %v416
        %v1442 = vunpack.c.l.b16 %v417
        %v1443 = vunpack.c.l.b16 %v418
        %v1444 = vunpack.c.l.b16 %v419
        %v1445 = vunpack.c.l.b16 %v420
        %v1446 = vunpack.c.l.b16 %v421
        %v1447 = vunpack.c.l.b16 %v422
        %v1448 = vunpack.c.l.b16 %v423
        %v1449 = vunpack.c.l.b16 %v424
        %v1450 = vunpack.c.l.b16 %v425
        %v1451 = vunpack.c.l.b16 %v426
        %v1452 = vunpack.c.l.b16 %v427
        %v1453 = vunpack.c.l.b16 %v428
        %v1454 = vunpack.c.l.b16 %v429
        %v1455 = vunpack.c.l.b16 %v430
        %v1456 = vunpack.c.l.b16 %v431
        %v1457 = vunpack.c.l.b16 %v432
        %v1458 = vunpack.c.l.b16 %v433
        %v1459 = vunpack.c.l.b16 %v434
        %v1460 = vunpack.c.l.b16 %v435
        %v1461 = vunpack.c.l.b16 %v436
        %v1462 = vunpack.c.l.b16 %v437
        %v1463 = vunpack.c.l.b16 %v438
        %v1464 = vunpack.c.l.b16 %v439
        %v1465 = vunpack.c.l.b16 %v440
        %v1466 = vunpack.c.l.b16 %v441
        %v1467 = vunpack.c.l.b16 %v442
        %v1468 = vunpack.c.l.b16 %v443
        %v1469 = vunpack.c.l.b16 %v444
        %v1470 = vunpack.c.l.b16 %v445
        %v1471 = vunpack.c.l.b16 %v446
        %v1472 = vunpack.c.l.b16 %v447
        %v1473 = vunpack.c.l.b16 %v448
        %v1474 = vunpack.c.l.b16 %v449
        %v1475 = vunpack.c.l.b16 %v450
        %v1476 = vunpack.c.l.b16 %v451
        %v1477 = vunpack.c.l.b16 %v452
        %v1478 = vunpack.c.l.b16 %v453
        %v1479 = vunpack.c.l.b16 %v454
        %v1480 = vunpack.c.l.b16 %v455
        %v1481 = vunpack.c.l.b16 %v456
        %v1482 = vunpack.c.l.b16 %v457
        %v1483 = vunpack.c.l.b16 %v458
        %v1484 = vunpack.c.l.b16 %v459
        %v1485 = vunpack.c.l.b16 %v460
        %v1486 = vunpack.c.l.b16 %v461
        %v1487 = vunpack.c.l.b16 %v462
        %v1488 = vunpack.c.l.b16 %v463
        %v1489 = vunpack.c.l.b16 %v464
        %v1490 = vunpack.c.l.b16 %v465
        %v1491 = vunpack.c.l.b16 %v466
        %v1492 = vunpack.c.l.b16 %v467
        %v1493 = vunpack.c.l.b16 %v468
        %v1494 = vunpack.c.l.b16 %v469
        %v1495 = vunpack.c.l.b16 %v470
        %v1496 = vunpack.c.l.b16 %v471
        %v1497 = vunpack.c.l.b16 %v472
        %v1498 = vunpack.c.l.b16 %v473
        %v1499 = vunpack.c.l.b16 %v474
        %v1500 = vunpack.c.l.b16 %v475
        %v1501 = vunpack.c.l.b16 %v476
        %v1502 = vunpack.c.l.b16 %v477
        %v1503 = vunpack.c.l.b16 %v478
        %v1504 = vunpack.c.l.b16 %v479
        %v1505 = vunpack.c.l.b16 %v480
        %v1506 = vunpack.c.l.b16 %v481
        %v1507 = vunpack.c.l.b16 %v482
        %v1508 = vunpack.c.l.b16 %v483
        %v1509 = vunpack.c.l.b16 %v484
        %v1510 = vunpack.c.l.b16 %v485
        %v1511 = vunpack.c.l.b16 %v486
        %v1512 = vunpack.c.l.b16 %v487
        %v1513 = vunpack.c.l.b16 %v488
        %v1514 = vunpack.c.l.b16 %v489
        %v1515 = vunpack.c.l.b16 %v490
        %v1516 = vunpack.c.l.b16 %v491
        %v1517 = vunpack.c.l.b16 %v492
        %v1518 = vunpack.c.l.b16 %v493
        %v1519 = vunpack.c.l.b16 %v494
        %v1520 = vunpack.c.l.b16 %v495
        %v1521 = vunpack.c.l.b16 %v496
        %v1522 = vunpack.c.l.b16 %v497
        %v1523 = vunpack.c.l.b16 %v498
        %v1524 = vunpack.c.l.b16 %v499
        %v1525 = vunpack.c.l.b16 %v500
        %v1526 = vunpack.c.l.b16 %v501
        %v1527 = vunpack.c.l.b16 %v502
        %v1528 = vunpack.c.l.b16 %v503
        %v1529 = vunpack.c.l.b16 %v504
        %v1530 = vunpack.c.l.b16 %v505
        %v1531 = vunpack.c.l.b16 %v506
        %v1532 = vunpack.c.l.b16 %v507
        %v1533 = vunpack.c.l.b16 %v508
        %v1534 = vunpack.c.l.b16 %v509
        %v1535 = vunpack.c.l.b16 %v510
        %v1536 = vunpack.c.l.b16 %v511
        %v1537 = vunpack.c.l.b16 %v512
        %v1538 = vunpack.c.l.b16 %v513
        %v1539 = vunpack.c.l.b16 %v514
        %v1540 = vunpack.c.l.b16 %v515
        %v1541 = vunpack.c.l.b16 %v516
        %v1542 = vunpack.c.l.b16 %v517
        %v1543 = vunpack.c.l.b16 %v518
        %v1544 = vunpack.c.l.b16 %v519
        %v1545 = vunpack.c.l.b16 %v520
        %v1546 = vunpack.c.l.b16 %v521
        %v1547 = vunpack.c.l.b16 %v522
        %v1548 = vunpack.c.l.b16 %v523
        %v1549 = vunpack.c.l.b16 %v524
        %v1550 = vunpack.c.l.b16 %v525
        %v1551 = vunpack.c.l.b16 %v526
        %v1552 = vunpack.c.l.b16 %v527
        %v1553 = vunpack.c.l.b16 %v528
        %v1554 = vunpack.c.l.b16 %v529
        %v1555 = vunpack.c.l.b16 %v530
        %v1556 = vunpack.c.l.b16 %v531
        %v1557 = vunpack.c.l.b16 %v532
        %v1558 = vunpack.c.l.b16 %v533
        %v1559 = vunpack.c.l.b16 %v534
        %v1560 = vunpack.c.l.b16 %v535
        %v1561 = vunpack.c.l.b16 %v536
        %v1562 = vunpack.c.l.b16 %v537
        %v1563 = vunpack.c.l.b16 %v538
        %v1564 = vunpack.c.l.b16 %v539
        %v1565 = vunpack.c.l.b16 %v540
        %v1566 = vunpack.c.l.b16 %v541
        %v1567 = vunpack.c.l.b16 %v542
        %v1568 = vunpack.c.l.b16 %v543
        %v1569 = vunpack.c.l.b16 %v544
        %v1570 = vunpack.c.l.b16 %v545
        %v1571 = vunpack.c.l.b16 %v546
        %v1572 = vunpack.c.l.b16 %v547
        %v1573 = vunpack.c.l.b16 %v548
        %v1574 = vunpack.c.l.b16 %v549
        %v1575 = vunpack.c.l.b16 %v550
        %v1576 = vunpack.c.l.b16 %v551
        %v1577 = vunpack.c.l.b16 %v552
        %v1578 = vunpack.c.l.b16 %v553
        %v1579 = vunpack.c.l.b16 %v554
        %v1580 = vunpack.c.l.b16 %v555
        %v1581 = vunpack.c.l.b16 %v556
        %v1582 = vunpack.c.l.b16 %v557
        %v1583 = vunpack.c.l.b16 %v558
        %v1584 = vunpack.c.l.b16 %v559
        %v1585 = vunpack.c.l.b16 %v560
        %v1586 = vunpack.c.l.b16 %v561
        %v1587 = vunpack.c.l.b16 %v562
        %v1588 = vunpack.c.l.b16 %v563
        %v1589 = vunpack.c.l.b16 %v564
        %v1590 = vunpack.c.l.b16 %v565
        %v1591 = vunpack.c.l.b16 %v566
        %v1592 = vunpack.c.l.b16 %v567
        %v1593 = vunpack.c.l.b16 %v568
        %v1594 = vunpack.c.l.b16 %v569
        %v1595 = vunpack.c.l.b16 %v570
        %v1596 = vunpack.c.l.b16 %v571
        %v1597 = vunpack.c.l.b16 %v572
        %v1598 = vunpack.c.l.b16 %v573
        %v1599 = vunpack.c.l.b16 %v574
        %v1600 = vunpack.c.l.b16 %v575
        %v1601 = vunpack.c.l.b16 %v576
        %v1602 = vunpack.c.l.b16 %v577
        %v1603 = vunpack.c.l.b16 %v578
        %v1604 = vunpack.c.l.b16 %v579
        %v1605 = vunpack.c.l.b16 %v580
        %v1606 = vunpack.c.l.b16 %v581
        %v1607 = vunpack.c.l.b16 %v582
        %v1608 = vunpack.c.l.b16 %v583
        %v1609 = vunpack.c.l.b16 %v584
        %v1610 = vunpack.c.l.b16 %v585
        %v1611 = vunpack.c.l.b16 %v586
        %v1612 = vunpack.c.l.b16 %v587
        %v1613 = vunpack.c.l.b16 %v588
        %v1614 = vunpack.c.l.b16 %v589
        %v1615 = vunpack.c.l.b16 %v590
        %v1616 = vunpack.c.l.b16 %v591
        %v1617 = vunpack.c.l.b16 %v592
        %v1618 = vunpack.c.l.b16 %v593
        %v1619 = vunpack.c.l.b16 %v594
        %v1620 = vunpack.c.l.b16 %v595
        %v1621 = vunpack.c.l.b16 %v596
        %v1622 = vunpack.c.l.b16 %v597
        %v1623 = vunpack.c.l.b16 %v598
        %v1624 = vunpack.c.l.b16 %v599
        %v1625 = vunpack.c.l.b16 %v600
        %v1626 = vunpack.c.l.b16 %v601
        %v1627 = vunpack.c.l.b16 %v602
        %v1628 = vunpack.c.l.b16 %v603
        %v1629 = vunpack.c.l.b16 %v604
        %v1630 = vunpack.c.l.b16 %v605
        %v1631 = vunpack.c.l.b16 %v606
        %v1632 = vunpack.c.l.b16 %v607
        %v1633 = vunpack.c.l.b16 %v608
        %v1634 = vunpack.c.l.b16 %v609
        %v1635 = vunpack.c.l.b16 %v610
        %v1636 = vunpack.c.l.b16 %v611
        %v1637 = vunpack.c.l.b16 %v612
        %v1638 = vunpack.c.l.b16 %v613
        %v1639 = vunpack.c.l.b16 %v614
        %v1640 = vunpack.c.l.b16 %v615
        %v1641 = vunpack.c.l.b16 %v616
        %v1642 = vunpack.c.l.b16 %v617
        %v1643 = vunpack.c.l.b16 %v618
        %v1644 = vunpack.c.l.b16 %v619
        %v1645 = vunpack.c.l.b16 %v620
        %v1646 = vunpack.c.l.b16 %v621
        %v1647 = vunpack.c.l.b16 %v622
        %v1648 = vunpack.c.l.b16 %v623
        %v1649 = vunpack.c.l.b16 %v624
        %v1650 = vunpack.c.l.b16 %v625
        %v1651 = vunpack.c.l.b16 %v626
        %v1652 = vunpack.c.l.b16 %v627
        %v1653 = vunpack.c.l.b16 %v628
        %v1654 = vunpack.c.l.b16 %v629
        %v1655 = vunpack.c.l.b16 %v630
        %v1656 = vunpack.c.l.b16 %v631
        %v1657 = vunpack.c.l.b16 %v632
        %v1658 = vunpack.c.l.b16 %v633
        %v1659 = vunpack.c.l.b16 %v634
        %v1660 = vunpack.c.l.b16 %v635
        %v1661 = vunpack.c.l.b16 %v636
        %v1662 = vunpack.c.l.b16 %v637
        %v1663 = vunpack.c.l.b16 %v638
        %v1664 = vunpack.c.l.b16 %v639
        %v1665 = vunpack.c.l.b16 %v640
        %v1666 = vunpack.c.l.b16 %v641
        %v1667 = vunpack.c.l.b16 %v642
        %v1668 = vunpack.c.l.b16 %v643
        %v1669 = vunpack.c.l.b16 %v644
        %v1670 = vunpack.c.l.b16 %v645
        %v1671 = vunpack.c.l.b16 %v646
        %v1672 = vunpack.c.l.b16 %v647
        %v1673 = vunpack.c.l.b16 %v648
        %v1674 = vunpack.c.l.b16 %v649
        %v1675 = vunpack.c.l.b16 %v650
        %v1676 = vunpack.c.l.b16 %v651
        %v1677 = vunpack.c.l.b16 %v652
        %v1678 = vunpack.c.l.b16 %v653
        %v1679 = vunpack.c.l.b16 %v654
        %v1680 = vunpack.c.l.b16 %v655
        %v1681 = vunpack.c.l.b16 %v656
        %v1682 = vunpack.c.l.b16 %v657
        %v1683 = vunpack.c.l.b16 %v658
        %v1684 = vunpack.c.l.b16 %v659
        %v1685 = vunpack.c.l.b16 %v660
        %v1686 = vunpack.c.l.b16 %v661
        %v1687 = vunpack.c.l.b16 %v662
        %v1688 = vunpack.c.l.b16 %v663
        %v1689 = vunpack.c.l.b16 %v664
        %v1690 = vunpack.c.l.b16 %v665
        %v1691 = vunpack.c.l.b16 %v666
        %v1692 = vunpack.c.l.b16 %v667
        %v1693 = vunpack.c.l.b16 %v668
        %v1694 = vunpack.c.l.b16 %v669
        %v1695 = vunpack.c.l.b16 %v670
        %v1696 = vunpack.c.l.b16 %v671
        %v1697 = vunpack.c.l.b16 %v672
        %v1698 = vunpack.c.l.b16 %v673
        %v1699 = vunpack.c.l.b16 %v674
        %v1700 = vunpack.c.l.b16 %v675
        %v1701 = vunpack.c.l.b16 %v676
        %v1702 = vunpack.c.l.b16 %v677
        %v1703 = vunpack.c.l.b16 %v678
        %v1704 = vunpack.c.l.b16 %v679
        %v1705 = vunpack.c.l.b16 %v680
        %v1706 = vunpack.c.l.b16 %v681
        %v1707 = vunpack.c.l.b16 %v682
        %v1708 = vunpack.c.l.b16 %v683
        %v1709 = vunpack.c.l.b16 %v684
        %v1710 = vunpack.c.l.b16 %v685
        %v1711 = vunpack.c.l.b16 %v686
        %v1712 = vunpack.c.l.b16 %v687
        %v1713 = vunpack.c.l.b16 %v688
        %v1714 = vunpack.c.l.b16 %v689
        %v1715 = vunpack.c.l.b16 %v690
        %v1716 = vunpack.c.l.b16 %v691
        %v1717 = vunpack.c.l.b16 %v692
        %v1718 = vunpack.c.l.b16 %v693
        %v1719 = vunpack.c.l.b16 %v694
        %v1720 = vunpack.c.l.b16 %v695
        %v1721 = vunpack.c.l.b16 %v696
        %v1722 = vunpack.c.l.b16 %v697
        %v1723 = vunpack.c.l.b16 %v698
        %v1724 = vunpack.c.l.b16 %v699
        %v1725 = vunpack.c.l.b16 %v700
        %v1726 = vunpack.c.l.b16 %v701
        %v1727 = vunpack.c.l.b16 %v702
        %v1728 = vunpack.c.l.b16 %v703
        %v1729 = vunpack.c.l.b16 %v704
        %v1730 = vunpack.c.l.b16 %v705
        %v1731 = vunpack.c.l.b16 %v706
        %v1732 = vunpack.c.l.b16 %v707
        %v1733 = vunpack.c.l.b16 %v708
        %v1734 = vunpack.c.l.b16 %v709
        %v1735 = vunpack.c.l.b16 %v710
        %v1736 = vunpack.c.l.b16 %v711
        %v1737 = vunpack.c.l.b16 %v712
        %v1738 = vunpack.c.l.b16 %v713
        %v1739 = vunpack.c.l.b16 %v714
        %v1740 = vunpack.c.l.b16 %v715
        %v1741 = vunpack.c.l.b16 %v716
        %v1742 = vunpack.c.l.b16 %v717
        %v1743 = vunpack.c.l.b16 %v718
        %v1744 = vunpack.c.l.b16 %v719
        %v1745 = vunpack.c.l.b16 %v720
        %v1746 = vunpack.c.l.b16 %v721
        %v1747 = vunpack.c.l.b16 %v722
        %v1748 = vunpack.c.l.b16 %v723
        %v1749 = vunpack.c.l.b16 %v724
        %v1750 = vunpack.c.l.b16 %v725
        %v1751 = vunpack.c.l.b16 %v726
        %v1752 = vunpack.c.l.b16 %v727
        %v1753 = vunpack.c.l.b16 %v728
        %v1754 = vunpack.c.l.b16 %v729
        %v1755 = vunpack.c.l.b16 %v730
        %v1756 = vunpack.c.l.b16 %v731
        %v1757 = vunpack.c.l.b16 %v732
        %v1758 = vunpack.c.l.b16 %v733
        %v1759 = vunpack.c.l.b16 %v734
        %v1760 = vunpack.c.l.b16 %v735
        %v1761 = vunpack.c.l.b16 %v736
        %v1762 = vunpack.c.l.b16 %v737
        %v1763 = vunpack.c.l.b16 %v738
        %v1764 = vunpack.c.l.b16 %v739
        %v1765 = vunpack.c.l.b16 %v740
        %v1766 = vunpack.c.l.b16 %v741
        %v1767 = vunpack.c.l.b16 %v742
        %v1768 = vunpack.c.l.b16 %v743
        %v1769 = vpack.c.b16 %v1258, %v1257
        %v1770 = vpack.c.b16 %v1260, %v1259
        %v1771 = vpack.c.b16 %v1262, %v1261
        %v1772 = vpack.c.b16 %v1264, %v1263
        %v1773 = vpack.c.b16 %v1266, %v1265
        %v1774 = vpack.c.b16 %v1268, %v1267
        %v1775 = vpack.c.b16 %v1270, %v1269
        %v1776 = vpack.c.b16 %v1272, %v1271
        %v1777 = vpack.c.b16 %v1274, %v1273
        %v1778 = vpack.c.b16 %v1276, %v1275
        %v1779 = vpack.c.b16 %v1278, %v1277
        %v1780 = vpack.c.b16 %v1280, %v1279
        %v1781 = vpack.c.b16 %v1282, %v1281
        %v1782 = vpack.c.b16 %v1284, %v1283
        %v1783 = vpack.c.b16 %v1286, %v1285
        %v1784 = vpack.c.b16 %v1288, %v1287
        %v1785 = vpack.c.b16 %v1290, %v1289
        %v1786 = vpack.c.b16 %v1292, %v1291
        %v1787 = vpack.c.b16 %v1294, %v1293
        %v1788 = vpack.c.b16 %v1296, %v1295
        %v1789 = vpack.c.b16 %v1298, %v1297
        %v1790 = vpack.c.b16 %v1300, %v1299
        %v1791 = vpack.c.b16 %v1302, %v1301
        %v1792 = vpack.c.b16 %v1304, %v1303
        %v1793 = vpack.c.b16 %v1306, %v1305
        %v1794 = vpack.c.b16 %v1308, %v1307
        %v1795 = vpack.c.b16 %v1310, %v1309
        %v1796 = vpack.c.b16 %v1312, %v1311
        %v1797 = vpack.c.b16 %v1314, %v1313
        %v1798 = vpack.c.b16 %v1316, %v1315
        %v1799 = vpack.c.b16 %v1318, %v1317
        %v1800 = vpack.c.b16 %v1320, %v1319
        %v1801 = vpack.c.b16 %v1322, %v1321
        %v1802 = vpack.c.b16 %v1324, %v1323
        %v1803 = vpack.c.b16 %v1326, %v1325
        %v1804 = vpack.c.b16 %v1328, %v1327
        %v1805 = vpack.c.b16 %v1330, %v1329
        %v1806 = vpack.c.b16 %v1332, %v1331
        %v1807 = vpack.c.b16 %v1334, %v1333
        %v1808 = vpack.c.b16 %v1336, %v1335
        %v1809 = vpack.c.b16 %v1338, %v1337
        %v1810 = vpack.c.b16 %v1340, %v1339
        %v1811 = vpack.c.b16 %v1342, %v1341
        %v1812 = vpack.c.b16 %v1344, %v1343
        %v1813 = vpack.c.b16 %v1346, %v1345
        %v1814 = vpack.c.b16 %v1348, %v1347
        %v1815 = vpack.c.b16 %v1350, %v1349
        %v1816 = vpack.c.b16 %v1352, %v1351
        %v1817 = vpack.c.b16 %v1354, %v1353
        %v1818 = vpack.c.b16 %v1356, %v1355
        %v1819 = vpack.c.b16 %v1358, %v1357
        %v1820 = vpack.c.b16 %v1360, %v1359
        %v1821 = vpack.c.b16 %v1362, %v1361
        %v1822 = vpack.c.b16 %v1364, %v1363
        %v1823 = vpack.c.b16 %v1366, %v1365
        %v1824 = vpack.c.b16 %v1368, %v1367
        %v1825 = vpack.c.b16 %v1370, %v1369
        %v1826 = vpack.c.b16 %v1372, %v1371
        %v1827 = vpack.c.b16 %v1374, %v1373
        %v1828 = vpack.c.b16 %v1376, %v1375
        %v1829 = vpack.c.b16 %v1378, %v1377
        %v1830 = vpack.c.b16 %v1380, %v1379
        %v1831 = vpack.c.b16 %v1382, %v1381
        %v1832 = vpack.c.b16 %v1384, %v1383
        %v1833 = vpack.c.b16 %v1386, %v1385
        %v1834 = vpack.c.b16 %v1388, %v1387
        %v1835 = vpack.c.b16 %v1390, %v1389
        %v1836 = vpack.c.b16 %v1392, %v1391
        %v1837 = vpack.c.b16 %v1394, %v1393
        %v1838 = vpack.c.b16 %v1396, %v1395
        %v1839 = vpack.c.b16 %v1398, %v1397
        %v1840 = vpack.c.b16 %v1400, %v1399
        %v1841 = vpack.c.b16 %v1402, %v1401
        %v1842 = vpack.c.b16 %v1404, %v1403
        %v1843 = vpack.c.b16 %v1406, %v1405
        %v1844 = vpack.c.b16 %v1408, %v1407
        %v1845 = vpack.c.b16 %v1410, %v1409
        %v1846 = vpack.c.b16 %v1412, %v1411
        %v1847 = vpack.c.b16 %v1414, %v1413
        %v1848 = vpack.c.b16 %v1416, %v1415
        %v1849 = vpack.c.b16 %v1418, %v1417
        %v1850 = vpack.c.b16 %v1420, %v1419
        %v1851 = vpack.c.b16 %v1422, %v1421
        %v1852 = vpack.c.b16 %v1424, %v1423
        %v1853 = vpack.c.b16 %v1426, %v1425
        %v1854 = vpack.c.b16 %v1428, %v1427
        %v1855 = vpack.c.b16 %v1430, %v1429
        %v1856 = vpack.c.b16 %v1432, %v1431
        %v1857 = vpack.c.b16 %v1434, %v1433
        %v1858 = vpack.c.b16 %v1436, %v1435
        %v1859 = vpack.c.b16 %v1438, %v1437
        %v1860 = vpack.c.b16 %v1440, %v1439
        %v1861 = vpack.c.b16 %v1442, %v1441
        %v1862 = vpack.c.b16 %v1444, %v1443
        %v1863 = vpack.c.b16 %v1446, %v1445
        %v1864 = vpack.c.b16 %v1448, %v1447
        %v1865 = vpack.c.b16 %v1450, %v1449
        %v1866 = vpack.c.b16 %v1452, %v1451
        %v1867 = vpack.c.b16 %v1454, %v1453
        %v1868 = vpack.c.b16 %v1456, %v1455
        %v1869 = vpack.c.b16 %v1458, %v1457
        %v1870 = vpack.c.b16 %v1460, %v1459
        %v1871 = vpack.c.b16 %v1462, %v1461
        %v1872 = vpack.c.b16 %v1464, %v1463
        %v1873 = vpack.c.b16 %v1466, %v1465
        %v1874 = vpack.c.b16 %v1468, %v1467
        %v1875 = vpack.c.b16 %v1470, %v1469
        %v1876 = vpack.c.b16 %v1472, %v1471
        %v1877 = vpack.c.b16 %v1474, %v1473
        %v1878 = vpack.c.b16 %v1476, %v1475
        %v1879 = vpack.c.b16 %v1478, %v1477
        %v1880 = vpack.c.b16 %v1480, %v1479
        %v1881 = vpack.c.b16 %v1482, %v1481
        %v1882 = vpack.c.b16 %v1484, %v1483
        %v1883 = vpack.c.b16 %v1486, %v1485
        %v1884 = vpack.c.b16 %v1488, %v1487
        %v1885 = vpack.c.b16 %v1490, %v1489
        %v1886 = vpack.c.b16 %v1492, %v1491
        %v1887 = vpack.c.b16 %v1494, %v1493
        %v1888 = vpack.c.b16 %v1496, %v1495
        %v1889 = vpack.c.b16 %v1498, %v1497
        %v1890 = vpack.c.b16 %v1500, %v1499
        %v1891 = vpack.c.b16 %v1502, %v1501
        %v1892 = vpack.c.b16 %v1504, %v1503
        %v1893 = vpack.c.b16 %v1506, %v1505
        %v1894 = vpack.c.b16 %v1508, %v1507
        %v1895 = vpack.c.b16 %v1510, %v1509
        %v1896 = vpack.c.b16 %v1512, %v1511
        %v1897 = vpack.c.b16 %v1514, %v1513
        %v1898 = vpack.c.b16 %v1516, %v1515
        %v1899 = vpack.c.b16 %v1518, %v1517
        %v1900 = vpack.c.b16 %v1520, %v1519
        %v1901 = vpack.c.b16 %v1522, %v1521
        %v1902 = vpack.c.b16 %v1524, %v1523
        %v1903 = vpack.c.b16 %v1526, %v1525
        %v1904 = vpack.c.b16 %v1528, %v1527
        %v1905 = vpack.c.b16 %v1530, %v1529
        %v1906 = vpack.c.b16 %v1532, %v1531
        %v1907 = vpack.c.b16 %v1534, %v1533
        %v1908 = vpack.c.b16 %v1536, %v1535
        %v1909 = vpack.c.b16 %v1538, %v1537
        %v1910 = vpack.c.b16 %v1540, %v1539
        %v1911 = vpack.c.b16 %v1542, %v1541
        %v1912 = vpack.c.b16 %v1544, %v1543
        %v1913 = vpack.c.b16 %v1546, %v1545
        %v1914 = vpack.c.b16 %v1548, %v1547
        %v1915 = vpack.c.b16 %v1550, %v1549
        %v1916 = vpack.c.b16 %v1552, %v1551
        %v1917 = vpack.c.b16 %v1554, %v1553
        %v1918 = vpack.c.b16 %v1556, %v1555
        %v1919 = vpack.c.b16 %v1558, %v1557
        %v1920 = vpack.c.b16 %v1560, %v1559
        %v1921 = vpack.c.b16 %v1562, %v1561
        %v1922 = vpack.c.b16 %v1564, %v1563
        %v1923 = vpack.c.b16 %v1566, %v1565
        %v1924 = vpack.c.b16 %v1568, %v1567
        %v1925 = vpack.c.b16 %v1570, %v1569
        %v1926 = vpack.c.b16 %v1572, %v1571
        %v1927 = vpack.c.b16 %v1574, %v1573
        %v1928 = vpack.c.b16 %v1576, %v1575
        %v1929 = vpack.c.b16 %v1578, %v1577
        %v1930 = vpack.c.b16 %v1580, %v1579
        %v1931 = vpack.c.b16 %v1582, %v1581
        %v1932 = vpack.c.b16 %v1584, %v1583
        %v1933 = vpack.c.b16 %v1586, %v1585
        %v1934 = vpack.c.b16 %v1588, %v1587
        %v1935 = vpack.c.b16 %v1590, %v1589
        %v1936 = vpack.c.b16 %v1592, %v1591
        %v1937 = vpack.c.b16 %v1594, %v1593
        %v1938 = vpack.c.b16 %v1596, %v1595
        %v1939 = vpack.c.b16 %v1598, %v1597
        %v1940 = vpack.c.b16 %v1600, %v1599
        %v1941 = vpack.c.b16 %v1602, %v1601
        %v1942 = vpack.c.b16 %v1604, %v1603
        %v1943 = vpack.c.b16 %v1606, %v1605
        %v1944 = vpack.c.b16 %v1608, %v1607
        %v1945 = vpack.c.b16 %v1610, %v1609
        %v1946 = vpack.c.b16 %v1612, %v1611
        %v1947 = vpack.c.b16 %v1614, %v1613
        %v1948 = vpack.c.b16 %v1616, %v1615
        %v1949 = vpack.c.b16 %v1618, %v1617
        %v1950 = vpack.c.b16 %v1620, %v1619
        %v1951 = vpack.c.b16 %v1622, %v1621
        %v1952 = vpack.c.b16 %v1624, %v1623
        %v1953 = vpack.c.b16 %v1626, %v1625
        %v1954 = vpack.c.b16 %v1628, %v1627
        %v1955 = vpack.c.b16 %v1630, %v1629
        %v1956 = vpack.c.b16 %v1632, %v1631
        %v1957 = vpack.c.b16 %v1634, %v1633
        %v1958 = vpack.c.b16 %v1636, %v1635
        %v1959 = vpack.c.b16 %v1638, %v1637
        %v1960 = vpack.c.b16 %v1640, %v1639
        %v1961 = vpack.c.b16 %v1642, %v1641
        %v1962 = vpack.c.b16 %v1644, %v1643
        %v1963 = vpack.c.b16 %v1646, %v1645
        %v1964 = vpack.c.b16 %v1648, %v1647
        %v1965 = vpack.c.b16 %v1650, %v1649
        %v1966 = vpack.c.b16 %v1652, %v1651
        %v1967 = vpack.c.b16 %v1654, %v1653
        %v1968 = vpack.c.b16 %v1656, %v1655
        %v1969 = vpack.c.b16 %v1658, %v1657
        %v1970 = vpack.c.b16 %v1660, %v1659
        %v1971 = vpack.c.b16 %v1662, %v1661
        %v1972 = vpack.c.b16 %v1664, %v1663
        %v1973 = vpack.c.b16 %v1666, %v1665
        %v1974 = vpack.c.b16 %v1668, %v1667
        %v1975 = vpack.c.b16 %v1670, %v1669
        %v1976 = vpack.c.b16 %v1672, %v1671
        %v1977 = vpack.c.b16 %v1674, %v1673
        %v1978 = vpack.c.b16 %v1676, %v1675
        %v1979 = vpack.c.b16 %v1678, %v1677
        %v1980 = vpack.c.b16 %v1680, %v1679
        %v1981 = vpack.c.b16 %v1682, %v1681
        %v1982 = vpack.c.b16 %v1684, %v1683
        %v1983 = vpack.c.b16 %v1686, %v1685
        %v1984 = vpack.c.b16 %v1688, %v1687
        %v1985 = vpack.c.b16 %v1690, %v1689
        %v1986 = vpack.c.b16 %v1692, %v1691
        %v1987 = vpack.c.b16 %v1694, %v1693
        %v1988 = vpack.c.b16 %v1696, %v1695
        %v1989 = vpack.c.b16 %v1698, %v1697
        %v1990 = vpack.c.b16 %v1700, %v1699
        %v1991 = vpack.c.b16 %v1702, %v1701
        %v1992 = vpack.c.b16 %v1704, %v1703
        %v1993 = vpack.c.b16 %v1706, %v1705
        %v1994 = vpack.c.b16 %v1708, %v1707
        %v1995 = vpack.c.b16 %v1710, %v1709
        %v1996 = vpack.c.b16 %v1712, %v1711
        %v1997 = vpack.c.b16 %v1714, %v1713
        %v1998 = vpack.c.b16 %v1716, %v1715
        %v1999 = vpack.c.b16 %v1718, %v1717
        %v2000 = vpack.c.b16 %v1720, %v1719
        %v2001 = vpack.c.b16 %v1722, %v1721
        %v2002 = vpack.c.b16 %v1724, %v1723
        %v2003 = vpack.c.b16 %v1726, %v1725
        %v2004 = vpack.c.b16 %v1728, %v1727
        %v2005 = vpack.c.b16 %v1730, %v1729
        %v2006 = vpack.c.b16 %v1732, %v1731
        %v2007 = vpack.c.b16 %v1734, %v1733
        %v2008 = vpack.c.b16 %v1736, %v1735
        %v2009 = vpack.c.b16 %v1738, %v1737
        %v2010 = vpack.c.b16 %v1740, %v1739
        %v2011 = vpack.c.b16 %v1742, %v1741
        %v2012 = vpack.c.b16 %v1744, %v1743
        %v2013 = vpack.c.b16 %v1746, %v1745
        %v2014 = vpack.c.b16 %v1748, %v1747
        %v2015 = vpack.c.b16 %v1750, %v1749
        %v2016 = vpack.c.b16 %v1752, %v1751
        %v2017 = vpack.c.b16 %v1754, %v1753
        %v2018 = vpack.c.b16 %v1756, %v1755
        %v2019 = vpack.c.b16 %v1758, %v1757
        %v2020 = vpack.c.b16 %v1760, %v1759
        %v2021 = vpack.c.b16 %v1762, %v1761
        %v2022 = vpack.c.b16 %v1764, %v1763
        %v2023 = vpack.c.b16 %v1766, %v1765
        %v2024 = vpack.c.b16 %v1768, %v1767
        %vm2025 = vcmask 64512
        %v2027 = vsel %vm2025, %v1769, 0
        %v2030 = vsel %vm2025, %v1770, 0
        %v2033 = vsel %vm2025, %v1771, 0
        %v2036 = vsel %vm2025, %v1772, 0
        %v2039 = vsel %vm2025, %v1773, 0
        %v2042 = vsel %vm2025, %v1774, 0
        %v2045 = vsel %vm2025, %v1775, 0
        %v2048 = vsel %vm2025, %v1776, 0
        %v2051 = vsel %vm2025, %v1777, 0
        %v2054 = vsel %vm2025, %v1778, 0
        %v2057 = vsel %vm2025, %v1779, 0
        %v2060 = vsel %vm2025, %v1780, 0
        %v2063 = vsel %vm2025, %v1781, 0
        %v2066 = vsel %vm2025, %v1782, 0
        %v2069 = vsel %vm2025, %v1783, 0
        %v2072 = vsel %vm2025, %v1784, 0
        %v2075 = vsel %vm2025, %v1785, 0
        %v2078 = vsel %vm2025, %v1786, 0
        %v2081 = vsel %vm2025, %v1787, 0
        %v2084 = vsel %vm2025, %v1788, 0
        %v2087 = vsel %vm2025, %v1789, 0
        %v2090 = vsel %vm2025, %v1790, 0
        %v2093 = vsel %vm2025, %v1791, 0
        %v2096 = vsel %vm2025, %v1792, 0
        %v2099 = vsel %vm2025, %v1793, 0
        %v2102 = vsel %vm2025, %v1794, 0
        %v2105 = vsel %vm2025, %v1795, 0
        %v2108 = vsel %vm2025, %v1796, 0
        %v2111 = vsel %vm2025, %v1797, 0
        %v2114 = vsel %vm2025, %v1798, 0
        %v2117 = vsel %vm2025, %v1799, 0
        %v2120 = vsel %vm2025, %v1800, 0
        %v2123 = vsel %vm2025, %v1801, 0
        %v2126 = vsel %vm2025, %v1802, 0
        %v2129 = vsel %vm2025, %v1803, 0
        %v2132 = vsel %vm2025, %v1804, 0
        %v2135 = vsel %vm2025, %v1805, 0
        %v2138 = vsel %vm2025, %v1806, 0
        %v2141 = vsel %vm2025, %v1807, 0
        %v2144 = vsel %vm2025, %v1808, 0
        %v2147 = vsel %vm2025, %v1809, 0
        %v2150 = vsel %vm2025, %v1810, 0
        %v2153 = vsel %vm2025, %v1811, 0
        %v2156 = vsel %vm2025, %v1812, 0
        %v2159 = vsel %vm2025, %v1813, 0
        %v2162 = vsel %vm2025, %v1814, 0
        %v2165 = vsel %vm2025, %v1815, 0
        %v2168 = vsel %vm2025, %v1816, 0
        %v2171 = vsel %vm2025, %v1817, 0
        %v2174 = vsel %vm2025, %v1818, 0
        %v2177 = vsel %vm2025, %v1819, 0
        %v2180 = vsel %vm2025, %v1820, 0
        %v2183 = vsel %vm2025, %v1821, 0
        %v2186 = vsel %vm2025, %v1822, 0
        %v2189 = vsel %vm2025, %v1823, 0
        %v2192 = vsel %vm2025, %v1824, 0
        %v2195 = vsel %vm2025, %v1825, 0
        %v2198 = vsel %vm2025, %v1826, 0
        %v2201 = vsel %vm2025, %v1827, 0
        %v2204 = vsel %vm2025, %v1828, 0
        %v2207 = vsel %vm2025, %v1829, 0
        %v2210 = vsel %vm2025, %v1830, 0
        %v2213 = vsel %vm2025, %v1831, 0
        %v2216 = vsel %vm2025, %v1832, 0
        %v2219 = vsel %vm2025, %v1833, 0
        %v2222 = vsel %vm2025, %v1834, 0
        %v2225 = vsel %vm2025, %v1835, 0
        %v2228 = vsel %vm2025, %v1836, 0
        %v2231 = vsel %vm2025, %v1837, 0
        %v2234 = vsel %vm2025, %v1838, 0
        %v2237 = vsel %vm2025, %v1839, 0
        %v2240 = vsel %vm2025, %v1840, 0
        %v2243 = vsel %vm2025, %v1841, 0
        %v2246 = vsel %vm2025, %v1842, 0
        %v2249 = vsel %vm2025, %v1843, 0
        %v2252 = vsel %vm2025, %v1844, 0
        %v2255 = vsel %vm2025, %v1845, 0
        %v2258 = vsel %vm2025, %v1846, 0
        %v2261 = vsel %vm2025, %v1847, 0
        %v2264 = vsel %vm2025, %v1848, 0
        %v2267 = vsel %vm2025, %v1849, 0
        %v2270 = vsel %vm2025, %v1850, 0
        %v2273 = vsel %vm2025, %v1851, 0
        %v2276 = vsel %vm2025, %v1852, 0
        %v2279 = vsel %vm2025, %v1853, 0
        %v2282 = vsel %vm2025, %v1854, 0
        %v2285 = vsel %vm2025, %v1855, 0
        %v2288 = vsel %vm2025, %v1856, 0
        %v2291 = vsel %vm2025, %v1857, 0
        %v2294 = vsel %vm2025, %v1858, 0
        %v2297 = vsel %vm2025, %v1859, 0
        %v2300 = vsel %vm2025, %v1860, 0
        %v2303 = vsel %vm2025, %v1861, 0
        %v2306 = vsel %vm2025, %v1862, 0
        %v2309 = vsel %vm2025, %v1863, 0
        %v2312 = vsel %vm2025, %v1864, 0
        %v2315 = vsel %vm2025, %v1865, 0
        %v2318 = vsel %vm2025, %v1866, 0
        %v2321 = vsel %vm2025, %v1867, 0
        %v2324 = vsel %vm2025, %v1868, 0
        %v2327 = vsel %vm2025, %v1869, 0
        %v2330 = vsel %vm2025, %v1870, 0
        %v2333 = vsel %vm2025, %v1871, 0
        %v2336 = vsel %vm2025, %v1872, 0
        %v2339 = vsel %vm2025, %v1873, 0
        %v2342 = vsel %vm2025, %v1874, 0
        %v2345 = vsel %vm2025, %v1875, 0
        %v2348 = vsel %vm2025, %v1876, 0
        %v2351 = vsel %vm2025, %v1877, 0
        %v2354 = vsel %vm2025, %v1878, 0
        %v2357 = vsel %vm2025, %v1879, 0
        %v2360 = vsel %vm2025, %v1880, 0
        %v2363 = vsel %vm2025, %v1881, 0
        %v2366 = vsel %vm2025, %v1882, 0
        %v2369 = vsel %vm2025, %v1883, 0
        %v2372 = vsel %vm2025, %v1884, 0
        %v2375 = vsel %vm2025, %v1885, 0
        %v2378 = vsel %vm2025, %v1886, 0
        %v2381 = vsel %vm2025, %v1887, 0
        %v2384 = vsel %vm2025, %v1888, 0
        %v2387 = vsel %vm2025, %v1889, 0
        %v2390 = vsel %vm2025, %v1890, 0
        %v2393 = vsel %vm2025, %v1891, 0
        %v2396 = vsel %vm2025, %v1892, 0
        %v2399 = vsel %vm2025, %v1893, 0
        %v2402 = vsel %vm2025, %v1894, 0
        %v2405 = vsel %vm2025, %v1895, 0
        %v2408 = vsel %vm2025, %v1896, 0
        %v2411 = vsel %vm2025, %v1897, 0
        %v2414 = vsel %vm2025, %v1898, 0
        %v2417 = vsel %vm2025, %v1899, 0
        %v2420 = vsel %vm2025, %v1900, 0
        %v2423 = vsel %vm2025, %v1901, 0
        %v2426 = vsel %vm2025, %v1902, 0
        %v2429 = vsel %vm2025, %v1903, 0
        %v2432 = vsel %vm2025, %v1904, 0
        %v2435 = vsel %vm2025, %v1905, 0
        %v2438 = vsel %vm2025, %v1906, 0
        %v2441 = vsel %vm2025, %v1907, 0
        %v2444 = vsel %vm2025, %v1908, 0
        %v2447 = vsel %vm2025, %v1909, 0
        %v2450 = vsel %vm2025, %v1910, 0
        %v2453 = vsel %vm2025, %v1911, 0
        %v2456 = vsel %vm2025, %v1912, 0
        %v2459 = vsel %vm2025, %v1913, 0
        %v2462 = vsel %vm2025, %v1914, 0
        %v2465 = vsel %vm2025, %v1915, 0
        %v2468 = vsel %vm2025, %v1916, 0
        %v2471 = vsel %vm2025, %v1917, 0
        %v2474 = vsel %vm2025, %v1918, 0
        %v2477 = vsel %vm2025, %v1919, 0
        %v2480 = vsel %vm2025, %v1920, 0
        %v2483 = vsel %vm2025, %v1921, 0
        %v2486 = vsel %vm2025, %v1922, 0
        %v2489 = vsel %vm2025, %v1923, 0
        %v2492 = vsel %vm2025, %v1924, 0
        %v2495 = vsel %vm2025, %v1925, 0
        %v2498 = vsel %vm2025, %v1926, 0
        %v2501 = vsel %vm2025, %v1927, 0
        %v2504 = vsel %vm2025, %v1928, 0
        %v2507 = vsel %vm2025, %v1929, 0
        %v2510 = vsel %vm2025, %v1930, 0
        %v2513 = vsel %vm2025, %v1931, 0
        %v2516 = vsel %vm2025, %v1932, 0
        %v2519 = vsel %vm2025, %v1933, 0
        %v2522 = vsel %vm2025, %v1934, 0
        %v2525 = vsel %vm2025, %v1935, 0
        %v2528 = vsel %vm2025, %v1936, 0
        %v2531 = vsel %vm2025, %v1937, 0
        %v2534 = vsel %vm2025, %v1938, 0
        %v2537 = vsel %vm2025, %v1939, 0
        %v2540 = vsel %vm2025, %v1940, 0
        %v2543 = vsel %vm2025, %v1941, 0
        %v2546 = vsel %vm2025, %v1942, 0
        %v2549 = vsel %vm2025, %v1943, 0
        %v2552 = vsel %vm2025, %v1944, 0
        %v2555 = vsel %vm2025, %v1945, 0
        %v2558 = vsel %vm2025, %v1946, 0
        %v2561 = vsel %vm2025, %v1947, 0
        %v2564 = vsel %vm2025, %v1948, 0
        %v2567 = vsel %vm2025, %v1949, 0
        %v2570 = vsel %vm2025, %v1950, 0
        %v2573 = vsel %vm2025, %v1951, 0
        %v2576 = vsel %vm2025, %v1952, 0
        %v2579 = vsel %vm2025, %v1953, 0
        %v2582 = vsel %vm2025, %v1954, 0
        %v2585 = vsel %vm2025, %v1955, 0
        %v2588 = vsel %vm2025, %v1956, 0
        %v2591 = vsel %vm2025, %v1957, 0
        %v2594 = vsel %vm2025, %v1958, 0
        %v2597 = vsel %vm2025, %v1959, 0
        %v2600 = vsel %vm2025, %v1960, 0
        %v2603 = vsel %vm2025, %v1961, 0
        %v2606 = vsel %vm2025, %v1962, 0
        %v2609 = vsel %vm2025, %v1963, 0
        %v2612 = vsel %vm2025, %v1964, 0
        %v2615 = vsel %vm2025, %v1965, 0
        %v2618 = vsel %vm2025, %v1966, 0
        %v2621 = vsel %vm2025, %v1967, 0
        %v2624 = vsel %vm2025, %v1968, 0
        %v2627 = vsel %vm2025, %v1969, 0
        %v2630 = vsel %vm2025, %v1970, 0
        %v2633 = vsel %vm2025, %v1971, 0
        %v2636 = vsel %vm2025, %v1972, 0
        %v2639 = vsel %vm2025, %v1973, 0
        %v2642 = vsel %vm2025, %v1974, 0
        %v2645 = vsel %vm2025, %v1975, 0
        %v2648 = vsel %vm2025, %v1976, 0
        %v2651 = vsel %vm2025, %v1977, 0
        %v2654 = vsel %vm2025, %v1978, 0
        %v2657 = vsel %vm2025, %v1979, 0
        %v2660 = vsel %vm2025, %v1980, 0
        %v2663 = vsel %vm2025, %v1981, 0
        %v2666 = vsel %vm2025, %v1982, 0
        %v2669 = vsel %vm2025, %v1983, 0
        %v2672 = vsel %vm2025, %v1984, 0
        %v2675 = vsel %vm2025, %v1985, 0
        %v2678 = vsel %vm2025, %v1986, 0
        %v2681 = vsel %vm2025, %v1987, 0
        %v2684 = vsel %vm2025, %v1988, 0
        %v2687 = vsel %vm2025, %v1989, 0
        %v2690 = vsel %vm2025, %v1990, 0
        %v2693 = vsel %vm2025, %v1991, 0
        %v2696 = vsel %vm2025, %v1992, 0
        %v2699 = vsel %vm2025, %v1993, 0
        %v2702 = vsel %vm2025, %v1994, 0
        %v2705 = vsel %vm2025, %v1995, 0
        %v2708 = vsel %vm2025, %v1996, 0
        %v2711 = vsel %vm2025, %v1997, 0
        %v2714 = vsel %vm2025, %v1998, 0
        %v2717 = vsel %vm2025, %v1999, 0
        %v2720 = vsel %vm2025, %v2000, 0
        %v2723 = vsel %vm2025, %v2001, 0
        %v2726 = vsel %vm2025, %v2002, 0
        %v2729 = vsel %vm2025, %v2003, 0
        %v2732 = vsel %vm2025, %v2004, 0
        %v2735 = vsel %vm2025, %v2005, 0
        %v2738 = vsel %vm2025, %v2006, 0
        %v2741 = vsel %vm2025, %v2007, 0
        %v2744 = vsel %vm2025, %v2008, 0
        %v2747 = vsel %vm2025, %v2009, 0
        %v2750 = vsel %vm2025, %v2010, 0
        %v2753 = vsel %vm2025, %v2011, 0
        %v2756 = vsel %vm2025, %v2012, 0
        %v2759 = vsel %vm2025, %v2013, 0
        %v2762 = vsel %vm2025, %v2014, 0
        %v2765 = vsel %vm2025, %v2015, 0
        %v2768 = vsel %vm2025, %v2016, 0
        %v2771 = vsel %vm2025, %v2017, 0
        %v2774 = vsel %vm2025, %v2018, 0
        %v2777 = vsel %vm2025, %v2019, 0
        %v2780 = vsel %vm2025, %v2020, 0
        %v2783 = vsel %vm2025, %v2021, 0
        %v2786 = vsel %vm2025, %v2022, 0
        %v2789 = vsel %vm2025, %v2023, 0
        %v2792 = vsel %vm2025, %v2024, 0
        %vm2794 = vcmask 1043456
        %v2796 = vsel %vm2794, %v744, 0
        %2798 = vmatpush.bf16.msra.mxu0 0
        %2799 = vmatpush.bf16.msra.mxu0 0
        %2800 = vmatpush.bf16.msra.mxu0 0
        %2801 = vmatpush.bf16.msra.mxu0 0
        %2802 = vmatpush.bf16.msra.mxu0 0
        %2803 = vmatpush.bf16.msra.mxu0 0
        %2804 = vmatpush.bf16.msra.mxu0 0
        %2805 = vmatpush.bf16.msra.mxu0 %v2796
        %2806 = vmatmul.bf16.gmra.mxu0 %v2027
        %v2807 = vpop.f32.mrf.mxu0
        %v2808 = vadd.f32 0.0, %v2807
        %v2809 = vpop.f32.mrf.mxu0
        %v2810 = vadd.f32 0.0, %v2809
        %2811 = vmatmul.bf16.gmra.mxu0 %v2030
        %v2812 = vpop.f32.mrf.mxu0
        %v2813 = vadd.f32 0.0, %v2812
        %v2814 = vpop.f32.mrf.mxu0
        %v2815 = vadd.f32 0.0, %v2814
        %2816 = vmatmul.bf16.gmra.mxu0 %v2033
        %v2817 = vpop.f32.mrf.mxu0
        %v2818 = vadd.f32 0.0, %v2817
        %v2819 = vpop.f32.mrf.mxu0
        %v2820 = vadd.f32 0.0, %v2819
        %2821 = vmatmul.bf16.gmra.mxu0 %v2036
        %v2822 = vpop.f32.mrf.mxu0
        %v2823 = vadd.f32 0.0, %v2822
        %v2824 = vpop.f32.mrf.mxu0
        %v2825 = vadd.f32 0.0, %v2824
        %2826 = vmatmul.bf16.gmra.mxu0 %v2039
        %v2827 = vpop.f32.mrf.mxu0
        %v2828 = vadd.f32 0.0, %v2827
        %v2829 = vpop.f32.mrf.mxu0
        %v2830 = vadd.f32 0.0, %v2829
        %2831 = vmatmul.bf16.gmra.mxu0 %v2042
        %v2832 = vpop.f32.mrf.mxu0
        %v2833 = vadd.f32 0.0, %v2832
        %v2834 = vpop.f32.mrf.mxu0
        %v2835 = vadd.f32 0.0, %v2834
        %2836 = vmatmul.bf16.gmra.mxu0 %v2045
        %v2837 = vpop.f32.mrf.mxu0
        %v2838 = vadd.f32 0.0, %v2837
        %v2839 = vpop.f32.mrf.mxu0
        %v2840 = vadd.f32 0.0, %v2839
        %2841 = vmatmul.bf16.gmra.mxu0 %v2048
        %v2842 = vpop.f32.mrf.mxu0
        %v2843 = vadd.f32 0.0, %v2842
        %v2844 = vpop.f32.mrf.mxu0
        %v2845 = vadd.f32 0.0, %v2844
        %2846 = vmatmul.bf16.gmra.mxu0 %v2051
        %v2847 = vpop.f32.mrf.mxu0
        %v2848 = vadd.f32 0.0, %v2847
        %v2849 = vpop.f32.mrf.mxu0
        %v2850 = vadd.f32 0.0, %v2849
        %2851 = vmatmul.bf16.gmra.mxu0 %v2054
        %v2852 = vpop.f32.mrf.mxu0
        %v2853 = vadd.f32 0.0, %v2852
        %v2854 = vpop.f32.mrf.mxu0
        %v2855 = vadd.f32 0.0, %v2854
        %2856 = vmatmul.bf16.gmra.mxu0 %v2057
        %v2857 = vpop.f32.mrf.mxu0
        %v2858 = vadd.f32 0.0, %v2857
        %v2859 = vpop.f32.mrf.mxu0
        %v2860 = vadd.f32 0.0, %v2859
        %2861 = vmatmul.bf16.gmra.mxu0 %v2060
        %v2862 = vpop.f32.mrf.mxu0
        %v2863 = vadd.f32 0.0, %v2862
        %v2864 = vpop.f32.mrf.mxu0
        %v2865 = vadd.f32 0.0, %v2864
        %2866 = vmatmul.bf16.gmra.mxu0 %v2063
        %v2867 = vpop.f32.mrf.mxu0
        %v2868 = vadd.f32 0.0, %v2867
        %v2869 = vpop.f32.mrf.mxu0
        %v2870 = vadd.f32 0.0, %v2869
        %2871 = vmatmul.bf16.gmra.mxu0 %v2066
        %v2872 = vpop.f32.mrf.mxu0
        %v2873 = vadd.f32 0.0, %v2872
        %v2874 = vpop.f32.mrf.mxu0
        %v2875 = vadd.f32 0.0, %v2874
        %2876 = vmatmul.bf16.gmra.mxu0 %v2069
        %v2877 = vpop.f32.mrf.mxu0
        %v2878 = vadd.f32 0.0, %v2877
        %v2879 = vpop.f32.mrf.mxu0
        %v2880 = vadd.f32 0.0, %v2879
        %2881 = vmatmul.bf16.gmra.mxu0 %v2072
        %v2882 = vpop.f32.mrf.mxu0
        %v2883 = vadd.f32 0.0, %v2882
        %v2884 = vpop.f32.mrf.mxu0
        %v2885 = vadd.f32 0.0, %v2884
        %2886 = vmatmul.bf16.gmra.mxu0 %v2075
        %v2887 = vpop.f32.mrf.mxu0
        %v2888 = vadd.f32 0.0, %v2887
        %v2889 = vpop.f32.mrf.mxu0
        %v2890 = vadd.f32 0.0, %v2889
        %2891 = vmatmul.bf16.gmra.mxu0 %v2078
        %v2892 = vpop.f32.mrf.mxu0
        %v2893 = vadd.f32 0.0, %v2892
        %v2894 = vpop.f32.mrf.mxu0
        %v2895 = vadd.f32 0.0, %v2894
        %2896 = vmatmul.bf16.gmra.mxu0 %v2081
        %v2897 = vpop.f32.mrf.mxu0
        %v2898 = vadd.f32 0.0, %v2897
        %v2899 = vpop.f32.mrf.mxu0
        %v2900 = vadd.f32 0.0, %v2899
        %2901 = vmatmul.bf16.gmra.mxu0 %v2084
        %v2902 = vpop.f32.mrf.mxu0
        %v2903 = vadd.f32 0.0, %v2902
        %v2904 = vpop.f32.mrf.mxu0
        %v2905 = vadd.f32 0.0, %v2904
        %2906 = vmatmul.bf16.gmra.mxu0 %v2087
        %v2907 = vpop.f32.mrf.mxu0
        %v2908 = vadd.f32 0.0, %v2907
        %v2909 = vpop.f32.mrf.mxu0
        %v2910 = vadd.f32 0.0, %v2909
        %2911 = vmatmul.bf16.gmra.mxu0 %v2090
        %v2912 = vpop.f32.mrf.mxu0
        %v2913 = vadd.f32 0.0, %v2912
        %v2914 = vpop.f32.mrf.mxu0
        %v2915 = vadd.f32 0.0, %v2914
        %2916 = vmatmul.bf16.gmra.mxu0 %v2093
        %v2917 = vpop.f32.mrf.mxu0
        %v2918 = vadd.f32 0.0, %v2917
        %v2919 = vpop.f32.mrf.mxu0
        %v2920 = vadd.f32 0.0, %v2919
        %2921 = vmatmul.bf16.gmra.mxu0 %v2096
        %v2922 = vpop.f32.mrf.mxu0
        %v2923 = vadd.f32 0.0, %v2922
        %v2924 = vpop.f32.mrf.mxu0
        %v2925 = vadd.f32 0.0, %v2924
        %2926 = vmatmul.bf16.gmra.mxu0 %v2099
        %v2927 = vpop.f32.mrf.mxu0
        %v2928 = vadd.f32 0.0, %v2927
        %v2929 = vpop.f32.mrf.mxu0
        %v2930 = vadd.f32 0.0, %v2929
        %2931 = vmatmul.bf16.gmra.mxu0 %v2102
        %v2932 = vpop.f32.mrf.mxu0
        %v2933 = vadd.f32 0.0, %v2932
        %v2934 = vpop.f32.mrf.mxu0
        %v2935 = vadd.f32 0.0, %v2934
        %2936 = vmatmul.bf16.gmra.mxu0 %v2105
        %v2937 = vpop.f32.mrf.mxu0
        %v2938 = vadd.f32 0.0, %v2937
        %v2939 = vpop.f32.mrf.mxu0
        %v2940 = vadd.f32 0.0, %v2939
        %2941 = vmatmul.bf16.gmra.mxu0 %v2108
        %v2942 = vpop.f32.mrf.mxu0
        %v2943 = vadd.f32 0.0, %v2942
        %v2944 = vpop.f32.mrf.mxu0
        %v2945 = vadd.f32 0.0, %v2944
        %2946 = vmatmul.bf16.gmra.mxu0 %v2111
        %v2947 = vpop.f32.mrf.mxu0
        %v2948 = vadd.f32 0.0, %v2947
        %v2949 = vpop.f32.mrf.mxu0
        %v2950 = vadd.f32 0.0, %v2949
        %2951 = vmatmul.bf16.gmra.mxu0 %v2114
        %v2952 = vpop.f32.mrf.mxu0
        %v2953 = vadd.f32 0.0, %v2952
        %v2954 = vpop.f32.mrf.mxu0
        %v2955 = vadd.f32 0.0, %v2954
        %2956 = vmatmul.bf16.gmra.mxu0 %v2117
        %v2957 = vpop.f32.mrf.mxu0
        %v2958 = vadd.f32 0.0, %v2957
        %v2959 = vpop.f32.mrf.mxu0
        %v2960 = vadd.f32 0.0, %v2959
        %2961 = vmatmul.bf16.gmra.mxu0 %v2120
        %v2962 = vpop.f32.mrf.mxu0
        %v2963 = vadd.f32 0.0, %v2962
        %v2964 = vpop.f32.mrf.mxu0
        %v2965 = vadd.f32 0.0, %v2964
        %2966 = vmatmul.bf16.gmra.mxu0 %v2123
        %v2967 = vpop.f32.mrf.mxu0
        %v2968 = vadd.f32 0.0, %v2967
        %v2969 = vpop.f32.mrf.mxu0
        %v2970 = vadd.f32 0.0, %v2969
        %2971 = vmatmul.bf16.gmra.mxu0 %v2126
        %v2972 = vpop.f32.mrf.mxu0
        %v2973 = vadd.f32 0.0, %v2972
        %v2974 = vpop.f32.mrf.mxu0
        %v2975 = vadd.f32 0.0, %v2974
        %2976 = vmatmul.bf16.gmra.mxu0 %v2129
        %v2977 = vpop.f32.mrf.mxu0
        %v2978 = vadd.f32 0.0, %v2977
        %v2979 = vpop.f32.mrf.mxu0
        %v2980 = vadd.f32 0.0, %v2979
        %2981 = vmatmul.bf16.gmra.mxu0 %v2132
        %v2982 = vpop.f32.mrf.mxu0
        %v2983 = vadd.f32 0.0, %v2982
        %v2984 = vpop.f32.mrf.mxu0
        %v2985 = vadd.f32 0.0, %v2984
        %2986 = vmatmul.bf16.gmra.mxu0 %v2135
        %v2987 = vpop.f32.mrf.mxu0
        %v2988 = vadd.f32 0.0, %v2987
        %v2989 = vpop.f32.mrf.mxu0
        %v2990 = vadd.f32 0.0, %v2989
        %2991 = vmatmul.bf16.gmra.mxu0 %v2138
        %v2992 = vpop.f32.mrf.mxu0
        %v2993 = vadd.f32 0.0, %v2992
        %v2994 = vpop.f32.mrf.mxu0
        %v2995 = vadd.f32 0.0, %v2994
        %2996 = vmatmul.bf16.gmra.mxu0 %v2141
        %v2997 = vpop.f32.mrf.mxu0
        %v2998 = vadd.f32 0.0, %v2997
        %v2999 = vpop.f32.mrf.mxu0
        %v3000 = vadd.f32 0.0, %v2999
        %3001 = vmatmul.bf16.gmra.mxu0 %v2144
        %v3002 = vpop.f32.mrf.mxu0
        %v3003 = vadd.f32 0.0, %v3002
        %v3004 = vpop.f32.mrf.mxu0
        %v3005 = vadd.f32 0.0, %v3004
        %3006 = vmatmul.bf16.gmra.mxu0 %v2147
        %v3007 = vpop.f32.mrf.mxu0
        %v3008 = vadd.f32 0.0, %v3007
        %v3009 = vpop.f32.mrf.mxu0
        %v3010 = vadd.f32 0.0, %v3009
        %3011 = vmatmul.bf16.gmra.mxu0 %v2150
        %v3012 = vpop.f32.mrf.mxu0
        %v3013 = vadd.f32 0.0, %v3012
        %v3014 = vpop.f32.mrf.mxu0
        %v3015 = vadd.f32 0.0, %v3014
        %3016 = vmatmul.bf16.gmra.mxu0 %v2153
        %v3017 = vpop.f32.mrf.mxu0
        %v3018 = vadd.f32 0.0, %v3017
        %v3019 = vpop.f32.mrf.mxu0
        %v3020 = vadd.f32 0.0, %v3019
        %3021 = vmatmul.bf16.gmra.mxu0 %v2156
        %v3022 = vpop.f32.mrf.mxu0
        %v3023 = vadd.f32 0.0, %v3022
        %v3024 = vpop.f32.mrf.mxu0
        %v3025 = vadd.f32 0.0, %v3024
        %3026 = vmatmul.bf16.gmra.mxu0 %v2159
        %v3027 = vpop.f32.mrf.mxu0
        %v3028 = vadd.f32 0.0, %v3027
        %v3029 = vpop.f32.mrf.mxu0
        %v3030 = vadd.f32 0.0, %v3029
        %3031 = vmatmul.bf16.gmra.mxu0 %v2162
        %v3032 = vpop.f32.mrf.mxu0
        %v3033 = vadd.f32 0.0, %v3032
        %v3034 = vpop.f32.mrf.mxu0
        %v3035 = vadd.f32 0.0, %v3034
        %3036 = vmatmul.bf16.gmra.mxu0 %v2165
        %v3037 = vpop.f32.mrf.mxu0
        %v3038 = vadd.f32 0.0, %v3037
        %v3039 = vpop.f32.mrf.mxu0
        %v3040 = vadd.f32 0.0, %v3039
        %3041 = vmatmul.bf16.gmra.mxu0 %v2168
        %v3042 = vpop.f32.mrf.mxu0
        %v3043 = vadd.f32 0.0, %v3042
        %v3044 = vpop.f32.mrf.mxu0
        %v3045 = vadd.f32 0.0, %v3044
        %3046 = vmatmul.bf16.gmra.mxu0 %v2171
        %v3047 = vpop.f32.mrf.mxu0
        %v3048 = vadd.f32 0.0, %v3047
        %v3049 = vpop.f32.mrf.mxu0
        %v3050 = vadd.f32 0.0, %v3049
        %3051 = vmatmul.bf16.gmra.mxu0 %v2174
        %v3052 = vpop.f32.mrf.mxu0
        %v3053 = vadd.f32 0.0, %v3052
        %v3054 = vpop.f32.mrf.mxu0
        %v3055 = vadd.f32 0.0, %v3054
        %3056 = vmatmul.bf16.gmra.mxu0 %v2177
        %v3057 = vpop.f32.mrf.mxu0
        %v3058 = vadd.f32 0.0, %v3057
        %v3059 = vpop.f32.mrf.mxu0
        %v3060 = vadd.f32 0.0, %v3059
        %3061 = vmatmul.bf16.gmra.mxu0 %v2180
        %v3062 = vpop.f32.mrf.mxu0
        %v3063 = vadd.f32 0.0, %v3062
        %v3064 = vpop.f32.mrf.mxu0
        %v3065 = vadd.f32 0.0, %v3064
        %3066 = vmatmul.bf16.gmra.mxu0 %v2183
        %v3067 = vpop.f32.mrf.mxu0
        %v3068 = vadd.f32 0.0, %v3067
        %v3069 = vpop.f32.mrf.mxu0
        %v3070 = vadd.f32 0.0, %v3069
        %3071 = vmatmul.bf16.gmra.mxu0 %v2186
        %v3072 = vpop.f32.mrf.mxu0
        %v3073 = vadd.f32 0.0, %v3072
        %v3074 = vpop.f32.mrf.mxu0
        %v3075 = vadd.f32 0.0, %v3074
        %3076 = vmatmul.bf16.gmra.mxu0 %v2189
        %v3077 = vpop.f32.mrf.mxu0
        %v3078 = vadd.f32 0.0, %v3077
        %v3079 = vpop.f32.mrf.mxu0
        %v3080 = vadd.f32 0.0, %v3079
        %3081 = vmatmul.bf16.gmra.mxu0 %v2192
        %v3082 = vpop.f32.mrf.mxu0
        %v3083 = vadd.f32 0.0, %v3082
        %v3084 = vpop.f32.mrf.mxu0
        %v3085 = vadd.f32 0.0, %v3084
        %3086 = vmatmul.bf16.gmra.mxu0 %v2195
        %v3087 = vpop.f32.mrf.mxu0
        %v3088 = vadd.f32 0.0, %v3087
        %v3089 = vpop.f32.mrf.mxu0
        %v3090 = vadd.f32 0.0, %v3089
        %3091 = vmatmul.bf16.gmra.mxu0 %v2198
        %v3092 = vpop.f32.mrf.mxu0
        %v3093 = vadd.f32 0.0, %v3092
        %v3094 = vpop.f32.mrf.mxu0
        %v3095 = vadd.f32 0.0, %v3094
        %3096 = vmatmul.bf16.gmra.mxu0 %v2201
        %v3097 = vpop.f32.mrf.mxu0
        %v3098 = vadd.f32 0.0, %v3097
        %v3099 = vpop.f32.mrf.mxu0
        %v3100 = vadd.f32 0.0, %v3099
        %3101 = vmatmul.bf16.gmra.mxu0 %v2204
        %v3102 = vpop.f32.mrf.mxu0
        %v3103 = vadd.f32 0.0, %v3102
        %v3104 = vpop.f32.mrf.mxu0
        %v3105 = vadd.f32 0.0, %v3104
        %3106 = vmatmul.bf16.gmra.mxu0 %v2207
        %v3107 = vpop.f32.mrf.mxu0
        %v3108 = vadd.f32 0.0, %v3107
        %v3109 = vpop.f32.mrf.mxu0
        %v3110 = vadd.f32 0.0, %v3109
        %3111 = vmatmul.bf16.gmra.mxu0 %v2210
        %v3112 = vpop.f32.mrf.mxu0
        %v3113 = vadd.f32 0.0, %v3112
        %v3114 = vpop.f32.mrf.mxu0
        %v3115 = vadd.f32 0.0, %v3114
        %3116 = vmatmul.bf16.gmra.mxu0 %v2213
        %v3117 = vpop.f32.mrf.mxu0
        %v3118 = vadd.f32 0.0, %v3117
        %v3119 = vpop.f32.mrf.mxu0
        %v3120 = vadd.f32 0.0, %v3119
        %3121 = vmatmul.bf16.gmra.mxu0 %v2216
        %v3122 = vpop.f32.mrf.mxu0
        %v3123 = vadd.f32 0.0, %v3122
        %v3124 = vpop.f32.mrf.mxu0
        %v3125 = vadd.f32 0.0, %v3124
        %3126 = vmatmul.bf16.gmra.mxu0 %v2219
        %v3127 = vpop.f32.mrf.mxu0
        %v3128 = vadd.f32 0.0, %v3127
        %v3129 = vpop.f32.mrf.mxu0
        %v3130 = vadd.f32 0.0, %v3129
        %3131 = vmatmul.bf16.gmra.mxu0 %v2222
        %v3132 = vpop.f32.mrf.mxu0
        %v3133 = vadd.f32 0.0, %v3132
        %v3134 = vpop.f32.mrf.mxu0
        %v3135 = vadd.f32 0.0, %v3134
        %3136 = vmatmul.bf16.gmra.mxu0 %v2225
        %v3137 = vpop.f32.mrf.mxu0
        %v3138 = vadd.f32 0.0, %v3137
        %v3139 = vpop.f32.mrf.mxu0
        %v3140 = vadd.f32 0.0, %v3139
        %3141 = vmatmul.bf16.gmra.mxu0 %v2228
        %v3142 = vpop.f32.mrf.mxu0
        %v3143 = vadd.f32 0.0, %v3142
        %v3144 = vpop.f32.mrf.mxu0
        %v3145 = vadd.f32 0.0, %v3144
        %3146 = vmatmul.bf16.gmra.mxu0 %v2231
        %v3147 = vpop.f32.mrf.mxu0
        %v3148 = vadd.f32 0.0, %v3147
        %v3149 = vpop.f32.mrf.mxu0
        %v3150 = vadd.f32 0.0, %v3149
        %3151 = vmatmul.bf16.gmra.mxu0 %v2234
        %v3152 = vpop.f32.mrf.mxu0
        %v3153 = vadd.f32 0.0, %v3152
        %v3154 = vpop.f32.mrf.mxu0
        %v3155 = vadd.f32 0.0, %v3154
        %3156 = vmatmul.bf16.gmra.mxu0 %v2237
        %v3157 = vpop.f32.mrf.mxu0
        %v3158 = vadd.f32 0.0, %v3157
        %v3159 = vpop.f32.mrf.mxu0
        %v3160 = vadd.f32 0.0, %v3159
        %3161 = vmatmul.bf16.gmra.mxu0 %v2240
        %v3162 = vpop.f32.mrf.mxu0
        %v3163 = vadd.f32 0.0, %v3162
        %v3164 = vpop.f32.mrf.mxu0
        %v3165 = vadd.f32 0.0, %v3164
        %3166 = vmatmul.bf16.gmra.mxu0 %v2243
        %v3167 = vpop.f32.mrf.mxu0
        %v3168 = vadd.f32 0.0, %v3167
        %v3169 = vpop.f32.mrf.mxu0
        %v3170 = vadd.f32 0.0, %v3169
        %3171 = vmatmul.bf16.gmra.mxu0 %v2246
        %v3172 = vpop.f32.mrf.mxu0
        %v3173 = vadd.f32 0.0, %v3172
        %v3174 = vpop.f32.mrf.mxu0
        %v3175 = vadd.f32 0.0, %v3174
        %3176 = vmatmul.bf16.gmra.mxu0 %v2249
        %v3177 = vpop.f32.mrf.mxu0
        %v3178 = vadd.f32 0.0, %v3177
        %v3179 = vpop.f32.mrf.mxu0
        %v3180 = vadd.f32 0.0, %v3179
        %3181 = vmatmul.bf16.gmra.mxu0 %v2252
        %v3182 = vpop.f32.mrf.mxu0
        %v3183 = vadd.f32 0.0, %v3182
        %v3184 = vpop.f32.mrf.mxu0
        %v3185 = vadd.f32 0.0, %v3184
        %3186 = vmatmul.bf16.gmra.mxu0 %v2255
        %v3187 = vpop.f32.mrf.mxu0
        %v3188 = vadd.f32 0.0, %v3187
        %v3189 = vpop.f32.mrf.mxu0
        %v3190 = vadd.f32 0.0, %v3189
        %3191 = vmatmul.bf16.gmra.mxu0 %v2258
        %v3192 = vpop.f32.mrf.mxu0
        %v3193 = vadd.f32 0.0, %v3192
        %v3194 = vpop.f32.mrf.mxu0
        %v3195 = vadd.f32 0.0, %v3194
        %3196 = vmatmul.bf16.gmra.mxu0 %v2261
        %v3197 = vpop.f32.mrf.mxu0
        %v3198 = vadd.f32 0.0, %v3197
        %v3199 = vpop.f32.mrf.mxu0
        %v3200 = vadd.f32 0.0, %v3199
        %3201 = vmatmul.bf16.gmra.mxu0 %v2264
        %v3202 = vpop.f32.mrf.mxu0
        %v3203 = vadd.f32 0.0, %v3202
        %v3204 = vpop.f32.mrf.mxu0
        %v3205 = vadd.f32 0.0, %v3204
        %3206 = vmatmul.bf16.gmra.mxu0 %v2267
        %v3207 = vpop.f32.mrf.mxu0
        %v3208 = vadd.f32 0.0, %v3207
        %v3209 = vpop.f32.mrf.mxu0
        %v3210 = vadd.f32 0.0, %v3209
        %3211 = vmatmul.bf16.gmra.mxu0 %v2270
        %v3212 = vpop.f32.mrf.mxu0
        %v3213 = vadd.f32 0.0, %v3212
        %v3214 = vpop.f32.mrf.mxu0
        %v3215 = vadd.f32 0.0, %v3214
        %3216 = vmatmul.bf16.gmra.mxu0 %v2273
        %v3217 = vpop.f32.mrf.mxu0
        %v3218 = vadd.f32 0.0, %v3217
        %v3219 = vpop.f32.mrf.mxu0
        %v3220 = vadd.f32 0.0, %v3219
        %3221 = vmatmul.bf16.gmra.mxu0 %v2276
        %v3222 = vpop.f32.mrf.mxu0
        %v3223 = vadd.f32 0.0, %v3222
        %v3224 = vpop.f32.mrf.mxu0
        %v3225 = vadd.f32 0.0, %v3224
        %3226 = vmatmul.bf16.gmra.mxu0 %v2279
        %v3227 = vpop.f32.mrf.mxu0
        %v3228 = vadd.f32 0.0, %v3227
        %v3229 = vpop.f32.mrf.mxu0
        %v3230 = vadd.f32 0.0, %v3229
        %3231 = vmatmul.bf16.gmra.mxu0 %v2282
        %v3232 = vpop.f32.mrf.mxu0
        %v3233 = vadd.f32 0.0, %v3232
        %v3234 = vpop.f32.mrf.mxu0
        %v3235 = vadd.f32 0.0, %v3234
        %3236 = vmatmul.bf16.gmra.mxu0 %v2285
        %v3237 = vpop.f32.mrf.mxu0
        %v3238 = vadd.f32 0.0, %v3237
        %v3239 = vpop.f32.mrf.mxu0
        %v3240 = vadd.f32 0.0, %v3239
        %3241 = vmatmul.bf16.gmra.mxu0 %v2288
        %v3242 = vpop.f32.mrf.mxu0
        %v3243 = vadd.f32 0.0, %v3242
        %v3244 = vpop.f32.mrf.mxu0
        %v3245 = vadd.f32 0.0, %v3244
        %3246 = vmatmul.bf16.gmra.mxu0 %v2291
        %v3247 = vpop.f32.mrf.mxu0
        %v3248 = vadd.f32 0.0, %v3247
        %v3249 = vpop.f32.mrf.mxu0
        %v3250 = vadd.f32 0.0, %v3249
        %3251 = vmatmul.bf16.gmra.mxu0 %v2294
        %v3252 = vpop.f32.mrf.mxu0
        %v3253 = vadd.f32 0.0, %v3252
        %v3254 = vpop.f32.mrf.mxu0
        %v3255 = vadd.f32 0.0, %v3254
        %3256 = vmatmul.bf16.gmra.mxu0 %v2297
        %v3257 = vpop.f32.mrf.mxu0
        %v3258 = vadd.f32 0.0, %v3257
        %v3259 = vpop.f32.mrf.mxu0
        %v3260 = vadd.f32 0.0, %v3259
        %3261 = vmatmul.bf16.gmra.mxu0 %v2300
        %v3262 = vpop.f32.mrf.mxu0
        %v3263 = vadd.f32 0.0, %v3262
        %v3264 = vpop.f32.mrf.mxu0
        %v3265 = vadd.f32 0.0, %v3264
        %3266 = vmatmul.bf16.gmra.mxu0 %v2303
        %v3267 = vpop.f32.mrf.mxu0
        %v3268 = vadd.f32 0.0, %v3267
        %v3269 = vpop.f32.mrf.mxu0
        %v3270 = vadd.f32 0.0, %v3269
        %3271 = vmatmul.bf16.gmra.mxu0 %v2306
        %v3272 = vpop.f32.mrf.mxu0
        %v3273 = vadd.f32 0.0, %v3272
        %v3274 = vpop.f32.mrf.mxu0
        %v3275 = vadd.f32 0.0, %v3274
        %3276 = vmatmul.bf16.gmra.mxu0 %v2309
        %v3277 = vpop.f32.mrf.mxu0
        %v3278 = vadd.f32 0.0, %v3277
        %v3279 = vpop.f32.mrf.mxu0
        %v3280 = vadd.f32 0.0, %v3279
        %3281 = vmatmul.bf16.gmra.mxu0 %v2312
        %v3282 = vpop.f32.mrf.mxu0
        %v3283 = vadd.f32 0.0, %v3282
        %v3284 = vpop.f32.mrf.mxu0
        %v3285 = vadd.f32 0.0, %v3284
        %3286 = vmatmul.bf16.gmra.mxu0 %v2315
        %v3287 = vpop.f32.mrf.mxu0
        %v3288 = vadd.f32 0.0, %v3287
        %v3289 = vpop.f32.mrf.mxu0
        %v3290 = vadd.f32 0.0, %v3289
        %3291 = vmatmul.bf16.gmra.mxu0 %v2318
        %v3292 = vpop.f32.mrf.mxu0
        %v3293 = vadd.f32 0.0, %v3292
        %v3294 = vpop.f32.mrf.mxu0
        %v3295 = vadd.f32 0.0, %v3294
        %3296 = vmatmul.bf16.gmra.mxu0 %v2321
        %v3297 = vpop.f32.mrf.mxu0
        %v3298 = vadd.f32 0.0, %v3297
        %v3299 = vpop.f32.mrf.mxu0
        %v3300 = vadd.f32 0.0, %v3299
        %3301 = vmatmul.bf16.gmra.mxu0 %v2324
        %v3302 = vpop.f32.mrf.mxu0
        %v3303 = vadd.f32 0.0, %v3302
        %v3304 = vpop.f32.mrf.mxu0
        %v3305 = vadd.f32 0.0, %v3304
        %3306 = vmatmul.bf16.gmra.mxu0 %v2327
        %v3307 = vpop.f32.mrf.mxu0
        %v3308 = vadd.f32 0.0, %v3307
        %v3309 = vpop.f32.mrf.mxu0
        %v3310 = vadd.f32 0.0, %v3309
        %3311 = vmatmul.bf16.gmra.mxu0 %v2330
        %v3312 = vpop.f32.mrf.mxu0
        %v3313 = vadd.f32 0.0, %v3312
        %v3314 = vpop.f32.mrf.mxu0
        %v3315 = vadd.f32 0.0, %v3314
        %3316 = vmatmul.bf16.gmra.mxu0 %v2333
        %v3317 = vpop.f32.mrf.mxu0
        %v3318 = vadd.f32 0.0, %v3317
        %v3319 = vpop.f32.mrf.mxu0
        %v3320 = vadd.f32 0.0, %v3319
        %3321 = vmatmul.bf16.gmra.mxu0 %v2336
        %v3322 = vpop.f32.mrf.mxu0
        %v3323 = vadd.f32 0.0, %v3322
        %v3324 = vpop.f32.mrf.mxu0
        %v3325 = vadd.f32 0.0, %v3324
        %3326 = vmatmul.bf16.gmra.mxu0 %v2339
        %v3327 = vpop.f32.mrf.mxu0
        %v3328 = vadd.f32 0.0, %v3327
        %v3329 = vpop.f32.mrf.mxu0
        %v3330 = vadd.f32 0.0, %v3329
        %3331 = vmatmul.bf16.gmra.mxu0 %v2342
        %v3332 = vpop.f32.mrf.mxu0
        %v3333 = vadd.f32 0.0, %v3332
        %v3334 = vpop.f32.mrf.mxu0
        %v3335 = vadd.f32 0.0, %v3334
        %3336 = vmatmul.bf16.gmra.mxu0 %v2345
        %v3337 = vpop.f32.mrf.mxu0
        %v3338 = vadd.f32 0.0, %v3337
        %v3339 = vpop.f32.mrf.mxu0
        %v3340 = vadd.f32 0.0, %v3339
        %3341 = vmatmul.bf16.gmra.mxu0 %v2348
        %v3342 = vpop.f32.mrf.mxu0
        %v3343 = vadd.f32 0.0, %v3342
        %v3344 = vpop.f32.mrf.mxu0
        %v3345 = vadd.f32 0.0, %v3344
        %3346 = vmatmul.bf16.gmra.mxu0 %v2351
        %v3347 = vpop.f32.mrf.mxu0
        %v3348 = vadd.f32 0.0, %v3347
        %v3349 = vpop.f32.mrf.mxu0
        %v3350 = vadd.f32 0.0, %v3349
        %3351 = vmatmul.bf16.gmra.mxu0 %v2354
        %v3352 = vpop.f32.mrf.mxu0
        %v3353 = vadd.f32 0.0, %v3352
        %v3354 = vpop.f32.mrf.mxu0
        %v3355 = vadd.f32 0.0, %v3354
        %3356 = vmatmul.bf16.gmra.mxu0 %v2357
        %v3357 = vpop.f32.mrf.mxu0
        %v3358 = vadd.f32 0.0, %v3357
        %v3359 = vpop.f32.mrf.mxu0
        %v3360 = vadd.f32 0.0, %v3359
        %3361 = vmatmul.bf16.gmra.mxu0 %v2360
        %v3362 = vpop.f32.mrf.mxu0
        %v3363 = vadd.f32 0.0, %v3362
        %v3364 = vpop.f32.mrf.mxu0
        %v3365 = vadd.f32 0.0, %v3364
        %3366 = vmatmul.bf16.gmra.mxu0 %v2363
        %v3367 = vpop.f32.mrf.mxu0
        %v3368 = vadd.f32 0.0, %v3367
        %v3369 = vpop.f32.mrf.mxu0
        %v3370 = vadd.f32 0.0, %v3369
        %3371 = vmatmul.bf16.gmra.mxu0 %v2366
        %v3372 = vpop.f32.mrf.mxu0
        %v3373 = vadd.f32 0.0, %v3372
        %v3374 = vpop.f32.mrf.mxu0
        %v3375 = vadd.f32 0.0, %v3374
        %3376 = vmatmul.bf16.gmra.mxu0 %v2369
        %v3377 = vpop.f32.mrf.mxu0
        %v3378 = vadd.f32 0.0, %v3377
        %v3379 = vpop.f32.mrf.mxu0
        %v3380 = vadd.f32 0.0, %v3379
        %3381 = vmatmul.bf16.gmra.mxu0 %v2372
        %v3382 = vpop.f32.mrf.mxu0
        %v3383 = vadd.f32 0.0, %v3382
        %v3384 = vpop.f32.mrf.mxu0
        %v3385 = vadd.f32 0.0, %v3384
        %3386 = vmatmul.bf16.gmra.mxu0 %v2375
        %v3387 = vpop.f32.mrf.mxu0
        %v3388 = vadd.f32 0.0, %v3387
        %v3389 = vpop.f32.mrf.mxu0
        %v3390 = vadd.f32 0.0, %v3389
        %3391 = vmatmul.bf16.gmra.mxu0 %v2378
        %v3392 = vpop.f32.mrf.mxu0
        %v3393 = vadd.f32 0.0, %v3392
        %v3394 = vpop.f32.mrf.mxu0
        %v3395 = vadd.f32 0.0, %v3394
        %3396 = vmatmul.bf16.gmra.mxu0 %v2381
        %v3397 = vpop.f32.mrf.mxu0
        %v3398 = vadd.f32 0.0, %v3397
        %v3399 = vpop.f32.mrf.mxu0
        %v3400 = vadd.f32 0.0, %v3399
        %3401 = vmatmul.bf16.gmra.mxu0 %v2384
        %v3402 = vpop.f32.mrf.mxu0
        %v3403 = vadd.f32 0.0, %v3402
        %v3404 = vpop.f32.mrf.mxu0
        %v3405 = vadd.f32 0.0, %v3404
        %3406 = vmatmul.bf16.gmra.mxu0 %v2387
        %v3407 = vpop.f32.mrf.mxu0
        %v3408 = vadd.f32 0.0, %v3407
        %v3409 = vpop.f32.mrf.mxu0
        %v3410 = vadd.f32 0.0, %v3409
        %3411 = vmatmul.bf16.gmra.mxu0 %v2390
        %v3412 = vpop.f32.mrf.mxu0
        %v3413 = vadd.f32 0.0, %v3412
        %v3414 = vpop.f32.mrf.mxu0
        %v3415 = vadd.f32 0.0, %v3414
        %3416 = vmatmul.bf16.gmra.mxu0 %v2393
        %v3417 = vpop.f32.mrf.mxu0
        %v3418 = vadd.f32 0.0, %v3417
        %v3419 = vpop.f32.mrf.mxu0
        %v3420 = vadd.f32 0.0, %v3419
        %3421 = vmatmul.bf16.gmra.mxu0 %v2396
        %v3422 = vpop.f32.mrf.mxu0
        %v3423 = vadd.f32 0.0, %v3422
        %v3424 = vpop.f32.mrf.mxu0
        %v3425 = vadd.f32 0.0, %v3424
        %3426 = vmatmul.bf16.gmra.mxu0 %v2399
        %v3427 = vpop.f32.mrf.mxu0
        %v3428 = vadd.f32 0.0, %v3427
        %v3429 = vpop.f32.mrf.mxu0
        %v3430 = vadd.f32 0.0, %v3429
        %3431 = vmatmul.bf16.gmra.mxu0 %v2402
        %v3432 = vpop.f32.mrf.mxu0
        %v3433 = vadd.f32 0.0, %v3432
        %v3434 = vpop.f32.mrf.mxu0
        %v3435 = vadd.f32 0.0, %v3434
        %3436 = vmatmul.bf16.gmra.mxu0 %v2405
        %v3437 = vpop.f32.mrf.mxu0
        %v3438 = vadd.f32 0.0, %v3437
        %v3439 = vpop.f32.mrf.mxu0
        %v3440 = vadd.f32 0.0, %v3439
        %3441 = vmatmul.bf16.gmra.mxu0 %v2408
        %v3442 = vpop.f32.mrf.mxu0
        %v3443 = vadd.f32 0.0, %v3442
        %v3444 = vpop.f32.mrf.mxu0
        %v3445 = vadd.f32 0.0, %v3444
        %3446 = vmatmul.bf16.gmra.mxu0 %v2411
        %v3447 = vpop.f32.mrf.mxu0
        %v3448 = vadd.f32 0.0, %v3447
        %v3449 = vpop.f32.mrf.mxu0
        %v3450 = vadd.f32 0.0, %v3449
        %3451 = vmatmul.bf16.gmra.mxu0 %v2414
        %v3452 = vpop.f32.mrf.mxu0
        %v3453 = vadd.f32 0.0, %v3452
        %v3454 = vpop.f32.mrf.mxu0
        %v3455 = vadd.f32 0.0, %v3454
        %3456 = vmatmul.bf16.gmra.mxu0 %v2417
        %v3457 = vpop.f32.mrf.mxu0
        %v3458 = vadd.f32 0.0, %v3457
        %v3459 = vpop.f32.mrf.mxu0
        %v3460 = vadd.f32 0.0, %v3459
        %3461 = vmatmul.bf16.gmra.mxu0 %v2420
        %v3462 = vpop.f32.mrf.mxu0
        %v3463 = vadd.f32 0.0, %v3462
        %v3464 = vpop.f32.mrf.mxu0
        %v3465 = vadd.f32 0.0, %v3464
        %3466 = vmatmul.bf16.gmra.mxu0 %v2423
        %v3467 = vpop.f32.mrf.mxu0
        %v3468 = vadd.f32 0.0, %v3467
        %v3469 = vpop.f32.mrf.mxu0
        %v3470 = vadd.f32 0.0, %v3469
        %3471 = vmatmul.bf16.gmra.mxu0 %v2426
        %v3472 = vpop.f32.mrf.mxu0
        %v3473 = vadd.f32 0.0, %v3472
        %v3474 = vpop.f32.mrf.mxu0
        %v3475 = vadd.f32 0.0, %v3474
        %3476 = vmatmul.bf16.gmra.mxu0 %v2429
        %v3477 = vpop.f32.mrf.mxu0
        %v3478 = vadd.f32 0.0, %v3477
        %v3479 = vpop.f32.mrf.mxu0
        %v3480 = vadd.f32 0.0, %v3479
        %3481 = vmatmul.bf16.gmra.mxu0 %v2432
        %v3482 = vpop.f32.mrf.mxu0
        %v3483 = vadd.f32 0.0, %v3482
        %v3484 = vpop.f32.mrf.mxu0
        %v3485 = vadd.f32 0.0, %v3484
        %3486 = vmatmul.bf16.gmra.mxu0 %v2435
        %v3487 = vpop.f32.mrf.mxu0
        %v3488 = vadd.f32 0.0, %v3487
        %v3489 = vpop.f32.mrf.mxu0
        %v3490 = vadd.f32 0.0, %v3489
        %3491 = vmatmul.bf16.gmra.mxu0 %v2438
        %v3492 = vpop.f32.mrf.mxu0
        %v3493 = vadd.f32 0.0, %v3492
        %v3494 = vpop.f32.mrf.mxu0
        %v3495 = vadd.f32 0.0, %v3494
        %3496 = vmatmul.bf16.gmra.mxu0 %v2441
        %v3497 = vpop.f32.mrf.mxu0
        %v3498 = vadd.f32 0.0, %v3497
        %v3499 = vpop.f32.mrf.mxu0
        %v3500 = vadd.f32 0.0, %v3499
        %3501 = vmatmul.bf16.gmra.mxu0 %v2444
        %v3502 = vpop.f32.mrf.mxu0
        %v3503 = vadd.f32 0.0, %v3502
        %v3504 = vpop.f32.mrf.mxu0
        %v3505 = vadd.f32 0.0, %v3504
        %3506 = vmatmul.bf16.gmra.mxu0 %v2447
        %v3507 = vpop.f32.mrf.mxu0
        %v3508 = vadd.f32 0.0, %v3507
        %v3509 = vpop.f32.mrf.mxu0
        %v3510 = vadd.f32 0.0, %v3509
        %3511 = vmatmul.bf16.gmra.mxu0 %v2450
        %v3512 = vpop.f32.mrf.mxu0
        %v3513 = vadd.f32 0.0, %v3512
        %v3514 = vpop.f32.mrf.mxu0
        %v3515 = vadd.f32 0.0, %v3514
        %3516 = vmatmul.bf16.gmra.mxu0 %v2453
        %v3517 = vpop.f32.mrf.mxu0
        %v3518 = vadd.f32 0.0, %v3517
        %v3519 = vpop.f32.mrf.mxu0
        %v3520 = vadd.f32 0.0, %v3519
        %3521 = vmatmul.bf16.gmra.mxu0 %v2456
        %v3522 = vpop.f32.mrf.mxu0
        %v3523 = vadd.f32 0.0, %v3522
        %v3524 = vpop.f32.mrf.mxu0
        %v3525 = vadd.f32 0.0, %v3524
        %3526 = vmatmul.bf16.gmra.mxu0 %v2459
        %v3527 = vpop.f32.mrf.mxu0
        %v3528 = vadd.f32 0.0, %v3527
        %v3529 = vpop.f32.mrf.mxu0
        %v3530 = vadd.f32 0.0, %v3529
        %3531 = vmatmul.bf16.gmra.mxu0 %v2462
        %v3532 = vpop.f32.mrf.mxu0
        %v3533 = vadd.f32 0.0, %v3532
        %v3534 = vpop.f32.mrf.mxu0
        %v3535 = vadd.f32 0.0, %v3534
        %3536 = vmatmul.bf16.gmra.mxu0 %v2465
        %v3537 = vpop.f32.mrf.mxu0
        %v3538 = vadd.f32 0.0, %v3537
        %v3539 = vpop.f32.mrf.mxu0
        %v3540 = vadd.f32 0.0, %v3539
        %3541 = vmatmul.bf16.gmra.mxu0 %v2468
        %v3542 = vpop.f32.mrf.mxu0
        %v3543 = vadd.f32 0.0, %v3542
        %v3544 = vpop.f32.mrf.mxu0
        %v3545 = vadd.f32 0.0, %v3544
        %3546 = vmatmul.bf16.gmra.mxu0 %v2471
        %v3547 = vpop.f32.mrf.mxu0
        %v3548 = vadd.f32 0.0, %v3547
        %v3549 = vpop.f32.mrf.mxu0
        %v3550 = vadd.f32 0.0, %v3549
        %3551 = vmatmul.bf16.gmra.mxu0 %v2474
        %v3552 = vpop.f32.mrf.mxu0
        %v3553 = vadd.f32 0.0, %v3552
        %v3554 = vpop.f32.mrf.mxu0
        %v3555 = vadd.f32 0.0, %v3554
        %3556 = vmatmul.bf16.gmra.mxu0 %v2477
        %v3557 = vpop.f32.mrf.mxu0
        %v3558 = vadd.f32 0.0, %v3557
        %v3559 = vpop.f32.mrf.mxu0
        %v3560 = vadd.f32 0.0, %v3559
        %3561 = vmatmul.bf16.gmra.mxu0 %v2480
        %v3562 = vpop.f32.mrf.mxu0
        %v3563 = vadd.f32 0.0, %v3562
        %v3564 = vpop.f32.mrf.mxu0
        %v3565 = vadd.f32 0.0, %v3564
        %3566 = vmatmul.bf16.gmra.mxu0 %v2483
        %v3567 = vpop.f32.mrf.mxu0
        %v3568 = vadd.f32 0.0, %v3567
        %v3569 = vpop.f32.mrf.mxu0
        %v3570 = vadd.f32 0.0, %v3569
        %3571 = vmatmul.bf16.gmra.mxu0 %v2486
        %v3572 = vpop.f32.mrf.mxu0
        %v3573 = vadd.f32 0.0, %v3572
        %v3574 = vpop.f32.mrf.mxu0
        %v3575 = vadd.f32 0.0, %v3574
        %3576 = vmatmul.bf16.gmra.mxu0 %v2489
        %v3577 = vpop.f32.mrf.mxu0
        %v3578 = vadd.f32 0.0, %v3577
        %v3579 = vpop.f32.mrf.mxu0
        %v3580 = vadd.f32 0.0, %v3579
        %3581 = vmatmul.bf16.gmra.mxu0 %v2492
        %v3582 = vpop.f32.mrf.mxu0
        %v3583 = vadd.f32 0.0, %v3582
        %v3584 = vpop.f32.mrf.mxu0
        %v3585 = vadd.f32 0.0, %v3584
        %3586 = vmatmul.bf16.gmra.mxu0 %v2495
        %v3587 = vpop.f32.mrf.mxu0
        %v3588 = vadd.f32 0.0, %v3587
        %v3589 = vpop.f32.mrf.mxu0
        %v3590 = vadd.f32 0.0, %v3589
        %3591 = vmatmul.bf16.gmra.mxu0 %v2498
        %v3592 = vpop.f32.mrf.mxu0
        %v3593 = vadd.f32 0.0, %v3592
        %v3594 = vpop.f32.mrf.mxu0
        %v3595 = vadd.f32 0.0, %v3594
        %3596 = vmatmul.bf16.gmra.mxu0 %v2501
        %v3597 = vpop.f32.mrf.mxu0
        %v3598 = vadd.f32 0.0, %v3597
        %v3599 = vpop.f32.mrf.mxu0
        %v3600 = vadd.f32 0.0, %v3599
        %3601 = vmatmul.bf16.gmra.mxu0 %v2504
        %v3602 = vpop.f32.mrf.mxu0
        %v3603 = vadd.f32 0.0, %v3602
        %v3604 = vpop.f32.mrf.mxu0
        %v3605 = vadd.f32 0.0, %v3604
        %3606 = vmatmul.bf16.gmra.mxu0 %v2507
        %v3607 = vpop.f32.mrf.mxu0
        %v3608 = vadd.f32 0.0, %v3607
        %v3609 = vpop.f32.mrf.mxu0
        %v3610 = vadd.f32 0.0, %v3609
        %3611 = vmatmul.bf16.gmra.mxu0 %v2510
        %v3612 = vpop.f32.mrf.mxu0
        %v3613 = vadd.f32 0.0, %v3612
        %v3614 = vpop.f32.mrf.mxu0
        %v3615 = vadd.f32 0.0, %v3614
        %3616 = vmatmul.bf16.gmra.mxu0 %v2513
        %v3617 = vpop.f32.mrf.mxu0
        %v3618 = vadd.f32 0.0, %v3617
        %v3619 = vpop.f32.mrf.mxu0
        %v3620 = vadd.f32 0.0, %v3619
        %3621 = vmatmul.bf16.gmra.mxu0 %v2516
        %v3622 = vpop.f32.mrf.mxu0
        %v3623 = vadd.f32 0.0, %v3622
        %v3624 = vpop.f32.mrf.mxu0
        %v3625 = vadd.f32 0.0, %v3624
        %3626 = vmatmul.bf16.gmra.mxu0 %v2519
        %v3627 = vpop.f32.mrf.mxu0
        %v3628 = vadd.f32 0.0, %v3627
        %v3629 = vpop.f32.mrf.mxu0
        %v3630 = vadd.f32 0.0, %v3629
        %3631 = vmatmul.bf16.gmra.mxu0 %v2522
        %v3632 = vpop.f32.mrf.mxu0
        %v3633 = vadd.f32 0.0, %v3632
        %v3634 = vpop.f32.mrf.mxu0
        %v3635 = vadd.f32 0.0, %v3634
        %3636 = vmatmul.bf16.gmra.mxu0 %v2525
        %v3637 = vpop.f32.mrf.mxu0
        %v3638 = vadd.f32 0.0, %v3637
        %v3639 = vpop.f32.mrf.mxu0
        %v3640 = vadd.f32 0.0, %v3639
        %3641 = vmatmul.bf16.gmra.mxu0 %v2528
        %v3642 = vpop.f32.mrf.mxu0
        %v3643 = vadd.f32 0.0, %v3642
        %v3644 = vpop.f32.mrf.mxu0
        %v3645 = vadd.f32 0.0, %v3644
        %3646 = vmatmul.bf16.gmra.mxu0 %v2531
        %v3647 = vpop.f32.mrf.mxu0
        %v3648 = vadd.f32 0.0, %v3647
        %v3649 = vpop.f32.mrf.mxu0
        %v3650 = vadd.f32 0.0, %v3649
        %3651 = vmatmul.bf16.gmra.mxu0 %v2534
        %v3652 = vpop.f32.mrf.mxu0
        %v3653 = vadd.f32 0.0, %v3652
        %v3654 = vpop.f32.mrf.mxu0
        %v3655 = vadd.f32 0.0, %v3654
        %3656 = vmatmul.bf16.gmra.mxu0 %v2537
        %v3657 = vpop.f32.mrf.mxu0
        %v3658 = vadd.f32 0.0, %v3657
        %v3659 = vpop.f32.mrf.mxu0
        %v3660 = vadd.f32 0.0, %v3659
        %3661 = vmatmul.bf16.gmra.mxu0 %v2540
        %v3662 = vpop.f32.mrf.mxu0
        %v3663 = vadd.f32 0.0, %v3662
        %v3664 = vpop.f32.mrf.mxu0
        %v3665 = vadd.f32 0.0, %v3664
        %3666 = vmatmul.bf16.gmra.mxu0 %v2543
        %v3667 = vpop.f32.mrf.mxu0
        %v3668 = vadd.f32 0.0, %v3667
        %v3669 = vpop.f32.mrf.mxu0
        %v3670 = vadd.f32 0.0, %v3669
        %3671 = vmatmul.bf16.gmra.mxu0 %v2546
        %v3672 = vpop.f32.mrf.mxu0
        %v3673 = vadd.f32 0.0, %v3672
        %v3674 = vpop.f32.mrf.mxu0
        %v3675 = vadd.f32 0.0, %v3674
        %3676 = vmatmul.bf16.gmra.mxu0 %v2549
        %v3677 = vpop.f32.mrf.mxu0
        %v3678 = vadd.f32 0.0, %v3677
        %v3679 = vpop.f32.mrf.mxu0
        %v3680 = vadd.f32 0.0, %v3679
        %3681 = vmatmul.bf16.gmra.mxu0 %v2552
        %v3682 = vpop.f32.mrf.mxu0
        %v3683 = vadd.f32 0.0, %v3682
        %v3684 = vpop.f32.mrf.mxu0
        %v3685 = vadd.f32 0.0, %v3684
        %3686 = vmatmul.bf16.gmra.mxu0 %v2555
        %v3687 = vpop.f32.mrf.mxu0
        %v3688 = vadd.f32 0.0, %v3687
        %v3689 = vpop.f32.mrf.mxu0
        %v3690 = vadd.f32 0.0, %v3689
        %3691 = vmatmul.bf16.gmra.mxu0 %v2558
        %v3692 = vpop.f32.mrf.mxu0
        %v3693 = vadd.f32 0.0, %v3692
        %v3694 = vpop.f32.mrf.mxu0
        %v3695 = vadd.f32 0.0, %v3694
        %3696 = vmatmul.bf16.gmra.mxu0 %v2561
        %v3697 = vpop.f32.mrf.mxu0
        %v3698 = vadd.f32 0.0, %v3697
        %v3699 = vpop.f32.mrf.mxu0
        %v3700 = vadd.f32 0.0, %v3699
        %3701 = vmatmul.bf16.gmra.mxu0 %v2564
        %v3702 = vpop.f32.mrf.mxu0
        %v3703 = vadd.f32 0.0, %v3702
        %v3704 = vpop.f32.mrf.mxu0
        %v3705 = vadd.f32 0.0, %v3704
        %3706 = vmatmul.bf16.gmra.mxu0 %v2567
        %v3707 = vpop.f32.mrf.mxu0
        %v3708 = vadd.f32 0.0, %v3707
        %v3709 = vpop.f32.mrf.mxu0
        %v3710 = vadd.f32 0.0, %v3709
        %3711 = vmatmul.bf16.gmra.mxu0 %v2570
        %v3712 = vpop.f32.mrf.mxu0
        %v3713 = vadd.f32 0.0, %v3712
        %v3714 = vpop.f32.mrf.mxu0
        %v3715 = vadd.f32 0.0, %v3714
        %3716 = vmatmul.bf16.gmra.mxu0 %v2573
        %v3717 = vpop.f32.mrf.mxu0
        %v3718 = vadd.f32 0.0, %v3717
        %v3719 = vpop.f32.mrf.mxu0
        %v3720 = vadd.f32 0.0, %v3719
        %3721 = vmatmul.bf16.gmra.mxu0 %v2576
        %v3722 = vpop.f32.mrf.mxu0
        %v3723 = vadd.f32 0.0, %v3722
        %v3724 = vpop.f32.mrf.mxu0
        %v3725 = vadd.f32 0.0, %v3724
        %3726 = vmatmul.bf16.gmra.mxu0 %v2579
        %v3727 = vpop.f32.mrf.mxu0
        %v3728 = vadd.f32 0.0, %v3727
        %v3729 = vpop.f32.mrf.mxu0
        %v3730 = vadd.f32 0.0, %v3729
        %3731 = vmatmul.bf16.gmra.mxu0 %v2582
        %v3732 = vpop.f32.mrf.mxu0
        %v3733 = vadd.f32 0.0, %v3732
        %v3734 = vpop.f32.mrf.mxu0
        %v3735 = vadd.f32 0.0, %v3734
        %3736 = vmatmul.bf16.gmra.mxu0 %v2585
        %v3737 = vpop.f32.mrf.mxu0
        %v3738 = vadd.f32 0.0, %v3737
        %v3739 = vpop.f32.mrf.mxu0
        %v3740 = vadd.f32 0.0, %v3739
        %3741 = vmatmul.bf16.gmra.mxu0 %v2588
        %v3742 = vpop.f32.mrf.mxu0
        %v3743 = vadd.f32 0.0, %v3742
        %v3744 = vpop.f32.mrf.mxu0
        %v3745 = vadd.f32 0.0, %v3744
        %3746 = vmatmul.bf16.gmra.mxu0 %v2591
        %v3747 = vpop.f32.mrf.mxu0
        %v3748 = vadd.f32 0.0, %v3747
        %v3749 = vpop.f32.mrf.mxu0
        %v3750 = vadd.f32 0.0, %v3749
        %3751 = vmatmul.bf16.gmra.mxu0 %v2594
        %v3752 = vpop.f32.mrf.mxu0
        %v3753 = vadd.f32 0.0, %v3752
        %v3754 = vpop.f32.mrf.mxu0
        %v3755 = vadd.f32 0.0, %v3754
        %3756 = vmatmul.bf16.gmra.mxu0 %v2597
        %v3757 = vpop.f32.mrf.mxu0
        %v3758 = vadd.f32 0.0, %v3757
        %v3759 = vpop.f32.mrf.mxu0
        %v3760 = vadd.f32 0.0, %v3759
        %3761 = vmatmul.bf16.gmra.mxu0 %v2600
        %v3762 = vpop.f32.mrf.mxu0
        %v3763 = vadd.f32 0.0, %v3762
        %v3764 = vpop.f32.mrf.mxu0
        %v3765 = vadd.f32 0.0, %v3764
        %3766 = vmatmul.bf16.gmra.mxu0 %v2603
        %v3767 = vpop.f32.mrf.mxu0
        %v3768 = vadd.f32 0.0, %v3767
        %v3769 = vpop.f32.mrf.mxu0
        %v3770 = vadd.f32 0.0, %v3769
        %3771 = vmatmul.bf16.gmra.mxu0 %v2606
        %v3772 = vpop.f32.mrf.mxu0
        %v3773 = vadd.f32 0.0, %v3772
        %v3774 = vpop.f32.mrf.mxu0
        %v3775 = vadd.f32 0.0, %v3774
        %3776 = vmatmul.bf16.gmra.mxu0 %v2609
        %v3777 = vpop.f32.mrf.mxu0
        %v3778 = vadd.f32 0.0, %v3777
        %v3779 = vpop.f32.mrf.mxu0
        %v3780 = vadd.f32 0.0, %v3779
        %3781 = vmatmul.bf16.gmra.mxu0 %v2612
        %v3782 = vpop.f32.mrf.mxu0
        %v3783 = vadd.f32 0.0, %v3782
        %v3784 = vpop.f32.mrf.mxu0
        %v3785 = vadd.f32 0.0, %v3784
        %3786 = vmatmul.bf16.gmra.mxu0 %v2615
        %v3787 = vpop.f32.mrf.mxu0
        %v3788 = vadd.f32 0.0, %v3787
        %v3789 = vpop.f32.mrf.mxu0
        %v3790 = vadd.f32 0.0, %v3789
        %3791 = vmatmul.bf16.gmra.mxu0 %v2618
        %v3792 = vpop.f32.mrf.mxu0
        %v3793 = vadd.f32 0.0, %v3792
        %v3794 = vpop.f32.mrf.mxu0
        %v3795 = vadd.f32 0.0, %v3794
        %3796 = vmatmul.bf16.gmra.mxu0 %v2621
        %v3797 = vpop.f32.mrf.mxu0
        %v3798 = vadd.f32 0.0, %v3797
        %v3799 = vpop.f32.mrf.mxu0
        %v3800 = vadd.f32 0.0, %v3799
        %3801 = vmatmul.bf16.gmra.mxu0 %v2624
        %v3802 = vpop.f32.mrf.mxu0
        %v3803 = vadd.f32 0.0, %v3802
        %v3804 = vpop.f32.mrf.mxu0
        %v3805 = vadd.f32 0.0, %v3804
        %3806 = vmatmul.bf16.gmra.mxu0 %v2627
        %v3807 = vpop.f32.mrf.mxu0
        %v3808 = vadd.f32 0.0, %v3807
        %v3809 = vpop.f32.mrf.mxu0
        %v3810 = vadd.f32 0.0, %v3809
        %3811 = vmatmul.bf16.gmra.mxu0 %v2630
        %v3812 = vpop.f32.mrf.mxu0
        %v3813 = vadd.f32 0.0, %v3812
        %v3814 = vpop.f32.mrf.mxu0
        %v3815 = vadd.f32 0.0, %v3814
        %3816 = vmatmul.bf16.gmra.mxu0 %v2633
        %v3817 = vpop.f32.mrf.mxu0
        %v3818 = vadd.f32 0.0, %v3817
        %v3819 = vpop.f32.mrf.mxu0
        %v3820 = vadd.f32 0.0, %v3819
        %3821 = vmatmul.bf16.gmra.mxu0 %v2636
        %v3822 = vpop.f32.mrf.mxu0
        %v3823 = vadd.f32 0.0, %v3822
        %v3824 = vpop.f32.mrf.mxu0
        %v3825 = vadd.f32 0.0, %v3824
        %3826 = vmatmul.bf16.gmra.mxu0 %v2639
        %v3827 = vpop.f32.mrf.mxu0
        %v3828 = vadd.f32 0.0, %v3827
        %v3829 = vpop.f32.mrf.mxu0
        %v3830 = vadd.f32 0.0, %v3829
        %3831 = vmatmul.bf16.gmra.mxu0 %v2642
        %v3832 = vpop.f32.mrf.mxu0
        %v3833 = vadd.f32 0.0, %v3832
        %v3834 = vpop.f32.mrf.mxu0
        %v3835 = vadd.f32 0.0, %v3834
        %3836 = vmatmul.bf16.gmra.mxu0 %v2645
        %v3837 = vpop.f32.mrf.mxu0
        %v3838 = vadd.f32 0.0, %v3837
        %v3839 = vpop.f32.mrf.mxu0
        %v3840 = vadd.f32 0.0, %v3839
        %3841 = vmatmul.bf16.gmra.mxu0 %v2648
        %v3842 = vpop.f32.mrf.mxu0
        %v3843 = vadd.f32 0.0, %v3842
        %v3844 = vpop.f32.mrf.mxu0
        %v3845 = vadd.f32 0.0, %v3844
        %3846 = vmatmul.bf16.gmra.mxu0 %v2651
        %v3847 = vpop.f32.mrf.mxu0
        %v3848 = vadd.f32 0.0, %v3847
        %v3849 = vpop.f32.mrf.mxu0
        %v3850 = vadd.f32 0.0, %v3849
        %3851 = vmatmul.bf16.gmra.mxu0 %v2654
        %v3852 = vpop.f32.mrf.mxu0
        %v3853 = vadd.f32 0.0, %v3852
        %v3854 = vpop.f32.mrf.mxu0
        %v3855 = vadd.f32 0.0, %v3854
        %3856 = vmatmul.bf16.gmra.mxu0 %v2657
        %v3857 = vpop.f32.mrf.mxu0
        %v3858 = vadd.f32 0.0, %v3857
        %v3859 = vpop.f32.mrf.mxu0
        %v3860 = vadd.f32 0.0, %v3859
        %3861 = vmatmul.bf16.gmra.mxu0 %v2660
        %v3862 = vpop.f32.mrf.mxu0
        %v3863 = vadd.f32 0.0, %v3862
        %v3864 = vpop.f32.mrf.mxu0
        %v3865 = vadd.f32 0.0, %v3864
        %3866 = vmatmul.bf16.gmra.mxu0 %v2663
        %v3867 = vpop.f32.mrf.mxu0
        %v3868 = vadd.f32 0.0, %v3867
        %v3869 = vpop.f32.mrf.mxu0
        %v3870 = vadd.f32 0.0, %v3869
        %3871 = vmatmul.bf16.gmra.mxu0 %v2666
        %v3872 = vpop.f32.mrf.mxu0
        %v3873 = vadd.f32 0.0, %v3872
        %v3874 = vpop.f32.mrf.mxu0
        %v3875 = vadd.f32 0.0, %v3874
        %3876 = vmatmul.bf16.gmra.mxu0 %v2669
        %v3877 = vpop.f32.mrf.mxu0
        %v3878 = vadd.f32 0.0, %v3877
        %v3879 = vpop.f32.mrf.mxu0
        %v3880 = vadd.f32 0.0, %v3879
        %3881 = vmatmul.bf16.gmra.mxu0 %v2672
        %v3882 = vpop.f32.mrf.mxu0
        %v3883 = vadd.f32 0.0, %v3882
        %v3884 = vpop.f32.mrf.mxu0
        %v3885 = vadd.f32 0.0, %v3884
        %3886 = vmatmul.bf16.gmra.mxu0 %v2675
        %v3887 = vpop.f32.mrf.mxu0
        %v3888 = vadd.f32 0.0, %v3887
        %v3889 = vpop.f32.mrf.mxu0
        %v3890 = vadd.f32 0.0, %v3889
        %3891 = vmatmul.bf16.gmra.mxu0 %v2678
        %v3892 = vpop.f32.mrf.mxu0
        %v3893 = vadd.f32 0.0, %v3892
        %v3894 = vpop.f32.mrf.mxu0
        %v3895 = vadd.f32 0.0, %v3894
        %3896 = vmatmul.bf16.gmra.mxu0 %v2681
        %v3897 = vpop.f32.mrf.mxu0
        %v3898 = vadd.f32 0.0, %v3897
        %v3899 = vpop.f32.mrf.mxu0
        %v3900 = vadd.f32 0.0, %v3899
        %3901 = vmatmul.bf16.gmra.mxu0 %v2684
        %v3902 = vpop.f32.mrf.mxu0
        %v3903 = vadd.f32 0.0, %v3902
        %v3904 = vpop.f32.mrf.mxu0
        %v3905 = vadd.f32 0.0, %v3904
        %3906 = vmatmul.bf16.gmra.mxu0 %v2687
        %v3907 = vpop.f32.mrf.mxu0
        %v3908 = vadd.f32 0.0, %v3907
        %v3909 = vpop.f32.mrf.mxu0
        %v3910 = vadd.f32 0.0, %v3909
        %3911 = vmatmul.bf16.gmra.mxu0 %v2690
        %v3912 = vpop.f32.mrf.mxu0
        %v3913 = vadd.f32 0.0, %v3912
        %v3914 = vpop.f32.mrf.mxu0
        %v3915 = vadd.f32 0.0, %v3914
        %3916 = vmatmul.bf16.gmra.mxu0 %v2693
        %v3917 = vpop.f32.mrf.mxu0
        %v3918 = vadd.f32 0.0, %v3917
        %v3919 = vpop.f32.mrf.mxu0
        %v3920 = vadd.f32 0.0, %v3919
        %3921 = vmatmul.bf16.gmra.mxu0 %v2696
        %v3922 = vpop.f32.mrf.mxu0
        %v3923 = vadd.f32 0.0, %v3922
        %v3924 = vpop.f32.mrf.mxu0
        %v3925 = vadd.f32 0.0, %v3924
        %3926 = vmatmul.bf16.gmra.mxu0 %v2699
        %v3927 = vpop.f32.mrf.mxu0
        %v3928 = vadd.f32 0.0, %v3927
        %v3929 = vpop.f32.mrf.mxu0
        %v3930 = vadd.f32 0.0, %v3929
        %3931 = vmatmul.bf16.gmra.mxu0 %v2702
        %v3932 = vpop.f32.mrf.mxu0
        %v3933 = vadd.f32 0.0, %v3932
        %v3934 = vpop.f32.mrf.mxu0
        %v3935 = vadd.f32 0.0, %v3934
        %3936 = vmatmul.bf16.gmra.mxu0 %v2705
        %v3937 = vpop.f32.mrf.mxu0
        %v3938 = vadd.f32 0.0, %v3937
        %v3939 = vpop.f32.mrf.mxu0
        %v3940 = vadd.f32 0.0, %v3939
        %3941 = vmatmul.bf16.gmra.mxu0 %v2708
        %v3942 = vpop.f32.mrf.mxu0
        %v3943 = vadd.f32 0.0, %v3942
        %v3944 = vpop.f32.mrf.mxu0
        %v3945 = vadd.f32 0.0, %v3944
        %3946 = vmatmul.bf16.gmra.mxu0 %v2711
        %v3947 = vpop.f32.mrf.mxu0
        %v3948 = vadd.f32 0.0, %v3947
        %v3949 = vpop.f32.mrf.mxu0
        %v3950 = vadd.f32 0.0, %v3949
        %3951 = vmatmul.bf16.gmra.mxu0 %v2714
        %v3952 = vpop.f32.mrf.mxu0
        %v3953 = vadd.f32 0.0, %v3952
        %v3954 = vpop.f32.mrf.mxu0
        %v3955 = vadd.f32 0.0, %v3954
        %3956 = vmatmul.bf16.gmra.mxu0 %v2717
        %v3957 = vpop.f32.mrf.mxu0
        %v3958 = vadd.f32 0.0, %v3957
        %v3959 = vpop.f32.mrf.mxu0
        %v3960 = vadd.f32 0.0, %v3959
        %3961 = vmatmul.bf16.gmra.mxu0 %v2720
        %v3962 = vpop.f32.mrf.mxu0
        %v3963 = vadd.f32 0.0, %v3962
        %v3964 = vpop.f32.mrf.mxu0
        %v3965 = vadd.f32 0.0, %v3964
        %3966 = vmatmul.bf16.gmra.mxu0 %v2723
        %v3967 = vpop.f32.mrf.mxu0
        %v3968 = vadd.f32 0.0, %v3967
        %v3969 = vpop.f32.mrf.mxu0
        %v3970 = vadd.f32 0.0, %v3969
        %3971 = vmatmul.bf16.gmra.mxu0 %v2726
        %v3972 = vpop.f32.mrf.mxu0
        %v3973 = vadd.f32 0.0, %v3972
        %v3974 = vpop.f32.mrf.mxu0
        %v3975 = vadd.f32 0.0, %v3974
        %3976 = vmatmul.bf16.gmra.mxu0 %v2729
        %v3977 = vpop.f32.mrf.mxu0
        %v3978 = vadd.f32 0.0, %v3977
        %v3979 = vpop.f32.mrf.mxu0
        %v3980 = vadd.f32 0.0, %v3979
        %3981 = vmatmul.bf16.gmra.mxu0 %v2732
        %v3982 = vpop.f32.mrf.mxu0
        %v3983 = vadd.f32 0.0, %v3982
        %v3984 = vpop.f32.mrf.mxu0
        %v3985 = vadd.f32 0.0, %v3984
        %3986 = vmatmul.bf16.gmra.mxu0 %v2735
        %v3987 = vpop.f32.mrf.mxu0
        %v3988 = vadd.f32 0.0, %v3987
        %v3989 = vpop.f32.mrf.mxu0
        %v3990 = vadd.f32 0.0, %v3989
        %3991 = vmatmul.bf16.gmra.mxu0 %v2738
        %v3992 = vpop.f32.mrf.mxu0
        %v3993 = vadd.f32 0.0, %v3992
        %v3994 = vpop.f32.mrf.mxu0
        %v3995 = vadd.f32 0.0, %v3994
        %3996 = vmatmul.bf16.gmra.mxu0 %v2741
        %v3997 = vpop.f32.mrf.mxu0
        %v3998 = vadd.f32 0.0, %v3997
        %v3999 = vpop.f32.mrf.mxu0
        %v4000 = vadd.f32 0.0, %v3999
        %4001 = vmatmul.bf16.gmra.mxu0 %v2744
        %v4002 = vpop.f32.mrf.mxu0
        %v4003 = vadd.f32 0.0, %v4002
        %v4004 = vpop.f32.mrf.mxu0
        %v4005 = vadd.f32 0.0, %v4004
        %4006 = vmatmul.bf16.gmra.mxu0 %v2747
        %v4007 = vpop.f32.mrf.mxu0
        %v4008 = vadd.f32 0.0, %v4007
        %v4009 = vpop.f32.mrf.mxu0
        %v4010 = vadd.f32 0.0, %v4009
        %4011 = vmatmul.bf16.gmra.mxu0 %v2750
        %v4012 = vpop.f32.mrf.mxu0
        %v4013 = vadd.f32 0.0, %v4012
        %v4014 = vpop.f32.mrf.mxu0
        %v4015 = vadd.f32 0.0, %v4014
        %4016 = vmatmul.bf16.gmra.mxu0 %v2753
        %v4017 = vpop.f32.mrf.mxu0
        %v4018 = vadd.f32 0.0, %v4017
        %v4019 = vpop.f32.mrf.mxu0
        %v4020 = vadd.f32 0.0, %v4019
        %4021 = vmatmul.bf16.gmra.mxu0 %v2756
        %v4022 = vpop.f32.mrf.mxu0
        %v4023 = vadd.f32 0.0, %v4022
        %v4024 = vpop.f32.mrf.mxu0
        %v4025 = vadd.f32 0.0, %v4024
        %4026 = vmatmul.bf16.gmra.mxu0 %v2759
        %v4027 = vpop.f32.mrf.mxu0
        %v4028 = vadd.f32 0.0, %v4027
        %v4029 = vpop.f32.mrf.mxu0
        %v4030 = vadd.f32 0.0, %v4029
        %4031 = vmatmul.bf16.gmra.mxu0 %v2762
        %v4032 = vpop.f32.mrf.mxu0
        %v4033 = vadd.f32 0.0, %v4032
        %v4034 = vpop.f32.mrf.mxu0
        %v4035 = vadd.f32 0.0, %v4034
        %4036 = vmatmul.bf16.gmra.mxu0 %v2765
        %v4037 = vpop.f32.mrf.mxu0
        %v4038 = vadd.f32 0.0, %v4037
        %v4039 = vpop.f32.mrf.mxu0
        %v4040 = vadd.f32 0.0, %v4039
        %4041 = vmatmul.bf16.gmra.mxu0 %v2768
        %v4042 = vpop.f32.mrf.mxu0
        %v4043 = vadd.f32 0.0, %v4042
        %v4044 = vpop.f32.mrf.mxu0
        %v4045 = vadd.f32 0.0, %v4044
        %4046 = vmatmul.bf16.gmra.mxu0 %v2771
        %v4047 = vpop.f32.mrf.mxu0
        %v4048 = vadd.f32 0.0, %v4047
        %v4049 = vpop.f32.mrf.mxu0
        %v4050 = vadd.f32 0.0, %v4049
        %4051 = vmatmul.bf16.gmra.mxu0 %v2774
        %v4052 = vpop.f32.mrf.mxu0
        %v4053 = vadd.f32 0.0, %v4052
        %v4054 = vpop.f32.mrf.mxu0
        %v4055 = vadd.f32 0.0, %v4054
        %4056 = vmatmul.bf16.gmra.mxu0 %v2777
        %v4057 = vpop.f32.mrf.mxu0
        %v4058 = vadd.f32 0.0, %v4057
        %v4059 = vpop.f32.mrf.mxu0
        %v4060 = vadd.f32 0.0, %v4059
        %4061 = vmatmul.bf16.gmra.mxu0 %v2780
        %v4062 = vpop.f32.mrf.mxu0
        %v4063 = vadd.f32 0.0, %v4062
        %v4064 = vpop.f32.mrf.mxu0
        %v4065 = vadd.f32 0.0, %v4064
        %4066 = vmatmul.bf16.gmra.mxu0 %v2783
        %v4067 = vpop.f32.mrf.mxu0
        %v4068 = vadd.f32 0.0, %v4067
        %v4069 = vpop.f32.mrf.mxu0
        %v4070 = vadd.f32 0.0, %v4069
        %4071 = vmatmul.bf16.gmra.mxu0 %v2786
        %v4072 = vpop.f32.mrf.mxu0
        %v4073 = vadd.f32 0.0, %v4072
        %v4074 = vpop.f32.mrf.mxu0
        %v4075 = vadd.f32 0.0, %v4074
        %4076 = vmatmul.bf16.gmra.mxu0 %v2789
        %v4077 = vpop.f32.mrf.mxu0
        %v4078 = vadd.f32 0.0, %v4077
        %v4079 = vpop.f32.mrf.mxu0
        %v4080 = vadd.f32 0.0, %v4079
        %4081 = vmatmul.bf16.gmra.mxu0 %v2792
        %v4082 = vpop.f32.mrf.mxu0
        %v4083 = vadd.f32 0.0, %v4082
        %v4084 = vpop.f32.mrf.mxu0
        %v4085 = vadd.f32 0.0, %v4084
        %4086 = vdwg.mxu0
        %vm4087 = vcmask 7168
        %4088 = vst.msk [vmem:[%s200] sm:$0xff] %vm4087, %v2808
        %4089 = vst.msk [vmem:[%s200 + $0x8] sm:$0xff] %vm4087, %v2810
        %4090 = vst.msk [vmem:[%s200 + $0x10] sm:$0xff] %vm4087, %v2813
        %4091 = vst.msk [vmem:[%s200 + $0x18] sm:$0xff] %vm4087, %v2815
        %4092 = vst.msk [vmem:[%s200 + $0x20] sm:$0xff] %vm4087, %v2818
        %4093 = vst.msk [vmem:[%s200 + $0x28] sm:$0xff] %vm4087, %v2820
        %4094 = vst.msk [vmem:[%s200 + $0x30] sm:$0xff] %vm4087, %v2823
        %4095 = vst.msk [vmem:[%s200 + $0x38] sm:$0xff] %vm4087, %v2825
        %4096 = vst.msk [vmem:[%s200 + $0x40] sm:$0xff] %vm4087, %v2828
        %4097 = vst.msk [vmem:[%s200 + $0x48] sm:$0xff] %vm4087, %v2830
        %4098 = vst.msk [vmem:[%s200 + $0x50] sm:$0xff] %vm4087, %v2833
        %4099 = vst.msk [vmem:[%s200 + $0x58] sm:$0xff] %vm4087, %v2835
        %4100 = vst.msk [vmem:[%s200 + $0x60] sm:$0xff] %vm4087, %v2838
        %4101 = vst.msk [vmem:[%s200 + $0x68] sm:$0xff] %vm4087, %v2840
        %4102 = vst.msk [vmem:[%s200 + $0x70] sm:$0xff] %vm4087, %v2843
        %4103 = vst.msk [vmem:[%s200 + $0x78] sm:$0xff] %vm4087, %v2845
        %4104 = vst.msk [vmem:[%s200 + $0x80] sm:$0xff] %vm4087, %v2848
        %4105 = vst.msk [vmem:[%s200 + $0x88] sm:$0xff] %vm4087, %v2850
        %4106 = vst.msk [vmem:[%s200 + $0x90] sm:$0xff] %vm4087, %v2853
        %4107 = vst.msk [vmem:[%s200 + $0x98] sm:$0xff] %vm4087, %v2855
        %4108 = vst.msk [vmem:[%s200 + $0xa0] sm:$0xff] %vm4087, %v2858
        %4109 = vst.msk [vmem:[%s200 + $0xa8] sm:$0xff] %vm4087, %v2860
        %4110 = vst.msk [vmem:[%s200 + $0xb0] sm:$0xff] %vm4087, %v2863
        %4111 = vst.msk [vmem:[%s200 + $0xb8] sm:$0xff] %vm4087, %v2865
        %4112 = vst.msk [vmem:[%s200 + $0xc0] sm:$0xff] %vm4087, %v2868
        %4113 = vst.msk [vmem:[%s200 + $0xc8] sm:$0xff] %vm4087, %v2870
        %4114 = vst.msk [vmem:[%s200 + $0xd0] sm:$0xff] %vm4087, %v2873
        %4115 = vst.msk [vmem:[%s200 + $0xd8] sm:$0xff] %vm4087, %v2875
        %4116 = vst.msk [vmem:[%s200 + $0xe0] sm:$0xff] %vm4087, %v2878
        %4117 = vst.msk [vmem:[%s200 + $0xe8] sm:$0xff] %vm4087, %v2880
        %4118 = vst.msk [vmem:[%s200 + $0xf0] sm:$0xff] %vm4087, %v2883
        %4119 = vst.msk [vmem:[%s200 + $0xf8] sm:$0xff] %vm4087, %v2885
        %4120 = vst.msk [vmem:[%s200 + $0x100] sm:$0xff] %vm4087, %v2888
        %4121 = vst.msk [vmem:[%s200 + $0x108] sm:$0xff] %vm4087, %v2890
        %4122 = vst.msk [vmem:[%s200 + $0x110] sm:$0xff] %vm4087, %v2893
        %4123 = vst.msk [vmem:[%s200 + $0x118] sm:$0xff] %vm4087, %v2895
        %4124 = vst.msk [vmem:[%s200 + $0x120] sm:$0xff] %vm4087, %v2898
        %4125 = vst.msk [vmem:[%s200 + $0x128] sm:$0xff] %vm4087, %v2900
        %4126 = vst.msk [vmem:[%s200 + $0x130] sm:$0xff] %vm4087, %v2903
        %4127 = vst.msk [vmem:[%s200 + $0x138] sm:$0xff] %vm4087, %v2905
        %4128 = vst.msk [vmem:[%s200 + $0x140] sm:$0xff] %vm4087, %v2908
        %4129 = vst.msk [vmem:[%s200 + $0x148] sm:$0xff] %vm4087, %v2910
        %4130 = vst.msk [vmem:[%s200 + $0x150] sm:$0xff] %vm4087, %v2913
        %4131 = vst.msk [vmem:[%s200 + $0x158] sm:$0xff] %vm4087, %v2915
        %4132 = vst.msk [vmem:[%s200 + $0x160] sm:$0xff] %vm4087, %v2918
        %4133 = vst.msk [vmem:[%s200 + $0x168] sm:$0xff] %vm4087, %v2920
        %4134 = vst.msk [vmem:[%s200 + $0x170] sm:$0xff] %vm4087, %v2923
        %4135 = vst.msk [vmem:[%s200 + $0x178] sm:$0xff] %vm4087, %v2925
        %4136 = vst.msk [vmem:[%s200 + $0x180] sm:$0xff] %vm4087, %v2928
        %4137 = vst.msk [vmem:[%s200 + $0x188] sm:$0xff] %vm4087, %v2930
        %4138 = vst.msk [vmem:[%s200 + $0x190] sm:$0xff] %vm4087, %v2933
        %4139 = vst.msk [vmem:[%s200 + $0x198] sm:$0xff] %vm4087, %v2935
        %4140 = vst.msk [vmem:[%s200 + $0x1a0] sm:$0xff] %vm4087, %v2938
        %4141 = vst.msk [vmem:[%s200 + $0x1a8] sm:$0xff] %vm4087, %v2940
        %4142 = vst.msk [vmem:[%s200 + $0x1b0] sm:$0xff] %vm4087, %v2943
        %4143 = vst.msk [vmem:[%s200 + $0x1b8] sm:$0xff] %vm4087, %v2945
        %4144 = vst.msk [vmem:[%s200 + $0x1c0] sm:$0xff] %vm4087, %v2948
        %4145 = vst.msk [vmem:[%s200 + $0x1c8] sm:$0xff] %vm4087, %v2950
        %4146 = vst.msk [vmem:[%s200 + $0x1d0] sm:$0xff] %vm4087, %v2953
        %4147 = vst.msk [vmem:[%s200 + $0x1d8] sm:$0xff] %vm4087, %v2955
        %4148 = vst.msk [vmem:[%s200 + $0x1e0] sm:$0xff] %vm4087, %v2958
        %4149 = vst.msk [vmem:[%s200 + $0x1e8] sm:$0xff] %vm4087, %v2960
        %4150 = vst.msk [vmem:[%s200 + $0x1f0] sm:$0xff] %vm4087, %v2963
        %4151 = vst.msk [vmem:[%s200 + $0x1f8] sm:$0xff] %vm4087, %v2965
        %4152 = vst.msk [vmem:[%s200 + $0x200] sm:$0xff] %vm4087, %v2968
        %4153 = vst.msk [vmem:[%s200 + $0x208] sm:$0xff] %vm4087, %v2970
        %4154 = vst.msk [vmem:[%s200 + $0x210] sm:$0xff] %vm4087, %v2973
        %4155 = vst.msk [vmem:[%s200 + $0x218] sm:$0xff] %vm4087, %v2975
        %4156 = vst.msk [vmem:[%s200 + $0x220] sm:$0xff] %vm4087, %v2978
        %4157 = vst.msk [vmem:[%s200 + $0x228] sm:$0xff] %vm4087, %v2980
        %4158 = vst.msk [vmem:[%s200 + $0x230] sm:$0xff] %vm4087, %v2983
        %4159 = vst.msk [vmem:[%s200 + $0x238] sm:$0xff] %vm4087, %v2985
        %4160 = vst.msk [vmem:[%s200 + $0x240] sm:$0xff] %vm4087, %v2988
        %4161 = vst.msk [vmem:[%s200 + $0x248] sm:$0xff] %vm4087, %v2990
        %4162 = vst.msk [vmem:[%s200 + $0x250] sm:$0xff] %vm4087, %v2993
        %4163 = vst.msk [vmem:[%s200 + $0x258] sm:$0xff] %vm4087, %v2995
        %4164 = vst.msk [vmem:[%s200 + $0x260] sm:$0xff] %vm4087, %v2998
        %4165 = vst.msk [vmem:[%s200 + $0x268] sm:$0xff] %vm4087, %v3000
        %4166 = vst.msk [vmem:[%s200 + $0x270] sm:$0xff] %vm4087, %v3003
        %4167 = vst.msk [vmem:[%s200 + $0x278] sm:$0xff] %vm4087, %v3005
        %4168 = vst.msk [vmem:[%s200 + $0x280] sm:$0xff] %vm4087, %v3008
        %4169 = vst.msk [vmem:[%s200 + $0x288] sm:$0xff] %vm4087, %v3010
        %4170 = vst.msk [vmem:[%s200 + $0x290] sm:$0xff] %vm4087, %v3013
        %4171 = vst.msk [vmem:[%s200 + $0x298] sm:$0xff] %vm4087, %v3015
        %4172 = vst.msk [vmem:[%s200 + $0x2a0] sm:$0xff] %vm4087, %v3018
        %4173 = vst.msk [vmem:[%s200 + $0x2a8] sm:$0xff] %vm4087, %v3020
        %4174 = vst.msk [vmem:[%s200 + $0x2b0] sm:$0xff] %vm4087, %v3023
        %4175 = vst.msk [vmem:[%s200 + $0x2b8] sm:$0xff] %vm4087, %v3025
        %4176 = vst.msk [vmem:[%s200 + $0x2c0] sm:$0xff] %vm4087, %v3028
        %4177 = vst.msk [vmem:[%s200 + $0x2c8] sm:$0xff] %vm4087, %v3030
        %4178 = vst.msk [vmem:[%s200 + $0x2d0] sm:$0xff] %vm4087, %v3033
        %4179 = vst.msk [vmem:[%s200 + $0x2d8] sm:$0xff] %vm4087, %v3035
        %4180 = vst.msk [vmem:[%s200 + $0x2e0] sm:$0xff] %vm4087, %v3038
        %4181 = vst.msk [vmem:[%s200 + $0x2e8] sm:$0xff] %vm4087, %v3040
        %4182 = vst.msk [vmem:[%s200 + $0x2f0] sm:$0xff] %vm4087, %v3043
        %4183 = vst.msk [vmem:[%s200 + $0x2f8] sm:$0xff] %vm4087, %v3045
        %4184 = vst.msk [vmem:[%s200 + $0x300] sm:$0xff] %vm4087, %v3048
        %4185 = vst.msk [vmem:[%s200 + $0x308] sm:$0xff] %vm4087, %v3050
        %4186 = vst.msk [vmem:[%s200 + $0x310] sm:$0xff] %vm4087, %v3053
        %4187 = vst.msk [vmem:[%s200 + $0x318] sm:$0xff] %vm4087, %v3055
        %4188 = vst.msk [vmem:[%s200 + $0x320] sm:$0xff] %vm4087, %v3058
        %4189 = vst.msk [vmem:[%s200 + $0x328] sm:$0xff] %vm4087, %v3060
        %4190 = vst.msk [vmem:[%s200 + $0x330] sm:$0xff] %vm4087, %v3063
        %4191 = vst.msk [vmem:[%s200 + $0x338] sm:$0xff] %vm4087, %v3065
        %4192 = vst.msk [vmem:[%s200 + $0x340] sm:$0xff] %vm4087, %v3068
        %4193 = vst.msk [vmem:[%s200 + $0x348] sm:$0xff] %vm4087, %v3070
        %4194 = vst.msk [vmem:[%s200 + $0x350] sm:$0xff] %vm4087, %v3073
        %4195 = vst.msk [vmem:[%s200 + $0x358] sm:$0xff] %vm4087, %v3075
        %4196 = vst.msk [vmem:[%s200 + $0x360] sm:$0xff] %vm4087, %v3078
        %4197 = vst.msk [vmem:[%s200 + $0x368] sm:$0xff] %vm4087, %v3080
        %4198 = vst.msk [vmem:[%s200 + $0x370] sm:$0xff] %vm4087, %v3083
        %4199 = vst.msk [vmem:[%s200 + $0x378] sm:$0xff] %vm4087, %v3085
        %4200 = vst.msk [vmem:[%s200 + $0x380] sm:$0xff] %vm4087, %v3088
        %4201 = vst.msk [vmem:[%s200 + $0x388] sm:$0xff] %vm4087, %v3090
        %4202 = vst.msk [vmem:[%s200 + $0x390] sm:$0xff] %vm4087, %v3093
        %4203 = vst.msk [vmem:[%s200 + $0x398] sm:$0xff] %vm4087, %v3095
        %4204 = vst.msk [vmem:[%s200 + $0x3a0] sm:$0xff] %vm4087, %v3098
        %4205 = vst.msk [vmem:[%s200 + $0x3a8] sm:$0xff] %vm4087, %v3100
        %4206 = vst.msk [vmem:[%s200 + $0x3b0] sm:$0xff] %vm4087, %v3103
        %4207 = vst.msk [vmem:[%s200 + $0x3b8] sm:$0xff] %vm4087, %v3105
        %4208 = vst.msk [vmem:[%s200 + $0x3c0] sm:$0xff] %vm4087, %v3108
        %4209 = vst.msk [vmem:[%s200 + $0x3c8] sm:$0xff] %vm4087, %v3110
        %4210 = vst.msk [vmem:[%s200 + $0x3d0] sm:$0xff] %vm4087, %v3113
        %4211 = vst.msk [vmem:[%s200 + $0x3d8] sm:$0xff] %vm4087, %v3115
        %4212 = vst.msk [vmem:[%s200 + $0x3e0] sm:$0xff] %vm4087, %v3118
        %4213 = vst.msk [vmem:[%s200 + $0x3e8] sm:$0xff] %vm4087, %v3120
        %4214 = vst.msk [vmem:[%s200 + $0x3f0] sm:$0xff] %vm4087, %v3123
        %4215 = vst.msk [vmem:[%s200 + $0x3f8] sm:$0xff] %vm4087, %v3125
        %4216 = vst.msk [vmem:[%s200 + $0x400] sm:$0xff] %vm4087, %v3128
        %4217 = vst.msk [vmem:[%s200 + $0x408] sm:$0xff] %vm4087, %v3130
        %4218 = vst.msk [vmem:[%s200 + $0x410] sm:$0xff] %vm4087, %v3133
        %4219 = vst.msk [vmem:[%s200 + $0x418] sm:$0xff] %vm4087, %v3135
        %4220 = vst.msk [vmem:[%s200 + $0x420] sm:$0xff] %vm4087, %v3138
        %4221 = vst.msk [vmem:[%s200 + $0x428] sm:$0xff] %vm4087, %v3140
        %4222 = vst.msk [vmem:[%s200 + $0x430] sm:$0xff] %vm4087, %v3143
        %4223 = vst.msk [vmem:[%s200 + $0x438] sm:$0xff] %vm4087, %v3145
        %4224 = vst.msk [vmem:[%s200 + $0x440] sm:$0xff] %vm4087, %v3148
        %4225 = vst.msk [vmem:[%s200 + $0x448] sm:$0xff] %vm4087, %v3150
        %4226 = vst.msk [vmem:[%s200 + $0x450] sm:$0xff] %vm4087, %v3153
        %4227 = vst.msk [vmem:[%s200 + $0x458] sm:$0xff] %vm4087, %v3155
        %4228 = vst.msk [vmem:[%s200 + $0x460] sm:$0xff] %vm4087, %v3158
        %4229 = vst.msk [vmem:[%s200 + $0x468] sm:$0xff] %vm4087, %v3160
        %4230 = vst.msk [vmem:[%s200 + $0x470] sm:$0xff] %vm4087, %v3163
        %4231 = vst.msk [vmem:[%s200 + $0x478] sm:$0xff] %vm4087, %v3165
        %4232 = vst.msk [vmem:[%s200 + $0x480] sm:$0xff] %vm4087, %v3168
        %4233 = vst.msk [vmem:[%s200 + $0x488] sm:$0xff] %vm4087, %v3170
        %4234 = vst.msk [vmem:[%s200 + $0x490] sm:$0xff] %vm4087, %v3173
        %4235 = vst.msk [vmem:[%s200 + $0x498] sm:$0xff] %vm4087, %v3175
        %4236 = vst.msk [vmem:[%s200 + $0x4a0] sm:$0xff] %vm4087, %v3178
        %4237 = vst.msk [vmem:[%s200 + $0x4a8] sm:$0xff] %vm4087, %v3180
        %4238 = vst.msk [vmem:[%s200 + $0x4b0] sm:$0xff] %vm4087, %v3183
        %4239 = vst.msk [vmem:[%s200 + $0x4b8] sm:$0xff] %vm4087, %v3185
        %4240 = vst.msk [vmem:[%s200 + $0x4c0] sm:$0xff] %vm4087, %v3188
        %4241 = vst.msk [vmem:[%s200 + $0x4c8] sm:$0xff] %vm4087, %v3190
        %4242 = vst.msk [vmem:[%s200 + $0x4d0] sm:$0xff] %vm4087, %v3193
        %4243 = vst.msk [vmem:[%s200 + $0x4d8] sm:$0xff] %vm4087, %v3195
        %4244 = vst.msk [vmem:[%s200 + $0x4e0] sm:$0xff] %vm4087, %v3198
        %4245 = vst.msk [vmem:[%s200 + $0x4e8] sm:$0xff] %vm4087, %v3200
        %4246 = vst.msk [vmem:[%s200 + $0x4f0] sm:$0xff] %vm4087, %v3203
        %4247 = vst.msk [vmem:[%s200 + $0x4f8] sm:$0xff] %vm4087, %v3205
        %4248 = vst.msk [vmem:[%s200 + $0x500] sm:$0xff] %vm4087, %v3208
        %4249 = vst.msk [vmem:[%s200 + $0x508] sm:$0xff] %vm4087, %v3210
        %4250 = vst.msk [vmem:[%s200 + $0x510] sm:$0xff] %vm4087, %v3213
        %4251 = vst.msk [vmem:[%s200 + $0x518] sm:$0xff] %vm4087, %v3215
        %4252 = vst.msk [vmem:[%s200 + $0x520] sm:$0xff] %vm4087, %v3218
        %4253 = vst.msk [vmem:[%s200 + $0x528] sm:$0xff] %vm4087, %v3220
        %4254 = vst.msk [vmem:[%s200 + $0x530] sm:$0xff] %vm4087, %v3223
        %4255 = vst.msk [vmem:[%s200 + $0x538] sm:$0xff] %vm4087, %v3225
        %4256 = vst.msk [vmem:[%s200 + $0x540] sm:$0xff] %vm4087, %v3228
        %4257 = vst.msk [vmem:[%s200 + $0x548] sm:$0xff] %vm4087, %v3230
        %4258 = vst.msk [vmem:[%s200 + $0x550] sm:$0xff] %vm4087, %v3233
        %4259 = vst.msk [vmem:[%s200 + $0x558] sm:$0xff] %vm4087, %v3235
        %4260 = vst.msk [vmem:[%s200 + $0x560] sm:$0xff] %vm4087, %v3238
        %4261 = vst.msk [vmem:[%s200 + $0x568] sm:$0xff] %vm4087, %v3240
        %4262 = vst.msk [vmem:[%s200 + $0x570] sm:$0xff] %vm4087, %v3243
        %4263 = vst.msk [vmem:[%s200 + $0x578] sm:$0xff] %vm4087, %v3245
        %4264 = vst.msk [vmem:[%s200 + $0x580] sm:$0xff] %vm4087, %v3248
        %4265 = vst.msk [vmem:[%s200 + $0x588] sm:$0xff] %vm4087, %v3250
        %4266 = vst.msk [vmem:[%s200 + $0x590] sm:$0xff] %vm4087, %v3253
        %4267 = vst.msk [vmem:[%s200 + $0x598] sm:$0xff] %vm4087, %v3255
        %4268 = vst.msk [vmem:[%s200 + $0x5a0] sm:$0xff] %vm4087, %v3258
        %4269 = vst.msk [vmem:[%s200 + $0x5a8] sm:$0xff] %vm4087, %v3260
        %4270 = vst.msk [vmem:[%s200 + $0x5b0] sm:$0xff] %vm4087, %v3263
        %4271 = vst.msk [vmem:[%s200 + $0x5b8] sm:$0xff] %vm4087, %v3265
        %4272 = vst.msk [vmem:[%s200 + $0x5c0] sm:$0xff] %vm4087, %v3268
        %4273 = vst.msk [vmem:[%s200 + $0x5c8] sm:$0xff] %vm4087, %v3270
        %4274 = vst.msk [vmem:[%s200 + $0x5d0] sm:$0xff] %vm4087, %v3273
        %4275 = vst.msk [vmem:[%s200 + $0x5d8] sm:$0xff] %vm4087, %v3275
        %4276 = vst.msk [vmem:[%s200 + $0x5e0] sm:$0xff] %vm4087, %v3278
        %4277 = vst.msk [vmem:[%s200 + $0x5e8] sm:$0xff] %vm4087, %v3280
        %4278 = vst.msk [vmem:[%s200 + $0x5f0] sm:$0xff] %vm4087, %v3283
        %4279 = vst.msk [vmem:[%s200 + $0x5f8] sm:$0xff] %vm4087, %v3285
        %4280 = vst.msk [vmem:[%s200 + $0x600] sm:$0xff] %vm4087, %v3288
        %4281 = vst.msk [vmem:[%s200 + $0x608] sm:$0xff] %vm4087, %v3290
        %4282 = vst.msk [vmem:[%s200 + $0x610] sm:$0xff] %vm4087, %v3293
        %4283 = vst.msk [vmem:[%s200 + $0x618] sm:$0xff] %vm4087, %v3295
        %4284 = vst.msk [vmem:[%s200 + $0x620] sm:$0xff] %vm4087, %v3298
        %4285 = vst.msk [vmem:[%s200 + $0x628] sm:$0xff] %vm4087, %v3300
        %4286 = vst.msk [vmem:[%s200 + $0x630] sm:$0xff] %vm4087, %v3303
        %4287 = vst.msk [vmem:[%s200 + $0x638] sm:$0xff] %vm4087, %v3305
        %4288 = vst.msk [vmem:[%s200 + $0x640] sm:$0xff] %vm4087, %v3308
        %4289 = vst.msk [vmem:[%s200 + $0x648] sm:$0xff] %vm4087, %v3310
        %4290 = vst.msk [vmem:[%s200 + $0x650] sm:$0xff] %vm4087, %v3313
        %4291 = vst.msk [vmem:[%s200 + $0x658] sm:$0xff] %vm4087, %v3315
        %4292 = vst.msk [vmem:[%s200 + $0x660] sm:$0xff] %vm4087, %v3318
        %4293 = vst.msk [vmem:[%s200 + $0x668] sm:$0xff] %vm4087, %v3320
        %4294 = vst.msk [vmem:[%s200 + $0x670] sm:$0xff] %vm4087, %v3323
        %4295 = vst.msk [vmem:[%s200 + $0x678] sm:$0xff] %vm4087, %v3325
        %4296 = vst.msk [vmem:[%s200 + $0x680] sm:$0xff] %vm4087, %v3328
        %4297 = vst.msk [vmem:[%s200 + $0x688] sm:$0xff] %vm4087, %v3330
        %4298 = vst.msk [vmem:[%s200 + $0x690] sm:$0xff] %vm4087, %v3333
        %4299 = vst.msk [vmem:[%s200 + $0x698] sm:$0xff] %vm4087, %v3335
        %4300 = vst.msk [vmem:[%s200 + $0x6a0] sm:$0xff] %vm4087, %v3338
        %4301 = vst.msk [vmem:[%s200 + $0x6a8] sm:$0xff] %vm4087, %v3340
        %4302 = vst.msk [vmem:[%s200 + $0x6b0] sm:$0xff] %vm4087, %v3343
        %4303 = vst.msk [vmem:[%s200 + $0x6b8] sm:$0xff] %vm4087, %v3345
        %4304 = vst.msk [vmem:[%s200 + $0x6c0] sm:$0xff] %vm4087, %v3348
        %4305 = vst.msk [vmem:[%s200 + $0x6c8] sm:$0xff] %vm4087, %v3350
        %4306 = vst.msk [vmem:[%s200 + $0x6d0] sm:$0xff] %vm4087, %v3353
        %4307 = vst.msk [vmem:[%s200 + $0x6d8] sm:$0xff] %vm4087, %v3355
        %4308 = vst.msk [vmem:[%s200 + $0x6e0] sm:$0xff] %vm4087, %v3358
        %4309 = vst.msk [vmem:[%s200 + $0x6e8] sm:$0xff] %vm4087, %v3360
        %4310 = vst.msk [vmem:[%s200 + $0x6f0] sm:$0xff] %vm4087, %v3363
        %4311 = vst.msk [vmem:[%s200 + $0x6f8] sm:$0xff] %vm4087, %v3365
        %4312 = vst.msk [vmem:[%s200 + $0x700] sm:$0xff] %vm4087, %v3368
        %4313 = vst.msk [vmem:[%s200 + $0x708] sm:$0xff] %vm4087, %v3370
        %4314 = vst.msk [vmem:[%s200 + $0x710] sm:$0xff] %vm4087, %v3373
        %4315 = vst.msk [vmem:[%s200 + $0x718] sm:$0xff] %vm4087, %v3375
        %4316 = vst.msk [vmem:[%s200 + $0x720] sm:$0xff] %vm4087, %v3378
        %4317 = vst.msk [vmem:[%s200 + $0x728] sm:$0xff] %vm4087, %v3380
        %4318 = vst.msk [vmem:[%s200 + $0x730] sm:$0xff] %vm4087, %v3383
        %4319 = vst.msk [vmem:[%s200 + $0x738] sm:$0xff] %vm4087, %v3385
        %4320 = vst.msk [vmem:[%s200 + $0x740] sm:$0xff] %vm4087, %v3388
        %4321 = vst.msk [vmem:[%s200 + $0x748] sm:$0xff] %vm4087, %v3390
        %4322 = vst.msk [vmem:[%s200 + $0x750] sm:$0xff] %vm4087, %v3393
        %4323 = vst.msk [vmem:[%s200 + $0x758] sm:$0xff] %vm4087, %v3395
        %4324 = vst.msk [vmem:[%s200 + $0x760] sm:$0xff] %vm4087, %v3398
        %4325 = vst.msk [vmem:[%s200 + $0x768] sm:$0xff] %vm4087, %v3400
        %4326 = vst.msk [vmem:[%s200 + $0x770] sm:$0xff] %vm4087, %v3403
        %4327 = vst.msk [vmem:[%s200 + $0x778] sm:$0xff] %vm4087, %v3405
        %4328 = vst.msk [vmem:[%s200 + $0x780] sm:$0xff] %vm4087, %v3408
        %4329 = vst.msk [vmem:[%s200 + $0x788] sm:$0xff] %vm4087, %v3410
        %4330 = vst.msk [vmem:[%s200 + $0x790] sm:$0xff] %vm4087, %v3413
        %4331 = vst.msk [vmem:[%s200 + $0x798] sm:$0xff] %vm4087, %v3415
        %4332 = vst.msk [vmem:[%s200 + $0x7a0] sm:$0xff] %vm4087, %v3418
        %4333 = vst.msk [vmem:[%s200 + $0x7a8] sm:$0xff] %vm4087, %v3420
        %4334 = vst.msk [vmem:[%s200 + $0x7b0] sm:$0xff] %vm4087, %v3423
        %4335 = vst.msk [vmem:[%s200 + $0x7b8] sm:$0xff] %vm4087, %v3425
        %4336 = vst.msk [vmem:[%s200 + $0x7c0] sm:$0xff] %vm4087, %v3428
        %4337 = vst.msk [vmem:[%s200 + $0x7c8] sm:$0xff] %vm4087, %v3430
        %4338 = vst.msk [vmem:[%s200 + $0x7d0] sm:$0xff] %vm4087, %v3433
        %4339 = vst.msk [vmem:[%s200 + $0x7d8] sm:$0xff] %vm4087, %v3435
        %4340 = vst.msk [vmem:[%s200 + $0x7e0] sm:$0xff] %vm4087, %v3438
        %4341 = vst.msk [vmem:[%s200 + $0x7e8] sm:$0xff] %vm4087, %v3440
        %4342 = vst.msk [vmem:[%s200 + $0x7f0] sm:$0xff] %vm4087, %v3443
        %4343 = vst.msk [vmem:[%s200 + $0x7f8] sm:$0xff] %vm4087, %v3445
        %4344 = vst.msk [vmem:[%s200 + $0x800] sm:$0xff] %vm4087, %v3448
        %4345 = vst.msk [vmem:[%s200 + $0x808] sm:$0xff] %vm4087, %v3450
        %4346 = vst.msk [vmem:[%s200 + $0x810] sm:$0xff] %vm4087, %v3453
        %4347 = vst.msk [vmem:[%s200 + $0x818] sm:$0xff] %vm4087, %v3455
        %4348 = vst.msk [vmem:[%s200 + $0x820] sm:$0xff] %vm4087, %v3458
        %4349 = vst.msk [vmem:[%s200 + $0x828] sm:$0xff] %vm4087, %v3460
        %4350 = vst.msk [vmem:[%s200 + $0x830] sm:$0xff] %vm4087, %v3463
        %4351 = vst.msk [vmem:[%s200 + $0x838] sm:$0xff] %vm4087, %v3465
        %4352 = vst.msk [vmem:[%s200 + $0x840] sm:$0xff] %vm4087, %v3468
        %4353 = vst.msk [vmem:[%s200 + $0x848] sm:$0xff] %vm4087, %v3470
        %4354 = vst.msk [vmem:[%s200 + $0x850] sm:$0xff] %vm4087, %v3473
        %4355 = vst.msk [vmem:[%s200 + $0x858] sm:$0xff] %vm4087, %v3475
        %4356 = vst.msk [vmem:[%s200 + $0x860] sm:$0xff] %vm4087, %v3478
        %4357 = vst.msk [vmem:[%s200 + $0x868] sm:$0xff] %vm4087, %v3480
        %4358 = vst.msk [vmem:[%s200 + $0x870] sm:$0xff] %vm4087, %v3483
        %4359 = vst.msk [vmem:[%s200 + $0x878] sm:$0xff] %vm4087, %v3485
        %4360 = vst.msk [vmem:[%s200 + $0x880] sm:$0xff] %vm4087, %v3488
        %4361 = vst.msk [vmem:[%s200 + $0x888] sm:$0xff] %vm4087, %v3490
        %4362 = vst.msk [vmem:[%s200 + $0x890] sm:$0xff] %vm4087, %v3493
        %4363 = vst.msk [vmem:[%s200 + $0x898] sm:$0xff] %vm4087, %v3495
        %4364 = vst.msk [vmem:[%s200 + $0x8a0] sm:$0xff] %vm4087, %v3498
        %4365 = vst.msk [vmem:[%s200 + $0x8a8] sm:$0xff] %vm4087, %v3500
        %4366 = vst.msk [vmem:[%s200 + $0x8b0] sm:$0xff] %vm4087, %v3503
        %4367 = vst.msk [vmem:[%s200 + $0x8b8] sm:$0xff] %vm4087, %v3505
        %4368 = vst.msk [vmem:[%s200 + $0x8c0] sm:$0xff] %vm4087, %v3508
        %4369 = vst.msk [vmem:[%s200 + $0x8c8] sm:$0xff] %vm4087, %v3510
        %4370 = vst.msk [vmem:[%s200 + $0x8d0] sm:$0xff] %vm4087, %v3513
        %4371 = vst.msk [vmem:[%s200 + $0x8d8] sm:$0xff] %vm4087, %v3515
        %4372 = vst.msk [vmem:[%s200 + $0x8e0] sm:$0xff] %vm4087, %v3518
        %4373 = vst.msk [vmem:[%s200 + $0x8e8] sm:$0xff] %vm4087, %v3520
        %4374 = vst.msk [vmem:[%s200 + $0x8f0] sm:$0xff] %vm4087, %v3523
        %4375 = vst.msk [vmem:[%s200 + $0x8f8] sm:$0xff] %vm4087, %v3525
        %4376 = vst.msk [vmem:[%s200 + $0x900] sm:$0xff] %vm4087, %v3528
        %4377 = vst.msk [vmem:[%s200 + $0x908] sm:$0xff] %vm4087, %v3530
        %4378 = vst.msk [vmem:[%s200 + $0x910] sm:$0xff] %vm4087, %v3533
        %4379 = vst.msk [vmem:[%s200 + $0x918] sm:$0xff] %vm4087, %v3535
        %4380 = vst.msk [vmem:[%s200 + $0x920] sm:$0xff] %vm4087, %v3538
        %4381 = vst.msk [vmem:[%s200 + $0x928] sm:$0xff] %vm4087, %v3540
        %4382 = vst.msk [vmem:[%s200 + $0x930] sm:$0xff] %vm4087, %v3543
        %4383 = vst.msk [vmem:[%s200 + $0x938] sm:$0xff] %vm4087, %v3545
        %4384 = vst.msk [vmem:[%s200 + $0x940] sm:$0xff] %vm4087, %v3548
        %4385 = vst.msk [vmem:[%s200 + $0x948] sm:$0xff] %vm4087, %v3550
        %4386 = vst.msk [vmem:[%s200 + $0x950] sm:$0xff] %vm4087, %v3553
        %4387 = vst.msk [vmem:[%s200 + $0x958] sm:$0xff] %vm4087, %v3555
        %4388 = vst.msk [vmem:[%s200 + $0x960] sm:$0xff] %vm4087, %v3558
        %4389 = vst.msk [vmem:[%s200 + $0x968] sm:$0xff] %vm4087, %v3560
        %4390 = vst.msk [vmem:[%s200 + $0x970] sm:$0xff] %vm4087, %v3563
        %4391 = vst.msk [vmem:[%s200 + $0x978] sm:$0xff] %vm4087, %v3565
        %4392 = vst.msk [vmem:[%s200 + $0x980] sm:$0xff] %vm4087, %v3568
        %4393 = vst.msk [vmem:[%s200 + $0x988] sm:$0xff] %vm4087, %v3570
        %4394 = vst.msk [vmem:[%s200 + $0x990] sm:$0xff] %vm4087, %v3573
        %4395 = vst.msk [vmem:[%s200 + $0x998] sm:$0xff] %vm4087, %v3575
        %4396 = vst.msk [vmem:[%s200 + $0x9a0] sm:$0xff] %vm4087, %v3578
        %4397 = vst.msk [vmem:[%s200 + $0x9a8] sm:$0xff] %vm4087, %v3580
        %4398 = vst.msk [vmem:[%s200 + $0x9b0] sm:$0xff] %vm4087, %v3583
        %4399 = vst.msk [vmem:[%s200 + $0x9b8] sm:$0xff] %vm4087, %v3585
        %4400 = vst.msk [vmem:[%s200 + $0x9c0] sm:$0xff] %vm4087, %v3588
        %4401 = vst.msk [vmem:[%s200 + $0x9c8] sm:$0xff] %vm4087, %v3590
        %4402 = vst.msk [vmem:[%s200 + $0x9d0] sm:$0xff] %vm4087, %v3593
        %4403 = vst.msk [vmem:[%s200 + $0x9d8] sm:$0xff] %vm4087, %v3595
        %4404 = vst.msk [vmem:[%s200 + $0x9e0] sm:$0xff] %vm4087, %v3598
        %4405 = vst.msk [vmem:[%s200 + $0x9e8] sm:$0xff] %vm4087, %v3600
        %4406 = vst.msk [vmem:[%s200 + $0x9f0] sm:$0xff] %vm4087, %v3603
        %4407 = vst.msk [vmem:[%s200 + $0x9f8] sm:$0xff] %vm4087, %v3605
        %4408 = vst.msk [vmem:[%s200 + $0xa00] sm:$0xff] %vm4087, %v3608
        %4409 = vst.msk [vmem:[%s200 + $0xa08] sm:$0xff] %vm4087, %v3610
        %4410 = vst.msk [vmem:[%s200 + $0xa10] sm:$0xff] %vm4087, %v3613
        %4411 = vst.msk [vmem:[%s200 + $0xa18] sm:$0xff] %vm4087, %v3615
        %4412 = vst.msk [vmem:[%s200 + $0xa20] sm:$0xff] %vm4087, %v3618
        %4413 = vst.msk [vmem:[%s200 + $0xa28] sm:$0xff] %vm4087, %v3620
        %4414 = vst.msk [vmem:[%s200 + $0xa30] sm:$0xff] %vm4087, %v3623
        %4415 = vst.msk [vmem:[%s200 + $0xa38] sm:$0xff] %vm4087, %v3625
        %4416 = vst.msk [vmem:[%s200 + $0xa40] sm:$0xff] %vm4087, %v3628
        %4417 = vst.msk [vmem:[%s200 + $0xa48] sm:$0xff] %vm4087, %v3630
        %4418 = vst.msk [vmem:[%s200 + $0xa50] sm:$0xff] %vm4087, %v3633
        %4419 = vst.msk [vmem:[%s200 + $0xa58] sm:$0xff] %vm4087, %v3635
        %4420 = vst.msk [vmem:[%s200 + $0xa60] sm:$0xff] %vm4087, %v3638
        %4421 = vst.msk [vmem:[%s200 + $0xa68] sm:$0xff] %vm4087, %v3640
        %4422 = vst.msk [vmem:[%s200 + $0xa70] sm:$0xff] %vm4087, %v3643
        %4423 = vst.msk [vmem:[%s200 + $0xa78] sm:$0xff] %vm4087, %v3645
        %4424 = vst.msk [vmem:[%s200 + $0xa80] sm:$0xff] %vm4087, %v3648
        %4425 = vst.msk [vmem:[%s200 + $0xa88] sm:$0xff] %vm4087, %v3650
        %4426 = vst.msk [vmem:[%s200 + $0xa90] sm:$0xff] %vm4087, %v3653
        %4427 = vst.msk [vmem:[%s200 + $0xa98] sm:$0xff] %vm4087, %v3655
        %4428 = vst.msk [vmem:[%s200 + $0xaa0] sm:$0xff] %vm4087, %v3658
        %4429 = vst.msk [vmem:[%s200 + $0xaa8] sm:$0xff] %vm4087, %v3660
        %4430 = vst.msk [vmem:[%s200 + $0xab0] sm:$0xff] %vm4087, %v3663
        %4431 = vst.msk [vmem:[%s200 + $0xab8] sm:$0xff] %vm4087, %v3665
        %4432 = vst.msk [vmem:[%s200 + $0xac0] sm:$0xff] %vm4087, %v3668
        %4433 = vst.msk [vmem:[%s200 + $0xac8] sm:$0xff] %vm4087, %v3670
        %4434 = vst.msk [vmem:[%s200 + $0xad0] sm:$0xff] %vm4087, %v3673
        %4435 = vst.msk [vmem:[%s200 + $0xad8] sm:$0xff] %vm4087, %v3675
        %4436 = vst.msk [vmem:[%s200 + $0xae0] sm:$0xff] %vm4087, %v3678
        %4437 = vst.msk [vmem:[%s200 + $0xae8] sm:$0xff] %vm4087, %v3680
        %4438 = vst.msk [vmem:[%s200 + $0xaf0] sm:$0xff] %vm4087, %v3683
        %4439 = vst.msk [vmem:[%s200 + $0xaf8] sm:$0xff] %vm4087, %v3685
        %4440 = vst.msk [vmem:[%s200 + $0xb00] sm:$0xff] %vm4087, %v3688
        %4441 = vst.msk [vmem:[%s200 + $0xb08] sm:$0xff] %vm4087, %v3690
        %4442 = vst.msk [vmem:[%s200 + $0xb10] sm:$0xff] %vm4087, %v3693
        %4443 = vst.msk [vmem:[%s200 + $0xb18] sm:$0xff] %vm4087, %v3695
        %4444 = vst.msk [vmem:[%s200 + $0xb20] sm:$0xff] %vm4087, %v3698
        %4445 = vst.msk [vmem:[%s200 + $0xb28] sm:$0xff] %vm4087, %v3700
        %4446 = vst.msk [vmem:[%s200 + $0xb30] sm:$0xff] %vm4087, %v3703
        %4447 = vst.msk [vmem:[%s200 + $0xb38] sm:$0xff] %vm4087, %v3705
        %4448 = vst.msk [vmem:[%s200 + $0xb40] sm:$0xff] %vm4087, %v3708
        %4449 = vst.msk [vmem:[%s200 + $0xb48] sm:$0xff] %vm4087, %v3710
        %4450 = vst.msk [vmem:[%s200 + $0xb50] sm:$0xff] %vm4087, %v3713
        %4451 = vst.msk [vmem:[%s200 + $0xb58] sm:$0xff] %vm4087, %v3715
        %4452 = vst.msk [vmem:[%s200 + $0xb60] sm:$0xff] %vm4087, %v3718
        %4453 = vst.msk [vmem:[%s200 + $0xb68] sm:$0xff] %vm4087, %v3720
        %4454 = vst.msk [vmem:[%s200 + $0xb70] sm:$0xff] %vm4087, %v3723
        %4455 = vst.msk [vmem:[%s200 + $0xb78] sm:$0xff] %vm4087, %v3725
        %4456 = vst.msk [vmem:[%s200 + $0xb80] sm:$0xff] %vm4087, %v3728
        %4457 = vst.msk [vmem:[%s200 + $0xb88] sm:$0xff] %vm4087, %v3730
        %4458 = vst.msk [vmem:[%s200 + $0xb90] sm:$0xff] %vm4087, %v3733
        %4459 = vst.msk [vmem:[%s200 + $0xb98] sm:$0xff] %vm4087, %v3735
        %4460 = vst.msk [vmem:[%s200 + $0xba0] sm:$0xff] %vm4087, %v3738
        %4461 = vst.msk [vmem:[%s200 + $0xba8] sm:$0xff] %vm4087, %v3740
        %4462 = vst.msk [vmem:[%s200 + $0xbb0] sm:$0xff] %vm4087, %v3743
        %4463 = vst.msk [vmem:[%s200 + $0xbb8] sm:$0xff] %vm4087, %v3745
        %4464 = vst.msk [vmem:[%s200 + $0xbc0] sm:$0xff] %vm4087, %v3748
        %4465 = vst.msk [vmem:[%s200 + $0xbc8] sm:$0xff] %vm4087, %v3750
        %4466 = vst.msk [vmem:[%s200 + $0xbd0] sm:$0xff] %vm4087, %v3753
        %4467 = vst.msk [vmem:[%s200 + $0xbd8] sm:$0xff] %vm4087, %v3755
        %4468 = vst.msk [vmem:[%s200 + $0xbe0] sm:$0xff] %vm4087, %v3758
        %4469 = vst.msk [vmem:[%s200 + $0xbe8] sm:$0xff] %vm4087, %v3760
        %4470 = vst.msk [vmem:[%s200 + $0xbf0] sm:$0xff] %vm4087, %v3763
        %4471 = vst.msk [vmem:[%s200 + $0xbf8] sm:$0xff] %vm4087, %v3765
        %4472 = vst.msk [vmem:[%s200 + $0xc00] sm:$0xff] %vm4087, %v3768
        %4473 = vst.msk [vmem:[%s200 + $0xc08] sm:$0xff] %vm4087, %v3770
        %4474 = vst.msk [vmem:[%s200 + $0xc10] sm:$0xff] %vm4087, %v3773
        %4475 = vst.msk [vmem:[%s200 + $0xc18] sm:$0xff] %vm4087, %v3775
        %4476 = vst.msk [vmem:[%s200 + $0xc20] sm:$0xff] %vm4087, %v3778
        %4477 = vst.msk [vmem:[%s200 + $0xc28] sm:$0xff] %vm4087, %v3780
        %4478 = vst.msk [vmem:[%s200 + $0xc30] sm:$0xff] %vm4087, %v3783
        %4479 = vst.msk [vmem:[%s200 + $0xc38] sm:$0xff] %vm4087, %v3785
        %4480 = vst.msk [vmem:[%s200 + $0xc40] sm:$0xff] %vm4087, %v3788
        %4481 = vst.msk [vmem:[%s200 + $0xc48] sm:$0xff] %vm4087, %v3790
        %4482 = vst.msk [vmem:[%s200 + $0xc50] sm:$0xff] %vm4087, %v3793
        %4483 = vst.msk [vmem:[%s200 + $0xc58] sm:$0xff] %vm4087, %v3795
        %4484 = vst.msk [vmem:[%s200 + $0xc60] sm:$0xff] %vm4087, %v3798
        %4485 = vst.msk [vmem:[%s200 + $0xc68] sm:$0xff] %vm4087, %v3800
        %4486 = vst.msk [vmem:[%s200 + $0xc70] sm:$0xff] %vm4087, %v3803
        %4487 = vst.msk [vmem:[%s200 + $0xc78] sm:$0xff] %vm4087, %v3805
        %4488 = vst.msk [vmem:[%s200 + $0xc80] sm:$0xff] %vm4087, %v3808
        %4489 = vst.msk [vmem:[%s200 + $0xc88] sm:$0xff] %vm4087, %v3810
        %4490 = vst.msk [vmem:[%s200 + $0xc90] sm:$0xff] %vm4087, %v3813
        %4491 = vst.msk [vmem:[%s200 + $0xc98] sm:$0xff] %vm4087, %v3815
        %4492 = vst.msk [vmem:[%s200 + $0xca0] sm:$0xff] %vm4087, %v3818
        %4493 = vst.msk [vmem:[%s200 + $0xca8] sm:$0xff] %vm4087, %v3820
        %4494 = vst.msk [vmem:[%s200 + $0xcb0] sm:$0xff] %vm4087, %v3823
        %4495 = vst.msk [vmem:[%s200 + $0xcb8] sm:$0xff] %vm4087, %v3825
        %4496 = vst.msk [vmem:[%s200 + $0xcc0] sm:$0xff] %vm4087, %v3828
        %4497 = vst.msk [vmem:[%s200 + $0xcc8] sm:$0xff] %vm4087, %v3830
        %4498 = vst.msk [vmem:[%s200 + $0xcd0] sm:$0xff] %vm4087, %v3833
        %4499 = vst.msk [vmem:[%s200 + $0xcd8] sm:$0xff] %vm4087, %v3835
        %4500 = vst.msk [vmem:[%s200 + $0xce0] sm:$0xff] %vm4087, %v3838
        %4501 = vst.msk [vmem:[%s200 + $0xce8] sm:$0xff] %vm4087, %v3840
        %4502 = vst.msk [vmem:[%s200 + $0xcf0] sm:$0xff] %vm4087, %v3843
        %4503 = vst.msk [vmem:[%s200 + $0xcf8] sm:$0xff] %vm4087, %v3845
        %4504 = vst.msk [vmem:[%s200 + $0xd00] sm:$0xff] %vm4087, %v3848
        %4505 = vst.msk [vmem:[%s200 + $0xd08] sm:$0xff] %vm4087, %v3850
        %4506 = vst.msk [vmem:[%s200 + $0xd10] sm:$0xff] %vm4087, %v3853
        %4507 = vst.msk [vmem:[%s200 + $0xd18] sm:$0xff] %vm4087, %v3855
        %4508 = vst.msk [vmem:[%s200 + $0xd20] sm:$0xff] %vm4087, %v3858
        %4509 = vst.msk [vmem:[%s200 + $0xd28] sm:$0xff] %vm4087, %v3860
        %4510 = vst.msk [vmem:[%s200 + $0xd30] sm:$0xff] %vm4087, %v3863
        %4511 = vst.msk [vmem:[%s200 + $0xd38] sm:$0xff] %vm4087, %v3865
        %4512 = vst.msk [vmem:[%s200 + $0xd40] sm:$0xff] %vm4087, %v3868
        %4513 = vst.msk [vmem:[%s200 + $0xd48] sm:$0xff] %vm4087, %v3870
        %4514 = vst.msk [vmem:[%s200 + $0xd50] sm:$0xff] %vm4087, %v3873
        %4515 = vst.msk [vmem:[%s200 + $0xd58] sm:$0xff] %vm4087, %v3875
        %4516 = vst.msk [vmem:[%s200 + $0xd60] sm:$0xff] %vm4087, %v3878
        %4517 = vst.msk [vmem:[%s200 + $0xd68] sm:$0xff] %vm4087, %v3880
        %4518 = vst.msk [vmem:[%s200 + $0xd70] sm:$0xff] %vm4087, %v3883
        %4519 = vst.msk [vmem:[%s200 + $0xd78] sm:$0xff] %vm4087, %v3885
        %4520 = vst.msk [vmem:[%s200 + $0xd80] sm:$0xff] %vm4087, %v3888
        %4521 = vst.msk [vmem:[%s200 + $0xd88] sm:$0xff] %vm4087, %v3890
        %4522 = vst.msk [vmem:[%s200 + $0xd90] sm:$0xff] %vm4087, %v3893
        %4523 = vst.msk [vmem:[%s200 + $0xd98] sm:$0xff] %vm4087, %v3895
        %4524 = vst.msk [vmem:[%s200 + $0xda0] sm:$0xff] %vm4087, %v3898
        %4525 = vst.msk [vmem:[%s200 + $0xda8] sm:$0xff] %vm4087, %v3900
        %4526 = vst.msk [vmem:[%s200 + $0xdb0] sm:$0xff] %vm4087, %v3903
        %4527 = vst.msk [vmem:[%s200 + $0xdb8] sm:$0xff] %vm4087, %v3905
        %4528 = vst.msk [vmem:[%s200 + $0xdc0] sm:$0xff] %vm4087, %v3908
        %4529 = vst.msk [vmem:[%s200 + $0xdc8] sm:$0xff] %vm4087, %v3910
        %4530 = vst.msk [vmem:[%s200 + $0xdd0] sm:$0xff] %vm4087, %v3913
        %4531 = vst.msk [vmem:[%s200 + $0xdd8] sm:$0xff] %vm4087, %v3915
        %4532 = vst.msk [vmem:[%s200 + $0xde0] sm:$0xff] %vm4087, %v3918
        %4533 = vst.msk [vmem:[%s200 + $0xde8] sm:$0xff] %vm4087, %v3920
        %4534 = vst.msk [vmem:[%s200 + $0xdf0] sm:$0xff] %vm4087, %v3923
        %4535 = vst.msk [vmem:[%s200 + $0xdf8] sm:$0xff] %vm4087, %v3925
        %4536 = vst.msk [vmem:[%s200 + $0xe00] sm:$0xff] %vm4087, %v3928
        %4537 = vst.msk [vmem:[%s200 + $0xe08] sm:$0xff] %vm4087, %v3930
        %4538 = vst.msk [vmem:[%s200 + $0xe10] sm:$0xff] %vm4087, %v3933
        %4539 = vst.msk [vmem:[%s200 + $0xe18] sm:$0xff] %vm4087, %v3935
        %4540 = vst.msk [vmem:[%s200 + $0xe20] sm:$0xff] %vm4087, %v3938
        %4541 = vst.msk [vmem:[%s200 + $0xe28] sm:$0xff] %vm4087, %v3940
        %4542 = vst.msk [vmem:[%s200 + $0xe30] sm:$0xff] %vm4087, %v3943
        %4543 = vst.msk [vmem:[%s200 + $0xe38] sm:$0xff] %vm4087, %v3945
        %4544 = vst.msk [vmem:[%s200 + $0xe40] sm:$0xff] %vm4087, %v3948
        %4545 = vst.msk [vmem:[%s200 + $0xe48] sm:$0xff] %vm4087, %v3950
        %4546 = vst.msk [vmem:[%s200 + $0xe50] sm:$0xff] %vm4087, %v3953
        %4547 = vst.msk [vmem:[%s200 + $0xe58] sm:$0xff] %vm4087, %v3955
        %4548 = vst.msk [vmem:[%s200 + $0xe60] sm:$0xff] %vm4087, %v3958
        %4549 = vst.msk [vmem:[%s200 + $0xe68] sm:$0xff] %vm4087, %v3960
        %4550 = vst.msk [vmem:[%s200 + $0xe70] sm:$0xff] %vm4087, %v3963
        %4551 = vst.msk [vmem:[%s200 + $0xe78] sm:$0xff] %vm4087, %v3965
        %4552 = vst.msk [vmem:[%s200 + $0xe80] sm:$0xff] %vm4087, %v3968
        %4553 = vst.msk [vmem:[%s200 + $0xe88] sm:$0xff] %vm4087, %v3970
        %4554 = vst.msk [vmem:[%s200 + $0xe90] sm:$0xff] %vm4087, %v3973
        %4555 = vst.msk [vmem:[%s200 + $0xe98] sm:$0xff] %vm4087, %v3975
        %4556 = vst.msk [vmem:[%s200 + $0xea0] sm:$0xff] %vm4087, %v3978
        %4557 = vst.msk [vmem:[%s200 + $0xea8] sm:$0xff] %vm4087, %v3980
        %4558 = vst.msk [vmem:[%s200 + $0xeb0] sm:$0xff] %vm4087, %v3983
        %4559 = vst.msk [vmem:[%s200 + $0xeb8] sm:$0xff] %vm4087, %v3985
        %4560 = vst.msk [vmem:[%s200 + $0xec0] sm:$0xff] %vm4087, %v3988
        %4561 = vst.msk [vmem:[%s200 + $0xec8] sm:$0xff] %vm4087, %v3990
        %4562 = vst.msk [vmem:[%s200 + $0xed0] sm:$0xff] %vm4087, %v3993
        %4563 = vst.msk [vmem:[%s200 + $0xed8] sm:$0xff] %vm4087, %v3995
        %4564 = vst.msk [vmem:[%s200 + $0xee0] sm:$0xff] %vm4087, %v3998
        %4565 = vst.msk [vmem:[%s200 + $0xee8] sm:$0xff] %vm4087, %v4000
        %4566 = vst.msk [vmem:[%s200 + $0xef0] sm:$0xff] %vm4087, %v4003
        %4567 = vst.msk [vmem:[%s200 + $0xef8] sm:$0xff] %vm4087, %v4005
        %4568 = vst.msk [vmem:[%s200 + $0xf00] sm:$0xff] %vm4087, %v4008
        %4569 = vst.msk [vmem:[%s200 + $0xf08] sm:$0xff] %vm4087, %v4010
        %4570 = vst.msk [vmem:[%s200 + $0xf10] sm:$0xff] %vm4087, %v4013
        %4571 = vst.msk [vmem:[%s200 + $0xf18] sm:$0xff] %vm4087, %v4015
        %4572 = vst.msk [vmem:[%s200 + $0xf20] sm:$0xff] %vm4087, %v4018
        %4573 = vst.msk [vmem:[%s200 + $0xf28] sm:$0xff] %vm4087, %v4020
        %4574 = vst.msk [vmem:[%s200 + $0xf30] sm:$0xff] %vm4087, %v4023
        %4575 = vst.msk [vmem:[%s200 + $0xf38] sm:$0xff] %vm4087, %v4025
        %4576 = vst.msk [vmem:[%s200 + $0xf40] sm:$0xff] %vm4087, %v4028
        %4577 = vst.msk [vmem:[%s200 + $0xf48] sm:$0xff] %vm4087, %v4030
        %4578 = vst.msk [vmem:[%s200 + $0xf50] sm:$0xff] %vm4087, %v4033
        %4579 = vst.msk [vmem:[%s200 + $0xf58] sm:$0xff] %vm4087, %v4035
        %4580 = vst.msk [vmem:[%s200 + $0xf60] sm:$0xff] %vm4087, %v4038
        %4581 = vst.msk [vmem:[%s200 + $0xf68] sm:$0xff] %vm4087, %v4040
        %4582 = vst.msk [vmem:[%s200 + $0xf70] sm:$0xff] %vm4087, %v4043
        %4583 = vst.msk [vmem:[%s200 + $0xf78] sm:$0xff] %vm4087, %v4045
        %4584 = vst.msk [vmem:[%s200 + $0xf80] sm:$0xff] %vm4087, %v4048
        %4585 = vst.msk [vmem:[%s200 + $0xf88] sm:$0xff] %vm4087, %v4050
        %4586 = vst.msk [vmem:[%s200 + $0xf90] sm:$0xff] %vm4087, %v4053
        %4587 = vst.msk [vmem:[%s200 + $0xf98] sm:$0xff] %vm4087, %v4055
        %4588 = vst.msk [vmem:[%s200 + $0xfa0] sm:$0xff] %vm4087, %v4058
        %4589 = vst.msk [vmem:[%s200 + $0xfa8] sm:$0xff] %vm4087, %v4060
        %4590 = vst.msk [vmem:[%s200 + $0xfb0] sm:$0xff] %vm4087, %v4063
        %4591 = vst.msk [vmem:[%s200 + $0xfb8] sm:$0xff] %vm4087, %v4065
        %4592 = vst.msk [vmem:[%s200 + $0xfc0] sm:$0xff] %vm4087, %v4068
        %4593 = vst.msk [vmem:[%s200 + $0xfc8] sm:$0xff] %vm4087, %v4070
        %4594 = vst.msk [vmem:[%s200 + $0xfd0] sm:$0xff] %vm4087, %v4073
        %4595 = vst.msk [vmem:[%s200 + $0xfd8] sm:$0xff] %vm4087, %v4075
        %4596 = vst.msk [vmem:[%s200 + $0xfe0] sm:$0xff] %vm4087, %v4078
        %4597 = vst.msk [vmem:[%s200 + $0xfe8] sm:$0xff] %vm4087, %v4080
        %4598 = vst.msk [vmem:[%s200 + $0xff0] sm:$0xff] %vm4087, %v4083
        %4599 = vst.msk [vmem:[%s200 + $0xff8] sm:$0xff] %vm4087, %v4085
        %v4600 = vld [vmem:[%s2] sm:$0xf]
        %v4602 = vsel %vm2794, %v4600, 0
        %4604 = vmatpush.bf16.msra.mxu0 0
        %4605 = vmatpush.bf16.msra.mxu0 0
        %4606 = vmatpush.bf16.msra.mxu0 0
        %4607 = vmatpush.bf16.msra.mxu0 0
        %4608 = vmatpush.bf16.msra.mxu0 0
        %4609 = vmatpush.bf16.msra.mxu0 0
        %4610 = vmatpush.bf16.msra.mxu0 0
        %4611 = vmatpush.bf16.msra.mxu0 %v4602
        %4612 = vmatmul.bf16.gmra.mxu0 %v2027
        %v4613 = vpop.f32.mrf.mxu0
        %v4614 = vadd.f32 0.0, %v4613
        %v4615 = vpop.f32.mrf.mxu0
        %v4616 = vadd.f32 0.0, %v4615
        %4617 = vmatmul.bf16.gmra.mxu0 %v2030
        %v4618 = vpop.f32.mrf.mxu0
        %v4619 = vadd.f32 0.0, %v4618
        %v4620 = vpop.f32.mrf.mxu0
        %v4621 = vadd.f32 0.0, %v4620
        %4622 = vmatmul.bf16.gmra.mxu0 %v2033
        %v4623 = vpop.f32.mrf.mxu0
        %v4624 = vadd.f32 0.0, %v4623
        %v4625 = vpop.f32.mrf.mxu0
        %v4626 = vadd.f32 0.0, %v4625
        %4627 = vmatmul.bf16.gmra.mxu0 %v2036
        %v4628 = vpop.f32.mrf.mxu0
        %v4629 = vadd.f32 0.0, %v4628
        %v4630 = vpop.f32.mrf.mxu0
        %v4631 = vadd.f32 0.0, %v4630
        %4632 = vmatmul.bf16.gmra.mxu0 %v2039
        %v4633 = vpop.f32.mrf.mxu0
        %v4634 = vadd.f32 0.0, %v4633
        %v4635 = vpop.f32.mrf.mxu0
        %v4636 = vadd.f32 0.0, %v4635
        %4637 = vmatmul.bf16.gmra.mxu0 %v2042
        %v4638 = vpop.f32.mrf.mxu0
        %v4639 = vadd.f32 0.0, %v4638
        %v4640 = vpop.f32.mrf.mxu0
        %v4641 = vadd.f32 0.0, %v4640
        %4642 = vmatmul.bf16.gmra.mxu0 %v2045
        %v4643 = vpop.f32.mrf.mxu0
        %v4644 = vadd.f32 0.0, %v4643
        %v4645 = vpop.f32.mrf.mxu0
        %v4646 = vadd.f32 0.0, %v4645
        %4647 = vmatmul.bf16.gmra.mxu0 %v2048
        %v4648 = vpop.f32.mrf.mxu0
        %v4649 = vadd.f32 0.0, %v4648
        %v4650 = vpop.f32.mrf.mxu0
        %v4651 = vadd.f32 0.0, %v4650
        %4652 = vmatmul.bf16.gmra.mxu0 %v2051
        %v4653 = vpop.f32.mrf.mxu0
        %v4654 = vadd.f32 0.0, %v4653
        %v4655 = vpop.f32.mrf.mxu0
        %v4656 = vadd.f32 0.0, %v4655
        %4657 = vmatmul.bf16.gmra.mxu0 %v2054
        %v4658 = vpop.f32.mrf.mxu0
        %v4659 = vadd.f32 0.0, %v4658
        %v4660 = vpop.f32.mrf.mxu0
        %v4661 = vadd.f32 0.0, %v4660
        %4662 = vmatmul.bf16.gmra.mxu0 %v2057
        %v4663 = vpop.f32.mrf.mxu0
        %v4664 = vadd.f32 0.0, %v4663
        %v4665 = vpop.f32.mrf.mxu0
        %v4666 = vadd.f32 0.0, %v4665
        %4667 = vmatmul.bf16.gmra.mxu0 %v2060
        %v4668 = vpop.f32.mrf.mxu0
        %v4669 = vadd.f32 0.0, %v4668
        %v4670 = vpop.f32.mrf.mxu0
        %v4671 = vadd.f32 0.0, %v4670
        %4672 = vmatmul.bf16.gmra.mxu0 %v2063
        %v4673 = vpop.f32.mrf.mxu0
        %v4674 = vadd.f32 0.0, %v4673
        %v4675 = vpop.f32.mrf.mxu0
        %v4676 = vadd.f32 0.0, %v4675
        %4677 = vmatmul.bf16.gmra.mxu0 %v2066
        %v4678 = vpop.f32.mrf.mxu0
        %v4679 = vadd.f32 0.0, %v4678
        %v4680 = vpop.f32.mrf.mxu0
        %v4681 = vadd.f32 0.0, %v4680
        %4682 = vmatmul.bf16.gmra.mxu0 %v2069
        %v4683 = vpop.f32.mrf.mxu0
        %v4684 = vadd.f32 0.0, %v4683
        %v4685 = vpop.f32.mrf.mxu0
        %v4686 = vadd.f32 0.0, %v4685
        %4687 = vmatmul.bf16.gmra.mxu0 %v2072
        %v4688 = vpop.f32.mrf.mxu0
        %v4689 = vadd.f32 0.0, %v4688
        %v4690 = vpop.f32.mrf.mxu0
        %v4691 = vadd.f32 0.0, %v4690
        %4692 = vmatmul.bf16.gmra.mxu0 %v2075
        %v4693 = vpop.f32.mrf.mxu0
        %v4694 = vadd.f32 0.0, %v4693
        %v4695 = vpop.f32.mrf.mxu0
        %v4696 = vadd.f32 0.0, %v4695
        %4697 = vmatmul.bf16.gmra.mxu0 %v2078
        %v4698 = vpop.f32.mrf.mxu0
        %v4699 = vadd.f32 0.0, %v4698
        %v4700 = vpop.f32.mrf.mxu0
        %v4701 = vadd.f32 0.0, %v4700
        %4702 = vmatmul.bf16.gmra.mxu0 %v2081
        %v4703 = vpop.f32.mrf.mxu0
        %v4704 = vadd.f32 0.0, %v4703
        %v4705 = vpop.f32.mrf.mxu0
        %v4706 = vadd.f32 0.0, %v4705
        %4707 = vmatmul.bf16.gmra.mxu0 %v2084
        %v4708 = vpop.f32.mrf.mxu0
        %v4709 = vadd.f32 0.0, %v4708
        %v4710 = vpop.f32.mrf.mxu0
        %v4711 = vadd.f32 0.0, %v4710
        %4712 = vmatmul.bf16.gmra.mxu0 %v2087
        %v4713 = vpop.f32.mrf.mxu0
        %v4714 = vadd.f32 0.0, %v4713
        %v4715 = vpop.f32.mrf.mxu0
        %v4716 = vadd.f32 0.0, %v4715
        %4717 = vmatmul.bf16.gmra.mxu0 %v2090
        %v4718 = vpop.f32.mrf.mxu0
        %v4719 = vadd.f32 0.0, %v4718
        %v4720 = vpop.f32.mrf.mxu0
        %v4721 = vadd.f32 0.0, %v4720
        %4722 = vmatmul.bf16.gmra.mxu0 %v2093
        %v4723 = vpop.f32.mrf.mxu0
        %v4724 = vadd.f32 0.0, %v4723
        %v4725 = vpop.f32.mrf.mxu0
        %v4726 = vadd.f32 0.0, %v4725
        %4727 = vmatmul.bf16.gmra.mxu0 %v2096
        %v4728 = vpop.f32.mrf.mxu0
        %v4729 = vadd.f32 0.0, %v4728
        %v4730 = vpop.f32.mrf.mxu0
        %v4731 = vadd.f32 0.0, %v4730
        %4732 = vmatmul.bf16.gmra.mxu0 %v2099
        %v4733 = vpop.f32.mrf.mxu0
        %v4734 = vadd.f32 0.0, %v4733
        %v4735 = vpop.f32.mrf.mxu0
        %v4736 = vadd.f32 0.0, %v4735
        %4737 = vmatmul.bf16.gmra.mxu0 %v2102
        %v4738 = vpop.f32.mrf.mxu0
        %v4739 = vadd.f32 0.0, %v4738
        %v4740 = vpop.f32.mrf.mxu0
        %v4741 = vadd.f32 0.0, %v4740
        %4742 = vmatmul.bf16.gmra.mxu0 %v2105
        %v4743 = vpop.f32.mrf.mxu0
        %v4744 = vadd.f32 0.0, %v4743
        %v4745 = vpop.f32.mrf.mxu0
        %v4746 = vadd.f32 0.0, %v4745
        %4747 = vmatmul.bf16.gmra.mxu0 %v2108
        %v4748 = vpop.f32.mrf.mxu0
        %v4749 = vadd.f32 0.0, %v4748
        %v4750 = vpop.f32.mrf.mxu0
        %v4751 = vadd.f32 0.0, %v4750
        %4752 = vmatmul.bf16.gmra.mxu0 %v2111
        %v4753 = vpop.f32.mrf.mxu0
        %v4754 = vadd.f32 0.0, %v4753
        %v4755 = vpop.f32.mrf.mxu0
        %v4756 = vadd.f32 0.0, %v4755
        %4757 = vmatmul.bf16.gmra.mxu0 %v2114
        %v4758 = vpop.f32.mrf.mxu0
        %v4759 = vadd.f32 0.0, %v4758
        %v4760 = vpop.f32.mrf.mxu0
        %v4761 = vadd.f32 0.0, %v4760
        %4762 = vmatmul.bf16.gmra.mxu0 %v2117
        %v4763 = vpop.f32.mrf.mxu0
        %v4764 = vadd.f32 0.0, %v4763
        %v4765 = vpop.f32.mrf.mxu0
        %v4766 = vadd.f32 0.0, %v4765
        %4767 = vmatmul.bf16.gmra.mxu0 %v2120
        %v4768 = vpop.f32.mrf.mxu0
        %v4769 = vadd.f32 0.0, %v4768
        %v4770 = vpop.f32.mrf.mxu0
        %v4771 = vadd.f32 0.0, %v4770
        %4772 = vmatmul.bf16.gmra.mxu0 %v2123
        %v4773 = vpop.f32.mrf.mxu0
        %v4774 = vadd.f32 0.0, %v4773
        %v4775 = vpop.f32.mrf.mxu0
        %v4776 = vadd.f32 0.0, %v4775
        %4777 = vmatmul.bf16.gmra.mxu0 %v2126
        %v4778 = vpop.f32.mrf.mxu0
        %v4779 = vadd.f32 0.0, %v4778
        %v4780 = vpop.f32.mrf.mxu0
        %v4781 = vadd.f32 0.0, %v4780
        %4782 = vmatmul.bf16.gmra.mxu0 %v2129
        %v4783 = vpop.f32.mrf.mxu0
        %v4784 = vadd.f32 0.0, %v4783
        %v4785 = vpop.f32.mrf.mxu0
        %v4786 = vadd.f32 0.0, %v4785
        %4787 = vmatmul.bf16.gmra.mxu0 %v2132
        %v4788 = vpop.f32.mrf.mxu0
        %v4789 = vadd.f32 0.0, %v4788
        %v4790 = vpop.f32.mrf.mxu0
        %v4791 = vadd.f32 0.0, %v4790
        %4792 = vmatmul.bf16.gmra.mxu0 %v2135
        %v4793 = vpop.f32.mrf.mxu0
        %v4794 = vadd.f32 0.0, %v4793
        %v4795 = vpop.f32.mrf.mxu0
        %v4796 = vadd.f32 0.0, %v4795
        %4797 = vmatmul.bf16.gmra.mxu0 %v2138
        %v4798 = vpop.f32.mrf.mxu0
        %v4799 = vadd.f32 0.0, %v4798
        %v4800 = vpop.f32.mrf.mxu0
        %v4801 = vadd.f32 0.0, %v4800
        %4802 = vmatmul.bf16.gmra.mxu0 %v2141
        %v4803 = vpop.f32.mrf.mxu0
        %v4804 = vadd.f32 0.0, %v4803
        %v4805 = vpop.f32.mrf.mxu0
        %v4806 = vadd.f32 0.0, %v4805
        %4807 = vmatmul.bf16.gmra.mxu0 %v2144
        %v4808 = vpop.f32.mrf.mxu0
        %v4809 = vadd.f32 0.0, %v4808
        %v4810 = vpop.f32.mrf.mxu0
        %v4811 = vadd.f32 0.0, %v4810
        %4812 = vmatmul.bf16.gmra.mxu0 %v2147
        %v4813 = vpop.f32.mrf.mxu0
        %v4814 = vadd.f32 0.0, %v4813
        %v4815 = vpop.f32.mrf.mxu0
        %v4816 = vadd.f32 0.0, %v4815
        %4817 = vmatmul.bf16.gmra.mxu0 %v2150
        %v4818 = vpop.f32.mrf.mxu0
        %v4819 = vadd.f32 0.0, %v4818
        %v4820 = vpop.f32.mrf.mxu0
        %v4821 = vadd.f32 0.0, %v4820
        %4822 = vmatmul.bf16.gmra.mxu0 %v2153
        %v4823 = vpop.f32.mrf.mxu0
        %v4824 = vadd.f32 0.0, %v4823
        %v4825 = vpop.f32.mrf.mxu0
        %v4826 = vadd.f32 0.0, %v4825
        %4827 = vmatmul.bf16.gmra.mxu0 %v2156
        %v4828 = vpop.f32.mrf.mxu0
        %v4829 = vadd.f32 0.0, %v4828
        %v4830 = vpop.f32.mrf.mxu0
        %v4831 = vadd.f32 0.0, %v4830
        %4832 = vmatmul.bf16.gmra.mxu0 %v2159
        %v4833 = vpop.f32.mrf.mxu0
        %v4834 = vadd.f32 0.0, %v4833
        %v4835 = vpop.f32.mrf.mxu0
        %v4836 = vadd.f32 0.0, %v4835
        %4837 = vmatmul.bf16.gmra.mxu0 %v2162
        %v4838 = vpop.f32.mrf.mxu0
        %v4839 = vadd.f32 0.0, %v4838
        %v4840 = vpop.f32.mrf.mxu0
        %v4841 = vadd.f32 0.0, %v4840
        %4842 = vmatmul.bf16.gmra.mxu0 %v2165
        %v4843 = vpop.f32.mrf.mxu0
        %v4844 = vadd.f32 0.0, %v4843
        %v4845 = vpop.f32.mrf.mxu0
        %v4846 = vadd.f32 0.0, %v4845
        %4847 = vmatmul.bf16.gmra.mxu0 %v2168
        %v4848 = vpop.f32.mrf.mxu0
        %v4849 = vadd.f32 0.0, %v4848
        %v4850 = vpop.f32.mrf.mxu0
        %v4851 = vadd.f32 0.0, %v4850
        %4852 = vmatmul.bf16.gmra.mxu0 %v2171
        %v4853 = vpop.f32.mrf.mxu0
        %v4854 = vadd.f32 0.0, %v4853
        %v4855 = vpop.f32.mrf.mxu0
        %v4856 = vadd.f32 0.0, %v4855
        %4857 = vmatmul.bf16.gmra.mxu0 %v2174
        %v4858 = vpop.f32.mrf.mxu0
        %v4859 = vadd.f32 0.0, %v4858
        %v4860 = vpop.f32.mrf.mxu0
        %v4861 = vadd.f32 0.0, %v4860
        %4862 = vmatmul.bf16.gmra.mxu0 %v2177
        %v4863 = vpop.f32.mrf.mxu0
        %v4864 = vadd.f32 0.0, %v4863
        %v4865 = vpop.f32.mrf.mxu0
        %v4866 = vadd.f32 0.0, %v4865
        %4867 = vmatmul.bf16.gmra.mxu0 %v2180
        %v4868 = vpop.f32.mrf.mxu0
        %v4869 = vadd.f32 0.0, %v4868
        %v4870 = vpop.f32.mrf.mxu0
        %v4871 = vadd.f32 0.0, %v4870
        %4872 = vmatmul.bf16.gmra.mxu0 %v2183
        %v4873 = vpop.f32.mrf.mxu0
        %v4874 = vadd.f32 0.0, %v4873
        %v4875 = vpop.f32.mrf.mxu0
        %v4876 = vadd.f32 0.0, %v4875
        %4877 = vmatmul.bf16.gmra.mxu0 %v2186
        %v4878 = vpop.f32.mrf.mxu0
        %v4879 = vadd.f32 0.0, %v4878
        %v4880 = vpop.f32.mrf.mxu0
        %v4881 = vadd.f32 0.0, %v4880
        %4882 = vmatmul.bf16.gmra.mxu0 %v2189
        %v4883 = vpop.f32.mrf.mxu0
        %v4884 = vadd.f32 0.0, %v4883
        %v4885 = vpop.f32.mrf.mxu0
        %v4886 = vadd.f32 0.0, %v4885
        %4887 = vmatmul.bf16.gmra.mxu0 %v2192
        %v4888 = vpop.f32.mrf.mxu0
        %v4889 = vadd.f32 0.0, %v4888
        %v4890 = vpop.f32.mrf.mxu0
        %v4891 = vadd.f32 0.0, %v4890
        %4892 = vmatmul.bf16.gmra.mxu0 %v2195
        %v4893 = vpop.f32.mrf.mxu0
        %v4894 = vadd.f32 0.0, %v4893
        %v4895 = vpop.f32.mrf.mxu0
        %v4896 = vadd.f32 0.0, %v4895
        %4897 = vmatmul.bf16.gmra.mxu0 %v2198
        %v4898 = vpop.f32.mrf.mxu0
        %v4899 = vadd.f32 0.0, %v4898
        %v4900 = vpop.f32.mrf.mxu0
        %v4901 = vadd.f32 0.0, %v4900
        %4902 = vmatmul.bf16.gmra.mxu0 %v2201
        %v4903 = vpop.f32.mrf.mxu0
        %v4904 = vadd.f32 0.0, %v4903
        %v4905 = vpop.f32.mrf.mxu0
        %v4906 = vadd.f32 0.0, %v4905
        %4907 = vmatmul.bf16.gmra.mxu0 %v2204
        %v4908 = vpop.f32.mrf.mxu0
        %v4909 = vadd.f32 0.0, %v4908
        %v4910 = vpop.f32.mrf.mxu0
        %v4911 = vadd.f32 0.0, %v4910
        %4912 = vmatmul.bf16.gmra.mxu0 %v2207
        %v4913 = vpop.f32.mrf.mxu0
        %v4914 = vadd.f32 0.0, %v4913
        %v4915 = vpop.f32.mrf.mxu0
        %v4916 = vadd.f32 0.0, %v4915
        %4917 = vmatmul.bf16.gmra.mxu0 %v2210
        %v4918 = vpop.f32.mrf.mxu0
        %v4919 = vadd.f32 0.0, %v4918
        %v4920 = vpop.f32.mrf.mxu0
        %v4921 = vadd.f32 0.0, %v4920
        %4922 = vmatmul.bf16.gmra.mxu0 %v2213
        %v4923 = vpop.f32.mrf.mxu0
        %v4924 = vadd.f32 0.0, %v4923
        %v4925 = vpop.f32.mrf.mxu0
        %v4926 = vadd.f32 0.0, %v4925
        %4927 = vmatmul.bf16.gmra.mxu0 %v2216
        %v4928 = vpop.f32.mrf.mxu0
        %v4929 = vadd.f32 0.0, %v4928
        %v4930 = vpop.f32.mrf.mxu0
        %v4931 = vadd.f32 0.0, %v4930
        %4932 = vmatmul.bf16.gmra.mxu0 %v2219
        %v4933 = vpop.f32.mrf.mxu0
        %v4934 = vadd.f32 0.0, %v4933
        %v4935 = vpop.f32.mrf.mxu0
        %v4936 = vadd.f32 0.0, %v4935
        %4937 = vmatmul.bf16.gmra.mxu0 %v2222
        %v4938 = vpop.f32.mrf.mxu0
        %v4939 = vadd.f32 0.0, %v4938
        %v4940 = vpop.f32.mrf.mxu0
        %v4941 = vadd.f32 0.0, %v4940
        %4942 = vmatmul.bf16.gmra.mxu0 %v2225
        %v4943 = vpop.f32.mrf.mxu0
        %v4944 = vadd.f32 0.0, %v4943
        %v4945 = vpop.f32.mrf.mxu0
        %v4946 = vadd.f32 0.0, %v4945
        %4947 = vmatmul.bf16.gmra.mxu0 %v2228
        %v4948 = vpop.f32.mrf.mxu0
        %v4949 = vadd.f32 0.0, %v4948
        %v4950 = vpop.f32.mrf.mxu0
        %v4951 = vadd.f32 0.0, %v4950
        %4952 = vmatmul.bf16.gmra.mxu0 %v2231
        %v4953 = vpop.f32.mrf.mxu0
        %v4954 = vadd.f32 0.0, %v4953
        %v4955 = vpop.f32.mrf.mxu0
        %v4956 = vadd.f32 0.0, %v4955
        %4957 = vmatmul.bf16.gmra.mxu0 %v2234
        %v4958 = vpop.f32.mrf.mxu0
        %v4959 = vadd.f32 0.0, %v4958
        %v4960 = vpop.f32.mrf.mxu0
        %v4961 = vadd.f32 0.0, %v4960
        %4962 = vmatmul.bf16.gmra.mxu0 %v2237
        %v4963 = vpop.f32.mrf.mxu0
        %v4964 = vadd.f32 0.0, %v4963
        %v4965 = vpop.f32.mrf.mxu0
        %v4966 = vadd.f32 0.0, %v4965
        %4967 = vmatmul.bf16.gmra.mxu0 %v2240
        %v4968 = vpop.f32.mrf.mxu0
        %v4969 = vadd.f32 0.0, %v4968
        %v4970 = vpop.f32.mrf.mxu0
        %v4971 = vadd.f32 0.0, %v4970
        %4972 = vmatmul.bf16.gmra.mxu0 %v2243
        %v4973 = vpop.f32.mrf.mxu0
        %v4974 = vadd.f32 0.0, %v4973
        %v4975 = vpop.f32.mrf.mxu0
        %v4976 = vadd.f32 0.0, %v4975
        %4977 = vmatmul.bf16.gmra.mxu0 %v2246
        %v4978 = vpop.f32.mrf.mxu0
        %v4979 = vadd.f32 0.0, %v4978
        %v4980 = vpop.f32.mrf.mxu0
        %v4981 = vadd.f32 0.0, %v4980
        %4982 = vmatmul.bf16.gmra.mxu0 %v2249
        %v4983 = vpop.f32.mrf.mxu0
        %v4984 = vadd.f32 0.0, %v4983
        %v4985 = vpop.f32.mrf.mxu0
        %v4986 = vadd.f32 0.0, %v4985
        %4987 = vmatmul.bf16.gmra.mxu0 %v2252
        %v4988 = vpop.f32.mrf.mxu0
        %v4989 = vadd.f32 0.0, %v4988
        %v4990 = vpop.f32.mrf.mxu0
        %v4991 = vadd.f32 0.0, %v4990
        %4992 = vmatmul.bf16.gmra.mxu0 %v2255
        %v4993 = vpop.f32.mrf.mxu0
        %v4994 = vadd.f32 0.0, %v4993
        %v4995 = vpop.f32.mrf.mxu0
        %v4996 = vadd.f32 0.0, %v4995
        %4997 = vmatmul.bf16.gmra.mxu0 %v2258
        %v4998 = vpop.f32.mrf.mxu0
        %v4999 = vadd.f32 0.0, %v4998
        %v5000 = vpop.f32.mrf.mxu0
        %v5001 = vadd.f32 0.0, %v5000
        %5002 = vmatmul.bf16.gmra.mxu0 %v2261
        %v5003 = vpop.f32.mrf.mxu0
        %v5004 = vadd.f32 0.0, %v5003
        %v5005 = vpop.f32.mrf.mxu0
        %v5006 = vadd.f32 0.0, %v5005
        %5007 = vmatmul.bf16.gmra.mxu0 %v2264
        %v5008 = vpop.f32.mrf.mxu0
        %v5009 = vadd.f32 0.0, %v5008
        %v5010 = vpop.f32.mrf.mxu0
        %v5011 = vadd.f32 0.0, %v5010
        %5012 = vmatmul.bf16.gmra.mxu0 %v2267
        %v5013 = vpop.f32.mrf.mxu0
        %v5014 = vadd.f32 0.0, %v5013
        %v5015 = vpop.f32.mrf.mxu0
        %v5016 = vadd.f32 0.0, %v5015
        %5017 = vmatmul.bf16.gmra.mxu0 %v2270
        %v5018 = vpop.f32.mrf.mxu0
        %v5019 = vadd.f32 0.0, %v5018
        %v5020 = vpop.f32.mrf.mxu0
        %v5021 = vadd.f32 0.0, %v5020
        %5022 = vmatmul.bf16.gmra.mxu0 %v2273
        %v5023 = vpop.f32.mrf.mxu0
        %v5024 = vadd.f32 0.0, %v5023
        %v5025 = vpop.f32.mrf.mxu0
        %v5026 = vadd.f32 0.0, %v5025
        %5027 = vmatmul.bf16.gmra.mxu0 %v2276
        %v5028 = vpop.f32.mrf.mxu0
        %v5029 = vadd.f32 0.0, %v5028
        %v5030 = vpop.f32.mrf.mxu0
        %v5031 = vadd.f32 0.0, %v5030
        %5032 = vmatmul.bf16.gmra.mxu0 %v2279
        %v5033 = vpop.f32.mrf.mxu0
        %v5034 = vadd.f32 0.0, %v5033
        %v5035 = vpop.f32.mrf.mxu0
        %v5036 = vadd.f32 0.0, %v5035
        %5037 = vmatmul.bf16.gmra.mxu0 %v2282
        %v5038 = vpop.f32.mrf.mxu0
        %v5039 = vadd.f32 0.0, %v5038
        %v5040 = vpop.f32.mrf.mxu0
        %v5041 = vadd.f32 0.0, %v5040
        %5042 = vmatmul.bf16.gmra.mxu0 %v2285
        %v5043 = vpop.f32.mrf.mxu0
        %v5044 = vadd.f32 0.0, %v5043
        %v5045 = vpop.f32.mrf.mxu0
        %v5046 = vadd.f32 0.0, %v5045
        %5047 = vmatmul.bf16.gmra.mxu0 %v2288
        %v5048 = vpop.f32.mrf.mxu0
        %v5049 = vadd.f32 0.0, %v5048
        %v5050 = vpop.f32.mrf.mxu0
        %v5051 = vadd.f32 0.0, %v5050
        %5052 = vmatmul.bf16.gmra.mxu0 %v2291
        %v5053 = vpop.f32.mrf.mxu0
        %v5054 = vadd.f32 0.0, %v5053
        %v5055 = vpop.f32.mrf.mxu0
        %v5056 = vadd.f32 0.0, %v5055
        %5057 = vmatmul.bf16.gmra.mxu0 %v2294
        %v5058 = vpop.f32.mrf.mxu0
        %v5059 = vadd.f32 0.0, %v5058
        %v5060 = vpop.f32.mrf.mxu0
        %v5061 = vadd.f32 0.0, %v5060
        %5062 = vmatmul.bf16.gmra.mxu0 %v2297
        %v5063 = vpop.f32.mrf.mxu0
        %v5064 = vadd.f32 0.0, %v5063
        %v5065 = vpop.f32.mrf.mxu0
        %v5066 = vadd.f32 0.0, %v5065
        %5067 = vmatmul.bf16.gmra.mxu0 %v2300
        %v5068 = vpop.f32.mrf.mxu0
        %v5069 = vadd.f32 0.0, %v5068
        %v5070 = vpop.f32.mrf.mxu0
        %v5071 = vadd.f32 0.0, %v5070
        %5072 = vmatmul.bf16.gmra.mxu0 %v2303
        %v5073 = vpop.f32.mrf.mxu0
        %v5074 = vadd.f32 0.0, %v5073
        %v5075 = vpop.f32.mrf.mxu0
        %v5076 = vadd.f32 0.0, %v5075
        %5077 = vmatmul.bf16.gmra.mxu0 %v2306
        %v5078 = vpop.f32.mrf.mxu0
        %v5079 = vadd.f32 0.0, %v5078
        %v5080 = vpop.f32.mrf.mxu0
        %v5081 = vadd.f32 0.0, %v5080
        %5082 = vmatmul.bf16.gmra.mxu0 %v2309
        %v5083 = vpop.f32.mrf.mxu0
        %v5084 = vadd.f32 0.0, %v5083
        %v5085 = vpop.f32.mrf.mxu0
        %v5086 = vadd.f32 0.0, %v5085
        %5087 = vmatmul.bf16.gmra.mxu0 %v2312
        %v5088 = vpop.f32.mrf.mxu0
        %v5089 = vadd.f32 0.0, %v5088
        %v5090 = vpop.f32.mrf.mxu0
        %v5091 = vadd.f32 0.0, %v5090
        %5092 = vmatmul.bf16.gmra.mxu0 %v2315
        %v5093 = vpop.f32.mrf.mxu0
        %v5094 = vadd.f32 0.0, %v5093
        %v5095 = vpop.f32.mrf.mxu0
        %v5096 = vadd.f32 0.0, %v5095
        %5097 = vmatmul.bf16.gmra.mxu0 %v2318
        %v5098 = vpop.f32.mrf.mxu0
        %v5099 = vadd.f32 0.0, %v5098
        %v5100 = vpop.f32.mrf.mxu0
        %v5101 = vadd.f32 0.0, %v5100
        %5102 = vmatmul.bf16.gmra.mxu0 %v2321
        %v5103 = vpop.f32.mrf.mxu0
        %v5104 = vadd.f32 0.0, %v5103
        %v5105 = vpop.f32.mrf.mxu0
        %v5106 = vadd.f32 0.0, %v5105
        %5107 = vmatmul.bf16.gmra.mxu0 %v2324
        %v5108 = vpop.f32.mrf.mxu0
        %v5109 = vadd.f32 0.0, %v5108
        %v5110 = vpop.f32.mrf.mxu0
        %v5111 = vadd.f32 0.0, %v5110
        %5112 = vmatmul.bf16.gmra.mxu0 %v2327
        %v5113 = vpop.f32.mrf.mxu0
        %v5114 = vadd.f32 0.0, %v5113
        %v5115 = vpop.f32.mrf.mxu0
        %v5116 = vadd.f32 0.0, %v5115
        %5117 = vmatmul.bf16.gmra.mxu0 %v2330
        %v5118 = vpop.f32.mrf.mxu0
        %v5119 = vadd.f32 0.0, %v5118
        %v5120 = vpop.f32.mrf.mxu0
        %v5121 = vadd.f32 0.0, %v5120
        %5122 = vmatmul.bf16.gmra.mxu0 %v2333
        %v5123 = vpop.f32.mrf.mxu0
        %v5124 = vadd.f32 0.0, %v5123
        %v5125 = vpop.f32.mrf.mxu0
        %v5126 = vadd.f32 0.0, %v5125
        %5127 = vmatmul.bf16.gmra.mxu0 %v2336
        %v5128 = vpop.f32.mrf.mxu0
        %v5129 = vadd.f32 0.0, %v5128
        %v5130 = vpop.f32.mrf.mxu0
        %v5131 = vadd.f32 0.0, %v5130
        %5132 = vmatmul.bf16.gmra.mxu0 %v2339
        %v5133 = vpop.f32.mrf.mxu0
        %v5134 = vadd.f32 0.0, %v5133
        %v5135 = vpop.f32.mrf.mxu0
        %v5136 = vadd.f32 0.0, %v5135
        %5137 = vmatmul.bf16.gmra.mxu0 %v2342
        %v5138 = vpop.f32.mrf.mxu0
        %v5139 = vadd.f32 0.0, %v5138
        %v5140 = vpop.f32.mrf.mxu0
        %v5141 = vadd.f32 0.0, %v5140
        %5142 = vmatmul.bf16.gmra.mxu0 %v2345
        %v5143 = vpop.f32.mrf.mxu0
        %v5144 = vadd.f32 0.0, %v5143
        %v5145 = vpop.f32.mrf.mxu0
        %v5146 = vadd.f32 0.0, %v5145
        %5147 = vmatmul.bf16.gmra.mxu0 %v2348
        %v5148 = vpop.f32.mrf.mxu0
        %v5149 = vadd.f32 0.0, %v5148
        %v5150 = vpop.f32.mrf.mxu0
        %v5151 = vadd.f32 0.0, %v5150
        %5152 = vmatmul.bf16.gmra.mxu0 %v2351
        %v5153 = vpop.f32.mrf.mxu0
        %v5154 = vadd.f32 0.0, %v5153
        %v5155 = vpop.f32.mrf.mxu0
        %v5156 = vadd.f32 0.0, %v5155
        %5157 = vmatmul.bf16.gmra.mxu0 %v2354
        %v5158 = vpop.f32.mrf.mxu0
        %v5159 = vadd.f32 0.0, %v5158
        %v5160 = vpop.f32.mrf.mxu0
        %v5161 = vadd.f32 0.0, %v5160
        %5162 = vmatmul.bf16.gmra.mxu0 %v2357
        %v5163 = vpop.f32.mrf.mxu0
        %v5164 = vadd.f32 0.0, %v5163
        %v5165 = vpop.f32.mrf.mxu0
        %v5166 = vadd.f32 0.0, %v5165
        %5167 = vmatmul.bf16.gmra.mxu0 %v2360
        %v5168 = vpop.f32.mrf.mxu0
        %v5169 = vadd.f32 0.0, %v5168
        %v5170 = vpop.f32.mrf.mxu0
        %v5171 = vadd.f32 0.0, %v5170
        %5172 = vmatmul.bf16.gmra.mxu0 %v2363
        %v5173 = vpop.f32.mrf.mxu0
        %v5174 = vadd.f32 0.0, %v5173
        %v5175 = vpop.f32.mrf.mxu0
        %v5176 = vadd.f32 0.0, %v5175
        %5177 = vmatmul.bf16.gmra.mxu0 %v2366
        %v5178 = vpop.f32.mrf.mxu0
        %v5179 = vadd.f32 0.0, %v5178
        %v5180 = vpop.f32.mrf.mxu0
        %v5181 = vadd.f32 0.0, %v5180
        %5182 = vmatmul.bf16.gmra.mxu0 %v2369
        %v5183 = vpop.f32.mrf.mxu0
        %v5184 = vadd.f32 0.0, %v5183
        %v5185 = vpop.f32.mrf.mxu0
        %v5186 = vadd.f32 0.0, %v5185
        %5187 = vmatmul.bf16.gmra.mxu0 %v2372
        %v5188 = vpop.f32.mrf.mxu0
        %v5189 = vadd.f32 0.0, %v5188
        %v5190 = vpop.f32.mrf.mxu0
        %v5191 = vadd.f32 0.0, %v5190
        %5192 = vmatmul.bf16.gmra.mxu0 %v2375
        %v5193 = vpop.f32.mrf.mxu0
        %v5194 = vadd.f32 0.0, %v5193
        %v5195 = vpop.f32.mrf.mxu0
        %v5196 = vadd.f32 0.0, %v5195
        %5197 = vmatmul.bf16.gmra.mxu0 %v2378
        %v5198 = vpop.f32.mrf.mxu0
        %v5199 = vadd.f32 0.0, %v5198
        %v5200 = vpop.f32.mrf.mxu0
        %v5201 = vadd.f32 0.0, %v5200
        %5202 = vmatmul.bf16.gmra.mxu0 %v2381
        %v5203 = vpop.f32.mrf.mxu0
        %v5204 = vadd.f32 0.0, %v5203
        %v5205 = vpop.f32.mrf.mxu0
        %v5206 = vadd.f32 0.0, %v5205
        %5207 = vmatmul.bf16.gmra.mxu0 %v2384
        %v5208 = vpop.f32.mrf.mxu0
        %v5209 = vadd.f32 0.0, %v5208
        %v5210 = vpop.f32.mrf.mxu0
        %v5211 = vadd.f32 0.0, %v5210
        %5212 = vmatmul.bf16.gmra.mxu0 %v2387
        %v5213 = vpop.f32.mrf.mxu0
        %v5214 = vadd.f32 0.0, %v5213
        %v5215 = vpop.f32.mrf.mxu0
        %v5216 = vadd.f32 0.0, %v5215
        %5217 = vmatmul.bf16.gmra.mxu0 %v2390
        %v5218 = vpop.f32.mrf.mxu0
        %v5219 = vadd.f32 0.0, %v5218
        %v5220 = vpop.f32.mrf.mxu0
        %v5221 = vadd.f32 0.0, %v5220
        %5222 = vmatmul.bf16.gmra.mxu0 %v2393
        %v5223 = vpop.f32.mrf.mxu0
        %v5224 = vadd.f32 0.0, %v5223
        %v5225 = vpop.f32.mrf.mxu0
        %v5226 = vadd.f32 0.0, %v5225
        %5227 = vmatmul.bf16.gmra.mxu0 %v2396
        %v5228 = vpop.f32.mrf.mxu0
        %v5229 = vadd.f32 0.0, %v5228
        %v5230 = vpop.f32.mrf.mxu0
        %v5231 = vadd.f32 0.0, %v5230
        %5232 = vmatmul.bf16.gmra.mxu0 %v2399
        %v5233 = vpop.f32.mrf.mxu0
        %v5234 = vadd.f32 0.0, %v5233
        %v5235 = vpop.f32.mrf.mxu0
        %v5236 = vadd.f32 0.0, %v5235
        %5237 = vmatmul.bf16.gmra.mxu0 %v2402
        %v5238 = vpop.f32.mrf.mxu0
        %v5239 = vadd.f32 0.0, %v5238
        %v5240 = vpop.f32.mrf.mxu0
        %v5241 = vadd.f32 0.0, %v5240
        %5242 = vmatmul.bf16.gmra.mxu0 %v2405
        %v5243 = vpop.f32.mrf.mxu0
        %v5244 = vadd.f32 0.0, %v5243
        %v5245 = vpop.f32.mrf.mxu0
        %v5246 = vadd.f32 0.0, %v5245
        %5247 = vmatmul.bf16.gmra.mxu0 %v2408
        %v5248 = vpop.f32.mrf.mxu0
        %v5249 = vadd.f32 0.0, %v5248
        %v5250 = vpop.f32.mrf.mxu0
        %v5251 = vadd.f32 0.0, %v5250
        %5252 = vmatmul.bf16.gmra.mxu0 %v2411
        %v5253 = vpop.f32.mrf.mxu0
        %v5254 = vadd.f32 0.0, %v5253
        %v5255 = vpop.f32.mrf.mxu0
        %v5256 = vadd.f32 0.0, %v5255
        %5257 = vmatmul.bf16.gmra.mxu0 %v2414
        %v5258 = vpop.f32.mrf.mxu0
        %v5259 = vadd.f32 0.0, %v5258
        %v5260 = vpop.f32.mrf.mxu0
        %v5261 = vadd.f32 0.0, %v5260
        %5262 = vmatmul.bf16.gmra.mxu0 %v2417
        %v5263 = vpop.f32.mrf.mxu0
        %v5264 = vadd.f32 0.0, %v5263
        %v5265 = vpop.f32.mrf.mxu0
        %v5266 = vadd.f32 0.0, %v5265
        %5267 = vmatmul.bf16.gmra.mxu0 %v2420
        %v5268 = vpop.f32.mrf.mxu0
        %v5269 = vadd.f32 0.0, %v5268
        %v5270 = vpop.f32.mrf.mxu0
        %v5271 = vadd.f32 0.0, %v5270
        %5272 = vmatmul.bf16.gmra.mxu0 %v2423
        %v5273 = vpop.f32.mrf.mxu0
        %v5274 = vadd.f32 0.0, %v5273
        %v5275 = vpop.f32.mrf.mxu0
        %v5276 = vadd.f32 0.0, %v5275
        %5277 = vmatmul.bf16.gmra.mxu0 %v2426
        %v5278 = vpop.f32.mrf.mxu0
        %v5279 = vadd.f32 0.0, %v5278
        %v5280 = vpop.f32.mrf.mxu0
        %v5281 = vadd.f32 0.0, %v5280
        %5282 = vmatmul.bf16.gmra.mxu0 %v2429
        %v5283 = vpop.f32.mrf.mxu0
        %v5284 = vadd.f32 0.0, %v5283
        %v5285 = vpop.f32.mrf.mxu0
        %v5286 = vadd.f32 0.0, %v5285
        %5287 = vmatmul.bf16.gmra.mxu0 %v2432
        %v5288 = vpop.f32.mrf.mxu0
        %v5289 = vadd.f32 0.0, %v5288
        %v5290 = vpop.f32.mrf.mxu0
        %v5291 = vadd.f32 0.0, %v5290
        %5292 = vmatmul.bf16.gmra.mxu0 %v2435
        %v5293 = vpop.f32.mrf.mxu0
        %v5294 = vadd.f32 0.0, %v5293
        %v5295 = vpop.f32.mrf.mxu0
        %v5296 = vadd.f32 0.0, %v5295
        %5297 = vmatmul.bf16.gmra.mxu0 %v2438
        %v5298 = vpop.f32.mrf.mxu0
        %v5299 = vadd.f32 0.0, %v5298
        %v5300 = vpop.f32.mrf.mxu0
        %v5301 = vadd.f32 0.0, %v5300
        %5302 = vmatmul.bf16.gmra.mxu0 %v2441
        %v5303 = vpop.f32.mrf.mxu0
        %v5304 = vadd.f32 0.0, %v5303
        %v5305 = vpop.f32.mrf.mxu0
        %v5306 = vadd.f32 0.0, %v5305
        %5307 = vmatmul.bf16.gmra.mxu0 %v2444
        %v5308 = vpop.f32.mrf.mxu0
        %v5309 = vadd.f32 0.0, %v5308
        %v5310 = vpop.f32.mrf.mxu0
        %v5311 = vadd.f32 0.0, %v5310
        %5312 = vmatmul.bf16.gmra.mxu0 %v2447
        %v5313 = vpop.f32.mrf.mxu0
        %v5314 = vadd.f32 0.0, %v5313
        %v5315 = vpop.f32.mrf.mxu0
        %v5316 = vadd.f32 0.0, %v5315
        %5317 = vmatmul.bf16.gmra.mxu0 %v2450
        %v5318 = vpop.f32.mrf.mxu0
        %v5319 = vadd.f32 0.0, %v5318
        %v5320 = vpop.f32.mrf.mxu0
        %v5321 = vadd.f32 0.0, %v5320
        %5322 = vmatmul.bf16.gmra.mxu0 %v2453
        %v5323 = vpop.f32.mrf.mxu0
        %v5324 = vadd.f32 0.0, %v5323
        %v5325 = vpop.f32.mrf.mxu0
        %v5326 = vadd.f32 0.0, %v5325
        %5327 = vmatmul.bf16.gmra.mxu0 %v2456
        %v5328 = vpop.f32.mrf.mxu0
        %v5329 = vadd.f32 0.0, %v5328
        %v5330 = vpop.f32.mrf.mxu0
        %v5331 = vadd.f32 0.0, %v5330
        %5332 = vmatmul.bf16.gmra.mxu0 %v2459
        %v5333 = vpop.f32.mrf.mxu0
        %v5334 = vadd.f32 0.0, %v5333
        %v5335 = vpop.f32.mrf.mxu0
        %v5336 = vadd.f32 0.0, %v5335
        %5337 = vmatmul.bf16.gmra.mxu0 %v2462
        %v5338 = vpop.f32.mrf.mxu0
        %v5339 = vadd.f32 0.0, %v5338
        %v5340 = vpop.f32.mrf.mxu0
        %v5341 = vadd.f32 0.0, %v5340
        %5342 = vmatmul.bf16.gmra.mxu0 %v2465
        %v5343 = vpop.f32.mrf.mxu0
        %v5344 = vadd.f32 0.0, %v5343
        %v5345 = vpop.f32.mrf.mxu0
        %v5346 = vadd.f32 0.0, %v5345
        %5347 = vmatmul.bf16.gmra.mxu0 %v2468
        %v5348 = vpop.f32.mrf.mxu0
        %v5349 = vadd.f32 0.0, %v5348
        %v5350 = vpop.f32.mrf.mxu0
        %v5351 = vadd.f32 0.0, %v5350
        %5352 = vmatmul.bf16.gmra.mxu0 %v2471
        %v5353 = vpop.f32.mrf.mxu0
        %v5354 = vadd.f32 0.0, %v5353
        %v5355 = vpop.f32.mrf.mxu0
        %v5356 = vadd.f32 0.0, %v5355
        %5357 = vmatmul.bf16.gmra.mxu0 %v2474
        %v5358 = vpop.f32.mrf.mxu0
        %v5359 = vadd.f32 0.0, %v5358
        %v5360 = vpop.f32.mrf.mxu0
        %v5361 = vadd.f32 0.0, %v5360
        %5362 = vmatmul.bf16.gmra.mxu0 %v2477
        %v5363 = vpop.f32.mrf.mxu0
        %v5364 = vadd.f32 0.0, %v5363
        %v5365 = vpop.f32.mrf.mxu0
        %v5366 = vadd.f32 0.0, %v5365
        %5367 = vmatmul.bf16.gmra.mxu0 %v2480
        %v5368 = vpop.f32.mrf.mxu0
        %v5369 = vadd.f32 0.0, %v5368
        %v5370 = vpop.f32.mrf.mxu0
        %v5371 = vadd.f32 0.0, %v5370
        %5372 = vmatmul.bf16.gmra.mxu0 %v2483
        %v5373 = vpop.f32.mrf.mxu0
        %v5374 = vadd.f32 0.0, %v5373
        %v5375 = vpop.f32.mrf.mxu0
        %v5376 = vadd.f32 0.0, %v5375
        %5377 = vmatmul.bf16.gmra.mxu0 %v2486
        %v5378 = vpop.f32.mrf.mxu0
        %v5379 = vadd.f32 0.0, %v5378
        %v5380 = vpop.f32.mrf.mxu0
        %v5381 = vadd.f32 0.0, %v5380
        %5382 = vmatmul.bf16.gmra.mxu0 %v2489
        %v5383 = vpop.f32.mrf.mxu0
        %v5384 = vadd.f32 0.0, %v5383
        %v5385 = vpop.f32.mrf.mxu0
        %v5386 = vadd.f32 0.0, %v5385
        %5387 = vmatmul.bf16.gmra.mxu0 %v2492
        %v5388 = vpop.f32.mrf.mxu0
        %v5389 = vadd.f32 0.0, %v5388
        %v5390 = vpop.f32.mrf.mxu0
        %v5391 = vadd.f32 0.0, %v5390
        %5392 = vmatmul.bf16.gmra.mxu0 %v2495
        %v5393 = vpop.f32.mrf.mxu0
        %v5394 = vadd.f32 0.0, %v5393
        %v5395 = vpop.f32.mrf.mxu0
        %v5396 = vadd.f32 0.0, %v5395
        %5397 = vmatmul.bf16.gmra.mxu0 %v2498
        %v5398 = vpop.f32.mrf.mxu0
        %v5399 = vadd.f32 0.0, %v5398
        %v5400 = vpop.f32.mrf.mxu0
        %v5401 = vadd.f32 0.0, %v5400
        %5402 = vmatmul.bf16.gmra.mxu0 %v2501
        %v5403 = vpop.f32.mrf.mxu0
        %v5404 = vadd.f32 0.0, %v5403
        %v5405 = vpop.f32.mrf.mxu0
        %v5406 = vadd.f32 0.0, %v5405
        %5407 = vmatmul.bf16.gmra.mxu0 %v2504
        %v5408 = vpop.f32.mrf.mxu0
        %v5409 = vadd.f32 0.0, %v5408
        %v5410 = vpop.f32.mrf.mxu0
        %v5411 = vadd.f32 0.0, %v5410
        %5412 = vmatmul.bf16.gmra.mxu0 %v2507
        %v5413 = vpop.f32.mrf.mxu0
        %v5414 = vadd.f32 0.0, %v5413
        %v5415 = vpop.f32.mrf.mxu0
        %v5416 = vadd.f32 0.0, %v5415
        %5417 = vmatmul.bf16.gmra.mxu0 %v2510
        %v5418 = vpop.f32.mrf.mxu0
        %v5419 = vadd.f32 0.0, %v5418
        %v5420 = vpop.f32.mrf.mxu0
        %v5421 = vadd.f32 0.0, %v5420
        %5422 = vmatmul.bf16.gmra.mxu0 %v2513
        %v5423 = vpop.f32.mrf.mxu0
        %v5424 = vadd.f32 0.0, %v5423
        %v5425 = vpop.f32.mrf.mxu0
        %v5426 = vadd.f32 0.0, %v5425
        %5427 = vmatmul.bf16.gmra.mxu0 %v2516
        %v5428 = vpop.f32.mrf.mxu0
        %v5429 = vadd.f32 0.0, %v5428
        %v5430 = vpop.f32.mrf.mxu0
        %v5431 = vadd.f32 0.0, %v5430
        %5432 = vmatmul.bf16.gmra.mxu0 %v2519
        %v5433 = vpop.f32.mrf.mxu0
        %v5434 = vadd.f32 0.0, %v5433
        %v5435 = vpop.f32.mrf.mxu0
        %v5436 = vadd.f32 0.0, %v5435
        %5437 = vmatmul.bf16.gmra.mxu0 %v2522
        %v5438 = vpop.f32.mrf.mxu0
        %v5439 = vadd.f32 0.0, %v5438
        %v5440 = vpop.f32.mrf.mxu0
        %v5441 = vadd.f32 0.0, %v5440
        %5442 = vmatmul.bf16.gmra.mxu0 %v2525
        %v5443 = vpop.f32.mrf.mxu0
        %v5444 = vadd.f32 0.0, %v5443
        %v5445 = vpop.f32.mrf.mxu0
        %v5446 = vadd.f32 0.0, %v5445
        %5447 = vmatmul.bf16.gmra.mxu0 %v2528
        %v5448 = vpop.f32.mrf.mxu0
        %v5449 = vadd.f32 0.0, %v5448
        %v5450 = vpop.f32.mrf.mxu0
        %v5451 = vadd.f32 0.0, %v5450
        %5452 = vmatmul.bf16.gmra.mxu0 %v2531
        %v5453 = vpop.f32.mrf.mxu0
        %v5454 = vadd.f32 0.0, %v5453
        %v5455 = vpop.f32.mrf.mxu0
        %v5456 = vadd.f32 0.0, %v5455
        %5457 = vmatmul.bf16.gmra.mxu0 %v2534
        %v5458 = vpop.f32.mrf.mxu0
        %v5459 = vadd.f32 0.0, %v5458
        %v5460 = vpop.f32.mrf.mxu0
        %v5461 = vadd.f32 0.0, %v5460
        %5462 = vmatmul.bf16.gmra.mxu0 %v2537
        %v5463 = vpop.f32.mrf.mxu0
        %v5464 = vadd.f32 0.0, %v5463
        %v5465 = vpop.f32.mrf.mxu0
        %v5466 = vadd.f32 0.0, %v5465
        %5467 = vmatmul.bf16.gmra.mxu0 %v2540
        %v5468 = vpop.f32.mrf.mxu0
        %v5469 = vadd.f32 0.0, %v5468
        %v5470 = vpop.f32.mrf.mxu0
        %v5471 = vadd.f32 0.0, %v5470
        %5472 = vmatmul.bf16.gmra.mxu0 %v2543
        %v5473 = vpop.f32.mrf.mxu0
        %v5474 = vadd.f32 0.0, %v5473
        %v5475 = vpop.f32.mrf.mxu0
        %v5476 = vadd.f32 0.0, %v5475
        %5477 = vmatmul.bf16.gmra.mxu0 %v2546
        %v5478 = vpop.f32.mrf.mxu0
        %v5479 = vadd.f32 0.0, %v5478
        %v5480 = vpop.f32.mrf.mxu0
        %v5481 = vadd.f32 0.0, %v5480
        %5482 = vmatmul.bf16.gmra.mxu0 %v2549
        %v5483 = vpop.f32.mrf.mxu0
        %v5484 = vadd.f32 0.0, %v5483
        %v5485 = vpop.f32.mrf.mxu0
        %v5486 = vadd.f32 0.0, %v5485
        %5487 = vmatmul.bf16.gmra.mxu0 %v2552
        %v5488 = vpop.f32.mrf.mxu0
        %v5489 = vadd.f32 0.0, %v5488
        %v5490 = vpop.f32.mrf.mxu0
        %v5491 = vadd.f32 0.0, %v5490
        %5492 = vmatmul.bf16.gmra.mxu0 %v2555
        %v5493 = vpop.f32.mrf.mxu0
        %v5494 = vadd.f32 0.0, %v5493
        %v5495 = vpop.f32.mrf.mxu0
        %v5496 = vadd.f32 0.0, %v5495
        %5497 = vmatmul.bf16.gmra.mxu0 %v2558
        %v5498 = vpop.f32.mrf.mxu0
        %v5499 = vadd.f32 0.0, %v5498
        %v5500 = vpop.f32.mrf.mxu0
        %v5501 = vadd.f32 0.0, %v5500
        %5502 = vmatmul.bf16.gmra.mxu0 %v2561
        %v5503 = vpop.f32.mrf.mxu0
        %v5504 = vadd.f32 0.0, %v5503
        %v5505 = vpop.f32.mrf.mxu0
        %v5506 = vadd.f32 0.0, %v5505
        %5507 = vmatmul.bf16.gmra.mxu0 %v2564
        %v5508 = vpop.f32.mrf.mxu0
        %v5509 = vadd.f32 0.0, %v5508
        %v5510 = vpop.f32.mrf.mxu0
        %v5511 = vadd.f32 0.0, %v5510
        %5512 = vmatmul.bf16.gmra.mxu0 %v2567
        %v5513 = vpop.f32.mrf.mxu0
        %v5514 = vadd.f32 0.0, %v5513
        %v5515 = vpop.f32.mrf.mxu0
        %v5516 = vadd.f32 0.0, %v5515
        %5517 = vmatmul.bf16.gmra.mxu0 %v2570
        %v5518 = vpop.f32.mrf.mxu0
        %v5519 = vadd.f32 0.0, %v5518
        %v5520 = vpop.f32.mrf.mxu0
        %v5521 = vadd.f32 0.0, %v5520
        %5522 = vmatmul.bf16.gmra.mxu0 %v2573
        %v5523 = vpop.f32.mrf.mxu0
        %v5524 = vadd.f32 0.0, %v5523
        %v5525 = vpop.f32.mrf.mxu0
        %v5526 = vadd.f32 0.0, %v5525
        %5527 = vmatmul.bf16.gmra.mxu0 %v2576
        %v5528 = vpop.f32.mrf.mxu0
        %v5529 = vadd.f32 0.0, %v5528
        %v5530 = vpop.f32.mrf.mxu0
        %v5531 = vadd.f32 0.0, %v5530
        %5532 = vmatmul.bf16.gmra.mxu0 %v2579
        %v5533 = vpop.f32.mrf.mxu0
        %v5534 = vadd.f32 0.0, %v5533
        %v5535 = vpop.f32.mrf.mxu0
        %v5536 = vadd.f32 0.0, %v5535
        %5537 = vmatmul.bf16.gmra.mxu0 %v2582
        %v5538 = vpop.f32.mrf.mxu0
        %v5539 = vadd.f32 0.0, %v5538
        %v5540 = vpop.f32.mrf.mxu0
        %v5541 = vadd.f32 0.0, %v5540
        %5542 = vmatmul.bf16.gmra.mxu0 %v2585
        %v5543 = vpop.f32.mrf.mxu0
        %v5544 = vadd.f32 0.0, %v5543
        %v5545 = vpop.f32.mrf.mxu0
        %v5546 = vadd.f32 0.0, %v5545
        %5547 = vmatmul.bf16.gmra.mxu0 %v2588
        %v5548 = vpop.f32.mrf.mxu0
        %v5549 = vadd.f32 0.0, %v5548
        %v5550 = vpop.f32.mrf.mxu0
        %v5551 = vadd.f32 0.0, %v5550
        %5552 = vmatmul.bf16.gmra.mxu0 %v2591
        %v5553 = vpop.f32.mrf.mxu0
        %v5554 = vadd.f32 0.0, %v5553
        %v5555 = vpop.f32.mrf.mxu0
        %v5556 = vadd.f32 0.0, %v5555
        %5557 = vmatmul.bf16.gmra.mxu0 %v2594
        %v5558 = vpop.f32.mrf.mxu0
        %v5559 = vadd.f32 0.0, %v5558
        %v5560 = vpop.f32.mrf.mxu0
        %v5561 = vadd.f32 0.0, %v5560
        %5562 = vmatmul.bf16.gmra.mxu0 %v2597
        %v5563 = vpop.f32.mrf.mxu0
        %v5564 = vadd.f32 0.0, %v5563
        %v5565 = vpop.f32.mrf.mxu0
        %v5566 = vadd.f32 0.0, %v5565
        %5567 = vmatmul.bf16.gmra.mxu0 %v2600
        %v5568 = vpop.f32.mrf.mxu0
        %v5569 = vadd.f32 0.0, %v5568
        %v5570 = vpop.f32.mrf.mxu0
        %v5571 = vadd.f32 0.0, %v5570
        %5572 = vmatmul.bf16.gmra.mxu0 %v2603
        %v5573 = vpop.f32.mrf.mxu0
        %v5574 = vadd.f32 0.0, %v5573
        %v5575 = vpop.f32.mrf.mxu0
        %v5576 = vadd.f32 0.0, %v5575
        %5577 = vmatmul.bf16.gmra.mxu0 %v2606
        %v5578 = vpop.f32.mrf.mxu0
        %v5579 = vadd.f32 0.0, %v5578
        %v5580 = vpop.f32.mrf.mxu0
        %v5581 = vadd.f32 0.0, %v5580
        %5582 = vmatmul.bf16.gmra.mxu0 %v2609
        %v5583 = vpop.f32.mrf.mxu0
        %v5584 = vadd.f32 0.0, %v5583
        %v5585 = vpop.f32.mrf.mxu0
        %v5586 = vadd.f32 0.0, %v5585
        %5587 = vmatmul.bf16.gmra.mxu0 %v2612
        %v5588 = vpop.f32.mrf.mxu0
        %v5589 = vadd.f32 0.0, %v5588
        %v5590 = vpop.f32.mrf.mxu0
        %v5591 = vadd.f32 0.0, %v5590
        %5592 = vmatmul.bf16.gmra.mxu0 %v2615
        %v5593 = vpop.f32.mrf.mxu0
        %v5594 = vadd.f32 0.0, %v5593
        %v5595 = vpop.f32.mrf.mxu0
        %v5596 = vadd.f32 0.0, %v5595
        %5597 = vmatmul.bf16.gmra.mxu0 %v2618
        %v5598 = vpop.f32.mrf.mxu0
        %v5599 = vadd.f32 0.0, %v5598
        %v5600 = vpop.f32.mrf.mxu0
        %v5601 = vadd.f32 0.0, %v5600
        %5602 = vmatmul.bf16.gmra.mxu0 %v2621
        %v5603 = vpop.f32.mrf.mxu0
        %v5604 = vadd.f32 0.0, %v5603
        %v5605 = vpop.f32.mrf.mxu0
        %v5606 = vadd.f32 0.0, %v5605
        %5607 = vmatmul.bf16.gmra.mxu0 %v2624
        %v5608 = vpop.f32.mrf.mxu0
        %v5609 = vadd.f32 0.0, %v5608
        %v5610 = vpop.f32.mrf.mxu0
        %v5611 = vadd.f32 0.0, %v5610
        %5612 = vmatmul.bf16.gmra.mxu0 %v2627
        %v5613 = vpop.f32.mrf.mxu0
        %v5614 = vadd.f32 0.0, %v5613
        %v5615 = vpop.f32.mrf.mxu0
        %v5616 = vadd.f32 0.0, %v5615
        %5617 = vmatmul.bf16.gmra.mxu0 %v2630
        %v5618 = vpop.f32.mrf.mxu0
        %v5619 = vadd.f32 0.0, %v5618
        %v5620 = vpop.f32.mrf.mxu0
        %v5621 = vadd.f32 0.0, %v5620
        %5622 = vmatmul.bf16.gmra.mxu0 %v2633
        %v5623 = vpop.f32.mrf.mxu0
        %v5624 = vadd.f32 0.0, %v5623
        %v5625 = vpop.f32.mrf.mxu0
        %v5626 = vadd.f32 0.0, %v5625
        %5627 = vmatmul.bf16.gmra.mxu0 %v2636
        %v5628 = vpop.f32.mrf.mxu0
        %v5629 = vadd.f32 0.0, %v5628
        %v5630 = vpop.f32.mrf.mxu0
        %v5631 = vadd.f32 0.0, %v5630
        %5632 = vmatmul.bf16.gmra.mxu0 %v2639
        %v5633 = vpop.f32.mrf.mxu0
        %v5634 = vadd.f32 0.0, %v5633
        %v5635 = vpop.f32.mrf.mxu0
        %v5636 = vadd.f32 0.0, %v5635
        %5637 = vmatmul.bf16.gmra.mxu0 %v2642
        %v5638 = vpop.f32.mrf.mxu0
        %v5639 = vadd.f32 0.0, %v5638
        %v5640 = vpop.f32.mrf.mxu0
        %v5641 = vadd.f32 0.0, %v5640
        %5642 = vmatmul.bf16.gmra.mxu0 %v2645
        %v5643 = vpop.f32.mrf.mxu0
        %v5644 = vadd.f32 0.0, %v5643
        %v5645 = vpop.f32.mrf.mxu0
        %v5646 = vadd.f32 0.0, %v5645
        %5647 = vmatmul.bf16.gmra.mxu0 %v2648
        %v5648 = vpop.f32.mrf.mxu0
        %v5649 = vadd.f32 0.0, %v5648
        %v5650 = vpop.f32.mrf.mxu0
        %v5651 = vadd.f32 0.0, %v5650
        %5652 = vmatmul.bf16.gmra.mxu0 %v2651
        %v5653 = vpop.f32.mrf.mxu0
        %v5654 = vadd.f32 0.0, %v5653
        %v5655 = vpop.f32.mrf.mxu0
        %v5656 = vadd.f32 0.0, %v5655
        %5657 = vmatmul.bf16.gmra.mxu0 %v2654
        %v5658 = vpop.f32.mrf.mxu0
        %v5659 = vadd.f32 0.0, %v5658
        %v5660 = vpop.f32.mrf.mxu0
        %v5661 = vadd.f32 0.0, %v5660
        %5662 = vmatmul.bf16.gmra.mxu0 %v2657
        %v5663 = vpop.f32.mrf.mxu0
        %v5664 = vadd.f32 0.0, %v5663
        %v5665 = vpop.f32.mrf.mxu0
        %v5666 = vadd.f32 0.0, %v5665
        %5667 = vmatmul.bf16.gmra.mxu0 %v2660
        %v5668 = vpop.f32.mrf.mxu0
        %v5669 = vadd.f32 0.0, %v5668
        %v5670 = vpop.f32.mrf.mxu0
        %v5671 = vadd.f32 0.0, %v5670
        %5672 = vmatmul.bf16.gmra.mxu0 %v2663
        %v5673 = vpop.f32.mrf.mxu0
        %v5674 = vadd.f32 0.0, %v5673
        %v5675 = vpop.f32.mrf.mxu0
        %v5676 = vadd.f32 0.0, %v5675
        %5677 = vmatmul.bf16.gmra.mxu0 %v2666
        %v5678 = vpop.f32.mrf.mxu0
        %v5679 = vadd.f32 0.0, %v5678
        %v5680 = vpop.f32.mrf.mxu0
        %v5681 = vadd.f32 0.0, %v5680
        %5682 = vmatmul.bf16.gmra.mxu0 %v2669
        %v5683 = vpop.f32.mrf.mxu0
        %v5684 = vadd.f32 0.0, %v5683
        %v5685 = vpop.f32.mrf.mxu0
        %v5686 = vadd.f32 0.0, %v5685
        %5687 = vmatmul.bf16.gmra.mxu0 %v2672
        %v5688 = vpop.f32.mrf.mxu0
        %v5689 = vadd.f32 0.0, %v5688
        %v5690 = vpop.f32.mrf.mxu0
        %v5691 = vadd.f32 0.0, %v5690
        %5692 = vmatmul.bf16.gmra.mxu0 %v2675
        %v5693 = vpop.f32.mrf.mxu0
        %v5694 = vadd.f32 0.0, %v5693
        %v5695 = vpop.f32.mrf.mxu0
        %v5696 = vadd.f32 0.0, %v5695
        %5697 = vmatmul.bf16.gmra.mxu0 %v2678
        %v5698 = vpop.f32.mrf.mxu0
        %v5699 = vadd.f32 0.0, %v5698
        %v5700 = vpop.f32.mrf.mxu0
        %v5701 = vadd.f32 0.0, %v5700
        %5702 = vmatmul.bf16.gmra.mxu0 %v2681
        %v5703 = vpop.f32.mrf.mxu0
        %v5704 = vadd.f32 0.0, %v5703
        %v5705 = vpop.f32.mrf.mxu0
        %v5706 = vadd.f32 0.0, %v5705
        %5707 = vmatmul.bf16.gmra.mxu0 %v2684
        %v5708 = vpop.f32.mrf.mxu0
        %v5709 = vadd.f32 0.0, %v5708
        %v5710 = vpop.f32.mrf.mxu0
        %v5711 = vadd.f32 0.0, %v5710
        %5712 = vmatmul.bf16.gmra.mxu0 %v2687
        %v5713 = vpop.f32.mrf.mxu0
        %v5714 = vadd.f32 0.0, %v5713
        %v5715 = vpop.f32.mrf.mxu0
        %v5716 = vadd.f32 0.0, %v5715
        %5717 = vmatmul.bf16.gmra.mxu0 %v2690
        %v5718 = vpop.f32.mrf.mxu0
        %v5719 = vadd.f32 0.0, %v5718
        %v5720 = vpop.f32.mrf.mxu0
        %v5721 = vadd.f32 0.0, %v5720
        %5722 = vmatmul.bf16.gmra.mxu0 %v2693
        %v5723 = vpop.f32.mrf.mxu0
        %v5724 = vadd.f32 0.0, %v5723
        %v5725 = vpop.f32.mrf.mxu0
        %v5726 = vadd.f32 0.0, %v5725
        %5727 = vmatmul.bf16.gmra.mxu0 %v2696
        %v5728 = vpop.f32.mrf.mxu0
        %v5729 = vadd.f32 0.0, %v5728
        %v5730 = vpop.f32.mrf.mxu0
        %v5731 = vadd.f32 0.0, %v5730
        %5732 = vmatmul.bf16.gmra.mxu0 %v2699
        %v5733 = vpop.f32.mrf.mxu0
        %v5734 = vadd.f32 0.0, %v5733
        %v5735 = vpop.f32.mrf.mxu0
        %v5736 = vadd.f32 0.0, %v5735
        %5737 = vmatmul.bf16.gmra.mxu0 %v2702
        %v5738 = vpop.f32.mrf.mxu0
        %v5739 = vadd.f32 0.0, %v5738
        %v5740 = vpop.f32.mrf.mxu0
        %v5741 = vadd.f32 0.0, %v5740
        %5742 = vmatmul.bf16.gmra.mxu0 %v2705
        %v5743 = vpop.f32.mrf.mxu0
        %v5744 = vadd.f32 0.0, %v5743
        %v5745 = vpop.f32.mrf.mxu0
        %v5746 = vadd.f32 0.0, %v5745
        %5747 = vmatmul.bf16.gmra.mxu0 %v2708
        %v5748 = vpop.f32.mrf.mxu0
        %v5749 = vadd.f32 0.0, %v5748
        %v5750 = vpop.f32.mrf.mxu0
        %v5751 = vadd.f32 0.0, %v5750
        %5752 = vmatmul.bf16.gmra.mxu0 %v2711
        %v5753 = vpop.f32.mrf.mxu0
        %v5754 = vadd.f32 0.0, %v5753
        %v5755 = vpop.f32.mrf.mxu0
        %v5756 = vadd.f32 0.0, %v5755
        %5757 = vmatmul.bf16.gmra.mxu0 %v2714
        %v5758 = vpop.f32.mrf.mxu0
        %v5759 = vadd.f32 0.0, %v5758
        %v5760 = vpop.f32.mrf.mxu0
        %v5761 = vadd.f32 0.0, %v5760
        %5762 = vmatmul.bf16.gmra.mxu0 %v2717
        %v5763 = vpop.f32.mrf.mxu0
        %v5764 = vadd.f32 0.0, %v5763
        %v5765 = vpop.f32.mrf.mxu0
        %v5766 = vadd.f32 0.0, %v5765
        %5767 = vmatmul.bf16.gmra.mxu0 %v2720
        %v5768 = vpop.f32.mrf.mxu0
        %v5769 = vadd.f32 0.0, %v5768
        %v5770 = vpop.f32.mrf.mxu0
        %v5771 = vadd.f32 0.0, %v5770
        %5772 = vmatmul.bf16.gmra.mxu0 %v2723
        %v5773 = vpop.f32.mrf.mxu0
        %v5774 = vadd.f32 0.0, %v5773
        %v5775 = vpop.f32.mrf.mxu0
        %v5776 = vadd.f32 0.0, %v5775
        %5777 = vmatmul.bf16.gmra.mxu0 %v2726
        %v5778 = vpop.f32.mrf.mxu0
        %v5779 = vadd.f32 0.0, %v5778
        %v5780 = vpop.f32.mrf.mxu0
        %v5781 = vadd.f32 0.0, %v5780
        %5782 = vmatmul.bf16.gmra.mxu0 %v2729
        %v5783 = vpop.f32.mrf.mxu0
        %v5784 = vadd.f32 0.0, %v5783
        %v5785 = vpop.f32.mrf.mxu0
        %v5786 = vadd.f32 0.0, %v5785
        %5787 = vmatmul.bf16.gmra.mxu0 %v2732
        %v5788 = vpop.f32.mrf.mxu0
        %v5789 = vadd.f32 0.0, %v5788
        %v5790 = vpop.f32.mrf.mxu0
        %v5791 = vadd.f32 0.0, %v5790
        %5792 = vmatmul.bf16.gmra.mxu0 %v2735
        %v5793 = vpop.f32.mrf.mxu0
        %v5794 = vadd.f32 0.0, %v5793
        %v5795 = vpop.f32.mrf.mxu0
        %v5796 = vadd.f32 0.0, %v5795
        %5797 = vmatmul.bf16.gmra.mxu0 %v2738
        %v5798 = vpop.f32.mrf.mxu0
        %v5799 = vadd.f32 0.0, %v5798
        %v5800 = vpop.f32.mrf.mxu0
        %v5801 = vadd.f32 0.0, %v5800
        %5802 = vmatmul.bf16.gmra.mxu0 %v2741
        %v5803 = vpop.f32.mrf.mxu0
        %v5804 = vadd.f32 0.0, %v5803
        %v5805 = vpop.f32.mrf.mxu0
        %v5806 = vadd.f32 0.0, %v5805
        %5807 = vmatmul.bf16.gmra.mxu0 %v2744
        %v5808 = vpop.f32.mrf.mxu0
        %v5809 = vadd.f32 0.0, %v5808
        %v5810 = vpop.f32.mrf.mxu0
        %v5811 = vadd.f32 0.0, %v5810
        %5812 = vmatmul.bf16.gmra.mxu0 %v2747
        %v5813 = vpop.f32.mrf.mxu0
        %v5814 = vadd.f32 0.0, %v5813
        %v5815 = vpop.f32.mrf.mxu0
        %v5816 = vadd.f32 0.0, %v5815
        %5817 = vmatmul.bf16.gmra.mxu0 %v2750
        %v5818 = vpop.f32.mrf.mxu0
        %v5819 = vadd.f32 0.0, %v5818
        %v5820 = vpop.f32.mrf.mxu0
        %v5821 = vadd.f32 0.0, %v5820
        %5822 = vmatmul.bf16.gmra.mxu0 %v2753
        %v5823 = vpop.f32.mrf.mxu0
        %v5824 = vadd.f32 0.0, %v5823
        %v5825 = vpop.f32.mrf.mxu0
        %v5826 = vadd.f32 0.0, %v5825
        %5827 = vmatmul.bf16.gmra.mxu0 %v2756
        %v5828 = vpop.f32.mrf.mxu0
        %v5829 = vadd.f32 0.0, %v5828
        %v5830 = vpop.f32.mrf.mxu0
        %v5831 = vadd.f32 0.0, %v5830
        %5832 = vmatmul.bf16.gmra.mxu0 %v2759
        %v5833 = vpop.f32.mrf.mxu0
        %v5834 = vadd.f32 0.0, %v5833
        %v5835 = vpop.f32.mrf.mxu0
        %v5836 = vadd.f32 0.0, %v5835
        %5837 = vmatmul.bf16.gmra.mxu0 %v2762
        %v5838 = vpop.f32.mrf.mxu0
        %v5839 = vadd.f32 0.0, %v5838
        %v5840 = vpop.f32.mrf.mxu0
        %v5841 = vadd.f32 0.0, %v5840
        %5842 = vmatmul.bf16.gmra.mxu0 %v2765
        %v5843 = vpop.f32.mrf.mxu0
        %v5844 = vadd.f32 0.0, %v5843
        %v5845 = vpop.f32.mrf.mxu0
        %v5846 = vadd.f32 0.0, %v5845
        %5847 = vmatmul.bf16.gmra.mxu0 %v2768
        %v5848 = vpop.f32.mrf.mxu0
        %v5849 = vadd.f32 0.0, %v5848
        %v5850 = vpop.f32.mrf.mxu0
        %v5851 = vadd.f32 0.0, %v5850
        %5852 = vmatmul.bf16.gmra.mxu0 %v2771
        %v5853 = vpop.f32.mrf.mxu0
        %v5854 = vadd.f32 0.0, %v5853
        %v5855 = vpop.f32.mrf.mxu0
        %v5856 = vadd.f32 0.0, %v5855
        %5857 = vmatmul.bf16.gmra.mxu0 %v2774
        %v5858 = vpop.f32.mrf.mxu0
        %v5859 = vadd.f32 0.0, %v5858
        %v5860 = vpop.f32.mrf.mxu0
        %v5861 = vadd.f32 0.0, %v5860
        %5862 = vmatmul.bf16.gmra.mxu0 %v2777
        %v5863 = vpop.f32.mrf.mxu0
        %v5864 = vadd.f32 0.0, %v5863
        %v5865 = vpop.f32.mrf.mxu0
        %v5866 = vadd.f32 0.0, %v5865
        %5867 = vmatmul.bf16.gmra.mxu0 %v2780
        %v5868 = vpop.f32.mrf.mxu0
        %v5869 = vadd.f32 0.0, %v5868
        %v5870 = vpop.f32.mrf.mxu0
        %v5871 = vadd.f32 0.0, %v5870
        %5872 = vmatmul.bf16.gmra.mxu0 %v2783
        %v5873 = vpop.f32.mrf.mxu0
        %v5874 = vadd.f32 0.0, %v5873
        %v5875 = vpop.f32.mrf.mxu0
        %v5876 = vadd.f32 0.0, %v5875
        %5877 = vmatmul.bf16.gmra.mxu0 %v2786
        %v5878 = vpop.f32.mrf.mxu0
        %v5879 = vadd.f32 0.0, %v5878
        %v5880 = vpop.f32.mrf.mxu0
        %v5881 = vadd.f32 0.0, %v5880
        %5882 = vmatmul.bf16.gmra.mxu0 %v2789
        %v5883 = vpop.f32.mrf.mxu0
        %v5884 = vadd.f32 0.0, %v5883
        %v5885 = vpop.f32.mrf.mxu0
        %v5886 = vadd.f32 0.0, %v5885
        %5887 = vmatmul.bf16.gmra.mxu0 %v2792
        %v5888 = vpop.f32.mrf.mxu0
        %v5889 = vadd.f32 0.0, %v5888
        %v5890 = vpop.f32.mrf.mxu0
        %v5891 = vadd.f32 0.0, %v5890
        %5892 = vdwg.mxu0
        %vm5893 = vcmask 97280
        %5894 = vst.msk [vmem:[%s206] sm:$0xff] %vm5893, %v4614
        %5895 = vst.msk [vmem:[%s206 + $0x8] sm:$0xff] %vm5893, %v4616
        %5896 = vst.msk [vmem:[%s206 + $0x10] sm:$0xff] %vm5893, %v4619
        %5897 = vst.msk [vmem:[%s206 + $0x18] sm:$0xff] %vm5893, %v4621
        %5898 = vst.msk [vmem:[%s206 + $0x20] sm:$0xff] %vm5893, %v4624
        %5899 = vst.msk [vmem:[%s206 + $0x28] sm:$0xff] %vm5893, %v4626
        %5900 = vst.msk [vmem:[%s206 + $0x30] sm:$0xff] %vm5893, %v4629
        %5901 = vst.msk [vmem:[%s206 + $0x38] sm:$0xff] %vm5893, %v4631
        %5902 = vst.msk [vmem:[%s206 + $0x40] sm:$0xff] %vm5893, %v4634
        %5903 = vst.msk [vmem:[%s206 + $0x48] sm:$0xff] %vm5893, %v4636
        %5904 = vst.msk [vmem:[%s206 + $0x50] sm:$0xff] %vm5893, %v4639
        %5905 = vst.msk [vmem:[%s206 + $0x58] sm:$0xff] %vm5893, %v4641
        %5906 = vst.msk [vmem:[%s206 + $0x60] sm:$0xff] %vm5893, %v4644
        %5907 = vst.msk [vmem:[%s206 + $0x68] sm:$0xff] %vm5893, %v4646
        %5908 = vst.msk [vmem:[%s206 + $0x70] sm:$0xff] %vm5893, %v4649
        %5909 = vst.msk [vmem:[%s206 + $0x78] sm:$0xff] %vm5893, %v4651
        %5910 = vst.msk [vmem:[%s206 + $0x80] sm:$0xff] %vm5893, %v4654
        %5911 = vst.msk [vmem:[%s206 + $0x88] sm:$0xff] %vm5893, %v4656
        %5912 = vst.msk [vmem:[%s206 + $0x90] sm:$0xff] %vm5893, %v4659
        %5913 = vst.msk [vmem:[%s206 + $0x98] sm:$0xff] %vm5893, %v4661
        %5914 = vst.msk [vmem:[%s206 + $0xa0] sm:$0xff] %vm5893, %v4664
        %5915 = vst.msk [vmem:[%s206 + $0xa8] sm:$0xff] %vm5893, %v4666
        %5916 = vst.msk [vmem:[%s206 + $0xb0] sm:$0xff] %vm5893, %v4669
        %5917 = vst.msk [vmem:[%s206 + $0xb8] sm:$0xff] %vm5893, %v4671
        %5918 = vst.msk [vmem:[%s206 + $0xc0] sm:$0xff] %vm5893, %v4674
        %5919 = vst.msk [vmem:[%s206 + $0xc8] sm:$0xff] %vm5893, %v4676
        %5920 = vst.msk [vmem:[%s206 + $0xd0] sm:$0xff] %vm5893, %v4679
        %5921 = vst.msk [vmem:[%s206 + $0xd8] sm:$0xff] %vm5893, %v4681
        %5922 = vst.msk [vmem:[%s206 + $0xe0] sm:$0xff] %vm5893, %v4684
        %5923 = vst.msk [vmem:[%s206 + $0xe8] sm:$0xff] %vm5893, %v4686
        %5924 = vst.msk [vmem:[%s206 + $0xf0] sm:$0xff] %vm5893, %v4689
        %5925 = vst.msk [vmem:[%s206 + $0xf8] sm:$0xff] %vm5893, %v4691
        %5926 = vst.msk [vmem:[%s206 + $0x100] sm:$0xff] %vm5893, %v4694
        %5927 = vst.msk [vmem:[%s206 + $0x108] sm:$0xff] %vm5893, %v4696
        %5928 = vst.msk [vmem:[%s206 + $0x110] sm:$0xff] %vm5893, %v4699
        %5929 = vst.msk [vmem:[%s206 + $0x118] sm:$0xff] %vm5893, %v4701
        %5930 = vst.msk [vmem:[%s206 + $0x120] sm:$0xff] %vm5893, %v4704
        %5931 = vst.msk [vmem:[%s206 + $0x128] sm:$0xff] %vm5893, %v4706
        %5932 = vst.msk [vmem:[%s206 + $0x130] sm:$0xff] %vm5893, %v4709
        %5933 = vst.msk [vmem:[%s206 + $0x138] sm:$0xff] %vm5893, %v4711
        %5934 = vst.msk [vmem:[%s206 + $0x140] sm:$0xff] %vm5893, %v4714
        %5935 = vst.msk [vmem:[%s206 + $0x148] sm:$0xff] %vm5893, %v4716
        %5936 = vst.msk [vmem:[%s206 + $0x150] sm:$0xff] %vm5893, %v4719
        %5937 = vst.msk [vmem:[%s206 + $0x158] sm:$0xff] %vm5893, %v4721
        %5938 = vst.msk [vmem:[%s206 + $0x160] sm:$0xff] %vm5893, %v4724
        %5939 = vst.msk [vmem:[%s206 + $0x168] sm:$0xff] %vm5893, %v4726
        %5940 = vst.msk [vmem:[%s206 + $0x170] sm:$0xff] %vm5893, %v4729
        %5941 = vst.msk [vmem:[%s206 + $0x178] sm:$0xff] %vm5893, %v4731
        %5942 = vst.msk [vmem:[%s206 + $0x180] sm:$0xff] %vm5893, %v4734
        %5943 = vst.msk [vmem:[%s206 + $0x188] sm:$0xff] %vm5893, %v4736
        %5944 = vst.msk [vmem:[%s206 + $0x190] sm:$0xff] %vm5893, %v4739
        %5945 = vst.msk [vmem:[%s206 + $0x198] sm:$0xff] %vm5893, %v4741
        %5946 = vst.msk [vmem:[%s206 + $0x1a0] sm:$0xff] %vm5893, %v4744
        %5947 = vst.msk [vmem:[%s206 + $0x1a8] sm:$0xff] %vm5893, %v4746
        %5948 = vst.msk [vmem:[%s206 + $0x1b0] sm:$0xff] %vm5893, %v4749
        %5949 = vst.msk [vmem:[%s206 + $0x1b8] sm:$0xff] %vm5893, %v4751
        %5950 = vst.msk [vmem:[%s206 + $0x1c0] sm:$0xff] %vm5893, %v4754
        %5951 = vst.msk [vmem:[%s206 + $0x1c8] sm:$0xff] %vm5893, %v4756
        %5952 = vst.msk [vmem:[%s206 + $0x1d0] sm:$0xff] %vm5893, %v4759
        %5953 = vst.msk [vmem:[%s206 + $0x1d8] sm:$0xff] %vm5893, %v4761
        %5954 = vst.msk [vmem:[%s206 + $0x1e0] sm:$0xff] %vm5893, %v4764
        %5955 = vst.msk [vmem:[%s206 + $0x1e8] sm:$0xff] %vm5893, %v4766
        %5956 = vst.msk [vmem:[%s206 + $0x1f0] sm:$0xff] %vm5893, %v4769
        %5957 = vst.msk [vmem:[%s206 + $0x1f8] sm:$0xff] %vm5893, %v4771
        %5958 = vst.msk [vmem:[%s206 + $0x200] sm:$0xff] %vm5893, %v4774
        %5959 = vst.msk [vmem:[%s206 + $0x208] sm:$0xff] %vm5893, %v4776
        %5960 = vst.msk [vmem:[%s206 + $0x210] sm:$0xff] %vm5893, %v4779
        %5961 = vst.msk [vmem:[%s206 + $0x218] sm:$0xff] %vm5893, %v4781
        %5962 = vst.msk [vmem:[%s206 + $0x220] sm:$0xff] %vm5893, %v4784
        %5963 = vst.msk [vmem:[%s206 + $0x228] sm:$0xff] %vm5893, %v4786
        %5964 = vst.msk [vmem:[%s206 + $0x230] sm:$0xff] %vm5893, %v4789
        %5965 = vst.msk [vmem:[%s206 + $0x238] sm:$0xff] %vm5893, %v4791
        %5966 = vst.msk [vmem:[%s206 + $0x240] sm:$0xff] %vm5893, %v4794
        %5967 = vst.msk [vmem:[%s206 + $0x248] sm:$0xff] %vm5893, %v4796
        %5968 = vst.msk [vmem:[%s206 + $0x250] sm:$0xff] %vm5893, %v4799
        %5969 = vst.msk [vmem:[%s206 + $0x258] sm:$0xff] %vm5893, %v4801
        %5970 = vst.msk [vmem:[%s206 + $0x260] sm:$0xff] %vm5893, %v4804
        %5971 = vst.msk [vmem:[%s206 + $0x268] sm:$0xff] %vm5893, %v4806
        %5972 = vst.msk [vmem:[%s206 + $0x270] sm:$0xff] %vm5893, %v4809
        %5973 = vst.msk [vmem:[%s206 + $0x278] sm:$0xff] %vm5893, %v4811
        %5974 = vst.msk [vmem:[%s206 + $0x280] sm:$0xff] %vm5893, %v4814
        %5975 = vst.msk [vmem:[%s206 + $0x288] sm:$0xff] %vm5893, %v4816
        %5976 = vst.msk [vmem:[%s206 + $0x290] sm:$0xff] %vm5893, %v4819
        %5977 = vst.msk [vmem:[%s206 + $0x298] sm:$0xff] %vm5893, %v4821
        %5978 = vst.msk [vmem:[%s206 + $0x2a0] sm:$0xff] %vm5893, %v4824
        %5979 = vst.msk [vmem:[%s206 + $0x2a8] sm:$0xff] %vm5893, %v4826
        %5980 = vst.msk [vmem:[%s206 + $0x2b0] sm:$0xff] %vm5893, %v4829
        %5981 = vst.msk [vmem:[%s206 + $0x2b8] sm:$0xff] %vm5893, %v4831
        %5982 = vst.msk [vmem:[%s206 + $0x2c0] sm:$0xff] %vm5893, %v4834
        %5983 = vst.msk [vmem:[%s206 + $0x2c8] sm:$0xff] %vm5893, %v4836
        %5984 = vst.msk [vmem:[%s206 + $0x2d0] sm:$0xff] %vm5893, %v4839
        %5985 = vst.msk [vmem:[%s206 + $0x2d8] sm:$0xff] %vm5893, %v4841
        %5986 = vst.msk [vmem:[%s206 + $0x2e0] sm:$0xff] %vm5893, %v4844
        %5987 = vst.msk [vmem:[%s206 + $0x2e8] sm:$0xff] %vm5893, %v4846
        %5988 = vst.msk [vmem:[%s206 + $0x2f0] sm:$0xff] %vm5893, %v4849
        %5989 = vst.msk [vmem:[%s206 + $0x2f8] sm:$0xff] %vm5893, %v4851
        %5990 = vst.msk [vmem:[%s206 + $0x300] sm:$0xff] %vm5893, %v4854
        %5991 = vst.msk [vmem:[%s206 + $0x308] sm:$0xff] %vm5893, %v4856
        %5992 = vst.msk [vmem:[%s206 + $0x310] sm:$0xff] %vm5893, %v4859
        %5993 = vst.msk [vmem:[%s206 + $0x318] sm:$0xff] %vm5893, %v4861
        %5994 = vst.msk [vmem:[%s206 + $0x320] sm:$0xff] %vm5893, %v4864
        %5995 = vst.msk [vmem:[%s206 + $0x328] sm:$0xff] %vm5893, %v4866
        %5996 = vst.msk [vmem:[%s206 + $0x330] sm:$0xff] %vm5893, %v4869
        %5997 = vst.msk [vmem:[%s206 + $0x338] sm:$0xff] %vm5893, %v4871
        %5998 = vst.msk [vmem:[%s206 + $0x340] sm:$0xff] %vm5893, %v4874
        %5999 = vst.msk [vmem:[%s206 + $0x348] sm:$0xff] %vm5893, %v4876
        %6000 = vst.msk [vmem:[%s206 + $0x350] sm:$0xff] %vm5893, %v4879
        %6001 = vst.msk [vmem:[%s206 + $0x358] sm:$0xff] %vm5893, %v4881
        %6002 = vst.msk [vmem:[%s206 + $0x360] sm:$0xff] %vm5893, %v4884
        %6003 = vst.msk [vmem:[%s206 + $0x368] sm:$0xff] %vm5893, %v4886
        %6004 = vst.msk [vmem:[%s206 + $0x370] sm:$0xff] %vm5893, %v4889
        %6005 = vst.msk [vmem:[%s206 + $0x378] sm:$0xff] %vm5893, %v4891
        %6006 = vst.msk [vmem:[%s206 + $0x380] sm:$0xff] %vm5893, %v4894
        %6007 = vst.msk [vmem:[%s206 + $0x388] sm:$0xff] %vm5893, %v4896
        %6008 = vst.msk [vmem:[%s206 + $0x390] sm:$0xff] %vm5893, %v4899
        %6009 = vst.msk [vmem:[%s206 + $0x398] sm:$0xff] %vm5893, %v4901
        %6010 = vst.msk [vmem:[%s206 + $0x3a0] sm:$0xff] %vm5893, %v4904
        %6011 = vst.msk [vmem:[%s206 + $0x3a8] sm:$0xff] %vm5893, %v4906
        %6012 = vst.msk [vmem:[%s206 + $0x3b0] sm:$0xff] %vm5893, %v4909
        %6013 = vst.msk [vmem:[%s206 + $0x3b8] sm:$0xff] %vm5893, %v4911
        %6014 = vst.msk [vmem:[%s206 + $0x3c0] sm:$0xff] %vm5893, %v4914
        %6015 = vst.msk [vmem:[%s206 + $0x3c8] sm:$0xff] %vm5893, %v4916
        %6016 = vst.msk [vmem:[%s206 + $0x3d0] sm:$0xff] %vm5893, %v4919
        %6017 = vst.msk [vmem:[%s206 + $0x3d8] sm:$0xff] %vm5893, %v4921
        %6018 = vst.msk [vmem:[%s206 + $0x3e0] sm:$0xff] %vm5893, %v4924
        %6019 = vst.msk [vmem:[%s206 + $0x3e8] sm:$0xff] %vm5893, %v4926
        %6020 = vst.msk [vmem:[%s206 + $0x3f0] sm:$0xff] %vm5893, %v4929
        %6021 = vst.msk [vmem:[%s206 + $0x3f8] sm:$0xff] %vm5893, %v4931
        %6022 = vst.msk [vmem:[%s206 + $0x400] sm:$0xff] %vm5893, %v4934
        %6023 = vst.msk [vmem:[%s206 + $0x408] sm:$0xff] %vm5893, %v4936
        %6024 = vst.msk [vmem:[%s206 + $0x410] sm:$0xff] %vm5893, %v4939
        %6025 = vst.msk [vmem:[%s206 + $0x418] sm:$0xff] %vm5893, %v4941
        %6026 = vst.msk [vmem:[%s206 + $0x420] sm:$0xff] %vm5893, %v4944
        %6027 = vst.msk [vmem:[%s206 + $0x428] sm:$0xff] %vm5893, %v4946
        %6028 = vst.msk [vmem:[%s206 + $0x430] sm:$0xff] %vm5893, %v4949
        %6029 = vst.msk [vmem:[%s206 + $0x438] sm:$0xff] %vm5893, %v4951
        %6030 = vst.msk [vmem:[%s206 + $0x440] sm:$0xff] %vm5893, %v4954
        %6031 = vst.msk [vmem:[%s206 + $0x448] sm:$0xff] %vm5893, %v4956
        %6032 = vst.msk [vmem:[%s206 + $0x450] sm:$0xff] %vm5893, %v4959
        %6033 = vst.msk [vmem:[%s206 + $0x458] sm:$0xff] %vm5893, %v4961
        %6034 = vst.msk [vmem:[%s206 + $0x460] sm:$0xff] %vm5893, %v4964
        %6035 = vst.msk [vmem:[%s206 + $0x468] sm:$0xff] %vm5893, %v4966
        %6036 = vst.msk [vmem:[%s206 + $0x470] sm:$0xff] %vm5893, %v4969
        %6037 = vst.msk [vmem:[%s206 + $0x478] sm:$0xff] %vm5893, %v4971
        %6038 = vst.msk [vmem:[%s206 + $0x480] sm:$0xff] %vm5893, %v4974
        %6039 = vst.msk [vmem:[%s206 + $0x488] sm:$0xff] %vm5893, %v4976
        %6040 = vst.msk [vmem:[%s206 + $0x490] sm:$0xff] %vm5893, %v4979
        %6041 = vst.msk [vmem:[%s206 + $0x498] sm:$0xff] %vm5893, %v4981
        %6042 = vst.msk [vmem:[%s206 + $0x4a0] sm:$0xff] %vm5893, %v4984
        %6043 = vst.msk [vmem:[%s206 + $0x4a8] sm:$0xff] %vm5893, %v4986
        %6044 = vst.msk [vmem:[%s206 + $0x4b0] sm:$0xff] %vm5893, %v4989
        %6045 = vst.msk [vmem:[%s206 + $0x4b8] sm:$0xff] %vm5893, %v4991
        %6046 = vst.msk [vmem:[%s206 + $0x4c0] sm:$0xff] %vm5893, %v4994
        %6047 = vst.msk [vmem:[%s206 + $0x4c8] sm:$0xff] %vm5893, %v4996
        %6048 = vst.msk [vmem:[%s206 + $0x4d0] sm:$0xff] %vm5893, %v4999
        %6049 = vst.msk [vmem:[%s206 + $0x4d8] sm:$0xff] %vm5893, %v5001
        %6050 = vst.msk [vmem:[%s206 + $0x4e0] sm:$0xff] %vm5893, %v5004
        %6051 = vst.msk [vmem:[%s206 + $0x4e8] sm:$0xff] %vm5893, %v5006
        %6052 = vst.msk [vmem:[%s206 + $0x4f0] sm:$0xff] %vm5893, %v5009
        %6053 = vst.msk [vmem:[%s206 + $0x4f8] sm:$0xff] %vm5893, %v5011
        %6054 = vst.msk [vmem:[%s206 + $0x500] sm:$0xff] %vm5893, %v5014
        %6055 = vst.msk [vmem:[%s206 + $0x508] sm:$0xff] %vm5893, %v5016
        %6056 = vst.msk [vmem:[%s206 + $0x510] sm:$0xff] %vm5893, %v5019
        %6057 = vst.msk [vmem:[%s206 + $0x518] sm:$0xff] %vm5893, %v5021
        %6058 = vst.msk [vmem:[%s206 + $0x520] sm:$0xff] %vm5893, %v5024
        %6059 = vst.msk [vmem:[%s206 + $0x528] sm:$0xff] %vm5893, %v5026
        %6060 = vst.msk [vmem:[%s206 + $0x530] sm:$0xff] %vm5893, %v5029
        %6061 = vst.msk [vmem:[%s206 + $0x538] sm:$0xff] %vm5893, %v5031
        %6062 = vst.msk [vmem:[%s206 + $0x540] sm:$0xff] %vm5893, %v5034
        %6063 = vst.msk [vmem:[%s206 + $0x548] sm:$0xff] %vm5893, %v5036
        %6064 = vst.msk [vmem:[%s206 + $0x550] sm:$0xff] %vm5893, %v5039
        %6065 = vst.msk [vmem:[%s206 + $0x558] sm:$0xff] %vm5893, %v5041
        %6066 = vst.msk [vmem:[%s206 + $0x560] sm:$0xff] %vm5893, %v5044
        %6067 = vst.msk [vmem:[%s206 + $0x568] sm:$0xff] %vm5893, %v5046
        %6068 = vst.msk [vmem:[%s206 + $0x570] sm:$0xff] %vm5893, %v5049
        %6069 = vst.msk [vmem:[%s206 + $0x578] sm:$0xff] %vm5893, %v5051
        %6070 = vst.msk [vmem:[%s206 + $0x580] sm:$0xff] %vm5893, %v5054
        %6071 = vst.msk [vmem:[%s206 + $0x588] sm:$0xff] %vm5893, %v5056
        %6072 = vst.msk [vmem:[%s206 + $0x590] sm:$0xff] %vm5893, %v5059
        %6073 = vst.msk [vmem:[%s206 + $0x598] sm:$0xff] %vm5893, %v5061
        %6074 = vst.msk [vmem:[%s206 + $0x5a0] sm:$0xff] %vm5893, %v5064
        %6075 = vst.msk [vmem:[%s206 + $0x5a8] sm:$0xff] %vm5893, %v5066
        %6076 = vst.msk [vmem:[%s206 + $0x5b0] sm:$0xff] %vm5893, %v5069
        %6077 = vst.msk [vmem:[%s206 + $0x5b8] sm:$0xff] %vm5893, %v5071
        %6078 = vst.msk [vmem:[%s206 + $0x5c0] sm:$0xff] %vm5893, %v5074
        %6079 = vst.msk [vmem:[%s206 + $0x5c8] sm:$0xff] %vm5893, %v5076
        %6080 = vst.msk [vmem:[%s206 + $0x5d0] sm:$0xff] %vm5893, %v5079
        %6081 = vst.msk [vmem:[%s206 + $0x5d8] sm:$0xff] %vm5893, %v5081
        %6082 = vst.msk [vmem:[%s206 + $0x5e0] sm:$0xff] %vm5893, %v5084
        %6083 = vst.msk [vmem:[%s206 + $0x5e8] sm:$0xff] %vm5893, %v5086
        %6084 = vst.msk [vmem:[%s206 + $0x5f0] sm:$0xff] %vm5893, %v5089
        %6085 = vst.msk [vmem:[%s206 + $0x5f8] sm:$0xff] %vm5893, %v5091
        %6086 = vst.msk [vmem:[%s206 + $0x600] sm:$0xff] %vm5893, %v5094
        %6087 = vst.msk [vmem:[%s206 + $0x608] sm:$0xff] %vm5893, %v5096
        %6088 = vst.msk [vmem:[%s206 + $0x610] sm:$0xff] %vm5893, %v5099
        %6089 = vst.msk [vmem:[%s206 + $0x618] sm:$0xff] %vm5893, %v5101
        %6090 = vst.msk [vmem:[%s206 + $0x620] sm:$0xff] %vm5893, %v5104
        %6091 = vst.msk [vmem:[%s206 + $0x628] sm:$0xff] %vm5893, %v5106
        %6092 = vst.msk [vmem:[%s206 + $0x630] sm:$0xff] %vm5893, %v5109
        %6093 = vst.msk [vmem:[%s206 + $0x638] sm:$0xff] %vm5893, %v5111
        %6094 = vst.msk [vmem:[%s206 + $0x640] sm:$0xff] %vm5893, %v5114
        %6095 = vst.msk [vmem:[%s206 + $0x648] sm:$0xff] %vm5893, %v5116
        %6096 = vst.msk [vmem:[%s206 + $0x650] sm:$0xff] %vm5893, %v5119
        %6097 = vst.msk [vmem:[%s206 + $0x658] sm:$0xff] %vm5893, %v5121
        %6098 = vst.msk [vmem:[%s206 + $0x660] sm:$0xff] %vm5893, %v5124
        %6099 = vst.msk [vmem:[%s206 + $0x668] sm:$0xff] %vm5893, %v5126
        %6100 = vst.msk [vmem:[%s206 + $0x670] sm:$0xff] %vm5893, %v5129
        %6101 = vst.msk [vmem:[%s206 + $0x678] sm:$0xff] %vm5893, %v5131
        %6102 = vst.msk [vmem:[%s206 + $0x680] sm:$0xff] %vm5893, %v5134
        %6103 = vst.msk [vmem:[%s206 + $0x688] sm:$0xff] %vm5893, %v5136
        %6104 = vst.msk [vmem:[%s206 + $0x690] sm:$0xff] %vm5893, %v5139
        %6105 = vst.msk [vmem:[%s206 + $0x698] sm:$0xff] %vm5893, %v5141
        %6106 = vst.msk [vmem:[%s206 + $0x6a0] sm:$0xff] %vm5893, %v5144
        %6107 = vst.msk [vmem:[%s206 + $0x6a8] sm:$0xff] %vm5893, %v5146
        %6108 = vst.msk [vmem:[%s206 + $0x6b0] sm:$0xff] %vm5893, %v5149
        %6109 = vst.msk [vmem:[%s206 + $0x6b8] sm:$0xff] %vm5893, %v5151
        %6110 = vst.msk [vmem:[%s206 + $0x6c0] sm:$0xff] %vm5893, %v5154
        %6111 = vst.msk [vmem:[%s206 + $0x6c8] sm:$0xff] %vm5893, %v5156
        %6112 = vst.msk [vmem:[%s206 + $0x6d0] sm:$0xff] %vm5893, %v5159
        %6113 = vst.msk [vmem:[%s206 + $0x6d8] sm:$0xff] %vm5893, %v5161
        %6114 = vst.msk [vmem:[%s206 + $0x6e0] sm:$0xff] %vm5893, %v5164
        %6115 = vst.msk [vmem:[%s206 + $0x6e8] sm:$0xff] %vm5893, %v5166
        %6116 = vst.msk [vmem:[%s206 + $0x6f0] sm:$0xff] %vm5893, %v5169
        %6117 = vst.msk [vmem:[%s206 + $0x6f8] sm:$0xff] %vm5893, %v5171
        %6118 = vst.msk [vmem:[%s206 + $0x700] sm:$0xff] %vm5893, %v5174
        %6119 = vst.msk [vmem:[%s206 + $0x708] sm:$0xff] %vm5893, %v5176
        %6120 = vst.msk [vmem:[%s206 + $0x710] sm:$0xff] %vm5893, %v5179
        %6121 = vst.msk [vmem:[%s206 + $0x718] sm:$0xff] %vm5893, %v5181
        %6122 = vst.msk [vmem:[%s206 + $0x720] sm:$0xff] %vm5893, %v5184
        %6123 = vst.msk [vmem:[%s206 + $0x728] sm:$0xff] %vm5893, %v5186
        %6124 = vst.msk [vmem:[%s206 + $0x730] sm:$0xff] %vm5893, %v5189
        %6125 = vst.msk [vmem:[%s206 + $0x738] sm:$0xff] %vm5893, %v5191
        %6126 = vst.msk [vmem:[%s206 + $0x740] sm:$0xff] %vm5893, %v5194
        %6127 = vst.msk [vmem:[%s206 + $0x748] sm:$0xff] %vm5893, %v5196
        %6128 = vst.msk [vmem:[%s206 + $0x750] sm:$0xff] %vm5893, %v5199
        %6129 = vst.msk [vmem:[%s206 + $0x758] sm:$0xff] %vm5893, %v5201
        %6130 = vst.msk [vmem:[%s206 + $0x760] sm:$0xff] %vm5893, %v5204
        %6131 = vst.msk [vmem:[%s206 + $0x768] sm:$0xff] %vm5893, %v5206
        %6132 = vst.msk [vmem:[%s206 + $0x770] sm:$0xff] %vm5893, %v5209
        %6133 = vst.msk [vmem:[%s206 + $0x778] sm:$0xff] %vm5893, %v5211
        %6134 = vst.msk [vmem:[%s206 + $0x780] sm:$0xff] %vm5893, %v5214
        %6135 = vst.msk [vmem:[%s206 + $0x788] sm:$0xff] %vm5893, %v5216
        %6136 = vst.msk [vmem:[%s206 + $0x790] sm:$0xff] %vm5893, %v5219
        %6137 = vst.msk [vmem:[%s206 + $0x798] sm:$0xff] %vm5893, %v5221
        %6138 = vst.msk [vmem:[%s206 + $0x7a0] sm:$0xff] %vm5893, %v5224
        %6139 = vst.msk [vmem:[%s206 + $0x7a8] sm:$0xff] %vm5893, %v5226
        %6140 = vst.msk [vmem:[%s206 + $0x7b0] sm:$0xff] %vm5893, %v5229
        %6141 = vst.msk [vmem:[%s206 + $0x7b8] sm:$0xff] %vm5893, %v5231
        %6142 = vst.msk [vmem:[%s206 + $0x7c0] sm:$0xff] %vm5893, %v5234
        %6143 = vst.msk [vmem:[%s206 + $0x7c8] sm:$0xff] %vm5893, %v5236
        %6144 = vst.msk [vmem:[%s206 + $0x7d0] sm:$0xff] %vm5893, %v5239
        %6145 = vst.msk [vmem:[%s206 + $0x7d8] sm:$0xff] %vm5893, %v5241
        %6146 = vst.msk [vmem:[%s206 + $0x7e0] sm:$0xff] %vm5893, %v5244
        %6147 = vst.msk [vmem:[%s206 + $0x7e8] sm:$0xff] %vm5893, %v5246
        %6148 = vst.msk [vmem:[%s206 + $0x7f0] sm:$0xff] %vm5893, %v5249
        %6149 = vst.msk [vmem:[%s206 + $0x7f8] sm:$0xff] %vm5893, %v5251
        %6150 = vst.msk [vmem:[%s206 + $0x800] sm:$0xff] %vm5893, %v5254
        %6151 = vst.msk [vmem:[%s206 + $0x808] sm:$0xff] %vm5893, %v5256
        %6152 = vst.msk [vmem:[%s206 + $0x810] sm:$0xff] %vm5893, %v5259
        %6153 = vst.msk [vmem:[%s206 + $0x818] sm:$0xff] %vm5893, %v5261
        %6154 = vst.msk [vmem:[%s206 + $0x820] sm:$0xff] %vm5893, %v5264
        %6155 = vst.msk [vmem:[%s206 + $0x828] sm:$0xff] %vm5893, %v5266
        %6156 = vst.msk [vmem:[%s206 + $0x830] sm:$0xff] %vm5893, %v5269
        %6157 = vst.msk [vmem:[%s206 + $0x838] sm:$0xff] %vm5893, %v5271
        %6158 = vst.msk [vmem:[%s206 + $0x840] sm:$0xff] %vm5893, %v5274
        %6159 = vst.msk [vmem:[%s206 + $0x848] sm:$0xff] %vm5893, %v5276
        %6160 = vst.msk [vmem:[%s206 + $0x850] sm:$0xff] %vm5893, %v5279
        %6161 = vst.msk [vmem:[%s206 + $0x858] sm:$0xff] %vm5893, %v5281
        %6162 = vst.msk [vmem:[%s206 + $0x860] sm:$0xff] %vm5893, %v5284
        %6163 = vst.msk [vmem:[%s206 + $0x868] sm:$0xff] %vm5893, %v5286
        %6164 = vst.msk [vmem:[%s206 + $0x870] sm:$0xff] %vm5893, %v5289
        %6165 = vst.msk [vmem:[%s206 + $0x878] sm:$0xff] %vm5893, %v5291
        %6166 = vst.msk [vmem:[%s206 + $0x880] sm:$0xff] %vm5893, %v5294
        %6167 = vst.msk [vmem:[%s206 + $0x888] sm:$0xff] %vm5893, %v5296
        %6168 = vst.msk [vmem:[%s206 + $0x890] sm:$0xff] %vm5893, %v5299
        %6169 = vst.msk [vmem:[%s206 + $0x898] sm:$0xff] %vm5893, %v5301
        %6170 = vst.msk [vmem:[%s206 + $0x8a0] sm:$0xff] %vm5893, %v5304
        %6171 = vst.msk [vmem:[%s206 + $0x8a8] sm:$0xff] %vm5893, %v5306
        %6172 = vst.msk [vmem:[%s206 + $0x8b0] sm:$0xff] %vm5893, %v5309
        %6173 = vst.msk [vmem:[%s206 + $0x8b8] sm:$0xff] %vm5893, %v5311
        %6174 = vst.msk [vmem:[%s206 + $0x8c0] sm:$0xff] %vm5893, %v5314
        %6175 = vst.msk [vmem:[%s206 + $0x8c8] sm:$0xff] %vm5893, %v5316
        %6176 = vst.msk [vmem:[%s206 + $0x8d0] sm:$0xff] %vm5893, %v5319
        %6177 = vst.msk [vmem:[%s206 + $0x8d8] sm:$0xff] %vm5893, %v5321
        %6178 = vst.msk [vmem:[%s206 + $0x8e0] sm:$0xff] %vm5893, %v5324
        %6179 = vst.msk [vmem:[%s206 + $0x8e8] sm:$0xff] %vm5893, %v5326
        %6180 = vst.msk [vmem:[%s206 + $0x8f0] sm:$0xff] %vm5893, %v5329
        %6181 = vst.msk [vmem:[%s206 + $0x8f8] sm:$0xff] %vm5893, %v5331
        %6182 = vst.msk [vmem:[%s206 + $0x900] sm:$0xff] %vm5893, %v5334
        %6183 = vst.msk [vmem:[%s206 + $0x908] sm:$0xff] %vm5893, %v5336
        %6184 = vst.msk [vmem:[%s206 + $0x910] sm:$0xff] %vm5893, %v5339
        %6185 = vst.msk [vmem:[%s206 + $0x918] sm:$0xff] %vm5893, %v5341
        %6186 = vst.msk [vmem:[%s206 + $0x920] sm:$0xff] %vm5893, %v5344
        %6187 = vst.msk [vmem:[%s206 + $0x928] sm:$0xff] %vm5893, %v5346
        %6188 = vst.msk [vmem:[%s206 + $0x930] sm:$0xff] %vm5893, %v5349
        %6189 = vst.msk [vmem:[%s206 + $0x938] sm:$0xff] %vm5893, %v5351
        %6190 = vst.msk [vmem:[%s206 + $0x940] sm:$0xff] %vm5893, %v5354
        %6191 = vst.msk [vmem:[%s206 + $0x948] sm:$0xff] %vm5893, %v5356
        %6192 = vst.msk [vmem:[%s206 + $0x950] sm:$0xff] %vm5893, %v5359
        %6193 = vst.msk [vmem:[%s206 + $0x958] sm:$0xff] %vm5893, %v5361
        %6194 = vst.msk [vmem:[%s206 + $0x960] sm:$0xff] %vm5893, %v5364
        %6195 = vst.msk [vmem:[%s206 + $0x968] sm:$0xff] %vm5893, %v5366
        %6196 = vst.msk [vmem:[%s206 + $0x970] sm:$0xff] %vm5893, %v5369
        %6197 = vst.msk [vmem:[%s206 + $0x978] sm:$0xff] %vm5893, %v5371
        %6198 = vst.msk [vmem:[%s206 + $0x980] sm:$0xff] %vm5893, %v5374
        %6199 = vst.msk [vmem:[%s206 + $0x988] sm:$0xff] %vm5893, %v5376
        %6200 = vst.msk [vmem:[%s206 + $0x990] sm:$0xff] %vm5893, %v5379
        %6201 = vst.msk [vmem:[%s206 + $0x998] sm:$0xff] %vm5893, %v5381
        %6202 = vst.msk [vmem:[%s206 + $0x9a0] sm:$0xff] %vm5893, %v5384
        %6203 = vst.msk [vmem:[%s206 + $0x9a8] sm:$0xff] %vm5893, %v5386
        %6204 = vst.msk [vmem:[%s206 + $0x9b0] sm:$0xff] %vm5893, %v5389
        %6205 = vst.msk [vmem:[%s206 + $0x9b8] sm:$0xff] %vm5893, %v5391
        %6206 = vst.msk [vmem:[%s206 + $0x9c0] sm:$0xff] %vm5893, %v5394
        %6207 = vst.msk [vmem:[%s206 + $0x9c8] sm:$0xff] %vm5893, %v5396
        %6208 = vst.msk [vmem:[%s206 + $0x9d0] sm:$0xff] %vm5893, %v5399
        %6209 = vst.msk [vmem:[%s206 + $0x9d8] sm:$0xff] %vm5893, %v5401
        %6210 = vst.msk [vmem:[%s206 + $0x9e0] sm:$0xff] %vm5893, %v5404
        %6211 = vst.msk [vmem:[%s206 + $0x9e8] sm:$0xff] %vm5893, %v5406
        %6212 = vst.msk [vmem:[%s206 + $0x9f0] sm:$0xff] %vm5893, %v5409
        %6213 = vst.msk [vmem:[%s206 + $0x9f8] sm:$0xff] %vm5893, %v5411
        %6214 = vst.msk [vmem:[%s206 + $0xa00] sm:$0xff] %vm5893, %v5414
        %6215 = vst.msk [vmem:[%s206 + $0xa08] sm:$0xff] %vm5893, %v5416
        %6216 = vst.msk [vmem:[%s206 + $0xa10] sm:$0xff] %vm5893, %v5419
        %6217 = vst.msk [vmem:[%s206 + $0xa18] sm:$0xff] %vm5893, %v5421
        %6218 = vst.msk [vmem:[%s206 + $0xa20] sm:$0xff] %vm5893, %v5424
        %6219 = vst.msk [vmem:[%s206 + $0xa28] sm:$0xff] %vm5893, %v5426
        %6220 = vst.msk [vmem:[%s206 + $0xa30] sm:$0xff] %vm5893, %v5429
        %6221 = vst.msk [vmem:[%s206 + $0xa38] sm:$0xff] %vm5893, %v5431
        %6222 = vst.msk [vmem:[%s206 + $0xa40] sm:$0xff] %vm5893, %v5434
        %6223 = vst.msk [vmem:[%s206 + $0xa48] sm:$0xff] %vm5893, %v5436
        %6224 = vst.msk [vmem:[%s206 + $0xa50] sm:$0xff] %vm5893, %v5439
        %6225 = vst.msk [vmem:[%s206 + $0xa58] sm:$0xff] %vm5893, %v5441
        %6226 = vst.msk [vmem:[%s206 + $0xa60] sm:$0xff] %vm5893, %v5444
        %6227 = vst.msk [vmem:[%s206 + $0xa68] sm:$0xff] %vm5893, %v5446
        %6228 = vst.msk [vmem:[%s206 + $0xa70] sm:$0xff] %vm5893, %v5449
        %6229 = vst.msk [vmem:[%s206 + $0xa78] sm:$0xff] %vm5893, %v5451
        %6230 = vst.msk [vmem:[%s206 + $0xa80] sm:$0xff] %vm5893, %v5454
        %6231 = vst.msk [vmem:[%s206 + $0xa88] sm:$0xff] %vm5893, %v5456
        %6232 = vst.msk [vmem:[%s206 + $0xa90] sm:$0xff] %vm5893, %v5459
        %6233 = vst.msk [vmem:[%s206 + $0xa98] sm:$0xff] %vm5893, %v5461
        %6234 = vst.msk [vmem:[%s206 + $0xaa0] sm:$0xff] %vm5893, %v5464
        %6235 = vst.msk [vmem:[%s206 + $0xaa8] sm:$0xff] %vm5893, %v5466
        %6236 = vst.msk [vmem:[%s206 + $0xab0] sm:$0xff] %vm5893, %v5469
        %6237 = vst.msk [vmem:[%s206 + $0xab8] sm:$0xff] %vm5893, %v5471
        %6238 = vst.msk [vmem:[%s206 + $0xac0] sm:$0xff] %vm5893, %v5474
        %6239 = vst.msk [vmem:[%s206 + $0xac8] sm:$0xff] %vm5893, %v5476
        %6240 = vst.msk [vmem:[%s206 + $0xad0] sm:$0xff] %vm5893, %v5479
        %6241 = vst.msk [vmem:[%s206 + $0xad8] sm:$0xff] %vm5893, %v5481
        %6242 = vst.msk [vmem:[%s206 + $0xae0] sm:$0xff] %vm5893, %v5484
        %6243 = vst.msk [vmem:[%s206 + $0xae8] sm:$0xff] %vm5893, %v5486
        %6244 = vst.msk [vmem:[%s206 + $0xaf0] sm:$0xff] %vm5893, %v5489
        %6245 = vst.msk [vmem:[%s206 + $0xaf8] sm:$0xff] %vm5893, %v5491
        %6246 = vst.msk [vmem:[%s206 + $0xb00] sm:$0xff] %vm5893, %v5494
        %6247 = vst.msk [vmem:[%s206 + $0xb08] sm:$0xff] %vm5893, %v5496
        %6248 = vst.msk [vmem:[%s206 + $0xb10] sm:$0xff] %vm5893, %v5499
        %6249 = vst.msk [vmem:[%s206 + $0xb18] sm:$0xff] %vm5893, %v5501
        %6250 = vst.msk [vmem:[%s206 + $0xb20] sm:$0xff] %vm5893, %v5504
        %6251 = vst.msk [vmem:[%s206 + $0xb28] sm:$0xff] %vm5893, %v5506
        %6252 = vst.msk [vmem:[%s206 + $0xb30] sm:$0xff] %vm5893, %v5509
        %6253 = vst.msk [vmem:[%s206 + $0xb38] sm:$0xff] %vm5893, %v5511
        %6254 = vst.msk [vmem:[%s206 + $0xb40] sm:$0xff] %vm5893, %v5514
        %6255 = vst.msk [vmem:[%s206 + $0xb48] sm:$0xff] %vm5893, %v5516
        %6256 = vst.msk [vmem:[%s206 + $0xb50] sm:$0xff] %vm5893, %v5519
        %6257 = vst.msk [vmem:[%s206 + $0xb58] sm:$0xff] %vm5893, %v5521
        %6258 = vst.msk [vmem:[%s206 + $0xb60] sm:$0xff] %vm5893, %v5524
        %6259 = vst.msk [vmem:[%s206 + $0xb68] sm:$0xff] %vm5893, %v5526
        %6260 = vst.msk [vmem:[%s206 + $0xb70] sm:$0xff] %vm5893, %v5529
        %6261 = vst.msk [vmem:[%s206 + $0xb78] sm:$0xff] %vm5893, %v5531
        %6262 = vst.msk [vmem:[%s206 + $0xb80] sm:$0xff] %vm5893, %v5534
        %6263 = vst.msk [vmem:[%s206 + $0xb88] sm:$0xff] %vm5893, %v5536
        %6264 = vst.msk [vmem:[%s206 + $0xb90] sm:$0xff] %vm5893, %v5539
        %6265 = vst.msk [vmem:[%s206 + $0xb98] sm:$0xff] %vm5893, %v5541
        %6266 = vst.msk [vmem:[%s206 + $0xba0] sm:$0xff] %vm5893, %v5544
        %6267 = vst.msk [vmem:[%s206 + $0xba8] sm:$0xff] %vm5893, %v5546
        %6268 = vst.msk [vmem:[%s206 + $0xbb0] sm:$0xff] %vm5893, %v5549
        %6269 = vst.msk [vmem:[%s206 + $0xbb8] sm:$0xff] %vm5893, %v5551
        %6270 = vst.msk [vmem:[%s206 + $0xbc0] sm:$0xff] %vm5893, %v5554
        %6271 = vst.msk [vmem:[%s206 + $0xbc8] sm:$0xff] %vm5893, %v5556
        %6272 = vst.msk [vmem:[%s206 + $0xbd0] sm:$0xff] %vm5893, %v5559
        %6273 = vst.msk [vmem:[%s206 + $0xbd8] sm:$0xff] %vm5893, %v5561
        %6274 = vst.msk [vmem:[%s206 + $0xbe0] sm:$0xff] %vm5893, %v5564
        %6275 = vst.msk [vmem:[%s206 + $0xbe8] sm:$0xff] %vm5893, %v5566
        %6276 = vst.msk [vmem:[%s206 + $0xbf0] sm:$0xff] %vm5893, %v5569
        %6277 = vst.msk [vmem:[%s206 + $0xbf8] sm:$0xff] %vm5893, %v5571
        %6278 = vst.msk [vmem:[%s206 + $0xc00] sm:$0xff] %vm5893, %v5574
        %6279 = vst.msk [vmem:[%s206 + $0xc08] sm:$0xff] %vm5893, %v5576
        %6280 = vst.msk [vmem:[%s206 + $0xc10] sm:$0xff] %vm5893, %v5579
        %6281 = vst.msk [vmem:[%s206 + $0xc18] sm:$0xff] %vm5893, %v5581
        %6282 = vst.msk [vmem:[%s206 + $0xc20] sm:$0xff] %vm5893, %v5584
        %6283 = vst.msk [vmem:[%s206 + $0xc28] sm:$0xff] %vm5893, %v5586
        %6284 = vst.msk [vmem:[%s206 + $0xc30] sm:$0xff] %vm5893, %v5589
        %6285 = vst.msk [vmem:[%s206 + $0xc38] sm:$0xff] %vm5893, %v5591
        %6286 = vst.msk [vmem:[%s206 + $0xc40] sm:$0xff] %vm5893, %v5594
        %6287 = vst.msk [vmem:[%s206 + $0xc48] sm:$0xff] %vm5893, %v5596
        %6288 = vst.msk [vmem:[%s206 + $0xc50] sm:$0xff] %vm5893, %v5599
        %6289 = vst.msk [vmem:[%s206 + $0xc58] sm:$0xff] %vm5893, %v5601
        %6290 = vst.msk [vmem:[%s206 + $0xc60] sm:$0xff] %vm5893, %v5604
        %6291 = vst.msk [vmem:[%s206 + $0xc68] sm:$0xff] %vm5893, %v5606
        %6292 = vst.msk [vmem:[%s206 + $0xc70] sm:$0xff] %vm5893, %v5609
        %6293 = vst.msk [vmem:[%s206 + $0xc78] sm:$0xff] %vm5893, %v5611
        %6294 = vst.msk [vmem:[%s206 + $0xc80] sm:$0xff] %vm5893, %v5614
        %6295 = vst.msk [vmem:[%s206 + $0xc88] sm:$0xff] %vm5893, %v5616
        %6296 = vst.msk [vmem:[%s206 + $0xc90] sm:$0xff] %vm5893, %v5619
        %6297 = vst.msk [vmem:[%s206 + $0xc98] sm:$0xff] %vm5893, %v5621
        %6298 = vst.msk [vmem:[%s206 + $0xca0] sm:$0xff] %vm5893, %v5624
        %6299 = vst.msk [vmem:[%s206 + $0xca8] sm:$0xff] %vm5893, %v5626
        %6300 = vst.msk [vmem:[%s206 + $0xcb0] sm:$0xff] %vm5893, %v5629
        %6301 = vst.msk [vmem:[%s206 + $0xcb8] sm:$0xff] %vm5893, %v5631
        %6302 = vst.msk [vmem:[%s206 + $0xcc0] sm:$0xff] %vm5893, %v5634
        %6303 = vst.msk [vmem:[%s206 + $0xcc8] sm:$0xff] %vm5893, %v5636
        %6304 = vst.msk [vmem:[%s206 + $0xcd0] sm:$0xff] %vm5893, %v5639
        %6305 = vst.msk [vmem:[%s206 + $0xcd8] sm:$0xff] %vm5893, %v5641
        %6306 = vst.msk [vmem:[%s206 + $0xce0] sm:$0xff] %vm5893, %v5644
        %6307 = vst.msk [vmem:[%s206 + $0xce8] sm:$0xff] %vm5893, %v5646
        %6308 = vst.msk [vmem:[%s206 + $0xcf0] sm:$0xff] %vm5893, %v5649
        %6309 = vst.msk [vmem:[%s206 + $0xcf8] sm:$0xff] %vm5893, %v5651
        %6310 = vst.msk [vmem:[%s206 + $0xd00] sm:$0xff] %vm5893, %v5654
        %6311 = vst.msk [vmem:[%s206 + $0xd08] sm:$0xff] %vm5893, %v5656
        %6312 = vst.msk [vmem:[%s206 + $0xd10] sm:$0xff] %vm5893, %v5659
        %6313 = vst.msk [vmem:[%s206 + $0xd18] sm:$0xff] %vm5893, %v5661
        %6314 = vst.msk [vmem:[%s206 + $0xd20] sm:$0xff] %vm5893, %v5664
        %6315 = vst.msk [vmem:[%s206 + $0xd28] sm:$0xff] %vm5893, %v5666
        %6316 = vst.msk [vmem:[%s206 + $0xd30] sm:$0xff] %vm5893, %v5669
        %6317 = vst.msk [vmem:[%s206 + $0xd38] sm:$0xff] %vm5893, %v5671
        %6318 = vst.msk [vmem:[%s206 + $0xd40] sm:$0xff] %vm5893, %v5674
        %6319 = vst.msk [vmem:[%s206 + $0xd48] sm:$0xff] %vm5893, %v5676
        %6320 = vst.msk [vmem:[%s206 + $0xd50] sm:$0xff] %vm5893, %v5679
        %6321 = vst.msk [vmem:[%s206 + $0xd58] sm:$0xff] %vm5893, %v5681
        %6322 = vst.msk [vmem:[%s206 + $0xd60] sm:$0xff] %vm5893, %v5684
        %6323 = vst.msk [vmem:[%s206 + $0xd68] sm:$0xff] %vm5893, %v5686
        %6324 = vst.msk [vmem:[%s206 + $0xd70] sm:$0xff] %vm5893, %v5689
        %6325 = vst.msk [vmem:[%s206 + $0xd78] sm:$0xff] %vm5893, %v5691
        %6326 = vst.msk [vmem:[%s206 + $0xd80] sm:$0xff] %vm5893, %v5694
        %6327 = vst.msk [vmem:[%s206 + $0xd88] sm:$0xff] %vm5893, %v5696
        %6328 = vst.msk [vmem:[%s206 + $0xd90] sm:$0xff] %vm5893, %v5699
        %6329 = vst.msk [vmem:[%s206 + $0xd98] sm:$0xff] %vm5893, %v5701
        %6330 = vst.msk [vmem:[%s206 + $0xda0] sm:$0xff] %vm5893, %v5704
        %6331 = vst.msk [vmem:[%s206 + $0xda8] sm:$0xff] %vm5893, %v5706
        %6332 = vst.msk [vmem:[%s206 + $0xdb0] sm:$0xff] %vm5893, %v5709
        %6333 = vst.msk [vmem:[%s206 + $0xdb8] sm:$0xff] %vm5893, %v5711
        %6334 = vst.msk [vmem:[%s206 + $0xdc0] sm:$0xff] %vm5893, %v5714
        %6335 = vst.msk [vmem:[%s206 + $0xdc8] sm:$0xff] %vm5893, %v5716
        %6336 = vst.msk [vmem:[%s206 + $0xdd0] sm:$0xff] %vm5893, %v5719
        %6337 = vst.msk [vmem:[%s206 + $0xdd8] sm:$0xff] %vm5893, %v5721
        %6338 = vst.msk [vmem:[%s206 + $0xde0] sm:$0xff] %vm5893, %v5724
        %6339 = vst.msk [vmem:[%s206 + $0xde8] sm:$0xff] %vm5893, %v5726
        %6340 = vst.msk [vmem:[%s206 + $0xdf0] sm:$0xff] %vm5893, %v5729
        %6341 = vst.msk [vmem:[%s206 + $0xdf8] sm:$0xff] %vm5893, %v5731
        %6342 = vst.msk [vmem:[%s206 + $0xe00] sm:$0xff] %vm5893, %v5734
        %6343 = vst.msk [vmem:[%s206 + $0xe08] sm:$0xff] %vm5893, %v5736
        %6344 = vst.msk [vmem:[%s206 + $0xe10] sm:$0xff] %vm5893, %v5739
        %6345 = vst.msk [vmem:[%s206 + $0xe18] sm:$0xff] %vm5893, %v5741
        %6346 = vst.msk [vmem:[%s206 + $0xe20] sm:$0xff] %vm5893, %v5744
        %6347 = vst.msk [vmem:[%s206 + $0xe28] sm:$0xff] %vm5893, %v5746
        %6348 = vst.msk [vmem:[%s206 + $0xe30] sm:$0xff] %vm5893, %v5749
        %6349 = vst.msk [vmem:[%s206 + $0xe38] sm:$0xff] %vm5893, %v5751
        %6350 = vst.msk [vmem:[%s206 + $0xe40] sm:$0xff] %vm5893, %v5754
        %6351 = vst.msk [vmem:[%s206 + $0xe48] sm:$0xff] %vm5893, %v5756
        %6352 = vst.msk [vmem:[%s206 + $0xe50] sm:$0xff] %vm5893, %v5759
        %6353 = vst.msk [vmem:[%s206 + $0xe58] sm:$0xff] %vm5893, %v5761
        %6354 = vst.msk [vmem:[%s206 + $0xe60] sm:$0xff] %vm5893, %v5764
        %6355 = vst.msk [vmem:[%s206 + $0xe68] sm:$0xff] %vm5893, %v5766
        %6356 = vst.msk [vmem:[%s206 + $0xe70] sm:$0xff] %vm5893, %v5769
        %6357 = vst.msk [vmem:[%s206 + $0xe78] sm:$0xff] %vm5893, %v5771
        %6358 = vst.msk [vmem:[%s206 + $0xe80] sm:$0xff] %vm5893, %v5774
        %6359 = vst.msk [vmem:[%s206 + $0xe88] sm:$0xff] %vm5893, %v5776
        %6360 = vst.msk [vmem:[%s206 + $0xe90] sm:$0xff] %vm5893, %v5779
        %6361 = vst.msk [vmem:[%s206 + $0xe98] sm:$0xff] %vm5893, %v5781
        %6362 = vst.msk [vmem:[%s206 + $0xea0] sm:$0xff] %vm5893, %v5784
        %6363 = vst.msk [vmem:[%s206 + $0xea8] sm:$0xff] %vm5893, %v5786
        %6364 = vst.msk [vmem:[%s206 + $0xeb0] sm:$0xff] %vm5893, %v5789
        %6365 = vst.msk [vmem:[%s206 + $0xeb8] sm:$0xff] %vm5893, %v5791
        %6366 = vst.msk [vmem:[%s206 + $0xec0] sm:$0xff] %vm5893, %v5794
        %6367 = vst.msk [vmem:[%s206 + $0xec8] sm:$0xff] %vm5893, %v5796
        %6368 = vst.msk [vmem:[%s206 + $0xed0] sm:$0xff] %vm5893, %v5799
        %6369 = vst.msk [vmem:[%s206 + $0xed8] sm:$0xff] %vm5893, %v5801
        %6370 = vst.msk [vmem:[%s206 + $0xee0] sm:$0xff] %vm5893, %v5804
        %6371 = vst.msk [vmem:[%s206 + $0xee8] sm:$0xff] %vm5893, %v5806
        %6372 = vst.msk [vmem:[%s206 + $0xef0] sm:$0xff] %vm5893, %v5809
        %6373 = vst.msk [vmem:[%s206 + $0xef8] sm:$0xff] %vm5893, %v5811
        %6374 = vst.msk [vmem:[%s206 + $0xf00] sm:$0xff] %vm5893, %v5814
        %6375 = vst.msk [vmem:[%s206 + $0xf08] sm:$0xff] %vm5893, %v5816
        %6376 = vst.msk [vmem:[%s206 + $0xf10] sm:$0xff] %vm5893, %v5819
        %6377 = vst.msk [vmem:[%s206 + $0xf18] sm:$0xff] %vm5893, %v5821
        %6378 = vst.msk [vmem:[%s206 + $0xf20] sm:$0xff] %vm5893, %v5824
        %6379 = vst.msk [vmem:[%s206 + $0xf28] sm:$0xff] %vm5893, %v5826
        %6380 = vst.msk [vmem:[%s206 + $0xf30] sm:$0xff] %vm5893, %v5829
        %6381 = vst.msk [vmem:[%s206 + $0xf38] sm:$0xff] %vm5893, %v5831
        %6382 = vst.msk [vmem:[%s206 + $0xf40] sm:$0xff] %vm5893, %v5834
        %6383 = vst.msk [vmem:[%s206 + $0xf48] sm:$0xff] %vm5893, %v5836
        %6384 = vst.msk [vmem:[%s206 + $0xf50] sm:$0xff] %vm5893, %v5839
        %6385 = vst.msk [vmem:[%s206 + $0xf58] sm:$0xff] %vm5893, %v5841
        %6386 = vst.msk [vmem:[%s206 + $0xf60] sm:$0xff] %vm5893, %v5844
        %6387 = vst.msk [vmem:[%s206 + $0xf68] sm:$0xff] %vm5893, %v5846
        %6388 = vst.msk [vmem:[%s206 + $0xf70] sm:$0xff] %vm5893, %v5849
        %6389 = vst.msk [vmem:[%s206 + $0xf78] sm:$0xff] %vm5893, %v5851
        %6390 = vst.msk [vmem:[%s206 + $0xf80] sm:$0xff] %vm5893, %v5854
        %6391 = vst.msk [vmem:[%s206 + $0xf88] sm:$0xff] %vm5893, %v5856
        %6392 = vst.msk [vmem:[%s206 + $0xf90] sm:$0xff] %vm5893, %v5859
        %6393 = vst.msk [vmem:[%s206 + $0xf98] sm:$0xff] %vm5893, %v5861
        %6394 = vst.msk [vmem:[%s206 + $0xfa0] sm:$0xff] %vm5893, %v5864
        %6395 = vst.msk [vmem:[%s206 + $0xfa8] sm:$0xff] %vm5893, %v5866
        %6396 = vst.msk [vmem:[%s206 + $0xfb0] sm:$0xff] %vm5893, %v5869
        %6397 = vst.msk [vmem:[%s206 + $0xfb8] sm:$0xff] %vm5893, %v5871
        %6398 = vst.msk [vmem:[%s206 + $0xfc0] sm:$0xff] %vm5893, %v5874
        %6399 = vst.msk [vmem:[%s206 + $0xfc8] sm:$0xff] %vm5893, %v5876
        %6400 = vst.msk [vmem:[%s206 + $0xfd0] sm:$0xff] %vm5893, %v5879
        %6401 = vst.msk [vmem:[%s206 + $0xfd8] sm:$0xff] %vm5893, %v5881
        %6402 = vst.msk [vmem:[%s206 + $0xfe0] sm:$0xff] %vm5893, %v5884
        %6403 = vst.msk [vmem:[%s206 + $0xfe8] sm:$0xff] %vm5893, %v5886
        %6404 = vst.msk [vmem:[%s206 + $0xff0] sm:$0xff] %vm5893, %v5889
        %6405 = vst.msk [vmem:[%s206 + $0xff8] sm:$0xff] %vm5893, %v5891
        %s6406 = sand.u32 %s92, 1
        %s6407 = sand.u32 %s92, 1
        %s6408 = smul.addr %s6407, 4096
        %s6409 = scalar_lea.vmem [#allocation2], %s6408
        %s6410 = sand.u32 %s118, 1
        %s6411 = sand.u32 %s118, 1
        %s6412 = smul.addr %s6411, 4096
        %s6413 = scalar_lea.vmem [#allocation3], %s6412
        // Predicated region
        $region33: #{cpw_forward.3} parent=31 // pred_check
          %p6414 = pneg %p102
        $region34: #{cpw_forward.3} parent=31 // pred_check_branch
          %6416 = sbr.rel (%p6414) target = $region36
        $region35: #{cpw_forward.3} parent=31 // pred_region
          %s6417 = smul.u32 512, %s16
          %s6418 = ssub.s32 5000, %s6417
          %p6419 = scmp.lt.s32.totalorder %s6418, 512
          %s6420 = scalar_select %p6419, %s6418, 512
          %s6421 = smul.u32 8, %s6420
          %p6422 = scmp.ne.s32.totalorder 0, %s6421
          %s6423 = smul.addr %s6417, 8
          %s6424 = scalar_lea.vmem %s3, %s6423
          // Predicated region
          $region37: #{cpw_forward.3} parent=35 // pred_check
            %p6425 = pneg %p6422
          $region38: #{cpw_forward.3} parent=35 // pred_check_branch
            %6427 = sbr.rel (%p6425) target = $region40
          $region39: #{cpw_forward.3} parent=35 // pred_region
            // Predicated region
            $region41: #{cpw_forward.3} parent=39 // pred_check
              _
            $region42: #{cpw_forward.3} parent=39 // pred_check_branch
              %6429 = sbr.rel (0) target = $region44
            $region43: #{cpw_forward.3} parent=39 // pred_region
              // Predicated region
              $region63: #{cpw_forward.3} parent=43 // pred_check
                _
              $region64: #{cpw_forward.3} parent=43 // pred_check_branch
                %6541 = sbr.rel (0) target = $region66
              $region65: #{cpw_forward.3} parent=43 // pred_region
                %s6542 = sshrl.u32 %s6420, 5
                // While loop
                $region67: #{cpw_forward.3} parent=65 // loop_pre_header
                  _
                $region68: #{cpw_forward.3} parent=65 // loop_header
                  %s6544 = sphi 0, %s6546
                  %p6545 = scmp.ge.s32.totalorder %s6544, %s6542
                  %s6549 = sphi 0, %s6618
                  %s6550 = sphi %s6409, %s6621
                  %s6551 = sphi %s6424, %s6622
                $region69: #{cpw_forward.3} parent=65 // loop_header_branch
                  %6548 = sbr.rel (%p6545) target = $region73
                $region70: #{cpw_forward.3} parent=65 // loop_body
                  %v6552 = vld [vmem:[%s6550] sm:$0xff]
                  %6553 = vst [vmem:[%s6551] sm:$0xff] %v6552
                  %v6554 = vld [vmem:[%s6550 + $0x8] sm:$0xff]
                  %6555 = vst [vmem:[%s6551 + $0x8] sm:$0xff] %v6554
                  %v6556 = vld [vmem:[%s6550 + $0x10] sm:$0xff]
                  %6557 = vst [vmem:[%s6551 + $0x10] sm:$0xff] %v6556
                  %v6558 = vld [vmem:[%s6550 + $0x18] sm:$0xff]
                  %6559 = vst [vmem:[%s6551 + $0x18] sm:$0xff] %v6558
                  %v6560 = vld [vmem:[%s6550 + $0x20] sm:$0xff]
                  %6561 = vst [vmem:[%s6551 + $0x20] sm:$0xff] %v6560
                  %v6562 = vld [vmem:[%s6550 + $0x28] sm:$0xff]
                  %6563 = vst [vmem:[%s6551 + $0x28] sm:$0xff] %v6562
                  %v6564 = vld [vmem:[%s6550 + $0x30] sm:$0xff]
                  %6565 = vst [vmem:[%s6551 + $0x30] sm:$0xff] %v6564
                  %v6566 = vld [vmem:[%s6550 + $0x38] sm:$0xff]
                  %6567 = vst [vmem:[%s6551 + $0x38] sm:$0xff] %v6566
                  %v6568 = vld [vmem:[%s6550 + $0x40] sm:$0xff]
                  %6569 = vst [vmem:[%s6551 + $0x40] sm:$0xff] %v6568
                  %v6570 = vld [vmem:[%s6550 + $0x48] sm:$0xff]
                  %6571 = vst [vmem:[%s6551 + $0x48] sm:$0xff] %v6570
                  %v6572 = vld [vmem:[%s6550 + $0x50] sm:$0xff]
                  %6573 = vst [vmem:[%s6551 + $0x50] sm:$0xff] %v6572
                  %v6574 = vld [vmem:[%s6550 + $0x58] sm:$0xff]
                  %6575 = vst [vmem:[%s6551 + $0x58] sm:$0xff] %v6574
                  %v6576 = vld [vmem:[%s6550 + $0x60] sm:$0xff]
                  %6577 = vst [vmem:[%s6551 + $0x60] sm:$0xff] %v6576
                  %v6578 = vld [vmem:[%s6550 + $0x68] sm:$0xff]
                  %6579 = vst [vmem:[%s6551 + $0x68] sm:$0xff] %v6578
                  %v6580 = vld [vmem:[%s6550 + $0x70] sm:$0xff]
                  %6581 = vst [vmem:[%s6551 + $0x70] sm:$0xff] %v6580
                  %v6582 = vld [vmem:[%s6550 + $0x78] sm:$0xff]
                  %6583 = vst [vmem:[%s6551 + $0x78] sm:$0xff] %v6582
                  %v6584 = vld [vmem:[%s6550 + $0x80] sm:$0xff]
                  %6585 = vst [vmem:[%s6551 + $0x80] sm:$0xff] %v6584
                  %v6586 = vld [vmem:[%s6550 + $0x88] sm:$0xff]
                  %6587 = vst [vmem:[%s6551 + $0x88] sm:$0xff] %v6586
                  %v6588 = vld [vmem:[%s6550 + $0x90] sm:$0xff]
                  %6589 = vst [vmem:[%s6551 + $0x90] sm:$0xff] %v6588
                  %v6590 = vld [vmem:[%s6550 + $0x98] sm:$0xff]
                  %6591 = vst [vmem:[%s6551 + $0x98] sm:$0xff] %v6590
                  %v6592 = vld [vmem:[%s6550 + $0xa0] sm:$0xff]
                  %6593 = vst [vmem:[%s6551 + $0xa0] sm:$0xff] %v6592
                  %v6594 = vld [vmem:[%s6550 + $0xa8] sm:$0xff]
                  %6595 = vst [vmem:[%s6551 + $0xa8] sm:$0xff] %v6594
                  %v6596 = vld [vmem:[%s6550 + $0xb0] sm:$0xff]
                  %6597 = vst [vmem:[%s6551 + $0xb0] sm:$0xff] %v6596
                  %v6598 = vld [vmem:[%s6550 + $0xb8] sm:$0xff]
                  %6599 = vst [vmem:[%s6551 + $0xb8] sm:$0xff] %v6598
                  %v6600 = vld [vmem:[%s6550 + $0xc0] sm:$0xff]
                  %6601 = vst [vmem:[%s6551 + $0xc0] sm:$0xff] %v6600
                  %v6602 = vld [vmem:[%s6550 + $0xc8] sm:$0xff]
                  %6603 = vst [vmem:[%s6551 + $0xc8] sm:$0xff] %v6602
                  %v6604 = vld [vmem:[%s6550 + $0xd0] sm:$0xff]
                  %6605 = vst [vmem:[%s6551 + $0xd0] sm:$0xff] %v6604
                  %v6606 = vld [vmem:[%s6550 + $0xd8] sm:$0xff]
                  %6607 = vst [vmem:[%s6551 + $0xd8] sm:$0xff] %v6606
                  %v6608 = vld [vmem:[%s6550 + $0xe0] sm:$0xff]
                  %6609 = vst [vmem:[%s6551 + $0xe0] sm:$0xff] %v6608
                  %v6610 = vld [vmem:[%s6550 + $0xe8] sm:$0xff]
                  %6611 = vst [vmem:[%s6551 + $0xe8] sm:$0xff] %v6610
                  %v6612 = vld [vmem:[%s6550 + $0xf0] sm:$0xff]
                  %6613 = vst [vmem:[%s6551 + $0xf0] sm:$0xff] %v6612
                  %v6614 = vld [vmem:[%s6550 + $0xf8] sm:$0xff]
                  %6615 = vst [vmem:[%s6551 + $0xf8] sm:$0xff] %v6614
                  %s6616 = sadd.s32 1, %s6549
                  %p6617 = scmp.ge.s32.totalorder %s6616, %s6542
                  %s6618 = scalar_select %p6617, 0, %s6616
                  %s6619 = smul.u32 %s6618, 256
                  %s6620 = smul.u32 %s6618, 256
                  %s6621 = scalar_lea.vmem %s6409, %s6619 [#allocation2]
                  %s6622 = scalar_lea.vmem %s6424, %s6620
                $region71: #{cpw_forward.3} parent=65 // loop_footer
                  %s6546 = sadd.s32 %s6544, 1
                $region72: #{cpw_forward.3} parent=65 // loop_footer_branch
                  %6543 = sbr.rel target = $region68
                $region73: #{cpw_forward.3} parent=65 // loop_exit
                  _
                %s6623 = sshrl.u32 %s6420, 5
                %s6624 = sand.u32 %s6420, 31
                %s6625 = smul.u32 %s6623, 32
                %s6626 = smul.u32 8, %s6625
                %s6627 = scalar_lea.vmem %s6409, %s6626 [#allocation2]
                %s6628 = smul.u32 8, %s6625
                %s6629 = scalar_lea.vmem %s6424, %s6628
                // While loop
                $region74: #{cpw_forward.3} parent=65 // loop_pre_header
                  _
                $region75: #{cpw_forward.3} parent=65 // loop_header
                  %s6631 = sphi 0, %s6633
                  %p6632 = scmp.ge.s32.totalorder %s6631, %s6624
                  %s6636 = sphi 0, %s6643
                  %s6637 = sphi %s6627, %s6646
                  %s6638 = sphi %s6629, %s6647
                $region76: #{cpw_forward.3} parent=65 // loop_header_branch
                  %6635 = sbr.rel (%p6632) target = $region80
                $region77: #{cpw_forward.3} parent=65 // loop_body
                  %v6639 = vld [vmem:[%s6637] sm:$0xff]
                  %6640 = vst [vmem:[%s6638] sm:$0xff] %v6639
                  %s6641 = sadd.s32 1, %s6636
                  %p6642 = scmp.ge.s32.totalorder %s6641, %s6624
                  %s6643 = scalar_select %p6642, 0, %s6641
                  %s6644 = smul.u32 %s6643, 8
                  %s6645 = smul.u32 %s6643, 8
                  %s6646 = scalar_lea.vmem %s6627, %s6644 [#allocation2]
                  %s6647 = scalar_lea.vmem %s6629, %s6645
                $region78: #{cpw_forward.3} parent=65 // loop_footer
                  %s6633 = sadd.s32 %s6631, 1
                $region79: #{cpw_forward.3} parent=65 // loop_footer_branch
                  %6630 = sbr.rel target = $region75
                $region80: #{cpw_forward.3} parent=65 // loop_exit
                  _
              $region66: #{cpw_forward.3} parent=43 // pred_fallthru
                _
              // Predicated region
              $region81: #{cpw_forward.3} parent=43 // pred_check
                _
              $region82: #{cpw_forward.3} parent=43 // pred_check_branch
                %6649 = sbr.rel target = $region84
              $region83: #{cpw_forward.3} parent=43 // pred_region
                _
              $region84: #{cpw_forward.3} parent=43 // pred_fallthru
                _
            $region44: #{cpw_forward.3} parent=39 // pred_fallthru
              _
            // Predicated region
            $region45: #{cpw_forward.3} parent=39 // pred_check
              _
            $region46: #{cpw_forward.3} parent=39 // pred_check_branch
              %6431 = sbr.rel target = $region48
            $region47: #{cpw_forward.3} parent=39 // pred_region
              %s6433 = ssub.s32 256, 1
              %s6434 = sshrl.u32 %s6420, 5
              // While loop
              $region49: #{cpw_forward.3} parent=47 // loop_pre_header
                _
              $region50: #{cpw_forward.3} parent=47 // loop_header
                %s6436 = sphi 0, %s6438
                %p6437 = scmp.ge.s32.totalorder %s6436, %s6434
                %s6441 = sphi 0, %s6510
                %s6442 = sphi %s6409, %s6513
                %s6443 = sphi %s6424, %s6514
              $region51: #{cpw_forward.3} parent=47 // loop_header_branch
                %6440 = sbr.rel (%p6437) target = $region55
              $region52: #{cpw_forward.3} parent=47 // loop_body
                %v6444 = vld [vmem:[%s6442] sm:%s6433]
                %6445 = vst [vmem:[%s6443] sm:%s6433] %v6444
                %v6446 = vld [vmem:[%s6442 + $0x8] sm:%s6433]
                %6447 = vst [vmem:[%s6443 + $0x8] sm:%s6433] %v6446
                %v6448 = vld [vmem:[%s6442 + $0x10] sm:%s6433]
                %6449 = vst [vmem:[%s6443 + $0x10] sm:%s6433] %v6448
                %v6450 = vld [vmem:[%s6442 + $0x18] sm:%s6433]
                %6451 = vst [vmem:[%s6443 + $0x18] sm:%s6433] %v6450
                %v6452 = vld [vmem:[%s6442 + $0x20] sm:%s6433]
                %6453 = vst [vmem:[%s6443 + $0x20] sm:%s6433] %v6452
                %v6454 = vld [vmem:[%s6442 + $0x28] sm:%s6433]
                %6455 = vst [vmem:[%s6443 + $0x28] sm:%s6433] %v6454
                %v6456 = vld [vmem:[%s6442 + $0x30] sm:%s6433]
                %6457 = vst [vmem:[%s6443 + $0x30] sm:%s6433] %v6456
                %v6458 = vld [vmem:[%s6442 + $0x38] sm:%s6433]
                %6459 = vst [vmem:[%s6443 + $0x38] sm:%s6433] %v6458
                %v6460 = vld [vmem:[%s6442 + $0x40] sm:%s6433]
                %6461 = vst [vmem:[%s6443 + $0x40] sm:%s6433] %v6460
                %v6462 = vld [vmem:[%s6442 + $0x48] sm:%s6433]
                %6463 = vst [vmem:[%s6443 + $0x48] sm:%s6433] %v6462
                %v6464 = vld [vmem:[%s6442 + $0x50] sm:%s6433]
                %6465 = vst [vmem:[%s6443 + $0x50] sm:%s6433] %v6464
                %v6466 = vld [vmem:[%s6442 + $0x58] sm:%s6433]
                %6467 = vst [vmem:[%s6443 + $0x58] sm:%s6433] %v6466
                %v6468 = vld [vmem:[%s6442 + $0x60] sm:%s6433]
                %6469 = vst [vmem:[%s6443 + $0x60] sm:%s6433] %v6468
                %v6470 = vld [vmem:[%s6442 + $0x68] sm:%s6433]
                %6471 = vst [vmem:[%s6443 + $0x68] sm:%s6433] %v6470
                %v6472 = vld [vmem:[%s6442 + $0x70] sm:%s6433]
                %6473 = vst [vmem:[%s6443 + $0x70] sm:%s6433] %v6472
                %v6474 = vld [vmem:[%s6442 + $0x78] sm:%s6433]
                %6475 = vst [vmem:[%s6443 + $0x78] sm:%s6433] %v6474
                %v6476 = vld [vmem:[%s6442 + $0x80] sm:%s6433]
                %6477 = vst [vmem:[%s6443 + $0x80] sm:%s6433] %v6476
                %v6478 = vld [vmem:[%s6442 + $0x88] sm:%s6433]
                %6479 = vst [vmem:[%s6443 + $0x88] sm:%s6433] %v6478
                %v6480 = vld [vmem:[%s6442 + $0x90] sm:%s6433]
                %6481 = vst [vmem:[%s6443 + $0x90] sm:%s6433] %v6480
                %v6482 = vld [vmem:[%s6442 + $0x98] sm:%s6433]
                %6483 = vst [vmem:[%s6443 + $0x98] sm:%s6433] %v6482
                %v6484 = vld [vmem:[%s6442 + $0xa0] sm:%s6433]
                %6485 = vst [vmem:[%s6443 + $0xa0] sm:%s6433] %v6484
                %v6486 = vld [vmem:[%s6442 + $0xa8] sm:%s6433]
                %6487 = vst [vmem:[%s6443 + $0xa8] sm:%s6433] %v6486
                %v6488 = vld [vmem:[%s6442 + $0xb0] sm:%s6433]
                %6489 = vst [vmem:[%s6443 + $0xb0] sm:%s6433] %v6488
                %v6490 = vld [vmem:[%s6442 + $0xb8] sm:%s6433]
                %6491 = vst [vmem:[%s6443 + $0xb8] sm:%s6433] %v6490
                %v6492 = vld [vmem:[%s6442 + $0xc0] sm:%s6433]
                %6493 = vst [vmem:[%s6443 + $0xc0] sm:%s6433] %v6492
                %v6494 = vld [vmem:[%s6442 + $0xc8] sm:%s6433]
                %6495 = vst [vmem:[%s6443 + $0xc8] sm:%s6433] %v6494
                %v6496 = vld [vmem:[%s6442 + $0xd0] sm:%s6433]
                %6497 = vst [vmem:[%s6443 + $0xd0] sm:%s6433] %v6496
                %v6498 = vld [vmem:[%s6442 + $0xd8] sm:%s6433]
                %6499 = vst [vmem:[%s6443 + $0xd8] sm:%s6433] %v6498
                %v6500 = vld [vmem:[%s6442 + $0xe0] sm:%s6433]
                %6501 = vst [vmem:[%s6443 + $0xe0] sm:%s6433] %v6500
                %v6502 = vld [vmem:[%s6442 + $0xe8] sm:%s6433]
                %6503 = vst [vmem:[%s6443 + $0xe8] sm:%s6433] %v6502
                %v6504 = vld [vmem:[%s6442 + $0xf0] sm:%s6433]
                %6505 = vst [vmem:[%s6443 + $0xf0] sm:%s6433] %v6504
                %v6506 = vld [vmem:[%s6442 + $0xf8] sm:%s6433]
                %6507 = vst [vmem:[%s6443 + $0xf8] sm:%s6433] %v6506
                %s6508 = sadd.s32 1, %s6441
                %p6509 = scmp.ge.s32.totalorder %s6508, %s6434
                %s6510 = scalar_select %p6509, 0, %s6508
                %s6511 = smul.u32 %s6510, 256
                %s6512 = smul.u32 %s6510, 256
                %s6513 = scalar_lea.vmem %s6409, %s6511 [#allocation2]
                %s6514 = scalar_lea.vmem %s6424, %s6512
              $region53: #{cpw_forward.3} parent=47 // loop_footer
                %s6438 = sadd.s32 %s6436, 1
              $region54: #{cpw_forward.3} parent=47 // loop_footer_branch
                %6435 = sbr.rel target = $region50
              $region55: #{cpw_forward.3} parent=47 // loop_exit
                _
              %s6515 = sshrl.u32 %s6420, 5
              %s6516 = sand.u32 %s6420, 31
              %s6517 = smul.u32 %s6515, 32
              %s6518 = smul.u32 8, %s6517
              %s6519 = scalar_lea.vmem %s6409, %s6518 [#allocation2]
              %s6520 = smul.u32 8, %s6517
              %s6521 = scalar_lea.vmem %s6424, %s6520
              // While loop
              $region56: #{cpw_forward.3} parent=47 // loop_pre_header
                _
              $region57: #{cpw_forward.3} parent=47 // loop_header
                %s6523 = sphi 0, %s6525
                %p6524 = scmp.ge.s32.totalorder %s6523, %s6516
                %s6528 = sphi 0, %s6535
                %s6529 = sphi %s6519, %s6538
                %s6530 = sphi %s6521, %s6539
              $region58: #{cpw_forward.3} parent=47 // loop_header_branch
                %6527 = sbr.rel (%p6524) target = $region62
              $region59: #{cpw_forward.3} parent=47 // loop_body
                %v6531 = vld [vmem:[%s6529] sm:%s6433]
                %6532 = vst [vmem:[%s6530] sm:%s6433] %v6531
                %s6533 = sadd.s32 1, %s6528
                %p6534 = scmp.ge.s32.totalorder %s6533, %s6516
                %s6535 = scalar_select %p6534, 0, %s6533
                %s6536 = smul.u32 %s6535, 8
                %s6537 = smul.u32 %s6535, 8
                %s6538 = scalar_lea.vmem %s6519, %s6536 [#allocation2]
                %s6539 = scalar_lea.vmem %s6521, %s6537
              $region60: #{cpw_forward.3} parent=47 // loop_footer
                %s6525 = sadd.s32 %s6523, 1
              $region61: #{cpw_forward.3} parent=47 // loop_footer_branch
                %6522 = sbr.rel target = $region57
              $region62: #{cpw_forward.3} parent=47 // loop_exit
                _
            $region48: #{cpw_forward.3} parent=39 // pred_fallthru
              _
          $region40: #{cpw_forward.3} parent=35 // pred_fallthru
            _
          %6650 = vnop
        $region36: #{cpw_forward.3} parent=31 // pred_fallthru
          _
        // Predicated region
        $region85: #{cpw_forward.3} parent=31 // pred_check
          %p6651 = pneg %p128
        $region86: #{cpw_forward.3} parent=31 // pred_check_branch
          %6653 = sbr.rel (%p6651) target = $region88
        $region87: #{cpw_forward.3} parent=31 // pred_region
          %s6654 = smul.u32 512, %s16
          %s6655 = ssub.s32 5000, %s6654
          %p6656 = scmp.lt.s32.totalorder %s6655, 512
          %s6657 = scalar_select %p6656, %s6655, 512
          %s6658 = smul.u32 8, %s6657
          %p6659 = scmp.ne.s32.totalorder 0, %s6658
          %s6660 = smul.addr %s6654, 8
          %s6661 = scalar_lea.vmem %s4, %s6660
          // Predicated region
          $region89: #{cpw_forward.3} parent=87 // pred_check
            %p6662 = pneg %p6659
          $region90: #{cpw_forward.3} parent=87 // pred_check_branch
            %6664 = sbr.rel (%p6662) target = $region92
          $region91: #{cpw_forward.3} parent=87 // pred_region
            // Predicated region
            $region93: #{cpw_forward.3} parent=91 // pred_check
              _
            $region94: #{cpw_forward.3} parent=91 // pred_check_branch
              %6666 = sbr.rel (0) target = $region96
            $region95: #{cpw_forward.3} parent=91 // pred_region
              // Predicated region
              $region115: #{cpw_forward.3} parent=95 // pred_check
                _
              $region116: #{cpw_forward.3} parent=95 // pred_check_branch
                %6778 = sbr.rel (0) target = $region118
              $region117: #{cpw_forward.3} parent=95 // pred_region
                %s6779 = sshrl.u32 %s6657, 5
                // While loop
                $region119: #{cpw_forward.3} parent=117 // loop_pre_header
                  _
                $region120: #{cpw_forward.3} parent=117 // loop_header
                  %s6781 = sphi 0, %s6783
                  %p6782 = scmp.ge.s32.totalorder %s6781, %s6779
                  %s6786 = sphi 0, %s6855
                  %s6787 = sphi %s6413, %s6858
                  %s6788 = sphi %s6661, %s6859
                $region121: #{cpw_forward.3} parent=117 // loop_header_branch
                  %6785 = sbr.rel (%p6782) target = $region125
                $region122: #{cpw_forward.3} parent=117 // loop_body
                  %v6789 = vld [vmem:[%s6787] sm:$0xff]
                  %6790 = vst [vmem:[%s6788] sm:$0xff] %v6789
                  %v6791 = vld [vmem:[%s6787 + $0x8] sm:$0xff]
                  %6792 = vst [vmem:[%s6788 + $0x8] sm:$0xff] %v6791
                  %v6793 = vld [vmem:[%s6787 + $0x10] sm:$0xff]
                  %6794 = vst [vmem:[%s6788 + $0x10] sm:$0xff] %v6793
                  %v6795 = vld [vmem:[%s6787 + $0x18] sm:$0xff]
                  %6796 = vst [vmem:[%s6788 + $0x18] sm:$0xff] %v6795
                  %v6797 = vld [vmem:[%s6787 + $0x20] sm:$0xff]
                  %6798 = vst [vmem:[%s6788 + $0x20] sm:$0xff] %v6797
                  %v6799 = vld [vmem:[%s6787 + $0x28] sm:$0xff]
                  %6800 = vst [vmem:[%s6788 + $0x28] sm:$0xff] %v6799
                  %v6801 = vld [vmem:[%s6787 + $0x30] sm:$0xff]
                  %6802 = vst [vmem:[%s6788 + $0x30] sm:$0xff] %v6801
                  %v6803 = vld [vmem:[%s6787 + $0x38] sm:$0xff]
                  %6804 = vst [vmem:[%s6788 + $0x38] sm:$0xff] %v6803
                  %v6805 = vld [vmem:[%s6787 + $0x40] sm:$0xff]
                  %6806 = vst [vmem:[%s6788 + $0x40] sm:$0xff] %v6805
                  %v6807 = vld [vmem:[%s6787 + $0x48] sm:$0xff]
                  %6808 = vst [vmem:[%s6788 + $0x48] sm:$0xff] %v6807
                  %v6809 = vld [vmem:[%s6787 + $0x50] sm:$0xff]
                  %6810 = vst [vmem:[%s6788 + $0x50] sm:$0xff] %v6809
                  %v6811 = vld [vmem:[%s6787 + $0x58] sm:$0xff]
                  %6812 = vst [vmem:[%s6788 + $0x58] sm:$0xff] %v6811
                  %v6813 = vld [vmem:[%s6787 + $0x60] sm:$0xff]
                  %6814 = vst [vmem:[%s6788 + $0x60] sm:$0xff] %v6813
                  %v6815 = vld [vmem:[%s6787 + $0x68] sm:$0xff]
                  %6816 = vst [vmem:[%s6788 + $0x68] sm:$0xff] %v6815
                  %v6817 = vld [vmem:[%s6787 + $0x70] sm:$0xff]
                  %6818 = vst [vmem:[%s6788 + $0x70] sm:$0xff] %v6817
                  %v6819 = vld [vmem:[%s6787 + $0x78] sm:$0xff]
                  %6820 = vst [vmem:[%s6788 + $0x78] sm:$0xff] %v6819
                  %v6821 = vld [vmem:[%s6787 + $0x80] sm:$0xff]
                  %6822 = vst [vmem:[%s6788 + $0x80] sm:$0xff] %v6821
                  %v6823 = vld [vmem:[%s6787 + $0x88] sm:$0xff]
                  %6824 = vst [vmem:[%s6788 + $0x88] sm:$0xff] %v6823
                  %v6825 = vld [vmem:[%s6787 + $0x90] sm:$0xff]
                  %6826 = vst [vmem:[%s6788 + $0x90] sm:$0xff] %v6825
                  %v6827 = vld [vmem:[%s6787 + $0x98] sm:$0xff]
                  %6828 = vst [vmem:[%s6788 + $0x98] sm:$0xff] %v6827
                  %v6829 = vld [vmem:[%s6787 + $0xa0] sm:$0xff]
                  %6830 = vst [vmem:[%s6788 + $0xa0] sm:$0xff] %v6829
                  %v6831 = vld [vmem:[%s6787 + $0xa8] sm:$0xff]
                  %6832 = vst [vmem:[%s6788 + $0xa8] sm:$0xff] %v6831
                  %v6833 = vld [vmem:[%s6787 + $0xb0] sm:$0xff]
                  %6834 = vst [vmem:[%s6788 + $0xb0] sm:$0xff] %v6833
                  %v6835 = vld [vmem:[%s6787 + $0xb8] sm:$0xff]
                  %6836 = vst [vmem:[%s6788 + $0xb8] sm:$0xff] %v6835
                  %v6837 = vld [vmem:[%s6787 + $0xc0] sm:$0xff]
                  %6838 = vst [vmem:[%s6788 + $0xc0] sm:$0xff] %v6837
                  %v6839 = vld [vmem:[%s6787 + $0xc8] sm:$0xff]
                  %6840 = vst [vmem:[%s6788 + $0xc8] sm:$0xff] %v6839
                  %v6841 = vld [vmem:[%s6787 + $0xd0] sm:$0xff]
                  %6842 = vst [vmem:[%s6788 + $0xd0] sm:$0xff] %v6841
                  %v6843 = vld [vmem:[%s6787 + $0xd8] sm:$0xff]
                  %6844 = vst [vmem:[%s6788 + $0xd8] sm:$0xff] %v6843
                  %v6845 = vld [vmem:[%s6787 + $0xe0] sm:$0xff]
                  %6846 = vst [vmem:[%s6788 + $0xe0] sm:$0xff] %v6845
                  %v6847 = vld [vmem:[%s6787 + $0xe8] sm:$0xff]
                  %6848 = vst [vmem:[%s6788 + $0xe8] sm:$0xff] %v6847
                  %v6849 = vld [vmem:[%s6787 + $0xf0] sm:$0xff]
                  %6850 = vst [vmem:[%s6788 + $0xf0] sm:$0xff] %v6849
                  %v6851 = vld [vmem:[%s6787 + $0xf8] sm:$0xff]
                  %6852 = vst [vmem:[%s6788 + $0xf8] sm:$0xff] %v6851
                  %s6853 = sadd.s32 1, %s6786
                  %p6854 = scmp.ge.s32.totalorder %s6853, %s6779
                  %s6855 = scalar_select %p6854, 0, %s6853
                  %s6856 = smul.u32 %s6855, 256
                  %s6857 = smul.u32 %s6855, 256
                  %s6858 = scalar_lea.vmem %s6413, %s6856 [#allocation3]
                  %s6859 = scalar_lea.vmem %s6661, %s6857
                $region123: #{cpw_forward.3} parent=117 // loop_footer
                  %s6783 = sadd.s32 %s6781, 1
                $region124: #{cpw_forward.3} parent=117 // loop_footer_branch
                  %6780 = sbr.rel target = $region120
                $region125: #{cpw_forward.3} parent=117 // loop_exit
                  _
                %s6860 = sshrl.u32 %s6657, 5
                %s6861 = sand.u32 %s6657, 31
                %s6862 = smul.u32 %s6860, 32
                %s6863 = smul.u32 8, %s6862
                %s6864 = scalar_lea.vmem %s6413, %s6863 [#allocation3]
                %s6865 = smul.u32 8, %s6862
                %s6866 = scalar_lea.vmem %s6661, %s6865
                // While loop
                $region126: #{cpw_forward.3} parent=117 // loop_pre_header
                  _
                $region127: #{cpw_forward.3} parent=117 // loop_header
                  %s6868 = sphi 0, %s6870
                  %p6869 = scmp.ge.s32.totalorder %s6868, %s6861
                  %s6873 = sphi 0, %s6880
                  %s6874 = sphi %s6864, %s6883
                  %s6875 = sphi %s6866, %s6884
                $region128: #{cpw_forward.3} parent=117 // loop_header_branch
                  %6872 = sbr.rel (%p6869) target = $region132
                $region129: #{cpw_forward.3} parent=117 // loop_body
                  %v6876 = vld [vmem:[%s6874] sm:$0xff]
                  %6877 = vst [vmem:[%s6875] sm:$0xff] %v6876
                  %s6878 = sadd.s32 1, %s6873
                  %p6879 = scmp.ge.s32.totalorder %s6878, %s6861
                  %s6880 = scalar_select %p6879, 0, %s6878
                  %s6881 = smul.u32 %s6880, 8
                  %s6882 = smul.u32 %s6880, 8
                  %s6883 = scalar_lea.vmem %s6864, %s6881 [#allocation3]
                  %s6884 = scalar_lea.vmem %s6866, %s6882
                $region130: #{cpw_forward.3} parent=117 // loop_footer
                  %s6870 = sadd.s32 %s6868, 1
                $region131: #{cpw_forward.3} parent=117 // loop_footer_branch
                  %6867 = sbr.rel target = $region127
                $region132: #{cpw_forward.3} parent=117 // loop_exit
                  _
              $region118: #{cpw_forward.3} parent=95 // pred_fallthru
                _
              // Predicated region
              $region133: #{cpw_forward.3} parent=95 // pred_check
                _
              $region134: #{cpw_forward.3} parent=95 // pred_check_branch
                %6886 = sbr.rel target = $region136
              $region135: #{cpw_forward.3} parent=95 // pred_region
                _
              $region136: #{cpw_forward.3} parent=95 // pred_fallthru
                _
            $region96: #{cpw_forward.3} parent=91 // pred_fallthru
              _
            // Predicated region
            $region97: #{cpw_forward.3} parent=91 // pred_check
              _
            $region98: #{cpw_forward.3} parent=91 // pred_check_branch
              %6668 = sbr.rel target = $region100
            $region99: #{cpw_forward.3} parent=91 // pred_region
              %s6670 = ssub.s32 256, 1
              %s6671 = sshrl.u32 %s6657, 5
              // While loop
              $region101: #{cpw_forward.3} parent=99 // loop_pre_header
                _
              $region102: #{cpw_forward.3} parent=99 // loop_header
                %s6673 = sphi 0, %s6675
                %p6674 = scmp.ge.s32.totalorder %s6673, %s6671
                %s6678 = sphi 0, %s6747
                %s6679 = sphi %s6413, %s6750
                %s6680 = sphi %s6661, %s6751
              $region103: #{cpw_forward.3} parent=99 // loop_header_branch
                %6677 = sbr.rel (%p6674) target = $region107
              $region104: #{cpw_forward.3} parent=99 // loop_body
                %v6681 = vld [vmem:[%s6679] sm:%s6670]
                %6682 = vst [vmem:[%s6680] sm:%s6670] %v6681
                %v6683 = vld [vmem:[%s6679 + $0x8] sm:%s6670]
                %6684 = vst [vmem:[%s6680 + $0x8] sm:%s6670] %v6683
                %v6685 = vld [vmem:[%s6679 + $0x10] sm:%s6670]
                %6686 = vst [vmem:[%s6680 + $0x10] sm:%s6670] %v6685
                %v6687 = vld [vmem:[%s6679 + $0x18] sm:%s6670]
                %6688 = vst [vmem:[%s6680 + $0x18] sm:%s6670] %v6687
                %v6689 = vld [vmem:[%s6679 + $0x20] sm:%s6670]
                %6690 = vst [vmem:[%s6680 + $0x20] sm:%s6670] %v6689
                %v6691 = vld [vmem:[%s6679 + $0x28] sm:%s6670]
                %6692 = vst [vmem:[%s6680 + $0x28] sm:%s6670] %v6691
                %v6693 = vld [vmem:[%s6679 + $0x30] sm:%s6670]
                %6694 = vst [vmem:[%s6680 + $0x30] sm:%s6670] %v6693
                %v6695 = vld [vmem:[%s6679 + $0x38] sm:%s6670]
                %6696 = vst [vmem:[%s6680 + $0x38] sm:%s6670] %v6695
                %v6697 = vld [vmem:[%s6679 + $0x40] sm:%s6670]
                %6698 = vst [vmem:[%s6680 + $0x40] sm:%s6670] %v6697
                %v6699 = vld [vmem:[%s6679 + $0x48] sm:%s6670]
                %6700 = vst [vmem:[%s6680 + $0x48] sm:%s6670] %v6699
                %v6701 = vld [vmem:[%s6679 + $0x50] sm:%s6670]
                %6702 = vst [vmem:[%s6680 + $0x50] sm:%s6670] %v6701
                %v6703 = vld [vmem:[%s6679 + $0x58] sm:%s6670]
                %6704 = vst [vmem:[%s6680 + $0x58] sm:%s6670] %v6703
                %v6705 = vld [vmem:[%s6679 + $0x60] sm:%s6670]
                %6706 = vst [vmem:[%s6680 + $0x60] sm:%s6670] %v6705
                %v6707 = vld [vmem:[%s6679 + $0x68] sm:%s6670]
                %6708 = vst [vmem:[%s6680 + $0x68] sm:%s6670] %v6707
                %v6709 = vld [vmem:[%s6679 + $0x70] sm:%s6670]
                %6710 = vst [vmem:[%s6680 + $0x70] sm:%s6670] %v6709
                %v6711 = vld [vmem:[%s6679 + $0x78] sm:%s6670]
                %6712 = vst [vmem:[%s6680 + $0x78] sm:%s6670] %v6711
                %v6713 = vld [vmem:[%s6679 + $0x80] sm:%s6670]
                %6714 = vst [vmem:[%s6680 + $0x80] sm:%s6670] %v6713
                %v6715 = vld [vmem:[%s6679 + $0x88] sm:%s6670]
                %6716 = vst [vmem:[%s6680 + $0x88] sm:%s6670] %v6715
                %v6717 = vld [vmem:[%s6679 + $0x90] sm:%s6670]
                %6718 = vst [vmem:[%s6680 + $0x90] sm:%s6670] %v6717
                %v6719 = vld [vmem:[%s6679 + $0x98] sm:%s6670]
                %6720 = vst [vmem:[%s6680 + $0x98] sm:%s6670] %v6719
                %v6721 = vld [vmem:[%s6679 + $0xa0] sm:%s6670]
                %6722 = vst [vmem:[%s6680 + $0xa0] sm:%s6670] %v6721
                %v6723 = vld [vmem:[%s6679 + $0xa8] sm:%s6670]
                %6724 = vst [vmem:[%s6680 + $0xa8] sm:%s6670] %v6723
                %v6725 = vld [vmem:[%s6679 + $0xb0] sm:%s6670]
                %6726 = vst [vmem:[%s6680 + $0xb0] sm:%s6670] %v6725
                %v6727 = vld [vmem:[%s6679 + $0xb8] sm:%s6670]
                %6728 = vst [vmem:[%s6680 + $0xb8] sm:%s6670] %v6727
                %v6729 = vld [vmem:[%s6679 + $0xc0] sm:%s6670]
                %6730 = vst [vmem:[%s6680 + $0xc0] sm:%s6670] %v6729
                %v6731 = vld [vmem:[%s6679 + $0xc8] sm:%s6670]
                %6732 = vst [vmem:[%s6680 + $0xc8] sm:%s6670] %v6731
                %v6733 = vld [vmem:[%s6679 + $0xd0] sm:%s6670]
                %6734 = vst [vmem:[%s6680 + $0xd0] sm:%s6670] %v6733
                %v6735 = vld [vmem:[%s6679 + $0xd8] sm:%s6670]
                %6736 = vst [vmem:[%s6680 + $0xd8] sm:%s6670] %v6735
                %v6737 = vld [vmem:[%s6679 + $0xe0] sm:%s6670]
                %6738 = vst [vmem:[%s6680 + $0xe0] sm:%s6670] %v6737
                %v6739 = vld [vmem:[%s6679 + $0xe8] sm:%s6670]
                %6740 = vst [vmem:[%s6680 + $0xe8] sm:%s6670] %v6739
                %v6741 = vld [vmem:[%s6679 + $0xf0] sm:%s6670]
                %6742 = vst [vmem:[%s6680 + $0xf0] sm:%s6670] %v6741
                %v6743 = vld [vmem:[%s6679 + $0xf8] sm:%s6670]
                %6744 = vst [vmem:[%s6680 + $0xf8] sm:%s6670] %v6743
                %s6745 = sadd.s32 1, %s6678
                %p6746 = scmp.ge.s32.totalorder %s6745, %s6671
                %s6747 = scalar_select %p6746, 0, %s6745
                %s6748 = smul.u32 %s6747, 256
                %s6749 = smul.u32 %s6747, 256
                %s6750 = scalar_lea.vmem %s6413, %s6748 [#allocation3]
                %s6751 = scalar_lea.vmem %s6661, %s6749
              $region105: #{cpw_forward.3} parent=99 // loop_footer
                %s6675 = sadd.s32 %s6673, 1
              $region106: #{cpw_forward.3} parent=99 // loop_footer_branch
                %6672 = sbr.rel target = $region102
              $region107: #{cpw_forward.3} parent=99 // loop_exit
                _
              %s6752 = sshrl.u32 %s6657, 5
              %s6753 = sand.u32 %s6657, 31
              %s6754 = smul.u32 %s6752, 32
              %s6755 = smul.u32 8, %s6754
              %s6756 = scalar_lea.vmem %s6413, %s6755 [#allocation3]
              %s6757 = smul.u32 8, %s6754
              %s6758 = scalar_lea.vmem %s6661, %s6757
              // While loop
              $region108: #{cpw_forward.3} parent=99 // loop_pre_header
                _
              $region109: #{cpw_forward.3} parent=99 // loop_header
                %s6760 = sphi 0, %s6762
                %p6761 = scmp.ge.s32.totalorder %s6760, %s6753
                %s6765 = sphi 0, %s6772
                %s6766 = sphi %s6756, %s6775
                %s6767 = sphi %s6758, %s6776
              $region110: #{cpw_forward.3} parent=99 // loop_header_branch
                %6764 = sbr.rel (%p6761) target = $region114
              $region111: #{cpw_forward.3} parent=99 // loop_body
                %v6768 = vld [vmem:[%s6766] sm:%s6670]
                %6769 = vst [vmem:[%s6767] sm:%s6670] %v6768
                %s6770 = sadd.s32 1, %s6765
                %p6771 = scmp.ge.s32.totalorder %s6770, %s6753
                %s6772 = scalar_select %p6771, 0, %s6770
                %s6773 = smul.u32 %s6772, 8
                %s6774 = smul.u32 %s6772, 8
                %s6775 = scalar_lea.vmem %s6756, %s6773 [#allocation3]
                %s6776 = scalar_lea.vmem %s6758, %s6774
              $region112: #{cpw_forward.3} parent=99 // loop_footer
                %s6762 = sadd.s32 %s6760, 1
              $region113: #{cpw_forward.3} parent=99 // loop_footer_branch
                %6759 = sbr.rel target = $region109
              $region114: #{cpw_forward.3} parent=99 // loop_exit
                _
            $region100: #{cpw_forward.3} parent=91 // pred_fallthru
              _
          $region92: #{cpw_forward.3} parent=87 // pred_fallthru
            _
          %6887 = vnop
        $region88: #{cpw_forward.3} parent=31 // pred_fallthru
          _
      $region32: #{cpw_forward.3} parent=5 // pred_fallthru
        _
      %p6888 = scmp.le.s32.totalorder 2, %s11
      // Predicated region
      $region137: #{cpw_forward.3} parent=5 // pred_check
        %p6889 = pneg %p6888
      $region138: #{cpw_forward.3} parent=5 // pred_check_branch
        %6891 = sbr.rel (%p6889) target = $region140
      $region139: #{cpw_forward.3} parent=5 // pred_region
        %s6892 = ssub.s32 %s11, 2
        // Predicated region
        $region141: #{cpw_forward.3} parent=139 // pred_check
          %p6893 = pneg %p108
        $region142: #{cpw_forward.3} parent=139 // pred_check_branch
          %6895 = sbr.rel (%p6893) target = $region144
        $region143: #{cpw_forward.3} parent=139 // pred_region
          %s6896 = sand.u32 %s93, 1
          %s6897 = sand.u32 %s93, 1
          %s6898 = smul.addr %s6897, 4096
          %s6899 = scalar_lea.vmem [#allocation2], %s6898
        $region144: #{cpw_forward.3} parent=139 // pred_fallthru
          _
        // Predicated region
        $region145: #{cpw_forward.3} parent=139 // pred_check
          %p6900 = pneg %p134
        $region146: #{cpw_forward.3} parent=139 // pred_check_branch
          %6902 = sbr.rel (%p6900) target = $region148
        $region147: #{cpw_forward.3} parent=139 // pred_region
          %s6903 = sand.u32 %s119, 1
          %s6904 = sand.u32 %s119, 1
          %s6905 = smul.addr %s6904, 4096
          %s6906 = scalar_lea.vmem [#allocation3], %s6905
        $region148: #{cpw_forward.3} parent=139 // pred_fallthru
          _
      $region140: #{cpw_forward.3} parent=5 // pred_fallthru
        _
    $region6: #{cpw_forward.3} parent=1 // loop_footer
      %s15 = sadd.s32 1, %s11
    $region7: #{cpw_forward.3} parent=1 // loop_footer_branch
      %10 = sbr.rel target = $region3
    $region8: #{cpw_forward.3} parent=1 // loop_exit
      _

</llo_original>
